<compile_context>
chip_gen: v6e
topology: v6e:2x2x1
jax: 0.10.0
libtpu: 0.0.40
codegen_flags: <defaults>
</compile_context>

<pallas_src>
import jax
import jax.numpy as jnp
from jax.experimental import pallas as pl
from jax.experimental.pallas import tpu as pltpu


def _build_fused_kernel(layer_cfgs, extract_mask, nb):
    """Fused conv stack for a batch chunk of `nb` images.

    layer_cfgs[l] = (cin, cout, stride, h_in, w_in, h_out, w_out)
    extract_mask[l] = True  => layer l's activation is written to HBM.

    Ref order:
      x (nb, H0, W0, C0) bf16,
      w_1..w_L   (9*Cin, Cout) bf16   im2col weights,
      b_1..b_L   (1, Cout)    f32,
      out_1..out_K (nb, H, W*C) f32   hooked layers only (lane-dense),
      pad_1..pad_L VMEM (nb, H+2, W+2, Cin)  zero-padded layer inputs.
    """
    n_layers = len(layer_cfgs)
    n_out = sum(extract_mask)

    def store_padded(pad, interior, h, w, c):
        # Zero only the 1-pixel halo (4 thin stores) and write the interior.
        dt = pad.dtype
        zrow = jnp.zeros((nb, 1, w + 2, c), dt)
        zcol = jnp.zeros((nb, h, 1, c), dt)
        pad[:, 0:1, :, :] = zrow
        pad[:, h + 1:h + 2, :, :] = zrow
        pad[:, 1:1 + h, 0:1, :] = zcol
        pad[:, 1:1 + h, w + 1:w + 2, :] = zcol
        pad[:, 1:1 + h, 1:1 + w, :] = interior.astype(dt)

    def kernel(*refs):
        x_ref = refs[0]
        w_refs = refs[1:1 + n_layers]
        b_refs = refs[1 + n_layers:1 + 2 * n_layers]
        out_refs = refs[1 + 2 * n_layers:1 + 2 * n_layers + n_out]
        pad_refs = refs[1 + 2 * n_layers + n_out:]

        # Input (already bf16 from the wrapper) -> layer-1 pad interior.
        c0, _, _, h0, w0, _, _ = layer_cfgs[0]
        store_padded(pad_refs[0], x_ref[...], h0, w0, c0)

        out_i = 0
        for l, (cin, cout, stride, h_in, w_in, h_out, w_out) in enumerate(layer_cfgs):
            pad = pad_refs[l]

            # im2col: 9 taps sliced straight off the pad ref (no whole-pad
            # value, no col scratch).  Stride-2 taps are strided ref reads.
            taps = []
            for kh in range(3):
                for kw in range(3):
                    if stride == 1:
                        tap = pad[:, kh:kh + h_out, kw:kw + w_out, :]
                    else:
                        tap = pad[:, pl.ds(kh, h_out, stride=2),
                                  pl.ds(kw, w_out, stride=2), :]
                    taps.append(tap.astype(jnp.bfloat16))
            patches = jnp.concatenate(taps, axis=-1)           # (nb,ho,wo,9*cin)
            patches = patches.reshape(nb * h_out * w_out, 9 * cin)

            # One MXU matmul per layer; bias + ReLU stay f32 on the VPU.
            acc = jnp.dot(patches, w_refs[l][...],
                          preferred_element_type=jnp.float32)   # (M, cout) f32
            acc = jnp.maximum(acc + b_refs[l][...], 0.0)
            act4 = acc.reshape(nb, h_out, w_out, cout)

            if extract_mask[l]:
                # Lane-dense hooked-layer store: (nb, H, W*C).
                out_refs[out_i][...] = jnp.concatenate(
                    [act4[:, :, j, :] for j in range(w_out)], axis=-1)
                out_i += 1
            if l + 1 < n_layers:
                # ReLU output goes straight into the next layer's pad interior.
                store_padded(pad_refs[l + 1], act4, h_out, w_out, cout)

    return kernel


class SyntheticBackbone:
    """Small deterministic conv backbone standing in for a torchvision model.

    Named sub-modules run in order: layer1 -> layer2 -> layer3 -> layer4.
    Each layer = 3x3 conv (padding=1), bias, ReLU, with the given stride.
    """

    def __init__(self, key, cin=4):
        self.layer_order = ["layer1", "layer2", "layer3", "layer4"]
        cfg = {
            "layer1": (cin, 8, 1),
            "layer2": (8, 16, 2),
            "layer3": (16, 32, 2),
            "layer4": (32, 64, 2),
        }
        self.params = {}
        for name in self.layer_order:
            ci, co, s = cfg[name]
            key, kw_, kb_ = jax.random.split(key, 3)
            w = jax.random.normal(kw_, (3, 3, ci, co), jnp.float32) * 0.1
            b = jax.random.normal(kb_, (co,), jnp.float32) * 0.1
            self.params[name] = (w, b, s)


class NetworkFeatureAggregator:
    """JAX/Pallas analogue of patchcore.common.NetworkFeatureAggregator.

    The forward-hook + LastLayerToExtractReachedException mechanism is
    emulated statically: the fused kernel is built only for layers
    layer1..last-requested-layer, and only the hooked layers' activations are
    written to HBM.  Returned features are NCHW, like the PyTorch hooks.
    """

    def __init__(self, backbone, layers_to_extract_from, batch_chunks=1):
        # batch_chunks=1: single fused grid step (best on single-TC v5e/v6e).
        # batch_chunks=2: shards the batch across v7x's two TensorCores.
        self.backbone = backbone
        self.layers_to_extract_from = list(layers_to_extract_from)
        self.batch_chunks = batch_chunks
        self.outputs = {}
        self._compiled = {}  # cache keyed by (N, H, W, Cin)

        order = backbone.layer_order
        last = self.layers_to_extract_from[-1]
        # Emulates raising LastLayerToExtractReachedException after `last`.
        self.run_layers = order[:order.index(last) + 1]

    def _get_fused(self, n, h, w, cin):
        key = (n, h, w, cin)
        if key in self._compiled:
            return self._compiled[key]

        bc = self.batch_chunks if (n % self.batch_chunks == 0) else 1
        nb = n // bc

        cfgs, w_mats, biases = [], [], []
        h_in, w_in, c_in = h, w, cin
        for name in self.run_layers:
            wgt, b, stride = self.backbone.params[name]
            kh_, kw_, ci, co = wgt.shape
            assert (kh_, kw_) == (3, 3) and ci == c_in and stride in (1, 2)
            h_out = (h_in + 2 - 3) // stride + 1
            w_out = (w_in + 2 - 3) // stride + 1
            cfgs.append((c_in, co, stride, h_in, w_in, h_out, w_out))
            # im2col weight layout: row = (kh*3 + kw)*Cin + cin; bf16 for MXU.
            w_mats.append(wgt.reshape(9 * ci, co).astype(jnp.bfloat16))
            biases.append(b.reshape(1, co).astype(jnp.float32))
            h_in, w_in, c_in = h_out, w_out, co

        extract_mask = tuple(name in self.layers_to_extract_from
                             for name in self.run_layers)
        kernel = _build_fused_kernel(tuple(cfgs), extract_mask, nb)

        in_specs = [pl.BlockSpec((nb, h, w, cin), lambda i: (i, 0, 0, 0))]
        in_specs += [pl.BlockSpec(wm.shape, lambda i: (0, 0)) for wm in w_mats]
        in_specs += [pl.BlockSpec(bb.shape, lambda i: (0, 0)) for bb in biases]

        out_shapes, out_specs, out_names, out_dims = [], [], [], []
        for cfg, name, take in zip(cfgs, self.run_layers, extract_mask):
            if not take:
                continue
            _, co, _, _, _, ho, wo = cfg
            out_shapes.append(jax.ShapeDtypeStruct((n, ho, wo * co), jnp.float32))
            out_specs.append(pl.BlockSpec((nb, ho, wo * co), lambda i: (i, 0, 0)))
            out_names.append(name)
            out_dims.append((ho, wo, co))

        scratch = []
        for (ci, _, stride, hi, wi, _, _) in cfgs:
            # TODO(synk): stride-2 pad scratch kept f32 (Mosaic strided loads
            # want 32-bit layouts); stride-1 pads are bf16 end-to-end.
            dt = jnp.bfloat16 if stride == 1 else jnp.float32
            scratch.append(pltpu.VMEM((nb, hi + 2, wi + 2, ci), dt))

        call = pl.pallas_call(
            kernel,
            out_shape=tuple(out_shapes),
            grid=(bc,),
            in_specs=in_specs,
            out_specs=tuple(out_specs),
            scratch_shapes=scratch,
            compiler_params=pltpu.CompilerParams(
                dimension_semantics=("parallel",) if bc > 1 else ("arbitrary",),
                vmem_limit_bytes=32 * 1024 * 1024),
        )

        @jax.jit
        def run(images_nchw):
            # NCHW -> NHWC; cast ONCE to bf16 (everything up to the MXU is bf16).
            x = jnp.transpose(images_nchw, (0, 2, 3, 1)).astype(jnp.bfloat16)
            outs = call(x, *w_mats, *biases)
            feats = {}
            for name, (ho, wo, co), o in zip(out_names, out_dims, outs):
                feats[name] = jnp.transpose(o.reshape(n, ho, wo, co), (0, 3, 1, 2))
            return feats

        self._compiled[key] = run
        return run

    def __call__(self, images_nchw):
        self.outputs.clear()
        n, c, h, w = images_nchw.shape
        run = self._get_fused(n, h, w, c)
        self.outputs.update(run(images_nchw))
        return dict(self.outputs)

    def feature_dimensions(self, input_shape):
        _input = jnp.ones((1,) + tuple(input_shape), jnp.float32)
        _output = self(_input)
        return [_output[layer].shape[1] for layer in self.layers_to_extract_from]


def _reference_features(aggregator, x_nchw):
    """Pure-JAX reference with the same bf16 rounding points as the kernel."""
    a = jnp.transpose(x_nchw, (0, 2, 3, 1)).astype(jnp.bfloat16).astype(jnp.float32)
    feats = {}
    for name in aggregator.run_layers:
        wgt, b, stride = aggregator.backbone.params[name]
        a_in = a.astype(jnp.bfloat16).astype(jnp.float32)
        w_in = wgt.astype(jnp.bfloat16).astype(jnp.float32)
        y = jax.lax.conv_general_dilated(
            a_in, w_in, window_strides=(stride, stride),
            padding=((1, 1), (1, 1)),
            dimension_numbers=("NHWC", "HWIO", "NHWC"))
        a = jnp.maximum(y + b, 0.0)
        if name in aggregator.layers_to_extract_from:
            feats[name] = jnp.transpose(a, (0, 3, 1, 2))
    return feats


if __name__ == "__main__":
    key = jax.random.PRNGKey(0)
    kx, kb = jax.random.split(key)

    backbone = SyntheticBackbone(kb, cin=4)
    aggregator = NetworkFeatureAggregator(backbone, ["layer2", "layer3"])

    # PyTorch-style NCHW input: batch=2, channels=4, spatial=16x16.
    x = jax.random.normal(kx, (2, 4, 16, 16), jnp.float32)

    feats = aggregator(x)
    for v in feats.values():
        jax.block_until_ready(v)

    assert set(feats.keys()) == {"layer2", "layer3"}
    assert feats["layer2"].shape == (2, 16, 8, 8)   # NCHW, stride-2 once
    assert feats["layer3"].shape == (2, 32, 4, 4)   # NCHW, stride-2 twice
    assert all(bool(jnp.all(jnp.isfinite(v))) for v in feats.values())

    # Numerical check against a pure-JAX conv reference (bf16-matmul tolerance).
    ref = _reference_features(aggregator, x)
    for name in feats:
        assert bool(jnp.allclose(feats[name], ref[name], rtol=1e-2, atol=1e-2)), name

    assert aggregator.feature_dimensions((4, 16, 16)) == [16, 32]

    print("KERNEL_OK")
</pallas_src>

<mosaic_0001>
module attributes {stable_mosaic.version = 11 : i64} {
  func.func @kernel(%arg0: i32, %arg1: memref<2x16x16x4xbf16, #tpu.memory_space<vmem>>, %arg2: memref<36x8xbf16, #tpu.memory_space<vmem>>, %arg3: memref<72x16xbf16, #tpu.memory_space<vmem>>, %arg4: memref<144x32xbf16, #tpu.memory_space<vmem>>, %arg5: memref<1x8xf32, #tpu.memory_space<vmem>>, %arg6: memref<1x16xf32, #tpu.memory_space<vmem>>, %arg7: memref<1x32xf32, #tpu.memory_space<vmem>>, %arg8: memref<2x8x128xf32, #tpu.memory_space<vmem>>, %arg9: memref<2x4x128xf32, #tpu.memory_space<vmem>>, %arg10: memref<2x18x18x4xbf16, #tpu.memory_space<vmem>>, %arg11: memref<2x18x18x8xf32, #tpu.memory_space<vmem>>, %arg12: memref<2x10x10x16xf32, #tpu.memory_space<vmem>>) attributes {dimension_semantics = [#tpu.dimension_semantics<arbitrary>], iteration_bounds = array<i64: 1>, scalar_prefetch = 0 : i64, scratch_operands = 3 : i64, tpu.core_type = #tpu.core_type<tc>, window_params = [{transform_indices = @transform_0, window_bounds = array<i64: 2, 16, 16, 4>}, {pipeline_mode = #tpu.pipeline_mode<synchronous>, transform_indices = @transform_1, window_bounds = array<i64: 36, 8>}, {pipeline_mode = #tpu.pipeline_mode<synchronous>, transform_indices = @transform_2, window_bounds = array<i64: 72, 16>}, {pipeline_mode = #tpu.pipeline_mode<synchronous>, transform_indices = @transform_3, window_bounds = array<i64: 144, 32>}, {pipeline_mode = #tpu.pipeline_mode<synchronous>, transform_indices = @transform_4, window_bounds = array<i64: 1, 8>}, {pipeline_mode = #tpu.pipeline_mode<synchronous>, transform_indices = @transform_5, window_bounds = array<i64: 1, 16>}, {pipeline_mode = #tpu.pipeline_mode<synchronous>, transform_indices = @transform_6, window_bounds = array<i64: 1, 32>}, {transform_indices = @transform_7, window_bounds = array<i64: 2, 8, 128>}, {transform_indices = @transform_8, window_bounds = array<i64: 2, 4, 128>}]} {
    %c0 = arith.constant 0 : index
    %c0_0 = arith.constant 0 : index
    %c0_1 = arith.constant 0 : index
    %c0_2 = arith.constant 0 : index
    %0 = vector.load %arg1[%c0, %c0_0, %c0_1, %c0_2] : memref<2x16x16x4xbf16, #tpu.memory_space<vmem>>, vector<2x16x16x4xbf16>
    %cst = arith.constant 0.000000e+00 : bf16
    %1 = vector.broadcast %cst : bf16 to vector<2x1x18x4xbf16>
    %cst_3 = arith.constant 0.000000e+00 : bf16
    %2 = vector.broadcast %cst_3 : bf16 to vector<2x16x1x4xbf16>
    %c0_4 = arith.constant 0 : index
    %c0_5 = arith.constant 0 : index
    %c0_6 = arith.constant 0 : index
    %c0_7 = arith.constant 0 : index
    %3 = vector.load %arg10[%c0_4, %c0_5, %c0_6, %c0_7] : memref<2x18x18x4xbf16, #tpu.memory_space<vmem>>, vector<2x1x18x4xbf16>
    tpu.vector_store %arg10[%c0_4, %c0_5, %c0_6, %c0_7], %1 {strides = array<i32>} : memref<2x18x18x4xbf16, #tpu.memory_space<vmem>>, vector<2x1x18x4xbf16>,
    %c0_8 = arith.constant 0 : index
    %c17 = arith.constant 17 : index
    %c0_9 = arith.constant 0 : index
    %c0_10 = arith.constant 0 : index
    %4 = vector.load %arg10[%c0_8, %c17, %c0_9, %c0_10] : memref<2x18x18x4xbf16, #tpu.memory_space<vmem>>, vector<2x1x18x4xbf16>
    tpu.vector_store %arg10[%c0_8, %c17, %c0_9, %c0_10], %1 {strides = array<i32>} : memref<2x18x18x4xbf16, #tpu.memory_space<vmem>>, vector<2x1x18x4xbf16>,
    %c0_11 = arith.constant 0 : index
    %c1 = arith.constant 1 : index
    %c0_12 = arith.constant 0 : index
    %c0_13 = arith.constant 0 : index
    %5 = vector.load %arg10[%c0_11, %c1, %c0_12, %c0_13] : memref<2x18x18x4xbf16, #tpu.memory_space<vmem>>, vector<2x16x1x4xbf16>
    tpu.vector_store %arg10[%c0_11, %c1, %c0_12, %c0_13], %2 {strides = array<i32>} : memref<2x18x18x4xbf16, #tpu.memory_space<vmem>>, vector<2x16x1x4xbf16>,
    %c0_14 = arith.constant 0 : index
    %c1_15 = arith.constant 1 : index
    %c17_16 = arith.constant 17 : index
    %c0_17 = arith.constant 0 : index
    %6 = vector.load %arg10[%c0_14, %c1_15, %c17_16, %c0_17] : memref<2x18x18x4xbf16, #tpu.memory_space<vmem>>, vector<2x16x1x4xbf16>
    tpu.vector_store %arg10[%c0_14, %c1_15, %c17_16, %c0_17], %2 {strides = array<i32>} : memref<2x18x18x4xbf16, #tpu.memory_space<vmem>>, vector<2x16x1x4xbf16>,
    %c0_18 = arith.constant 0 : index
    %c1_19 = arith.constant 1 : index
    %c1_20 = arith.constant 1 : index
    %c0_21 = arith.constant 0 : index
    %7 = vector.load %arg10[%c0_18, %c1_19, %c1_20, %c0_21] : memref<2x18x18x4xbf16, #tpu.memory_space<vmem>>, vector<2x16x16x4xbf16>
    tpu.vector_store %arg10[%c0_18, %c1_19, %c1_20, %c0_21], %0 {strides = array<i32>} : memref<2x18x18x4xbf16, #tpu.memory_space<vmem>>, vector<2x16x16x4xbf16>,
    %c0_22 = arith.constant 0 : index
    %c0_23 = arith.constant 0 : index
    %c0_24 = arith.constant 0 : index
    %c0_25 = arith.constant 0 : index
    %8 = vector.load %arg10[%c0_22, %c0_23, %c0_24, %c0_25] : memref<2x18x18x4xbf16, #tpu.memory_space<vmem>>, vector<2x16x16x4xbf16>
    %c0_26 = arith.constant 0 : index
    %c0_27 = arith.constant 0 : index
    %c1_28 = arith.constant 1 : index
    %c0_29 = arith.constant 0 : index
    %9 = vector.load %arg10[%c0_26, %c0_27, %c1_28, %c0_29] : memref<2x18x18x4xbf16, #tpu.memory_space<vmem>>, vector<2x16x16x4xbf16>
    %c0_30 = arith.constant 0 : index
    %c0_31 = arith.constant 0 : index
    %c2 = arith.constant 2 : index
    %c0_32 = arith.constant 0 : index
    %10 = vector.load %arg10[%c0_30, %c0_31, %c2, %c0_32] : memref<2x18x18x4xbf16, #tpu.memory_space<vmem>>, vector<2x16x16x4xbf16>
    %c0_33 = arith.constant 0 : index
    %c1_34 = arith.constant 1 : index
    %c0_35 = arith.constant 0 : index
    %c0_36 = arith.constant 0 : index
    %11 = vector.load %arg10[%c0_33, %c1_34, %c0_35, %c0_36] : memref<2x18x18x4xbf16, #tpu.memory_space<vmem>>, vector<2x16x16x4xbf16>
    %c0_37 = arith.constant 0 : index
    %c1_38 = arith.constant 1 : index
    %c1_39 = arith.constant 1 : index
    %c0_40 = arith.constant 0 : index
    %12 = vector.load %arg10[%c0_37, %c1_38, %c1_39, %c0_40] : memref<2x18x18x4xbf16, #tpu.memory_space<vmem>>, vector<2x16x16x4xbf16>
    %c0_41 = arith.constant 0 : index
    %c1_42 = arith.constant 1 : index
    %c2_43 = arith.constant 2 : index
    %c0_44 = arith.constant 0 : index
    %13 = vector.load %arg10[%c0_41, %c1_42, %c2_43, %c0_44] : memref<2x18x18x4xbf16, #tpu.memory_space<vmem>>, vector<2x16x16x4xbf16>
    %c0_45 = arith.constant 0 : index
    %c2_46 = arith.constant 2 : index
    %c0_47 = arith.constant 0 : index
    %c0_48 = arith.constant 0 : index
    %14 = vector.load %arg10[%c0_45, %c2_46, %c0_47, %c0_48] : memref<2x18x18x4xbf16, #tpu.memory_space<vmem>>, vector<2x16x16x4xbf16>
    %c0_49 = arith.constant 0 : index
    %c2_50 = arith.constant 2 : index
    %c1_51 = arith.constant 1 : index
    %c0_52 = arith.constant 0 : index
    %15 = vector.load %arg10[%c0_49, %c2_50, %c1_51, %c0_52] : memref<2x18x18x4xbf16, #tpu.memory_space<vmem>>, vector<2x16x16x4xbf16>
    %c0_53 = arith.constant 0 : index
    %c2_54 = arith.constant 2 : index
    %c2_55 = arith.constant 2 : index
    %c0_56 = arith.constant 0 : index
    %16 = vector.load %arg10[%c0_53, %c2_54, %c2_55, %c0_56] : memref<2x18x18x4xbf16, #tpu.memory_space<vmem>>, vector<2x16x16x4xbf16>
    %17 = tpu.concatenate %8, %9, %10, %11, %12, %13, %14, %15, %16 in 3 : vector<2x16x16x4xbf16>, vector<2x16x16x4xbf16>, vector<2x16x16x4xbf16>, vector<2x16x16x4xbf16>, vector<2x16x16x4xbf16>, vector<2x16x16x4xbf16>, vector<2x16x16x4xbf16>, vector<2x16x16x4xbf16>, vector<2x16x16x4xbf16> -> vector<2x16x16x36xbf16>
    %18 = vector.shape_cast %17 : vector<2x16x16x36xbf16> to vector<512x36xbf16>
    %c0_57 = arith.constant 0 : index
    %c0_58 = arith.constant 0 : index
    %19 = vector.load %arg2[%c0_57, %c0_58] : memref<36x8xbf16, #tpu.memory_space<vmem>>, vector<36x8xbf16>
    %cst_59 = arith.constant dense<0.000000e+00> : vector<512x8xf32>
    %20 = tpu.matmul %18, %19, %cst_59 {dimension_numbers = #tpu.dot_dimension_numbers<[1], [0], [0], [1], [0, 0, 1, 1], [], []>} : vector<512x36xbf16>, vector<36x8xbf16>, vector<512x8xf32> -> vector<512x8xf32>
    %c0_60 = arith.constant 0 : index
    %c0_61 = arith.constant 0 : index
    %21 = vector.load %arg5[%c0_60, %c0_61] : memref<1x8xf32, #tpu.memory_space<vmem>>, vector<1x8xf32>
    %22 = vector.broadcast %21 : vector<1x8xf32> to vector<512x8xf32>
    %23 = arith.addf %20, %22 : vector<512x8xf32>
    %cst_62 = arith.constant 0.000000e+00 : f32
    %24 = vector.broadcast %cst_62 : f32 to vector<512x8xf32>
    %25 = arith.maximumf %23, %24 : vector<512x8xf32>
    %26 = vector.shape_cast %25 : vector<512x8xf32> to vector<2x16x16x8xf32>
    %cst_63 = arith.constant 0.000000e+00 : f32
    %27 = vector.broadcast %cst_63 : f32 to vector<2x1x18x8xf32>
    %cst_64 = arith.constant 0.000000e+00 : f32
    %28 = vector.broadcast %cst_64 : f32 to vector<2x16x1x8xf32>
    %c0_65 = arith.constant 0 : index
    %c0_66 = arith.constant 0 : index
    %c0_67 = arith.constant 0 : index
    %c0_68 = arith.constant 0 : index
    %29 = vector.load %arg11[%c0_65, %c0_66, %c0_67, %c0_68] : memref<2x18x18x8xf32, #tpu.memory_space<vmem>>, vector<2x1x18x8xf32>
    tpu.vector_store %arg11[%c0_65, %c0_66, %c0_67, %c0_68], %27 {strides = array<i32>} : memref<2x18x18x8xf32, #tpu.memory_space<vmem>>, vector<2x1x18x8xf32>,
    %c0_69 = arith.constant 0 : index
    %c17_70 = arith.constant 17 : index
    %c0_71 = arith.constant 0 : index
    %c0_72 = arith.constant 0 : index
    %30 = vector.load %arg11[%c0_69, %c17_70, %c0_71, %c0_72] : memref<2x18x18x8xf32, #tpu.memory_space<vmem>>, vector<2x1x18x8xf32>
    tpu.vector_store %arg11[%c0_69, %c17_70, %c0_71, %c0_72], %27 {strides = array<i32>} : memref<2x18x18x8xf32, #tpu.memory_space<vmem>>, vector<2x1x18x8xf32>,
    %c0_73 = arith.constant 0 : index
    %c1_74 = arith.constant 1 : index
    %c0_75 = arith.constant 0 : index
    %c0_76 = arith.constant 0 : index
    %31 = vector.load %arg11[%c0_73, %c1_74, %c0_75, %c0_76] : memref<2x18x18x8xf32, #tpu.memory_space<vmem>>, vector<2x16x1x8xf32>
    tpu.vector_store %arg11[%c0_73, %c1_74, %c0_75, %c0_76], %28 {strides = array<i32>} : memref<2x18x18x8xf32, #tpu.memory_space<vmem>>, vector<2x16x1x8xf32>,
    %c0_77 = arith.constant 0 : index
    %c1_78 = arith.constant 1 : index
    %c17_79 = arith.constant 17 : index
    %c0_80 = arith.constant 0 : index
    %32 = vector.load %arg11[%c0_77, %c1_78, %c17_79, %c0_80] : memref<2x18x18x8xf32, #tpu.memory_space<vmem>>, vector<2x16x1x8xf32>
    tpu.vector_store %arg11[%c0_77, %c1_78, %c17_79, %c0_80], %28 {strides = array<i32>} : memref<2x18x18x8xf32, #tpu.memory_space<vmem>>, vector<2x16x1x8xf32>,
    %c0_81 = arith.constant 0 : index
    %c1_82 = arith.constant 1 : index
    %c1_83 = arith.constant 1 : index
    %c0_84 = arith.constant 0 : index
    %33 = vector.load %arg11[%c0_81, %c1_82, %c1_83, %c0_84] : memref<2x18x18x8xf32, #tpu.memory_space<vmem>>, vector<2x16x16x8xf32>
    tpu.vector_store %arg11[%c0_81, %c1_82, %c1_83, %c0_84], %26 {strides = array<i32>} : memref<2x18x18x8xf32, #tpu.memory_space<vmem>>, vector<2x16x16x8xf32>,
    %c0_85 = arith.constant 0 : index
    %c0_86 = arith.constant 0 : index
    %c0_87 = arith.constant 0 : index
    %c0_88 = arith.constant 0 : index
    %34 = tpu.strided_load %arg11[%c0_85, %c0_86, %c0_87, %c0_88] {strides = array<i32: 1, 2, 2, 1>} : memref<2x18x18x8xf32, #tpu.memory_space<vmem>>, vector<2x8x8x8xf32>
    %35 = arith.truncf %34 : vector<2x8x8x8xf32> to vector<2x8x8x8xbf16>
    %c0_89 = arith.constant 0 : index
    %c0_90 = arith.constant 0 : index
    %c1_91 = arith.constant 1 : index
    %c0_92 = arith.constant 0 : index
    %36 = tpu.strided_load %arg11[%c0_89, %c0_90, %c1_91, %c0_92] {strides = array<i32: 1, 2, 2, 1>} : memref<2x18x18x8xf32, #tpu.memory_space<vmem>>, vector<2x8x8x8xf32>
    %37 = arith.truncf %36 : vector<2x8x8x8xf32> to vector<2x8x8x8xbf16>
    %c0_93 = arith.constant 0 : index
    %c0_94 = arith.constant 0 : index
    %c2_95 = arith.constant 2 : index
    %c0_96 = arith.constant 0 : index
    %38 = tpu.strided_load %arg11[%c0_93, %c0_94, %c2_95, %c0_96] {strides = array<i32: 1, 2, 2, 1>} : memref<2x18x18x8xf32, #tpu.memory_space<vmem>>, vector<2x8x8x8xf32>
    %39 = arith.truncf %38 : vector<2x8x8x8xf32> to vector<2x8x8x8xbf16>
    %c0_97 = arith.constant 0 : index
    %c1_98 = arith.constant 1 : index
    %c0_99 = arith.constant 0 : index
    %c0_100 = arith.constant 0 : index
    %40 = tpu.strided_load %arg11[%c0_97, %c1_98, %c0_99, %c0_100] {strides = array<i32: 1, 2, 2, 1>} : memref<2x18x18x8xf32, #tpu.memory_space<vmem>>, vector<2x8x8x8xf32>
    %41 = arith.truncf %40 : vector<2x8x8x8xf32> to vector<2x8x8x8xbf16>
    %c0_101 = arith.constant 0 : index
    %c1_102 = arith.constant 1 : index
    %c1_103 = arith.constant 1 : index
    %c0_104 = arith.constant 0 : index
    %42 = tpu.strided_load %arg11[%c0_101, %c1_102, %c1_103, %c0_104] {strides = array<i32: 1, 2, 2, 1>} : memref<2x18x18x8xf32, #tpu.memory_space<vmem>>, vector<2x8x8x8xf32>
    %43 = arith.truncf %42 : vector<2x8x8x8xf32> to vector<2x8x8x8xbf16>
    %c0_105 = arith.constant 0 : index
    %c1_106 = arith.constant 1 : index
    %c2_107 = arith.constant 2 : index
    %c0_108 = arith.constant 0 : index
    %44 = tpu.strided_load %arg11[%c0_105, %c1_106, %c2_107, %c0_108] {strides = array<i32: 1, 2, 2, 1>} : memref<2x18x18x8xf32, #tpu.memory_space<vmem>>, vector<2x8x8x8xf32>
    %45 = arith.truncf %44 : vector<2x8x8x8xf32> to vector<2x8x8x8xbf16>
    %c0_109 = arith.constant 0 : index
    %c2_110 = arith.constant 2 : index
    %c0_111 = arith.constant 0 : index
    %c0_112 = arith.constant 0 : index
    %46 = tpu.strided_load %arg11[%c0_109, %c2_110, %c0_111, %c0_112] {strides = array<i32: 1, 2, 2, 1>} : memref<2x18x18x8xf32, #tpu.memory_space<vmem>>, vector<2x8x8x8xf32>
    %47 = arith.truncf %46 : vector<2x8x8x8xf32> to vector<2x8x8x8xbf16>
    %c0_113 = arith.constant 0 : index
    %c2_114 = arith.constant 2 : index
    %c1_115 = arith.constant 1 : index
    %c0_116 = arith.constant 0 : index
    %48 = tpu.strided_load %arg11[%c0_113, %c2_114, %c1_115, %c0_116] {strides = array<i32: 1, 2, 2, 1>} : memref<2x18x18x8xf32, #tpu.memory_space<vmem>>, vector<2x8x8x8xf32>
    %49 = arith.truncf %48 : vector<2x8x8x8xf32> to vector<2x8x8x8xbf16>
    %c0_117 = arith.constant 0 : index
    %c2_118 = arith.constant 2 : index
    %c2_119 = arith.constant 2 : index
    %c0_120 = arith.constant 0 : index
    %50 = tpu.strided_load %arg11[%c0_117, %c2_118, %c2_119, %c0_120] {strides = array<i32: 1, 2, 2, 1>} : memref<2x18x18x8xf32, #tpu.memory_space<vmem>>, vector<2x8x8x8xf32>
    %51 = arith.truncf %50 : vector<2x8x8x8xf32> to vector<2x8x8x8xbf16>
    %52 = tpu.concatenate %35, %37, %39, %41, %43, %45, %47, %49, %51 in 3 : vector<2x8x8x8xbf16>, vector<2x8x8x8xbf16>, vector<2x8x8x8xbf16>, vector<2x8x8x8xbf16>, vector<2x8x8x8xbf16>, vector<2x8x8x8xbf16>, vector<2x8x8x8xbf16>, vector<2x8x8x8xbf16>, vector<2x8x8x8xbf16> -> vector<2x8x8x72xbf16>
    %53 = vector.shape_cast %52 : vector<2x8x8x72xbf16> to vector<128x72xbf16>
    %c0_121 = arith.constant 0 : index
    %c0_122 = arith.constant 0 : index
    %54 = vector.load %arg3[%c0_121, %c0_122] : memref<72x16xbf16, #tpu.memory_space<vmem>>, vector<72x16xbf16>
    %cst_123 = arith.constant dense<0.000000e+00> : vector<128x16xf32>
    %55 = tpu.matmul %53, %54, %cst_123 {dimension_numbers = #tpu.dot_dimension_numbers<[1], [0], [0], [1], [0, 0, 1, 1], [], []>} : vector<128x72xbf16>, vector<72x16xbf16>, vector<128x16xf32> -> vector<128x16xf32>
    %c0_124 = arith.constant 0 : index
    %c0_125 = arith.constant 0 : index
    %56 = vector.load %arg6[%c0_124, %c0_125] : memref<1x16xf32, #tpu.memory_space<vmem>>, vector<1x16xf32>
    %57 = vector.broadcast %56 : vector<1x16xf32> to vector<128x16xf32>
    %58 = arith.addf %55, %57 : vector<128x16xf32>
    %cst_126 = arith.constant 0.000000e+00 : f32
    %59 = vector.broadcast %cst_126 : f32 to vector<128x16xf32>
    %60 = arith.maximumf %58, %59 : vector<128x16xf32>
    %61 = vector.shape_cast %60 : vector<128x16xf32> to vector<2x8x8x16xf32>
    %62 = vector.extract_strided_slice %61 {offsets = [0, 0, 0, 0], sizes = [2, 8, 1, 16], strides = [1, 1, 1, 1]} : vector<2x8x8x16xf32> to vector<2x8x1x16xf32>
    %63 = vector.shape_cast %62 : vector<2x8x1x16xf32> to vector<2x8x16xf32>
    %64 = vector.extract_strided_slice %61 {offsets = [0, 0, 1, 0], sizes = [2, 8, 1, 16], strides = [1, 1, 1, 1]} : vector<2x8x8x16xf32> to vector<2x8x1x16xf32>
    %65 = vector.shape_cast %64 : vector<2x8x1x16xf32> to vector<2x8x16xf32>
    %66 = vector.extract_strided_slice %61 {offsets = [0, 0, 2, 0], sizes = [2, 8, 1, 16], strides = [1, 1, 1, 1]} : vector<2x8x8x16xf32> to vector<2x8x1x16xf32>
    %67 = vector.shape_cast %66 : vector<2x8x1x16xf32> to vector<2x8x16xf32>
    %68 = vector.extract_strided_slice %61 {offsets = [0, 0, 3, 0], sizes = [2, 8, 1, 16], strides = [1, 1, 1, 1]} : vector<2x8x8x16xf32> to vector<2x8x1x16xf32>
    %69 = vector.shape_cast %68 : vector<2x8x1x16xf32> to vector<2x8x16xf32>
    %70 = vector.extract_strided_slice %61 {offsets = [0, 0, 4, 0], sizes = [2, 8, 1, 16], strides = [1, 1, 1, 1]} : vector<2x8x8x16xf32> to vector<2x8x1x16xf32>
    %71 = vector.shape_cast %70 : vector<2x8x1x16xf32> to vector<2x8x16xf32>
    %72 = vector.extract_strided_slice %61 {offsets = [0, 0, 5, 0], sizes = [2, 8, 1, 16], strides = [1, 1, 1, 1]} : vector<2x8x8x16xf32> to vector<2x8x1x16xf32>
    %73 = vector.shape_cast %72 : vector<2x8x1x16xf32> to vector<2x8x16xf32>
    %74 = vector.extract_strided_slice %61 {offsets = [0, 0, 6, 0], sizes = [2, 8, 1, 16], strides = [1, 1, 1, 1]} : vector<2x8x8x16xf32> to vector<2x8x1x16xf32>
    %75 = vector.shape_cast %74 : vector<2x8x1x16xf32> to vector<2x8x16xf32>
    %76 = vector.extract_strided_slice %61 {offsets = [0, 0, 7, 0], sizes = [2, 8, 1, 16], strides = [1, 1, 1, 1]} : vector<2x8x8x16xf32> to vector<2x8x1x16xf32>
    %77 = vector.shape_cast %76 : vector<2x8x1x16xf32> to vector<2x8x16xf32>
    %78 = tpu.concatenate %63, %65, %67, %69, %71, %73, %75, %77 in 2 : vector<2x8x16xf32>, vector<2x8x16xf32>, vector<2x8x16xf32>, vector<2x8x16xf32>, vector<2x8x16xf32>, vector<2x8x16xf32>, vector<2x8x16xf32>, vector<2x8x16xf32> -> vector<2x8x128xf32>
    %c0_127 = arith.constant 0 : index
    %c0_128 = arith.constant 0 : index
    %c0_129 = arith.constant 0 : index
    %79 = vector.load %arg8[%c0_127, %c0_128, %c0_129] : memref<2x8x128xf32, #tpu.memory_space<vmem>>, vector<2x8x128xf32>
    tpu.vector_store %arg8[%c0_127, %c0_128, %c0_129], %78 {strides = array<i32>} : memref<2x8x128xf32, #tpu.memory_space<vmem>>, vector<2x8x128xf32>,
    %cst_130 = arith.constant 0.000000e+00 : f32
    %80 = vector.broadcast %cst_130 : f32 to vector<2x1x10x16xf32>
    %cst_131 = arith.constant 0.000000e+00 : f32
    %81 = vector.broadcast %cst_131 : f32 to vector<2x8x1x16xf32>
    %c0_132 = arith.constant 0 : index
    %c0_133 = arith.constant 0 : index
    %c0_134 = arith.constant 0 : index
    %c0_135 = arith.constant 0 : index
    %82 = vector.load %arg12[%c0_132, %c0_133, %c0_134, %c0_135] : memref<2x10x10x16xf32, #tpu.memory_space<vmem>>, vector<2x1x10x16xf32>
    tpu.vector_store %arg12[%c0_132, %c0_133, %c0_134, %c0_135], %80 {strides = array<i32>} : memref<2x10x10x16xf32, #tpu.memory_space<vmem>>, vector<2x1x10x16xf32>,
    %c0_136 = arith.constant 0 : index
    %c9 = arith.constant 9 : index
    %c0_137 = arith.constant 0 : index
    %c0_138 = arith.constant 0 : index
    %83 = vector.load %arg12[%c0_136, %c9, %c0_137, %c0_138] : memref<2x10x10x16xf32, #tpu.memory_space<vmem>>, vector<2x1x10x16xf32>
    tpu.vector_store %arg12[%c0_136, %c9, %c0_137, %c0_138], %80 {strides = array<i32>} : memref<2x10x10x16xf32, #tpu.memory_space<vmem>>, vector<2x1x10x16xf32>,
    %c0_139 = arith.constant 0 : index
    %c1_140 = arith.constant 1 : index
    %c0_141 = arith.constant 0 : index
    %c0_142 = arith.constant 0 : index
    %84 = vector.load %arg12[%c0_139, %c1_140, %c0_141, %c0_142] : memref<2x10x10x16xf32, #tpu.memory_space<vmem>>, vector<2x8x1x16xf32>
    tpu.vector_store %arg12[%c0_139, %c1_140, %c0_141, %c0_142], %81 {strides = array<i32>} : memref<2x10x10x16xf32, #tpu.memory_space<vmem>>, vector<2x8x1x16xf32>,
    %c0_143 = arith.constant 0 : index
    %c1_144 = arith.constant 1 : index
    %c9_145 = arith.constant 9 : index
    %c0_146 = arith.constant 0 : index
    %85 = vector.load %arg12[%c0_143, %c1_144, %c9_145, %c0_146] : memref<2x10x10x16xf32, #tpu.memory_space<vmem>>, vector<2x8x1x16xf32>
    tpu.vector_store %arg12[%c0_143, %c1_144, %c9_145, %c0_146], %81 {strides = array<i32>} : memref<2x10x10x16xf32, #tpu.memory_space<vmem>>, vector<2x8x1x16xf32>,
    %c0_147 = arith.constant 0 : index
    %c1_148 = arith.constant 1 : index
    %c1_149 = arith.constant 1 : index
    %c0_150 = arith.constant 0 : index
    %86 = vector.load %arg12[%c0_147, %c1_148, %c1_149, %c0_150] : memref<2x10x10x16xf32, #tpu.memory_space<vmem>>, vector<2x8x8x16xf32>
    tpu.vector_store %arg12[%c0_147, %c1_148, %c1_149, %c0_150], %61 {strides = array<i32>} : memref<2x10x10x16xf32, #tpu.memory_space<vmem>>, vector<2x8x8x16xf32>,
    %c0_151 = arith.constant 0 : index
    %c0_152 = arith.constant 0 : index
    %c0_153 = arith.constant 0 : index
    %c0_154 = arith.constant 0 : index
    %87 = tpu.strided_load %arg12[%c0_151, %c0_152, %c0_153, %c0_154] {strides = array<i32: 1, 2, 2, 1>} : memref<2x10x10x16xf32, #tpu.memory_space<vmem>>, vector<2x4x4x16xf32>
    %88 = arith.truncf %87 : vector<2x4x4x16xf32> to vector<2x4x4x16xbf16>
    %c0_155 = arith.constant 0 : index
    %c0_156 = arith.constant 0 : index
    %c1_157 = arith.constant 1 : index
    %c0_158 = arith.constant 0 : index
    %89 = tpu.strided_load %arg12[%c0_155, %c0_156, %c1_157, %c0_158] {strides = array<i32: 1, 2, 2, 1>} : memref<2x10x10x16xf32, #tpu.memory_space<vmem>>, vector<2x4x4x16xf32>
    %90 = arith.truncf %89 : vector<2x4x4x16xf32> to vector<2x4x4x16xbf16>
    %c0_159 = arith.constant 0 : index
    %c0_160 = arith.constant 0 : index
    %c2_161 = arith.constant 2 : index
    %c0_162 = arith.constant 0 : index
    %91 = tpu.strided_load %arg12[%c0_159, %c0_160, %c2_161, %c0_162] {strides = array<i32: 1, 2, 2, 1>} : memref<2x10x10x16xf32, #tpu.memory_space<vmem>>, vector<2x4x4x16xf32>
    %92 = arith.truncf %91 : vector<2x4x4x16xf32> to vector<2x4x4x16xbf16>
    %c0_163 = arith.constant 0 : index
    %c1_164 = arith.constant 1 : index
    %c0_165 = arith.constant 0 : index
    %c0_166 = arith.constant 0 : index
    %93 = tpu.strided_load %arg12[%c0_163, %c1_164, %c0_165, %c0_166] {strides = array<i32: 1, 2, 2, 1>} : memref<2x10x10x16xf32, #tpu.memory_space<vmem>>, vector<2x4x4x16xf32>
    %94 = arith.truncf %93 : vector<2x4x4x16xf32> to vector<2x4x4x16xbf16>
    %c0_167 = arith.constant 0 : index
    %c1_168 = arith.constant 1 : index
    %c1_169 = arith.constant 1 : index
    %c0_170 = arith.constant 0 : index
    %95 = tpu.strided_load %arg12[%c0_167, %c1_168, %c1_169, %c0_170] {strides = array<i32: 1, 2, 2, 1>} : memref<2x10x10x16xf32, #tpu.memory_space<vmem>>, vector<2x4x4x16xf32>
    %96 = arith.truncf %95 : vector<2x4x4x16xf32> to vector<2x4x4x16xbf16>
    %c0_171 = arith.constant 0 : index
    %c1_172 = arith.constant 1 : index
    %c2_173 = arith.constant 2 : index
    %c0_174 = arith.constant 0 : index
    %97 = tpu.strided_load %arg12[%c0_171, %c1_172, %c2_173, %c0_174] {strides = array<i32: 1, 2, 2, 1>} : memref<2x10x10x16xf32, #tpu.memory_space<vmem>>, vector<2x4x4x16xf32>
    %98 = arith.truncf %97 : vector<2x4x4x16xf32> to vector<2x4x4x16xbf16>
    %c0_175 = arith.constant 0 : index
    %c2_176 = arith.constant 2 : index
    %c0_177 = arith.constant 0 : index
    %c0_178 = arith.constant 0 : index
    %99 = tpu.strided_load %arg12[%c0_175, %c2_176, %c0_177, %c0_178] {strides = array<i32: 1, 2, 2, 1>} : memref<2x10x10x16xf32, #tpu.memory_space<vmem>>, vector<2x4x4x16xf32>
    %100 = arith.truncf %99 : vector<2x4x4x16xf32> to vector<2x4x4x16xbf16>
    %c0_179 = arith.constant 0 : index
    %c2_180 = arith.constant 2 : index
    %c1_181 = arith.constant 1 : index
    %c0_182 = arith.constant 0 : index
    %101 = tpu.strided_load %arg12[%c0_179, %c2_180, %c1_181, %c0_182] {strides = array<i32: 1, 2, 2, 1>} : memref<2x10x10x16xf32, #tpu.memory_space<vmem>>, vector<2x4x4x16xf32>
    %102 = arith.truncf %101 : vector<2x4x4x16xf32> to vector<2x4x4x16xbf16>
    %c0_183 = arith.constant 0 : index
    %c2_184 = arith.constant 2 : index
    %c2_185 = arith.constant 2 : index
    %c0_186 = arith.constant 0 : index
    %103 = tpu.strided_load %arg12[%c0_183, %c2_184, %c2_185, %c0_186] {strides = array<i32: 1, 2, 2, 1>} : memref<2x10x10x16xf32, #tpu.memory_space<vmem>>, vector<2x4x4x16xf32>
    %104 = arith.truncf %103 : vector<2x4x4x16xf32> to vector<2x4x4x16xbf16>
    %105 = tpu.concatenate %88, %90, %92, %94, %96, %98, %100, %102, %104 in 3 : vector<2x4x4x16xbf16>, vector<2x4x4x16xbf16>, vector<2x4x4x16xbf16>, vector<2x4x4x16xbf16>, vector<2x4x4x16xbf16>, vector<2x4x4x16xbf16>, vector<2x4x4x16xbf16>, vector<2x4x4x16xbf16>, vector<2x4x4x16xbf16> -> vector<2x4x4x144xbf16>
    %106 = vector.shape_cast %105 : vector<2x4x4x144xbf16> to vector<32x144xbf16>
    %c0_187 = arith.constant 0 : index
    %c0_188 = arith.constant 0 : index
    %107 = vector.load %arg4[%c0_187, %c0_188] : memref<144x32xbf16, #tpu.memory_space<vmem>>, vector<144x32xbf16>
    %cst_189 = arith.constant dense<0.000000e+00> : vector<32x32xf32>
    %108 = tpu.matmul %106, %107, %cst_189 {dimension_numbers = #tpu.dot_dimension_numbers<[1], [0], [0], [1], [0, 0, 1, 1], [], []>} : vector<32x144xbf16>, vector<144x32xbf16>, vector<32x32xf32> -> vector<32x32xf32>
    %c0_190 = arith.constant 0 : index
    %c0_191 = arith.constant 0 : index
    %109 = vector.load %arg7[%c0_190, %c0_191] : memref<1x32xf32, #tpu.memory_space<vmem>>, vector<1x32xf32>
    %110 = vector.broadcast %109 : vector<1x32xf32> to vector<32x32xf32>
    %111 = arith.addf %108, %110 : vector<32x32xf32>
    %cst_192 = arith.constant 0.000000e+00 : f32
    %112 = vector.broadcast %cst_192 : f32 to vector<32x32xf32>
    %113 = arith.maximumf %111, %112 : vector<32x32xf32>
    %114 = vector.shape_cast %113 : vector<32x32xf32> to vector<2x4x4x32xf32>
    %115 = vector.extract_strided_slice %114 {offsets = [0, 0, 0, 0], sizes = [2, 4, 1, 32], strides = [1, 1, 1, 1]} : vector<2x4x4x32xf32> to vector<2x4x1x32xf32>
    %116 = vector.shape_cast %115 : vector<2x4x1x32xf32> to vector<2x4x32xf32>
    %117 = vector.extract_strided_slice %114 {offsets = [0, 0, 1, 0], sizes = [2, 4, 1, 32], strides = [1, 1, 1, 1]} : vector<2x4x4x32xf32> to vector<2x4x1x32xf32>
    %118 = vector.shape_cast %117 : vector<2x4x1x32xf32> to vector<2x4x32xf32>
    %119 = vector.extract_strided_slice %114 {offsets = [0, 0, 2, 0], sizes = [2, 4, 1, 32], strides = [1, 1, 1, 1]} : vector<2x4x4x32xf32> to vector<2x4x1x32xf32>
    %120 = vector.shape_cast %119 : vector<2x4x1x32xf32> to vector<2x4x32xf32>
    %121 = vector.extract_strided_slice %114 {offsets = [0, 0, 3, 0], sizes = [2, 4, 1, 32], strides = [1, 1, 1, 1]} : vector<2x4x4x32xf32> to vector<2x4x1x32xf32>
    %122 = vector.shape_cast %121 : vector<2x4x1x32xf32> to vector<2x4x32xf32>
    %123 = tpu.concatenate %116, %118, %120, %122 in 2 : vector<2x4x32xf32>, vector<2x4x32xf32>, vector<2x4x32xf32>, vector<2x4x32xf32> -> vector<2x4x128xf32>
    %c0_193 = arith.constant 0 : index
    %c0_194 = arith.constant 0 : index
    %c0_195 = arith.constant 0 : index
    %124 = vector.load %arg9[%c0_193, %c0_194, %c0_195] : memref<2x4x128xf32, #tpu.memory_space<vmem>>, vector<2x4x128xf32>
    tpu.vector_store %arg9[%c0_193, %c0_194, %c0_195], %123 {strides = array<i32>} : memref<2x4x128xf32, #tpu.memory_space<vmem>>, vector<2x4x128xf32>,
    return
  }
  func.func @transform_0(%arg0: i32) -> (i32, i32, i32, i32) {
    %c0_i32 = arith.constant 0 : i32
    %c0_i32_0 = arith.constant 0 : i32
    %c0_i32_1 = arith.constant 0 : i32
    %c0_i32_2 = arith.constant 0 : i32
    return %arg0, %c0_i32, %c0_i32_0, %c0_i32_1 : i32, i32, i32, i32
  }
  func.func @transform_1(%arg0: i32) -> (i32, i32) {
    %c0_i32 = arith.constant 0 : i32
    %c0_i32_0 = arith.constant 0 : i32
    %c0_i32_1 = arith.constant 0 : i32
    return %c0_i32, %c0_i32_0 : i32, i32
  }
  func.func @transform_2(%arg0: i32) -> (i32, i32) {
    %c0_i32 = arith.constant 0 : i32
    %c0_i32_0 = arith.constant 0 : i32
    %c0_i32_1 = arith.constant 0 : i32
    return %c0_i32, %c0_i32_0 : i32, i32
  }
  func.func @transform_3(%arg0: i32) -> (i32, i32) {
    %c0_i32 = arith.constant 0 : i32
    %c0_i32_0 = arith.constant 0 : i32
    %c0_i32_1 = arith.constant 0 : i32
    return %c0_i32, %c0_i32_0 : i32, i32
  }
  func.func @transform_4(%arg0: i32) -> (i32, i32) {
    %c0_i32 = arith.constant 0 : i32
    %c0_i32_0 = arith.constant 0 : i32
    %c0_i32_1 = arith.constant 0 : i32
    return %c0_i32, %c0_i32_0 : i32, i32
  }
  func.func @transform_5(%arg0: i32) -> (i32, i32) {
    %c0_i32 = arith.constant 0 : i32
    %c0_i32_0 = arith.constant 0 : i32
    %c0_i32_1 = arith.constant 0 : i32
    return %c0_i32, %c0_i32_0 : i32, i32
  }
  func.func @transform_6(%arg0: i32) -> (i32, i32) {
    %c0_i32 = arith.constant 0 : i32
    %c0_i32_0 = arith.constant 0 : i32
    %c0_i32_1 = arith.constant 0 : i32
    return %c0_i32, %c0_i32_0 : i32, i32
  }
  func.func @transform_7(%arg0: i32) -> (i32, i32, i32) {
    %c0_i32 = arith.constant 0 : i32
    %c0_i32_0 = arith.constant 0 : i32
    %c0_i32_1 = arith.constant 0 : i32
    return %arg0, %c0_i32, %c0_i32_0 : i32, i32, i32
  }
  func.func @transform_8(%arg0: i32) -> (i32, i32, i32) {
    %c0_i32 = arith.constant 0 : i32
    %c0_i32_0 = arith.constant 0 : i32
    %c0_i32_1 = arith.constant 0 : i32
    return %arg0, %c0_i32, %c0_i32_0 : i32, i32, i32
  }
}

</mosaic_0001>

<llo_original>
// kernel: run.1
$region0: #{run.1}
  #allocation0 [shape = 'u32[]', space=smem, size = 0x4, offset = 0x4, fixed_abs, tag = 'smem constant byte address 0x4 - core index']
  #allocation1 [shape = 'u32[144,128]{1,0:T(1,128)}', space=vmem, size = 0x12000, scoped, tag = 'internal scratch']
  #allocation2 [shape = 'bf16[2,18,18,4]{3,2,1,0:T(8,128)(2,1)}', space=vmem, size = 0x36000, scoped, tag = 'scratch operand']
  #allocation3 [shape = 'f32[2,18,18,8]{3,2,1,0:T(8,128)}', space=vmem, size = 0x6c000, scoped, tag = 'scratch operand']
  #allocation4 [shape = 'f32[2,10,10,16]{3,2,1,0:T(8,128)}', space=vmem, size = 0x28000, scoped, tag = 'scratch operand']
  %s0 = inlined_call_operand.vmem [shape: bf16[2,16,16,4], index: 0, kind: input, shape index: {}]
  %s1 = inlined_call_operand.vmem [shape: bf16[36,8], index: 1, kind: input, shape index: {}]
  %s2 = inlined_call_operand.vmem [shape: bf16[72,16], index: 2, kind: input, shape index: {}]
  %s3 = inlined_call_operand.vmem [shape: bf16[144,32], index: 3, kind: input, shape index: {}]
  %s4 = inlined_call_operand.vmem [shape: f32[1,8], index: 4, kind: input, shape index: {}]
  %s5 = inlined_call_operand.vmem [shape: f32[1,16], index: 5, kind: input, shape index: {}]
  %s6 = inlined_call_operand.vmem [shape: f32[1,32], index: 6, kind: input, shape index: {}]
  %s7 = inlined_call_operand.vmem [shape: f32[2,8,128], index: 7, kind: output, shape index: {0}]
  %s8 = inlined_call_operand.vmem [shape: f32[2,4,128], index: 8, kind: output, shape index: {1}]
  %9 = xla_tuple %s7, %s8
  %s10 = sld [smem:[#allocation0]]
  $region46: #{run.1} parent=0
    _
  %s12 = ssub.s32 1, %s10
  %s13 = scalar_select 0, %s12, %s10
  // Predicated region
  $region2: #{run.1} parent=0 // pred_check
    _
  $region3: #{run.1} parent=0 // pred_check_branch
    %15 = sbr.rel (0) target = $region5
  $region4: #{run.1} parent=0 // pred_region
    _
  $region5: #{run.1} parent=0 // pred_fallthru
    _
  // Predicated region
  $region6: #{run.1} parent=0 // pred_check
    _
  $region7: #{run.1} parent=0 // pred_check_branch
    %17 = sbr.rel (0) target = $region9
  $region8: #{run.1} parent=0 // pred_region
    _
  $region9: #{run.1} parent=0 // pred_fallthru
    _
  // Predicated region
  $region10: #{run.1} parent=0 // pred_check
    _
  $region11: #{run.1} parent=0 // pred_check_branch
    %19 = sbr.rel (0) target = $region13
  $region12: #{run.1} parent=0 // pred_region
    _
  $region13: #{run.1} parent=0 // pred_fallthru
    _
  // Predicated region
  $region14: #{run.1} parent=0 // pred_check
    _
  $region15: #{run.1} parent=0 // pred_check_branch
    %21 = sbr.rel (0) target = $region17
  $region16: #{run.1} parent=0 // pred_region
    _
  $region17: #{run.1} parent=0 // pred_fallthru
    _
  // Predicated region
  $region18: #{run.1} parent=0 // pred_check
    _
  $region19: #{run.1} parent=0 // pred_check_branch
    %23 = sbr.rel (0) target = $region21
  $region20: #{run.1} parent=0 // pred_region
    _
  $region21: #{run.1} parent=0 // pred_fallthru
    _
  // Predicated region
  $region22: #{run.1} parent=0 // pred_check
    _
  $region23: #{run.1} parent=0 // pred_check_branch
    %25 = sbr.rel (0) target = $region25
  $region24: #{run.1} parent=0 // pred_region
    _
  $region25: #{run.1} parent=0 // pred_fallthru
    _
  // Predicated region
  $region26: #{run.1} parent=0 // pred_check
    _
  $region27: #{run.1} parent=0 // pred_check_branch
    %27 = sbr.rel (0) target = $region29
  $region28: #{run.1} parent=0 // pred_region
    _
  $region29: #{run.1} parent=0 // pred_fallthru
    _
  %v29 = vld [vmem:[%s0] sm:$0xf]
  %v30 = vld [vmem:[%s0 + $0x4] sm:$0xf]
  %v31 = vld [vmem:[%s0 + $0x8] sm:$0xf]
  %v32 = vld [vmem:[%s0 + $0xc] sm:$0xf]
  %v33 = vld [vmem:[%s0 + $0x10] sm:$0xf]
  %v34 = vld [vmem:[%s0 + $0x14] sm:$0xf]
  %v35 = vld [vmem:[%s0 + $0x18] sm:$0xf]
  %v36 = vld [vmem:[%s0 + $0x1c] sm:$0xf]
  %v37 = vld [vmem:[%s0 + $0x20] sm:$0xf]
  %v38 = vld [vmem:[%s0 + $0x24] sm:$0xf]
  %v39 = vld [vmem:[%s0 + $0x28] sm:$0xf]
  %v40 = vld [vmem:[%s0 + $0x2c] sm:$0xf]
  %v41 = vld [vmem:[%s0 + $0x30] sm:$0xf]
  %v42 = vld [vmem:[%s0 + $0x34] sm:$0xf]
  %v43 = vld [vmem:[%s0 + $0x38] sm:$0xf]
  %v44 = vld [vmem:[%s0 + $0x3c] sm:$0xf]
  %v45 = vld [vmem:[%s0 + $0x40] sm:$0xf]
  %v46 = vld [vmem:[%s0 + $0x44] sm:$0xf]
  %v47 = vld [vmem:[%s0 + $0x48] sm:$0xf]
  %v48 = vld [vmem:[%s0 + $0x4c] sm:$0xf]
  %v49 = vld [vmem:[%s0 + $0x50] sm:$0xf]
  %v50 = vld [vmem:[%s0 + $0x54] sm:$0xf]
  %v51 = vld [vmem:[%s0 + $0x58] sm:$0xf]
  %v52 = vld [vmem:[%s0 + $0x5c] sm:$0xf]
  %v53 = vld [vmem:[%s0 + $0x60] sm:$0xf]
  %v54 = vld [vmem:[%s0 + $0x64] sm:$0xf]
  %v55 = vld [vmem:[%s0 + $0x68] sm:$0xf]
  %v56 = vld [vmem:[%s0 + $0x6c] sm:$0xf]
  %v57 = vld [vmem:[%s0 + $0x70] sm:$0xf]
  %v58 = vld [vmem:[%s0 + $0x74] sm:$0xf]
  %v59 = vld [vmem:[%s0 + $0x78] sm:$0xf]
  %v60 = vld [vmem:[%s0 + $0x7c] sm:$0xf]
  %v61 = vld [vmem:[%s0 + $0x80] sm:$0xf]
  %v62 = vld [vmem:[%s0 + $0x84] sm:$0xf]
  %v63 = vld [vmem:[%s0 + $0x88] sm:$0xf]
  %v64 = vld [vmem:[%s0 + $0x8c] sm:$0xf]
  %v65 = vld [vmem:[%s0 + $0x90] sm:$0xf]
  %v66 = vld [vmem:[%s0 + $0x94] sm:$0xf]
  %v67 = vld [vmem:[%s0 + $0x98] sm:$0xf]
  %v68 = vld [vmem:[%s0 + $0x9c] sm:$0xf]
  %v69 = vld [vmem:[%s0 + $0xa0] sm:$0xf]
  %v70 = vld [vmem:[%s0 + $0xa4] sm:$0xf]
  %v71 = vld [vmem:[%s0 + $0xa8] sm:$0xf]
  %v72 = vld [vmem:[%s0 + $0xac] sm:$0xf]
  %v73 = vld [vmem:[%s0 + $0xb0] sm:$0xf]
  %v74 = vld [vmem:[%s0 + $0xb4] sm:$0xf]
  %v75 = vld [vmem:[%s0 + $0xb8] sm:$0xf]
  %v76 = vld [vmem:[%s0 + $0xbc] sm:$0xf]
  %v77 = vld [vmem:[%s0 + $0xc0] sm:$0xf]
  %v78 = vld [vmem:[%s0 + $0xc4] sm:$0xf]
  %v79 = vld [vmem:[%s0 + $0xc8] sm:$0xf]
  %v80 = vld [vmem:[%s0 + $0xcc] sm:$0xf]
  %v81 = vld [vmem:[%s0 + $0xd0] sm:$0xf]
  %v82 = vld [vmem:[%s0 + $0xd4] sm:$0xf]
  %v83 = vld [vmem:[%s0 + $0xd8] sm:$0xf]
  %v84 = vld [vmem:[%s0 + $0xdc] sm:$0xf]
  %v85 = vld [vmem:[%s0 + $0xe0] sm:$0xf]
  %v86 = vld [vmem:[%s0 + $0xe4] sm:$0xf]
  %v87 = vld [vmem:[%s0 + $0xe8] sm:$0xf]
  %v88 = vld [vmem:[%s0 + $0xec] sm:$0xf]
  %v89 = vld [vmem:[%s0 + $0xf0] sm:$0xf]
  %v90 = vld [vmem:[%s0 + $0xf4] sm:$0xf]
  %v91 = vld [vmem:[%s0 + $0xf8] sm:$0xf]
  %v92 = vld [vmem:[%s0 + $0xfc] sm:$0xf]
  %vm93 = vcmask 27648
  %94 = vst.msk [vmem:[#allocation2] sm:$0xf] %vm93, 0
  %95 = vst.msk [vmem:[#allocation2 + $0x4] sm:$0xf] %vm93, 0
  %vm96 = vcmask 24576
  %97 = vst.msk [vmem:[#allocation2 + $0x8] sm:$0x1] %vm96, 0
  %98 = vst.msk [vmem:[#allocation2 + $0xd8] sm:$0xf] %vm93, 0
  %99 = vst.msk [vmem:[#allocation2 + $0xdc] sm:$0xf] %vm93, 0
  %100 = vst.msk [vmem:[#allocation2 + $0xe0] sm:$0x1] %vm96, 0
  %s101 = scalar_lea.vmem [#allocation2], 204
  %102 = vst.msk [vmem:[%s101] sm:$0xf] %vm93, 0
  %103 = vst.msk [vmem:[%s101 + $0x4] sm:$0xf] %vm93, 0
  %104 = vst.msk [vmem:[%s101 + $0x8] sm:$0x1] %vm96, 0
  %105 = vst.msk [vmem:[%s101 + $0xd8] sm:$0xf] %vm93, 0
  %106 = vst.msk [vmem:[%s101 + $0xdc] sm:$0xf] %vm93, 0
  %107 = vst.msk [vmem:[%s101 + $0xe0] sm:$0x1] %vm96, 0
  %s108 = scalar_lea.vmem [#allocation2], 12
  %vm109 = vcmask 24576
  %vm110 = vsmask.f32 256
  %vm111 = vmand %vm109, %vm110
  %v112 = vld [vmem:[%s108] sm:$0x1]
  %v113 = vsel %vm111, 0, %v112
  %114 = vst [vmem:[%s108] sm:$0x1] %v113
  %v115 = vld [vmem:[%s108 + $0xc] sm:$0x1]
  %v116 = vsel %vm111, 0, %v115
  %117 = vst [vmem:[%s108 + $0xc] sm:$0x1] %v116
  %v118 = vld [vmem:[%s108 + $0x18] sm:$0x1]
  %v119 = vsel %vm111, 0, %v118
  %120 = vst [vmem:[%s108 + $0x18] sm:$0x1] %v119
  %v121 = vld [vmem:[%s108 + $0x24] sm:$0x1]
  %v122 = vsel %vm111, 0, %v121
  %123 = vst [vmem:[%s108 + $0x24] sm:$0x1] %v122
  %v124 = vld [vmem:[%s108 + $0x30] sm:$0x1]
  %v125 = vsel %vm111, 0, %v124
  %126 = vst [vmem:[%s108 + $0x30] sm:$0x1] %v125
  %v127 = vld [vmem:[%s108 + $0x3c] sm:$0x1]
  %v128 = vsel %vm111, 0, %v127
  %129 = vst [vmem:[%s108 + $0x3c] sm:$0x1] %v128
  %v130 = vld [vmem:[%s108 + $0x48] sm:$0x1]
  %v131 = vsel %vm111, 0, %v130
  %132 = vst [vmem:[%s108 + $0x48] sm:$0x1] %v131
  %v133 = vld [vmem:[%s108 + $0x54] sm:$0x1]
  %v134 = vsel %vm111, 0, %v133
  %135 = vst [vmem:[%s108 + $0x54] sm:$0x1] %v134
  %v136 = vld [vmem:[%s108 + $0x60] sm:$0x1]
  %v137 = vsel %vm111, 0, %v136
  %138 = vst [vmem:[%s108 + $0x60] sm:$0x1] %v137
  %v139 = vld [vmem:[%s108 + $0x6c] sm:$0x1]
  %v140 = vsel %vm111, 0, %v139
  %141 = vst [vmem:[%s108 + $0x6c] sm:$0x1] %v140
  %v142 = vld [vmem:[%s108 + $0x78] sm:$0x1]
  %v143 = vsel %vm111, 0, %v142
  %144 = vst [vmem:[%s108 + $0x78] sm:$0x1] %v143
  %v145 = vld [vmem:[%s108 + $0x84] sm:$0x1]
  %v146 = vsel %vm111, 0, %v145
  %147 = vst [vmem:[%s108 + $0x84] sm:$0x1] %v146
  %v148 = vld [vmem:[%s108 + $0x90] sm:$0x1]
  %v149 = vsel %vm111, 0, %v148
  %150 = vst [vmem:[%s108 + $0x90] sm:$0x1] %v149
  %v151 = vld [vmem:[%s108 + $0x9c] sm:$0x1]
  %v152 = vsel %vm111, 0, %v151
  %153 = vst [vmem:[%s108 + $0x9c] sm:$0x1] %v152
  %v154 = vld [vmem:[%s108 + $0xa8] sm:$0x1]
  %v155 = vsel %vm111, 0, %v154
  %156 = vst [vmem:[%s108 + $0xa8] sm:$0x1] %v155
  %v157 = vld [vmem:[%s108 + $0xb4] sm:$0x1]
  %v158 = vsel %vm111, 0, %v157
  %159 = vst [vmem:[%s108 + $0xb4] sm:$0x1] %v158
  %v160 = vld [vmem:[%s108 + $0xd8] sm:$0x1]
  %v161 = vsel %vm111, 0, %v160
  %162 = vst [vmem:[%s108 + $0xd8] sm:$0x1] %v161
  %v163 = vld [vmem:[%s108 + $0xe4] sm:$0x1]
  %v164 = vsel %vm111, 0, %v163
  %165 = vst [vmem:[%s108 + $0xe4] sm:$0x1] %v164
  %v166 = vld [vmem:[%s108 + $0xf0] sm:$0x1]
  %v167 = vsel %vm111, 0, %v166
  %168 = vst [vmem:[%s108 + $0xf0] sm:$0x1] %v167
  %v169 = vld [vmem:[%s108 + $0xfc] sm:$0x1]
  %v170 = vsel %vm111, 0, %v169
  %171 = vst [vmem:[%s108 + $0xfc] sm:$0x1] %v170
  %v172 = vld [vmem:[%s108 + $0x108] sm:$0x1]
  %v173 = vsel %vm111, 0, %v172
  %174 = vst [vmem:[%s108 + $0x108] sm:$0x1] %v173
  %v175 = vld [vmem:[%s108 + $0x114] sm:$0x1]
  %v176 = vsel %vm111, 0, %v175
  %177 = vst [vmem:[%s108 + $0x114] sm:$0x1] %v176
  %v178 = vld [vmem:[%s108 + $0x120] sm:$0x1]
  %v179 = vsel %vm111, 0, %v178
  %180 = vst [vmem:[%s108 + $0x120] sm:$0x1] %v179
  %v181 = vld [vmem:[%s108 + $0x12c] sm:$0x1]
  %v182 = vsel %vm111, 0, %v181
  %183 = vst [vmem:[%s108 + $0x12c] sm:$0x1] %v182
  %v184 = vld [vmem:[%s108 + $0x138] sm:$0x1]
  %v185 = vsel %vm111, 0, %v184
  %186 = vst [vmem:[%s108 + $0x138] sm:$0x1] %v185
  %v187 = vld [vmem:[%s108 + $0x144] sm:$0x1]
  %v188 = vsel %vm111, 0, %v187
  %189 = vst [vmem:[%s108 + $0x144] sm:$0x1] %v188
  %v190 = vld [vmem:[%s108 + $0x150] sm:$0x1]
  %v191 = vsel %vm111, 0, %v190
  %192 = vst [vmem:[%s108 + $0x150] sm:$0x1] %v191
  %v193 = vld [vmem:[%s108 + $0x15c] sm:$0x1]
  %v194 = vsel %vm111, 0, %v193
  %195 = vst [vmem:[%s108 + $0x15c] sm:$0x1] %v194
  %v196 = vld [vmem:[%s108 + $0x168] sm:$0x1]
  %v197 = vsel %vm111, 0, %v196
  %198 = vst [vmem:[%s108 + $0x168] sm:$0x1] %v197
  %v199 = vld [vmem:[%s108 + $0x174] sm:$0x1]
  %v200 = vsel %vm111, 0, %v199
  %201 = vst [vmem:[%s108 + $0x174] sm:$0x1] %v200
  %v202 = vld [vmem:[%s108 + $0x180] sm:$0x1]
  %v203 = vsel %vm111, 0, %v202
  %204 = vst [vmem:[%s108 + $0x180] sm:$0x1] %v203
  %v205 = vld [vmem:[%s108 + $0x18c] sm:$0x1]
  %v206 = vsel %vm111, 0, %v205
  %207 = vst [vmem:[%s108 + $0x18c] sm:$0x1] %v206
  %vm208 = vsmask.f32 7938
  %vm209 = vmand %vm109, %vm208
  %v210 = vld [vmem:[%s108 + $0x8] sm:$0x1]
  %v211 = vsel %vm209, 0, %v210
  %212 = vst [vmem:[%s108 + $0x8] sm:$0x1] %v211
  %v213 = vld [vmem:[%s108 + $0x14] sm:$0x1]
  %v214 = vsel %vm209, 0, %v213
  %215 = vst [vmem:[%s108 + $0x14] sm:$0x1] %v214
  %v216 = vld [vmem:[%s108 + $0x20] sm:$0x1]
  %v217 = vsel %vm209, 0, %v216
  %218 = vst [vmem:[%s108 + $0x20] sm:$0x1] %v217
  %v219 = vld [vmem:[%s108 + $0x2c] sm:$0x1]
  %v220 = vsel %vm209, 0, %v219
  %221 = vst [vmem:[%s108 + $0x2c] sm:$0x1] %v220
  %v222 = vld [vmem:[%s108 + $0x38] sm:$0x1]
  %v223 = vsel %vm209, 0, %v222
  %224 = vst [vmem:[%s108 + $0x38] sm:$0x1] %v223
  %v225 = vld [vmem:[%s108 + $0x44] sm:$0x1]
  %v226 = vsel %vm209, 0, %v225
  %227 = vst [vmem:[%s108 + $0x44] sm:$0x1] %v226
  %v228 = vld [vmem:[%s108 + $0x50] sm:$0x1]
  %v229 = vsel %vm209, 0, %v228
  %230 = vst [vmem:[%s108 + $0x50] sm:$0x1] %v229
  %v231 = vld [vmem:[%s108 + $0x5c] sm:$0x1]
  %v232 = vsel %vm209, 0, %v231
  %233 = vst [vmem:[%s108 + $0x5c] sm:$0x1] %v232
  %v234 = vld [vmem:[%s108 + $0x68] sm:$0x1]
  %v235 = vsel %vm209, 0, %v234
  %236 = vst [vmem:[%s108 + $0x68] sm:$0x1] %v235
  %v237 = vld [vmem:[%s108 + $0x74] sm:$0x1]
  %v238 = vsel %vm209, 0, %v237
  %239 = vst [vmem:[%s108 + $0x74] sm:$0x1] %v238
  %v240 = vld [vmem:[%s108 + $0x80] sm:$0x1]
  %v241 = vsel %vm209, 0, %v240
  %242 = vst [vmem:[%s108 + $0x80] sm:$0x1] %v241
  %v243 = vld [vmem:[%s108 + $0x8c] sm:$0x1]
  %v244 = vsel %vm209, 0, %v243
  %245 = vst [vmem:[%s108 + $0x8c] sm:$0x1] %v244
  %v246 = vld [vmem:[%s108 + $0x98] sm:$0x1]
  %v247 = vsel %vm209, 0, %v246
  %248 = vst [vmem:[%s108 + $0x98] sm:$0x1] %v247
  %v249 = vld [vmem:[%s108 + $0xa4] sm:$0x1]
  %v250 = vsel %vm209, 0, %v249
  %251 = vst [vmem:[%s108 + $0xa4] sm:$0x1] %v250
  %v252 = vld [vmem:[%s108 + $0xb0] sm:$0x1]
  %v253 = vsel %vm209, 0, %v252
  %254 = vst [vmem:[%s108 + $0xb0] sm:$0x1] %v253
  %v255 = vld [vmem:[%s108 + $0xbc] sm:$0x1]
  %v256 = vsel %vm209, 0, %v255
  %257 = vst [vmem:[%s108 + $0xbc] sm:$0x1] %v256
  %v258 = vld [vmem:[%s108 + $0xe0] sm:$0x1]
  %v259 = vsel %vm209, 0, %v258
  %260 = vst [vmem:[%s108 + $0xe0] sm:$0x1] %v259
  %v261 = vld [vmem:[%s108 + $0xec] sm:$0x1]
  %v262 = vsel %vm209, 0, %v261
  %263 = vst [vmem:[%s108 + $0xec] sm:$0x1] %v262
  %v264 = vld [vmem:[%s108 + $0xf8] sm:$0x1]
  %v265 = vsel %vm209, 0, %v264
  %266 = vst [vmem:[%s108 + $0xf8] sm:$0x1] %v265
  %v267 = vld [vmem:[%s108 + $0x104] sm:$0x1]
  %v268 = vsel %vm209, 0, %v267
  %269 = vst [vmem:[%s108 + $0x104] sm:$0x1] %v268
  %v270 = vld [vmem:[%s108 + $0x110] sm:$0x1]
  %v271 = vsel %vm209, 0, %v270
  %272 = vst [vmem:[%s108 + $0x110] sm:$0x1] %v271
  %v273 = vld [vmem:[%s108 + $0x11c] sm:$0x1]
  %v274 = vsel %vm209, 0, %v273
  %275 = vst [vmem:[%s108 + $0x11c] sm:$0x1] %v274
  %v276 = vld [vmem:[%s108 + $0x128] sm:$0x1]
  %v277 = vsel %vm209, 0, %v276
  %278 = vst [vmem:[%s108 + $0x128] sm:$0x1] %v277
  %v279 = vld [vmem:[%s108 + $0x134] sm:$0x1]
  %v280 = vsel %vm209, 0, %v279
  %281 = vst [vmem:[%s108 + $0x134] sm:$0x1] %v280
  %v282 = vld [vmem:[%s108 + $0x140] sm:$0x1]
  %v283 = vsel %vm209, 0, %v282
  %284 = vst [vmem:[%s108 + $0x140] sm:$0x1] %v283
  %v285 = vld [vmem:[%s108 + $0x14c] sm:$0x1]
  %v286 = vsel %vm209, 0, %v285
  %287 = vst [vmem:[%s108 + $0x14c] sm:$0x1] %v286
  %v288 = vld [vmem:[%s108 + $0x158] sm:$0x1]
  %v289 = vsel %vm209, 0, %v288
  %290 = vst [vmem:[%s108 + $0x158] sm:$0x1] %v289
  %v291 = vld [vmem:[%s108 + $0x164] sm:$0x1]
  %v292 = vsel %vm209, 0, %v291
  %293 = vst [vmem:[%s108 + $0x164] sm:$0x1] %v292
  %v294 = vld [vmem:[%s108 + $0x170] sm:$0x1]
  %v295 = vsel %vm209, 0, %v294
  %296 = vst [vmem:[%s108 + $0x170] sm:$0x1] %v295
  %v297 = vld [vmem:[%s108 + $0x17c] sm:$0x1]
  %v298 = vsel %vm209, 0, %v297
  %299 = vst [vmem:[%s108 + $0x17c] sm:$0x1] %v298
  %v300 = vld [vmem:[%s108 + $0x188] sm:$0x1]
  %v301 = vsel %vm209, 0, %v300
  %302 = vst [vmem:[%s108 + $0x188] sm:$0x1] %v301
  %v303 = vld [vmem:[%s108 + $0x194] sm:$0x1]
  %v304 = vsel %vm209, 0, %v303
  %305 = vst [vmem:[%s108 + $0x194] sm:$0x1] %v304
  %vm306 = vsmask.f32 4368
  %vm307 = vmor %vm110, %vm306
  %v309 = vshrl.u32 %v29, 16
  %v311 = vrot.slane %v309, 7
  %v312 = vshll.u32 %v29, 16
  %v314 = vor.u32 %v311, %v312
  %v315 = vrot.slane %v311, 4
  %v317 = vshrl.u32 %v30, 16
  %v319 = vrot.slane %v317, 7
  %v320 = vshll.u32 %v30, 16
  %v322 = vor.u32 %v319, %v320
  %v323 = vsel %vm307, %v315, %v322
  %v324 = vrot.slane %v319, 4
  %v326 = vshrl.u32 %v31, 16
  %v328 = vrot.slane %v326, 7
  %v329 = vshll.u32 %v31, 16
  %v331 = vor.u32 %v328, %v329
  %v332 = vrot.slane %v328, 4
  %v334 = vshrl.u32 %v32, 16
  %v336 = vrot.slane %v334, 7
  %v337 = vshll.u32 %v32, 16
  %v339 = vor.u32 %v336, %v337
  %v340 = vsel %vm307, %v332, %v339
  %v341 = vrot.slane %v336, 4
  %v343 = vshrl.u32 %v33, 16
  %v345 = vrot.slane %v343, 7
  %v346 = vshll.u32 %v33, 16
  %v348 = vor.u32 %v345, %v346
  %v349 = vrot.slane %v345, 4
  %v351 = vshrl.u32 %v34, 16
  %v353 = vrot.slane %v351, 7
  %v354 = vshll.u32 %v34, 16
  %v356 = vor.u32 %v353, %v354
  %v357 = vsel %vm307, %v349, %v356
  %v358 = vrot.slane %v353, 4
  %v360 = vshrl.u32 %v35, 16
  %v362 = vrot.slane %v360, 7
  %v363 = vshll.u32 %v35, 16
  %v365 = vor.u32 %v362, %v363
  %v366 = vrot.slane %v362, 4
  %v368 = vshrl.u32 %v36, 16
  %v370 = vrot.slane %v368, 7
  %v371 = vshll.u32 %v36, 16
  %v373 = vor.u32 %v370, %v371
  %v374 = vsel %vm307, %v366, %v373
  %v375 = vrot.slane %v370, 4
  %v377 = vshrl.u32 %v37, 16
  %v379 = vrot.slane %v377, 7
  %v380 = vshll.u32 %v37, 16
  %v382 = vor.u32 %v379, %v380
  %v383 = vrot.slane %v379, 4
  %v385 = vshrl.u32 %v38, 16
  %v387 = vrot.slane %v385, 7
  %v388 = vshll.u32 %v38, 16
  %v390 = vor.u32 %v387, %v388
  %v391 = vsel %vm307, %v383, %v390
  %v392 = vrot.slane %v387, 4
  %v394 = vshrl.u32 %v39, 16
  %v396 = vrot.slane %v394, 7
  %v397 = vshll.u32 %v39, 16
  %v399 = vor.u32 %v396, %v397
  %v400 = vrot.slane %v396, 4
  %v402 = vshrl.u32 %v40, 16
  %v404 = vrot.slane %v402, 7
  %v405 = vshll.u32 %v40, 16
  %v407 = vor.u32 %v404, %v405
  %v408 = vsel %vm307, %v400, %v407
  %v409 = vrot.slane %v404, 4
  %v411 = vshrl.u32 %v41, 16
  %v413 = vrot.slane %v411, 7
  %v414 = vshll.u32 %v41, 16
  %v416 = vor.u32 %v413, %v414
  %v417 = vrot.slane %v413, 4
  %v419 = vshrl.u32 %v42, 16
  %v421 = vrot.slane %v419, 7
  %v422 = vshll.u32 %v42, 16
  %v424 = vor.u32 %v421, %v422
  %v425 = vsel %vm307, %v417, %v424
  %v426 = vrot.slane %v421, 4
  %v428 = vshrl.u32 %v43, 16
  %v430 = vrot.slane %v428, 7
  %v431 = vshll.u32 %v43, 16
  %v433 = vor.u32 %v430, %v431
  %v434 = vrot.slane %v430, 4
  %v436 = vshrl.u32 %v44, 16
  %v438 = vrot.slane %v436, 7
  %v439 = vshll.u32 %v44, 16
  %v441 = vor.u32 %v438, %v439
  %v442 = vsel %vm307, %v434, %v441
  %v443 = vrot.slane %v438, 4
  %v445 = vshrl.u32 %v45, 16
  %v447 = vrot.slane %v445, 7
  %v448 = vshll.u32 %v45, 16
  %v450 = vor.u32 %v447, %v448
  %v451 = vrot.slane %v447, 4
  %v453 = vshrl.u32 %v46, 16
  %v455 = vrot.slane %v453, 7
  %v456 = vshll.u32 %v46, 16
  %v458 = vor.u32 %v455, %v456
  %v459 = vsel %vm307, %v451, %v458
  %v460 = vrot.slane %v455, 4
  %v462 = vshrl.u32 %v47, 16
  %v464 = vrot.slane %v462, 7
  %v465 = vshll.u32 %v47, 16
  %v467 = vor.u32 %v464, %v465
  %v468 = vrot.slane %v464, 4
  %v470 = vshrl.u32 %v48, 16
  %v472 = vrot.slane %v470, 7
  %v473 = vshll.u32 %v48, 16
  %v475 = vor.u32 %v472, %v473
  %v476 = vsel %vm307, %v468, %v475
  %v477 = vrot.slane %v472, 4
  %v479 = vshrl.u32 %v49, 16
  %v481 = vrot.slane %v479, 7
  %v482 = vshll.u32 %v49, 16
  %v484 = vor.u32 %v481, %v482
  %v485 = vrot.slane %v481, 4
  %v487 = vshrl.u32 %v50, 16
  %v489 = vrot.slane %v487, 7
  %v490 = vshll.u32 %v50, 16
  %v492 = vor.u32 %v489, %v490
  %v493 = vsel %vm307, %v485, %v492
  %v494 = vrot.slane %v489, 4
  %v496 = vshrl.u32 %v51, 16
  %v498 = vrot.slane %v496, 7
  %v499 = vshll.u32 %v51, 16
  %v501 = vor.u32 %v498, %v499
  %v502 = vrot.slane %v498, 4
  %v504 = vshrl.u32 %v52, 16
  %v506 = vrot.slane %v504, 7
  %v507 = vshll.u32 %v52, 16
  %v509 = vor.u32 %v506, %v507
  %v510 = vsel %vm307, %v502, %v509
  %v511 = vrot.slane %v506, 4
  %v513 = vshrl.u32 %v53, 16
  %v515 = vrot.slane %v513, 7
  %v516 = vshll.u32 %v53, 16
  %v518 = vor.u32 %v515, %v516
  %v519 = vrot.slane %v515, 4
  %v521 = vshrl.u32 %v54, 16
  %v523 = vrot.slane %v521, 7
  %v524 = vshll.u32 %v54, 16
  %v526 = vor.u32 %v523, %v524
  %v527 = vsel %vm307, %v519, %v526
  %v528 = vrot.slane %v523, 4
  %v530 = vshrl.u32 %v55, 16
  %v532 = vrot.slane %v530, 7
  %v533 = vshll.u32 %v55, 16
  %v535 = vor.u32 %v532, %v533
  %v536 = vrot.slane %v532, 4
  %v538 = vshrl.u32 %v56, 16
  %v540 = vrot.slane %v538, 7
  %v541 = vshll.u32 %v56, 16
  %v543 = vor.u32 %v540, %v541
  %v544 = vsel %vm307, %v536, %v543
  %v545 = vrot.slane %v540, 4
  %v547 = vshrl.u32 %v57, 16
  %v549 = vrot.slane %v547, 7
  %v550 = vshll.u32 %v57, 16
  %v552 = vor.u32 %v549, %v550
  %v553 = vrot.slane %v549, 4
  %v555 = vshrl.u32 %v58, 16
  %v557 = vrot.slane %v555, 7
  %v558 = vshll.u32 %v58, 16
  %v560 = vor.u32 %v557, %v558
  %v561 = vsel %vm307, %v553, %v560
  %v562 = vrot.slane %v557, 4
  %v564 = vshrl.u32 %v59, 16
  %v566 = vrot.slane %v564, 7
  %v567 = vshll.u32 %v59, 16
  %v569 = vor.u32 %v566, %v567
  %v570 = vrot.slane %v566, 4
  %v572 = vshrl.u32 %v60, 16
  %v574 = vrot.slane %v572, 7
  %v575 = vshll.u32 %v60, 16
  %v577 = vor.u32 %v574, %v575
  %v578 = vsel %vm307, %v570, %v577
  %v579 = vrot.slane %v574, 4
  %v581 = vshrl.u32 %v61, 16
  %v583 = vrot.slane %v581, 7
  %v584 = vshll.u32 %v61, 16
  %v586 = vor.u32 %v583, %v584
  %v587 = vrot.slane %v583, 4
  %v589 = vshrl.u32 %v62, 16
  %v591 = vrot.slane %v589, 7
  %v592 = vshll.u32 %v62, 16
  %v594 = vor.u32 %v591, %v592
  %v595 = vsel %vm307, %v587, %v594
  %v596 = vrot.slane %v591, 4
  %v598 = vshrl.u32 %v63, 16
  %v600 = vrot.slane %v598, 7
  %v601 = vshll.u32 %v63, 16
  %v603 = vor.u32 %v600, %v601
  %v604 = vrot.slane %v600, 4
  %v606 = vshrl.u32 %v64, 16
  %v608 = vrot.slane %v606, 7
  %v609 = vshll.u32 %v64, 16
  %v611 = vor.u32 %v608, %v609
  %v612 = vsel %vm307, %v604, %v611
  %v613 = vrot.slane %v608, 4
  %v615 = vshrl.u32 %v65, 16
  %v617 = vrot.slane %v615, 7
  %v618 = vshll.u32 %v65, 16
  %v620 = vor.u32 %v617, %v618
  %v621 = vrot.slane %v617, 4
  %v623 = vshrl.u32 %v66, 16
  %v625 = vrot.slane %v623, 7
  %v626 = vshll.u32 %v66, 16
  %v628 = vor.u32 %v625, %v626
  %v629 = vsel %vm307, %v621, %v628
  %v630 = vrot.slane %v625, 4
  %v632 = vshrl.u32 %v67, 16
  %v634 = vrot.slane %v632, 7
  %v635 = vshll.u32 %v67, 16
  %v637 = vor.u32 %v634, %v635
  %v638 = vrot.slane %v634, 4
  %v640 = vshrl.u32 %v68, 16
  %v642 = vrot.slane %v640, 7
  %v643 = vshll.u32 %v68, 16
  %v645 = vor.u32 %v642, %v643
  %v646 = vsel %vm307, %v638, %v645
  %v647 = vrot.slane %v642, 4
  %v649 = vshrl.u32 %v69, 16
  %v651 = vrot.slane %v649, 7
  %v652 = vshll.u32 %v69, 16
  %v654 = vor.u32 %v651, %v652
  %v655 = vrot.slane %v651, 4
  %v657 = vshrl.u32 %v70, 16
  %v659 = vrot.slane %v657, 7
  %v660 = vshll.u32 %v70, 16
  %v662 = vor.u32 %v659, %v660
  %v663 = vsel %vm307, %v655, %v662
  %v664 = vrot.slane %v659, 4
  %v666 = vshrl.u32 %v71, 16
  %v668 = vrot.slane %v666, 7
  %v669 = vshll.u32 %v71, 16
  %v671 = vor.u32 %v668, %v669
  %v672 = vrot.slane %v668, 4
  %v674 = vshrl.u32 %v72, 16
  %v676 = vrot.slane %v674, 7
  %v677 = vshll.u32 %v72, 16
  %v679 = vor.u32 %v676, %v677
  %v680 = vsel %vm307, %v672, %v679
  %v681 = vrot.slane %v676, 4
  %v683 = vshrl.u32 %v73, 16
  %v685 = vrot.slane %v683, 7
  %v686 = vshll.u32 %v73, 16
  %v688 = vor.u32 %v685, %v686
  %v689 = vrot.slane %v685, 4
  %v691 = vshrl.u32 %v74, 16
  %v693 = vrot.slane %v691, 7
  %v694 = vshll.u32 %v74, 16
  %v696 = vor.u32 %v693, %v694
  %v697 = vsel %vm307, %v689, %v696
  %v698 = vrot.slane %v693, 4
  %v700 = vshrl.u32 %v75, 16
  %v702 = vrot.slane %v700, 7
  %v703 = vshll.u32 %v75, 16
  %v705 = vor.u32 %v702, %v703
  %v706 = vrot.slane %v702, 4
  %v708 = vshrl.u32 %v76, 16
  %v710 = vrot.slane %v708, 7
  %v711 = vshll.u32 %v76, 16
  %v713 = vor.u32 %v710, %v711
  %v714 = vsel %vm307, %v706, %v713
  %v715 = vrot.slane %v710, 4
  %v717 = vshrl.u32 %v77, 16
  %v719 = vrot.slane %v717, 7
  %v720 = vshll.u32 %v77, 16
  %v722 = vor.u32 %v719, %v720
  %v723 = vrot.slane %v719, 4
  %v725 = vshrl.u32 %v78, 16
  %v727 = vrot.slane %v725, 7
  %v728 = vshll.u32 %v78, 16
  %v730 = vor.u32 %v727, %v728
  %v731 = vsel %vm307, %v723, %v730
  %v732 = vrot.slane %v727, 4
  %v734 = vshrl.u32 %v79, 16
  %v736 = vrot.slane %v734, 7
  %v737 = vshll.u32 %v79, 16
  %v739 = vor.u32 %v736, %v737
  %v740 = vrot.slane %v736, 4
  %v742 = vshrl.u32 %v80, 16
  %v744 = vrot.slane %v742, 7
  %v745 = vshll.u32 %v80, 16
  %v747 = vor.u32 %v744, %v745
  %v748 = vsel %vm307, %v740, %v747
  %v749 = vrot.slane %v744, 4
  %v751 = vshrl.u32 %v81, 16
  %v753 = vrot.slane %v751, 7
  %v754 = vshll.u32 %v81, 16
  %v756 = vor.u32 %v753, %v754
  %v757 = vrot.slane %v753, 4
  %v759 = vshrl.u32 %v82, 16
  %v761 = vrot.slane %v759, 7
  %v762 = vshll.u32 %v82, 16
  %v764 = vor.u32 %v761, %v762
  %v765 = vsel %vm307, %v757, %v764
  %v766 = vrot.slane %v761, 4
  %v768 = vshrl.u32 %v83, 16
  %v770 = vrot.slane %v768, 7
  %v771 = vshll.u32 %v83, 16
  %v773 = vor.u32 %v770, %v771
  %v774 = vrot.slane %v770, 4
  %v776 = vshrl.u32 %v84, 16
  %v778 = vrot.slane %v776, 7
  %v779 = vshll.u32 %v84, 16
  %v781 = vor.u32 %v778, %v779
  %v782 = vsel %vm307, %v774, %v781
  %v783 = vrot.slane %v778, 4
  %v785 = vshrl.u32 %v85, 16
  %v787 = vrot.slane %v785, 7
  %v788 = vshll.u32 %v85, 16
  %v790 = vor.u32 %v787, %v788
  %v791 = vrot.slane %v787, 4
  %v793 = vshrl.u32 %v86, 16
  %v795 = vrot.slane %v793, 7
  %v796 = vshll.u32 %v86, 16
  %v798 = vor.u32 %v795, %v796
  %v799 = vsel %vm307, %v791, %v798
  %v800 = vrot.slane %v795, 4
  %v802 = vshrl.u32 %v87, 16
  %v804 = vrot.slane %v802, 7
  %v805 = vshll.u32 %v87, 16
  %v807 = vor.u32 %v804, %v805
  %v808 = vrot.slane %v804, 4
  %v810 = vshrl.u32 %v88, 16
  %v812 = vrot.slane %v810, 7
  %v813 = vshll.u32 %v88, 16
  %v815 = vor.u32 %v812, %v813
  %v816 = vsel %vm307, %v808, %v815
  %v817 = vrot.slane %v812, 4
  %v819 = vshrl.u32 %v89, 16
  %v821 = vrot.slane %v819, 7
  %v822 = vshll.u32 %v89, 16
  %v824 = vor.u32 %v821, %v822
  %v825 = vrot.slane %v821, 4
  %v827 = vshrl.u32 %v90, 16
  %v829 = vrot.slane %v827, 7
  %v830 = vshll.u32 %v90, 16
  %v832 = vor.u32 %v829, %v830
  %v833 = vsel %vm307, %v825, %v832
  %v834 = vrot.slane %v829, 4
  %v836 = vshrl.u32 %v91, 16
  %v838 = vrot.slane %v836, 7
  %v839 = vshll.u32 %v91, 16
  %v841 = vor.u32 %v838, %v839
  %v842 = vrot.slane %v838, 4
  %v844 = vshrl.u32 %v92, 16
  %v846 = vrot.slane %v844, 7
  %v847 = vshll.u32 %v92, 16
  %v849 = vor.u32 %v846, %v847
  %v850 = vsel %vm307, %v842, %v849
  %v851 = vrot.slane %v846, 4
  %vm948 = vcmask 27648
  %vm949 = vmand %vm948, %vm208
  %v950 = vld [vmem:[%s108] sm:$0xf]
  %v951 = vsel %vm949, %v314, %v950
  %952 = vst [vmem:[%s108] sm:$0xf] %v951
  %953 = vst.msk [vmem:[%s108 + $0x4] sm:$0xf] %vm93, %v323
  %v954 = vld [vmem:[%s108 + $0x8] sm:$0x1]
  %v955 = vsel %vm111, %v324, %v954
  %956 = vst [vmem:[%s108 + $0x8] sm:$0x1] %v955
  %v957 = vld [vmem:[%s108 + $0xc] sm:$0xf]
  %v958 = vsel %vm949, %v331, %v957
  %959 = vst [vmem:[%s108 + $0xc] sm:$0xf] %v958
  %960 = vst.msk [vmem:[%s108 + $0x10] sm:$0xf] %vm93, %v340
  %v961 = vld [vmem:[%s108 + $0x14] sm:$0x1]
  %v962 = vsel %vm111, %v341, %v961
  %963 = vst [vmem:[%s108 + $0x14] sm:$0x1] %v962
  %v964 = vld [vmem:[%s108 + $0x18] sm:$0xf]
  %v965 = vsel %vm949, %v348, %v964
  %966 = vst [vmem:[%s108 + $0x18] sm:$0xf] %v965
  %967 = vst.msk [vmem:[%s108 + $0x1c] sm:$0xf] %vm93, %v357
  %v968 = vld [vmem:[%s108 + $0x20] sm:$0x1]
  %v969 = vsel %vm111, %v358, %v968
  %970 = vst [vmem:[%s108 + $0x20] sm:$0x1] %v969
  %v971 = vld [vmem:[%s108 + $0x24] sm:$0xf]
  %v972 = vsel %vm949, %v365, %v971
  %973 = vst [vmem:[%s108 + $0x24] sm:$0xf] %v972
  %974 = vst.msk [vmem:[%s108 + $0x28] sm:$0xf] %vm93, %v374
  %v975 = vld [vmem:[%s108 + $0x2c] sm:$0x1]
  %v976 = vsel %vm111, %v375, %v975
  %977 = vst [vmem:[%s108 + $0x2c] sm:$0x1] %v976
  %v978 = vld [vmem:[%s108 + $0x30] sm:$0xf]
  %v979 = vsel %vm949, %v382, %v978
  %980 = vst [vmem:[%s108 + $0x30] sm:$0xf] %v979
  %981 = vst.msk [vmem:[%s108 + $0x34] sm:$0xf] %vm93, %v391
  %v982 = vld [vmem:[%s108 + $0x38] sm:$0x1]
  %v983 = vsel %vm111, %v392, %v982
  %984 = vst [vmem:[%s108 + $0x38] sm:$0x1] %v983
  %v985 = vld [vmem:[%s108 + $0x3c] sm:$0xf]
  %v986 = vsel %vm949, %v399, %v985
  %987 = vst [vmem:[%s108 + $0x3c] sm:$0xf] %v986
  %988 = vst.msk [vmem:[%s108 + $0x40] sm:$0xf] %vm93, %v408
  %v989 = vld [vmem:[%s108 + $0x44] sm:$0x1]
  %v990 = vsel %vm111, %v409, %v989
  %991 = vst [vmem:[%s108 + $0x44] sm:$0x1] %v990
  %v992 = vld [vmem:[%s108 + $0x48] sm:$0xf]
  %v993 = vsel %vm949, %v416, %v992
  %994 = vst [vmem:[%s108 + $0x48] sm:$0xf] %v993
  %995 = vst.msk [vmem:[%s108 + $0x4c] sm:$0xf] %vm93, %v425
  %v996 = vld [vmem:[%s108 + $0x50] sm:$0x1]
  %v997 = vsel %vm111, %v426, %v996
  %998 = vst [vmem:[%s108 + $0x50] sm:$0x1] %v997
  %v999 = vld [vmem:[%s108 + $0x54] sm:$0xf]
  %v1000 = vsel %vm949, %v433, %v999
  %1001 = vst [vmem:[%s108 + $0x54] sm:$0xf] %v1000
  %1002 = vst.msk [vmem:[%s108 + $0x58] sm:$0xf] %vm93, %v442
  %v1003 = vld [vmem:[%s108 + $0x5c] sm:$0x1]
  %v1004 = vsel %vm111, %v443, %v1003
  %1005 = vst [vmem:[%s108 + $0x5c] sm:$0x1] %v1004
  %v1006 = vld [vmem:[%s108 + $0x60] sm:$0xf]
  %v1007 = vsel %vm949, %v450, %v1006
  %1008 = vst [vmem:[%s108 + $0x60] sm:$0xf] %v1007
  %1009 = vst.msk [vmem:[%s108 + $0x64] sm:$0xf] %vm93, %v459
  %v1010 = vld [vmem:[%s108 + $0x68] sm:$0x1]
  %v1011 = vsel %vm111, %v460, %v1010
  %1012 = vst [vmem:[%s108 + $0x68] sm:$0x1] %v1011
  %v1013 = vld [vmem:[%s108 + $0x6c] sm:$0xf]
  %v1014 = vsel %vm949, %v467, %v1013
  %1015 = vst [vmem:[%s108 + $0x6c] sm:$0xf] %v1014
  %1016 = vst.msk [vmem:[%s108 + $0x70] sm:$0xf] %vm93, %v476
  %v1017 = vld [vmem:[%s108 + $0x74] sm:$0x1]
  %v1018 = vsel %vm111, %v477, %v1017
  %1019 = vst [vmem:[%s108 + $0x74] sm:$0x1] %v1018
  %v1020 = vld [vmem:[%s108 + $0x78] sm:$0xf]
  %v1021 = vsel %vm949, %v484, %v1020
  %1022 = vst [vmem:[%s108 + $0x78] sm:$0xf] %v1021
  %1023 = vst.msk [vmem:[%s108 + $0x7c] sm:$0xf] %vm93, %v493
  %v1024 = vld [vmem:[%s108 + $0x80] sm:$0x1]
  %v1025 = vsel %vm111, %v494, %v1024
  %1026 = vst [vmem:[%s108 + $0x80] sm:$0x1] %v1025
  %v1027 = vld [vmem:[%s108 + $0x84] sm:$0xf]
  %v1028 = vsel %vm949, %v501, %v1027
  %1029 = vst [vmem:[%s108 + $0x84] sm:$0xf] %v1028
  %1030 = vst.msk [vmem:[%s108 + $0x88] sm:$0xf] %vm93, %v510
  %v1031 = vld [vmem:[%s108 + $0x8c] sm:$0x1]
  %v1032 = vsel %vm111, %v511, %v1031
  %1033 = vst [vmem:[%s108 + $0x8c] sm:$0x1] %v1032
  %v1034 = vld [vmem:[%s108 + $0x90] sm:$0xf]
  %v1035 = vsel %vm949, %v518, %v1034
  %1036 = vst [vmem:[%s108 + $0x90] sm:$0xf] %v1035
  %1037 = vst.msk [vmem:[%s108 + $0x94] sm:$0xf] %vm93, %v527
  %v1038 = vld [vmem:[%s108 + $0x98] sm:$0x1]
  %v1039 = vsel %vm111, %v528, %v1038
  %1040 = vst [vmem:[%s108 + $0x98] sm:$0x1] %v1039
  %v1041 = vld [vmem:[%s108 + $0x9c] sm:$0xf]
  %v1042 = vsel %vm949, %v535, %v1041
  %1043 = vst [vmem:[%s108 + $0x9c] sm:$0xf] %v1042
  %1044 = vst.msk [vmem:[%s108 + $0xa0] sm:$0xf] %vm93, %v544
  %v1045 = vld [vmem:[%s108 + $0xa4] sm:$0x1]
  %v1046 = vsel %vm111, %v545, %v1045
  %1047 = vst [vmem:[%s108 + $0xa4] sm:$0x1] %v1046
  %v1048 = vld [vmem:[%s108 + $0xa8] sm:$0xf]
  %v1049 = vsel %vm949, %v552, %v1048
  %1050 = vst [vmem:[%s108 + $0xa8] sm:$0xf] %v1049
  %1051 = vst.msk [vmem:[%s108 + $0xac] sm:$0xf] %vm93, %v561
  %v1052 = vld [vmem:[%s108 + $0xb0] sm:$0x1]
  %v1053 = vsel %vm111, %v562, %v1052
  %1054 = vst [vmem:[%s108 + $0xb0] sm:$0x1] %v1053
  %v1055 = vld [vmem:[%s108 + $0xb4] sm:$0xf]
  %v1056 = vsel %vm949, %v569, %v1055
  %1057 = vst [vmem:[%s108 + $0xb4] sm:$0xf] %v1056
  %1058 = vst.msk [vmem:[%s108 + $0xb8] sm:$0xf] %vm93, %v578
  %v1059 = vld [vmem:[%s108 + $0xbc] sm:$0x1]
  %v1060 = vsel %vm111, %v579, %v1059
  %1061 = vst [vmem:[%s108 + $0xbc] sm:$0x1] %v1060
  %v1062 = vld [vmem:[%s108 + $0xd8] sm:$0xf]
  %v1063 = vsel %vm949, %v586, %v1062
  %1064 = vst [vmem:[%s108 + $0xd8] sm:$0xf] %v1063
  %1065 = vst.msk [vmem:[%s108 + $0xdc] sm:$0xf] %vm93, %v595
  %v1066 = vld [vmem:[%s108 + $0xe0] sm:$0x1]
  %v1067 = vsel %vm111, %v596, %v1066
  %1068 = vst [vmem:[%s108 + $0xe0] sm:$0x1] %v1067
  %v1069 = vld [vmem:[%s108 + $0xe4] sm:$0xf]
  %v1070 = vsel %vm949, %v603, %v1069
  %1071 = vst [vmem:[%s108 + $0xe4] sm:$0xf] %v1070
  %1072 = vst.msk [vmem:[%s108 + $0xe8] sm:$0xf] %vm93, %v612
  %v1073 = vld [vmem:[%s108 + $0xec] sm:$0x1]
  %v1074 = vsel %vm111, %v613, %v1073
  %1075 = vst [vmem:[%s108 + $0xec] sm:$0x1] %v1074
  %v1076 = vld [vmem:[%s108 + $0xf0] sm:$0xf]
  %v1077 = vsel %vm949, %v620, %v1076
  %1078 = vst [vmem:[%s108 + $0xf0] sm:$0xf] %v1077
  %1079 = vst.msk [vmem:[%s108 + $0xf4] sm:$0xf] %vm93, %v629
  %v1080 = vld [vmem:[%s108 + $0xf8] sm:$0x1]
  %v1081 = vsel %vm111, %v630, %v1080
  %1082 = vst [vmem:[%s108 + $0xf8] sm:$0x1] %v1081
  %v1083 = vld [vmem:[%s108 + $0xfc] sm:$0xf]
  %v1084 = vsel %vm949, %v637, %v1083
  %1085 = vst [vmem:[%s108 + $0xfc] sm:$0xf] %v1084
  %1086 = vst.msk [vmem:[%s108 + $0x100] sm:$0xf] %vm93, %v646
  %v1087 = vld [vmem:[%s108 + $0x104] sm:$0x1]
  %v1088 = vsel %vm111, %v647, %v1087
  %1089 = vst [vmem:[%s108 + $0x104] sm:$0x1] %v1088
  %v1090 = vld [vmem:[%s108 + $0x108] sm:$0xf]
  %v1091 = vsel %vm949, %v654, %v1090
  %1092 = vst [vmem:[%s108 + $0x108] sm:$0xf] %v1091
  %1093 = vst.msk [vmem:[%s108 + $0x10c] sm:$0xf] %vm93, %v663
  %v1094 = vld [vmem:[%s108 + $0x110] sm:$0x1]
  %v1095 = vsel %vm111, %v664, %v1094
  %1096 = vst [vmem:[%s108 + $0x110] sm:$0x1] %v1095
  %v1097 = vld [vmem:[%s108 + $0x114] sm:$0xf]
  %v1098 = vsel %vm949, %v671, %v1097
  %1099 = vst [vmem:[%s108 + $0x114] sm:$0xf] %v1098
  %1100 = vst.msk [vmem:[%s108 + $0x118] sm:$0xf] %vm93, %v680
  %v1101 = vld [vmem:[%s108 + $0x11c] sm:$0x1]
  %v1102 = vsel %vm111, %v681, %v1101
  %1103 = vst [vmem:[%s108 + $0x11c] sm:$0x1] %v1102
  %v1104 = vld [vmem:[%s108 + $0x120] sm:$0xf]
  %v1105 = vsel %vm949, %v688, %v1104
  %1106 = vst [vmem:[%s108 + $0x120] sm:$0xf] %v1105
  %1107 = vst.msk [vmem:[%s108 + $0x124] sm:$0xf] %vm93, %v697
  %v1108 = vld [vmem:[%s108 + $0x128] sm:$0x1]
  %v1109 = vsel %vm111, %v698, %v1108
  %1110 = vst [vmem:[%s108 + $0x128] sm:$0x1] %v1109
  %v1111 = vld [vmem:[%s108 + $0x12c] sm:$0xf]
  %v1112 = vsel %vm949, %v705, %v1111
  %1113 = vst [vmem:[%s108 + $0x12c] sm:$0xf] %v1112
  %1114 = vst.msk [vmem:[%s108 + $0x130] sm:$0xf] %vm93, %v714
  %v1115 = vld [vmem:[%s108 + $0x134] sm:$0x1]
  %v1116 = vsel %vm111, %v715, %v1115
  %1117 = vst [vmem:[%s108 + $0x134] sm:$0x1] %v1116
  %v1118 = vld [vmem:[%s108 + $0x138] sm:$0xf]
  %v1119 = vsel %vm949, %v722, %v1118
  %1120 = vst [vmem:[%s108 + $0x138] sm:$0xf] %v1119
  %1121 = vst.msk [vmem:[%s108 + $0x13c] sm:$0xf] %vm93, %v731
  %v1122 = vld [vmem:[%s108 + $0x140] sm:$0x1]
  %v1123 = vsel %vm111, %v732, %v1122
  %1124 = vst [vmem:[%s108 + $0x140] sm:$0x1] %v1123
  %v1125 = vld [vmem:[%s108 + $0x144] sm:$0xf]
  %v1126 = vsel %vm949, %v739, %v1125
  %1127 = vst [vmem:[%s108 + $0x144] sm:$0xf] %v1126
  %1128 = vst.msk [vmem:[%s108 + $0x148] sm:$0xf] %vm93, %v748
  %v1129 = vld [vmem:[%s108 + $0x14c] sm:$0x1]
  %v1130 = vsel %vm111, %v749, %v1129
  %1131 = vst [vmem:[%s108 + $0x14c] sm:$0x1] %v1130
  %v1132 = vld [vmem:[%s108 + $0x150] sm:$0xf]
  %v1133 = vsel %vm949, %v756, %v1132
  %1134 = vst [vmem:[%s108 + $0x150] sm:$0xf] %v1133
  %1135 = vst.msk [vmem:[%s108 + $0x154] sm:$0xf] %vm93, %v765
  %v1136 = vld [vmem:[%s108 + $0x158] sm:$0x1]
  %v1137 = vsel %vm111, %v766, %v1136
  %1138 = vst [vmem:[%s108 + $0x158] sm:$0x1] %v1137
  %v1139 = vld [vmem:[%s108 + $0x15c] sm:$0xf]
  %v1140 = vsel %vm949, %v773, %v1139
  %1141 = vst [vmem:[%s108 + $0x15c] sm:$0xf] %v1140
  %1142 = vst.msk [vmem:[%s108 + $0x160] sm:$0xf] %vm93, %v782
  %v1143 = vld [vmem:[%s108 + $0x164] sm:$0x1]
  %v1144 = vsel %vm111, %v783, %v1143
  %1145 = vst [vmem:[%s108 + $0x164] sm:$0x1] %v1144
  %v1146 = vld [vmem:[%s108 + $0x168] sm:$0xf]
  %v1147 = vsel %vm949, %v790, %v1146
  %1148 = vst [vmem:[%s108 + $0x168] sm:$0xf] %v1147
  %1149 = vst.msk [vmem:[%s108 + $0x16c] sm:$0xf] %vm93, %v799
  %v1150 = vld [vmem:[%s108 + $0x170] sm:$0x1]
  %v1151 = vsel %vm111, %v800, %v1150
  %1152 = vst [vmem:[%s108 + $0x170] sm:$0x1] %v1151
  %v1153 = vld [vmem:[%s108 + $0x174] sm:$0xf]
  %v1154 = vsel %vm949, %v807, %v1153
  %1155 = vst [vmem:[%s108 + $0x174] sm:$0xf] %v1154
  %1156 = vst.msk [vmem:[%s108 + $0x178] sm:$0xf] %vm93, %v816
  %v1157 = vld [vmem:[%s108 + $0x17c] sm:$0x1]
  %v1158 = vsel %vm111, %v817, %v1157
  %1159 = vst [vmem:[%s108 + $0x17c] sm:$0x1] %v1158
  %v1160 = vld [vmem:[%s108 + $0x180] sm:$0xf]
  %v1161 = vsel %vm949, %v824, %v1160
  %1162 = vst [vmem:[%s108 + $0x180] sm:$0xf] %v1161
  %1163 = vst.msk [vmem:[%s108 + $0x184] sm:$0xf] %vm93, %v833
  %v1164 = vld [vmem:[%s108 + $0x188] sm:$0x1]
  %v1165 = vsel %vm111, %v834, %v1164
  %1166 = vst [vmem:[%s108 + $0x188] sm:$0x1] %v1165
  %v1167 = vld [vmem:[%s108 + $0x18c] sm:$0xf]
  %v1168 = vsel %vm949, %v841, %v1167
  %1169 = vst [vmem:[%s108 + $0x18c] sm:$0xf] %v1168
  %1170 = vst.msk [vmem:[%s108 + $0x190] sm:$0xf] %vm93, %v850
  %v1171 = vld [vmem:[%s108 + $0x194] sm:$0x1]
  %v1172 = vsel %vm111, %v851, %v1171
  %1173 = vst [vmem:[%s108 + $0x194] sm:$0x1] %v1172
  %v1174 = vld [vmem:[#allocation2] sm:$0xf]
  %v1175 = vld [vmem:[#allocation2 + $0x4] sm:$0xf]
  %v1176 = vld [vmem:[#allocation2 + $0xc] sm:$0xf]
  %v1177 = vld [vmem:[#allocation2 + $0x10] sm:$0xf]
  %v1178 = vld [vmem:[#allocation2 + $0x18] sm:$0xf]
  %v1179 = vld [vmem:[#allocation2 + $0x1c] sm:$0xf]
  %v1180 = vld [vmem:[#allocation2 + $0x24] sm:$0xf]
  %v1181 = vld [vmem:[#allocation2 + $0x28] sm:$0xf]
  %v1182 = vld [vmem:[#allocation2 + $0x30] sm:$0xf]
  %v1183 = vld [vmem:[#allocation2 + $0x34] sm:$0xf]
  %v1184 = vld [vmem:[#allocation2 + $0x3c] sm:$0xf]
  %v1185 = vld [vmem:[#allocation2 + $0x40] sm:$0xf]
  %v1186 = vld [vmem:[#allocation2 + $0x48] sm:$0xf]
  %v1187 = vld [vmem:[#allocation2 + $0x4c] sm:$0xf]
  %v1188 = vld [vmem:[#allocation2 + $0x54] sm:$0xf]
  %v1189 = vld [vmem:[#allocation2 + $0x58] sm:$0xf]
  %v1190 = vld [vmem:[#allocation2 + $0x60] sm:$0xf]
  %v1191 = vld [vmem:[#allocation2 + $0x64] sm:$0xf]
  %v1192 = vld [vmem:[#allocation2 + $0x6c] sm:$0xf]
  %v1193 = vld [vmem:[#allocation2 + $0x70] sm:$0xf]
  %v1194 = vld [vmem:[#allocation2 + $0x78] sm:$0xf]
  %v1195 = vld [vmem:[#allocation2 + $0x7c] sm:$0xf]
  %v1196 = vld [vmem:[#allocation2 + $0x84] sm:$0xf]
  %v1197 = vld [vmem:[#allocation2 + $0x88] sm:$0xf]
  %v1198 = vld [vmem:[#allocation2 + $0x90] sm:$0xf]
  %v1199 = vld [vmem:[#allocation2 + $0x94] sm:$0xf]
  %v1200 = vld [vmem:[#allocation2 + $0x9c] sm:$0xf]
  %v1201 = vld [vmem:[#allocation2 + $0xa0] sm:$0xf]
  %v1202 = vld [vmem:[#allocation2 + $0xa8] sm:$0xf]
  %v1203 = vld [vmem:[#allocation2 + $0xac] sm:$0xf]
  %v1204 = vld [vmem:[#allocation2 + $0xb4] sm:$0xf]
  %v1205 = vld [vmem:[#allocation2 + $0xb8] sm:$0xf]
  %v1206 = vld [vmem:[#allocation2 + $0xd8] sm:$0xf]
  %v1207 = vld [vmem:[#allocation2 + $0xdc] sm:$0xf]
  %v1208 = vld [vmem:[#allocation2 + $0xe4] sm:$0xf]
  %v1209 = vld [vmem:[#allocation2 + $0xe8] sm:$0xf]
  %v1210 = vld [vmem:[#allocation2 + $0xf0] sm:$0xf]
  %v1211 = vld [vmem:[#allocation2 + $0xf4] sm:$0xf]
  %v1212 = vld [vmem:[#allocation2 + $0xfc] sm:$0xf]
  %v1213 = vld [vmem:[#allocation2 + $0x100] sm:$0xf]
  %v1214 = vld [vmem:[#allocation2 + $0x108] sm:$0xf]
  %v1215 = vld [vmem:[#allocation2 + $0x10c] sm:$0xf]
  %v1216 = vld [vmem:[#allocation2 + $0x114] sm:$0xf]
  %v1217 = vld [vmem:[#allocation2 + $0x118] sm:$0xf]
  %v1218 = vld [vmem:[#allocation2 + $0x120] sm:$0xf]
  %v1219 = vld [vmem:[#allocation2 + $0x124] sm:$0xf]
  %v1220 = vld [vmem:[#allocation2 + $0x12c] sm:$0xf]
  %v1221 = vld [vmem:[#allocation2 + $0x130] sm:$0xf]
  %v1222 = vld [vmem:[#allocation2 + $0x138] sm:$0xf]
  %v1223 = vld [vmem:[#allocation2 + $0x13c] sm:$0xf]
  %v1224 = vld [vmem:[#allocation2 + $0x144] sm:$0xf]
  %v1225 = vld [vmem:[#allocation2 + $0x148] sm:$0xf]
  %v1226 = vld [vmem:[#allocation2 + $0x150] sm:$0xf]
  %v1227 = vld [vmem:[#allocation2 + $0x154] sm:$0xf]
  %v1228 = vld [vmem:[#allocation2 + $0x15c] sm:$0xf]
  %v1229 = vld [vmem:[#allocation2 + $0x160] sm:$0xf]
  %v1230 = vld [vmem:[#allocation2 + $0x168] sm:$0xf]
  %v1231 = vld [vmem:[#allocation2 + $0x16c] sm:$0xf]
  %v1232 = vld [vmem:[#allocation2 + $0x174] sm:$0xf]
  %v1233 = vld [vmem:[#allocation2 + $0x178] sm:$0xf]
  %v1234 = vld [vmem:[#allocation2 + $0x180] sm:$0xf]
  %v1235 = vld [vmem:[#allocation2 + $0x184] sm:$0xf]
  %v1236 = vld [vmem:[#allocation2 + $0x18c] sm:$0xf]
  %v1237 = vld [vmem:[#allocation2 + $0x190] sm:$0xf]
  %v1238 = vld [vmem:[#allocation2 + $0x8] sm:$0x1]
  %v1239 = vld [vmem:[#allocation2 + $0x14] sm:$0x1]
  %v1240 = vld [vmem:[#allocation2 + $0x20] sm:$0x1]
  %v1241 = vld [vmem:[#allocation2 + $0x2c] sm:$0x1]
  %v1242 = vld [vmem:[#allocation2 + $0x38] sm:$0x1]
  %v1243 = vld [vmem:[#allocation2 + $0x44] sm:$0x1]
  %v1244 = vld [vmem:[#allocation2 + $0x50] sm:$0x1]
  %v1245 = vld [vmem:[#allocation2 + $0x5c] sm:$0x1]
  %v1246 = vld [vmem:[#allocation2 + $0x68] sm:$0x1]
  %v1247 = vld [vmem:[#allocation2 + $0x74] sm:$0x1]
  %v1248 = vld [vmem:[#allocation2 + $0x80] sm:$0x1]
  %v1249 = vld [vmem:[#allocation2 + $0x8c] sm:$0x1]
  %v1250 = vld [vmem:[#allocation2 + $0x98] sm:$0x1]
  %v1251 = vld [vmem:[#allocation2 + $0xa4] sm:$0x1]
  %v1252 = vld [vmem:[#allocation2 + $0xb0] sm:$0x1]
  %v1253 = vld [vmem:[#allocation2 + $0xbc] sm:$0x1]
  %v1254 = vld [vmem:[#allocation2 + $0xe0] sm:$0x1]
  %v1255 = vld [vmem:[#allocation2 + $0xec] sm:$0x1]
  %v1256 = vld [vmem:[#allocation2 + $0xf8] sm:$0x1]
  %v1257 = vld [vmem:[#allocation2 + $0x104] sm:$0x1]
  %v1258 = vld [vmem:[#allocation2 + $0x110] sm:$0x1]
  %v1259 = vld [vmem:[#allocation2 + $0x11c] sm:$0x1]
  %v1260 = vld [vmem:[#allocation2 + $0x128] sm:$0x1]
  %v1261 = vld [vmem:[#allocation2 + $0x134] sm:$0x1]
  %v1262 = vld [vmem:[#allocation2 + $0x140] sm:$0x1]
  %v1263 = vld [vmem:[#allocation2 + $0x14c] sm:$0x1]
  %v1264 = vld [vmem:[#allocation2 + $0x158] sm:$0x1]
  %v1265 = vld [vmem:[#allocation2 + $0x164] sm:$0x1]
  %v1266 = vld [vmem:[#allocation2 + $0x170] sm:$0x1]
  %v1267 = vld [vmem:[#allocation2 + $0x17c] sm:$0x1]
  %v1268 = vld [vmem:[#allocation2 + $0x188] sm:$0x1]
  %v1269 = vld [vmem:[#allocation2 + $0x194] sm:$0x1]
  %v1270 = vld [vmem:[#allocation2] sm:$0xe]
  %v1271 = vld [vmem:[#allocation2 + $0xc] sm:$0xe]
  %v1272 = vld [vmem:[#allocation2 + $0x18] sm:$0xe]
  %v1273 = vld [vmem:[#allocation2 + $0x24] sm:$0xe]
  %v1274 = vld [vmem:[#allocation2 + $0x30] sm:$0xe]
  %v1275 = vld [vmem:[#allocation2 + $0x3c] sm:$0xe]
  %v1276 = vld [vmem:[#allocation2 + $0x48] sm:$0xe]
  %v1277 = vld [vmem:[#allocation2 + $0x54] sm:$0xe]
  %v1278 = vld [vmem:[#allocation2 + $0x60] sm:$0xe]
  %v1279 = vld [vmem:[#allocation2 + $0x6c] sm:$0xe]
  %v1280 = vld [vmem:[#allocation2 + $0x78] sm:$0xe]
  %v1281 = vld [vmem:[#allocation2 + $0x84] sm:$0xe]
  %v1282 = vld [vmem:[#allocation2 + $0x90] sm:$0xe]
  %v1283 = vld [vmem:[#allocation2 + $0x9c] sm:$0xe]
  %v1284 = vld [vmem:[#allocation2 + $0xa8] sm:$0xe]
  %v1285 = vld [vmem:[#allocation2 + $0xb4] sm:$0xe]
  %v1286 = vld [vmem:[#allocation2 + $0xd8] sm:$0xe]
  %v1287 = vld [vmem:[#allocation2 + $0xe4] sm:$0xe]
  %v1288 = vld [vmem:[#allocation2 + $0xf0] sm:$0xe]
  %v1289 = vld [vmem:[#allocation2 + $0xfc] sm:$0xe]
  %v1290 = vld [vmem:[#allocation2 + $0x108] sm:$0xe]
  %v1291 = vld [vmem:[#allocation2 + $0x114] sm:$0xe]
  %v1292 = vld [vmem:[#allocation2 + $0x120] sm:$0xe]
  %v1293 = vld [vmem:[#allocation2 + $0x12c] sm:$0xe]
  %v1294 = vld [vmem:[#allocation2 + $0x138] sm:$0xe]
  %v1295 = vld [vmem:[#allocation2 + $0x144] sm:$0xe]
  %v1296 = vld [vmem:[#allocation2 + $0x150] sm:$0xe]
  %v1297 = vld [vmem:[#allocation2 + $0x15c] sm:$0xe]
  %v1298 = vld [vmem:[#allocation2 + $0x168] sm:$0xe]
  %v1299 = vld [vmem:[#allocation2 + $0x174] sm:$0xe]
  %v1300 = vld [vmem:[#allocation2 + $0x180] sm:$0xe]
  %v1301 = vld [vmem:[#allocation2 + $0x18c] sm:$0xe]
  %v1302 = vld [vmem:[%s108] sm:$0xf]
  %v1303 = vld [vmem:[%s108 + $0x4] sm:$0xf]
  %v1304 = vld [vmem:[%s108 + $0xc] sm:$0xf]
  %v1305 = vld [vmem:[%s108 + $0x10] sm:$0xf]
  %v1306 = vld [vmem:[%s108 + $0x18] sm:$0xf]
  %v1307 = vld [vmem:[%s108 + $0x1c] sm:$0xf]
  %v1308 = vld [vmem:[%s108 + $0x24] sm:$0xf]
  %v1309 = vld [vmem:[%s108 + $0x28] sm:$0xf]
  %v1310 = vld [vmem:[%s108 + $0x30] sm:$0xf]
  %v1311 = vld [vmem:[%s108 + $0x34] sm:$0xf]
  %v1312 = vld [vmem:[%s108 + $0x3c] sm:$0xf]
  %v1313 = vld [vmem:[%s108 + $0x40] sm:$0xf]
  %v1314 = vld [vmem:[%s108 + $0x48] sm:$0xf]
  %v1315 = vld [vmem:[%s108 + $0x4c] sm:$0xf]
  %v1316 = vld [vmem:[%s108 + $0x54] sm:$0xf]
  %v1317 = vld [vmem:[%s108 + $0x58] sm:$0xf]
  %v1318 = vld [vmem:[%s108 + $0x60] sm:$0xf]
  %v1319 = vld [vmem:[%s108 + $0x64] sm:$0xf]
  %v1320 = vld [vmem:[%s108 + $0x6c] sm:$0xf]
  %v1321 = vld [vmem:[%s108 + $0x70] sm:$0xf]
  %v1322 = vld [vmem:[%s108 + $0x78] sm:$0xf]
  %v1323 = vld [vmem:[%s108 + $0x7c] sm:$0xf]
  %v1324 = vld [vmem:[%s108 + $0x84] sm:$0xf]
  %v1325 = vld [vmem:[%s108 + $0x88] sm:$0xf]
  %v1326 = vld [vmem:[%s108 + $0x90] sm:$0xf]
  %v1327 = vld [vmem:[%s108 + $0x94] sm:$0xf]
  %v1328 = vld [vmem:[%s108 + $0x9c] sm:$0xf]
  %v1329 = vld [vmem:[%s108 + $0xa0] sm:$0xf]
  %v1330 = vld [vmem:[%s108 + $0xa8] sm:$0xf]
  %v1331 = vld [vmem:[%s108 + $0xac] sm:$0xf]
  %v1332 = vld [vmem:[%s108 + $0xb4] sm:$0xf]
  %v1333 = vld [vmem:[%s108 + $0xb8] sm:$0xf]
  %v1334 = vld [vmem:[%s108 + $0xd8] sm:$0xf]
  %v1335 = vld [vmem:[%s108 + $0xdc] sm:$0xf]
  %v1336 = vld [vmem:[%s108 + $0xe4] sm:$0xf]
  %v1337 = vld [vmem:[%s108 + $0xe8] sm:$0xf]
  %v1338 = vld [vmem:[%s108 + $0xf0] sm:$0xf]
  %v1339 = vld [vmem:[%s108 + $0xf4] sm:$0xf]
  %v1340 = vld [vmem:[%s108 + $0xfc] sm:$0xf]
  %v1341 = vld [vmem:[%s108 + $0x100] sm:$0xf]
  %v1342 = vld [vmem:[%s108 + $0x108] sm:$0xf]
  %v1343 = vld [vmem:[%s108 + $0x10c] sm:$0xf]
  %v1344 = vld [vmem:[%s108 + $0x114] sm:$0xf]
  %v1345 = vld [vmem:[%s108 + $0x118] sm:$0xf]
  %v1346 = vld [vmem:[%s108 + $0x120] sm:$0xf]
  %v1347 = vld [vmem:[%s108 + $0x124] sm:$0xf]
  %v1348 = vld [vmem:[%s108 + $0x12c] sm:$0xf]
  %v1349 = vld [vmem:[%s108 + $0x130] sm:$0xf]
  %v1350 = vld [vmem:[%s108 + $0x138] sm:$0xf]
  %v1351 = vld [vmem:[%s108 + $0x13c] sm:$0xf]
  %v1352 = vld [vmem:[%s108 + $0x144] sm:$0xf]
  %v1353 = vld [vmem:[%s108 + $0x148] sm:$0xf]
  %v1354 = vld [vmem:[%s108 + $0x150] sm:$0xf]
  %v1355 = vld [vmem:[%s108 + $0x154] sm:$0xf]
  %v1356 = vld [vmem:[%s108 + $0x15c] sm:$0xf]
  %v1357 = vld [vmem:[%s108 + $0x160] sm:$0xf]
  %v1358 = vld [vmem:[%s108 + $0x168] sm:$0xf]
  %v1359 = vld [vmem:[%s108 + $0x16c] sm:$0xf]
  %v1360 = vld [vmem:[%s108 + $0x174] sm:$0xf]
  %v1361 = vld [vmem:[%s108 + $0x178] sm:$0xf]
  %v1362 = vld [vmem:[%s108 + $0x180] sm:$0xf]
  %v1363 = vld [vmem:[%s108 + $0x184] sm:$0xf]
  %v1364 = vld [vmem:[%s108 + $0x18c] sm:$0xf]
  %v1365 = vld [vmem:[%s108 + $0x190] sm:$0xf]
  %v1366 = vld [vmem:[%s108 + $0x8] sm:$0x1]
  %v1367 = vld [vmem:[%s108 + $0x14] sm:$0x1]
  %v1368 = vld [vmem:[%s108 + $0x20] sm:$0x1]
  %v1369 = vld [vmem:[%s108 + $0x2c] sm:$0x1]
  %v1370 = vld [vmem:[%s108 + $0x38] sm:$0x1]
  %v1371 = vld [vmem:[%s108 + $0x44] sm:$0x1]
  %v1372 = vld [vmem:[%s108 + $0x50] sm:$0x1]
  %v1373 = vld [vmem:[%s108 + $0x5c] sm:$0x1]
  %v1374 = vld [vmem:[%s108 + $0x68] sm:$0x1]
  %v1375 = vld [vmem:[%s108 + $0x74] sm:$0x1]
  %v1376 = vld [vmem:[%s108 + $0x80] sm:$0x1]
  %v1377 = vld [vmem:[%s108 + $0x8c] sm:$0x1]
  %v1378 = vld [vmem:[%s108 + $0x98] sm:$0x1]
  %v1379 = vld [vmem:[%s108 + $0xa4] sm:$0x1]
  %v1380 = vld [vmem:[%s108 + $0xb0] sm:$0x1]
  %v1381 = vld [vmem:[%s108 + $0xbc] sm:$0x1]
  %v1382 = vld [vmem:[%s108 + $0xe0] sm:$0x1]
  %v1383 = vld [vmem:[%s108 + $0xec] sm:$0x1]
  %v1384 = vld [vmem:[%s108 + $0xf8] sm:$0x1]
  %v1385 = vld [vmem:[%s108 + $0x104] sm:$0x1]
  %v1386 = vld [vmem:[%s108 + $0x110] sm:$0x1]
  %v1387 = vld [vmem:[%s108 + $0x11c] sm:$0x1]
  %v1388 = vld [vmem:[%s108 + $0x128] sm:$0x1]
  %v1389 = vld [vmem:[%s108 + $0x134] sm:$0x1]
  %v1390 = vld [vmem:[%s108 + $0x140] sm:$0x1]
  %v1391 = vld [vmem:[%s108 + $0x14c] sm:$0x1]
  %v1392 = vld [vmem:[%s108 + $0x158] sm:$0x1]
  %v1393 = vld [vmem:[%s108 + $0x164] sm:$0x1]
  %v1394 = vld [vmem:[%s108 + $0x170] sm:$0x1]
  %v1395 = vld [vmem:[%s108 + $0x17c] sm:$0x1]
  %v1396 = vld [vmem:[%s108 + $0x188] sm:$0x1]
  %v1397 = vld [vmem:[%s108 + $0x194] sm:$0x1]
  %v1398 = vld [vmem:[%s108] sm:$0xe]
  %v1399 = vld [vmem:[%s108 + $0xc] sm:$0xe]
  %v1400 = vld [vmem:[%s108 + $0x18] sm:$0xe]
  %v1401 = vld [vmem:[%s108 + $0x24] sm:$0xe]
  %v1402 = vld [vmem:[%s108 + $0x30] sm:$0xe]
  %v1403 = vld [vmem:[%s108 + $0x3c] sm:$0xe]
  %v1404 = vld [vmem:[%s108 + $0x48] sm:$0xe]
  %v1405 = vld [vmem:[%s108 + $0x54] sm:$0xe]
  %v1406 = vld [vmem:[%s108 + $0x60] sm:$0xe]
  %v1407 = vld [vmem:[%s108 + $0x6c] sm:$0xe]
  %v1408 = vld [vmem:[%s108 + $0x78] sm:$0xe]
  %v1409 = vld [vmem:[%s108 + $0x84] sm:$0xe]
  %v1410 = vld [vmem:[%s108 + $0x90] sm:$0xe]
  %v1411 = vld [vmem:[%s108 + $0x9c] sm:$0xe]
  %v1412 = vld [vmem:[%s108 + $0xa8] sm:$0xe]
  %v1413 = vld [vmem:[%s108 + $0xb4] sm:$0xe]
  %v1414 = vld [vmem:[%s108 + $0xd8] sm:$0xe]
  %v1415 = vld [vmem:[%s108 + $0xe4] sm:$0xe]
  %v1416 = vld [vmem:[%s108 + $0xf0] sm:$0xe]
  %v1417 = vld [vmem:[%s108 + $0xfc] sm:$0xe]
  %v1418 = vld [vmem:[%s108 + $0x108] sm:$0xe]
  %v1419 = vld [vmem:[%s108 + $0x114] sm:$0xe]
  %v1420 = vld [vmem:[%s108 + $0x120] sm:$0xe]
  %v1421 = vld [vmem:[%s108 + $0x12c] sm:$0xe]
  %v1422 = vld [vmem:[%s108 + $0x138] sm:$0xe]
  %v1423 = vld [vmem:[%s108 + $0x144] sm:$0xe]
  %v1424 = vld [vmem:[%s108 + $0x150] sm:$0xe]
  %v1425 = vld [vmem:[%s108 + $0x15c] sm:$0xe]
  %v1426 = vld [vmem:[%s108 + $0x168] sm:$0xe]
  %v1427 = vld [vmem:[%s108 + $0x174] sm:$0xe]
  %v1428 = vld [vmem:[%s108 + $0x180] sm:$0xe]
  %v1429 = vld [vmem:[%s108 + $0x18c] sm:$0xe]
  %s1430 = scalar_lea.vmem [#allocation2], 24
  %v1431 = vld [vmem:[%s1430] sm:$0xf]
  %v1432 = vld [vmem:[%s1430 + $0x4] sm:$0xf]
  %v1433 = vld [vmem:[%s1430 + $0xc] sm:$0xf]
  %v1434 = vld [vmem:[%s1430 + $0x10] sm:$0xf]
  %v1435 = vld [vmem:[%s1430 + $0x18] sm:$0xf]
  %v1436 = vld [vmem:[%s1430 + $0x1c] sm:$0xf]
  %v1437 = vld [vmem:[%s1430 + $0x24] sm:$0xf]
  %v1438 = vld [vmem:[%s1430 + $0x28] sm:$0xf]
  %v1439 = vld [vmem:[%s1430 + $0x30] sm:$0xf]
  %v1440 = vld [vmem:[%s1430 + $0x34] sm:$0xf]
  %v1441 = vld [vmem:[%s1430 + $0x3c] sm:$0xf]
  %v1442 = vld [vmem:[%s1430 + $0x40] sm:$0xf]
  %v1443 = vld [vmem:[%s1430 + $0x48] sm:$0xf]
  %v1444 = vld [vmem:[%s1430 + $0x4c] sm:$0xf]
  %v1445 = vld [vmem:[%s1430 + $0x54] sm:$0xf]
  %v1446 = vld [vmem:[%s1430 + $0x58] sm:$0xf]
  %v1447 = vld [vmem:[%s1430 + $0x60] sm:$0xf]
  %v1448 = vld [vmem:[%s1430 + $0x64] sm:$0xf]
  %v1449 = vld [vmem:[%s1430 + $0x6c] sm:$0xf]
  %v1450 = vld [vmem:[%s1430 + $0x70] sm:$0xf]
  %v1451 = vld [vmem:[%s1430 + $0x78] sm:$0xf]
  %v1452 = vld [vmem:[%s1430 + $0x7c] sm:$0xf]
  %v1453 = vld [vmem:[%s1430 + $0x84] sm:$0xf]
  %v1454 = vld [vmem:[%s1430 + $0x88] sm:$0xf]
  %v1455 = vld [vmem:[%s1430 + $0x90] sm:$0xf]
  %v1456 = vld [vmem:[%s1430 + $0x94] sm:$0xf]
  %v1457 = vld [vmem:[%s1430 + $0x9c] sm:$0xf]
  %v1458 = vld [vmem:[%s1430 + $0xa0] sm:$0xf]
  %v1459 = vld [vmem:[%s1430 + $0xa8] sm:$0xf]
  %v1460 = vld [vmem:[%s1430 + $0xac] sm:$0xf]
  %v1461 = vld [vmem:[%s1430 + $0xb4] sm:$0xf]
  %v1462 = vld [vmem:[%s1430 + $0xb8] sm:$0xf]
  %v1463 = vld [vmem:[%s1430 + $0xd8] sm:$0xf]
  %v1464 = vld [vmem:[%s1430 + $0xdc] sm:$0xf]
  %v1465 = vld [vmem:[%s1430 + $0xe4] sm:$0xf]
  %v1466 = vld [vmem:[%s1430 + $0xe8] sm:$0xf]
  %v1467 = vld [vmem:[%s1430 + $0xf0] sm:$0xf]
  %v1468 = vld [vmem:[%s1430 + $0xf4] sm:$0xf]
  %v1469 = vld [vmem:[%s1430 + $0xfc] sm:$0xf]
  %v1470 = vld [vmem:[%s1430 + $0x100] sm:$0xf]
  %v1471 = vld [vmem:[%s1430 + $0x108] sm:$0xf]
  %v1472 = vld [vmem:[%s1430 + $0x10c] sm:$0xf]
  %v1473 = vld [vmem:[%s1430 + $0x114] sm:$0xf]
  %v1474 = vld [vmem:[%s1430 + $0x118] sm:$0xf]
  %v1475 = vld [vmem:[%s1430 + $0x120] sm:$0xf]
  %v1476 = vld [vmem:[%s1430 + $0x124] sm:$0xf]
  %v1477 = vld [vmem:[%s1430 + $0x12c] sm:$0xf]
  %v1478 = vld [vmem:[%s1430 + $0x130] sm:$0xf]
  %v1479 = vld [vmem:[%s1430 + $0x138] sm:$0xf]
  %v1480 = vld [vmem:[%s1430 + $0x13c] sm:$0xf]
  %v1481 = vld [vmem:[%s1430 + $0x144] sm:$0xf]
  %v1482 = vld [vmem:[%s1430 + $0x148] sm:$0xf]
  %v1483 = vld [vmem:[%s1430 + $0x150] sm:$0xf]
  %v1484 = vld [vmem:[%s1430 + $0x154] sm:$0xf]
  %v1485 = vld [vmem:[%s1430 + $0x15c] sm:$0xf]
  %v1486 = vld [vmem:[%s1430 + $0x160] sm:$0xf]
  %v1487 = vld [vmem:[%s1430 + $0x168] sm:$0xf]
  %v1488 = vld [vmem:[%s1430 + $0x16c] sm:$0xf]
  %v1489 = vld [vmem:[%s1430 + $0x174] sm:$0xf]
  %v1490 = vld [vmem:[%s1430 + $0x178] sm:$0xf]
  %v1491 = vld [vmem:[%s1430 + $0x180] sm:$0xf]
  %v1492 = vld [vmem:[%s1430 + $0x184] sm:$0xf]
  %v1493 = vld [vmem:[%s1430 + $0x18c] sm:$0xf]
  %v1494 = vld [vmem:[%s1430 + $0x190] sm:$0xf]
  %v1495 = vld [vmem:[%s1430 + $0x8] sm:$0x1]
  %v1496 = vld [vmem:[%s1430 + $0x14] sm:$0x1]
  %v1497 = vld [vmem:[%s1430 + $0x20] sm:$0x1]
  %v1498 = vld [vmem:[%s1430 + $0x2c] sm:$0x1]
  %v1499 = vld [vmem:[%s1430 + $0x38] sm:$0x1]
  %v1500 = vld [vmem:[%s1430 + $0x44] sm:$0x1]
  %v1501 = vld [vmem:[%s1430 + $0x50] sm:$0x1]
  %v1502 = vld [vmem:[%s1430 + $0x5c] sm:$0x1]
  %v1503 = vld [vmem:[%s1430 + $0x68] sm:$0x1]
  %v1504 = vld [vmem:[%s1430 + $0x74] sm:$0x1]
  %v1505 = vld [vmem:[%s1430 + $0x80] sm:$0x1]
  %v1506 = vld [vmem:[%s1430 + $0x8c] sm:$0x1]
  %v1507 = vld [vmem:[%s1430 + $0x98] sm:$0x1]
  %v1508 = vld [vmem:[%s1430 + $0xa4] sm:$0x1]
  %v1509 = vld [vmem:[%s1430 + $0xb0] sm:$0x1]
  %v1510 = vld [vmem:[%s1430 + $0xbc] sm:$0x1]
  %v1511 = vld [vmem:[%s1430 + $0xe0] sm:$0x1]
  %v1512 = vld [vmem:[%s1430 + $0xec] sm:$0x1]
  %v1513 = vld [vmem:[%s1430 + $0xf8] sm:$0x1]
  %v1514 = vld [vmem:[%s1430 + $0x104] sm:$0x1]
  %v1515 = vld [vmem:[%s1430 + $0x110] sm:$0x1]
  %v1516 = vld [vmem:[%s1430 + $0x11c] sm:$0x1]
  %v1517 = vld [vmem:[%s1430 + $0x128] sm:$0x1]
  %v1518 = vld [vmem:[%s1430 + $0x134] sm:$0x1]
  %v1519 = vld [vmem:[%s1430 + $0x140] sm:$0x1]
  %v1520 = vld [vmem:[%s1430 + $0x14c] sm:$0x1]
  %v1521 = vld [vmem:[%s1430 + $0x158] sm:$0x1]
  %v1522 = vld [vmem:[%s1430 + $0x164] sm:$0x1]
  %v1523 = vld [vmem:[%s1430 + $0x170] sm:$0x1]
  %v1524 = vld [vmem:[%s1430 + $0x17c] sm:$0x1]
  %v1525 = vld [vmem:[%s1430 + $0x188] sm:$0x1]
  %v1526 = vld [vmem:[%s1430 + $0x194] sm:$0x1]
  %v1527 = vld [vmem:[%s1430] sm:$0xe]
  %v1528 = vld [vmem:[%s1430 + $0xc] sm:$0xe]
  %v1529 = vld [vmem:[%s1430 + $0x18] sm:$0xe]
  %v1530 = vld [vmem:[%s1430 + $0x24] sm:$0xe]
  %v1531 = vld [vmem:[%s1430 + $0x30] sm:$0xe]
  %v1532 = vld [vmem:[%s1430 + $0x3c] sm:$0xe]
  %v1533 = vld [vmem:[%s1430 + $0x48] sm:$0xe]
  %v1534 = vld [vmem:[%s1430 + $0x54] sm:$0xe]
  %v1535 = vld [vmem:[%s1430 + $0x60] sm:$0xe]
  %v1536 = vld [vmem:[%s1430 + $0x6c] sm:$0xe]
  %v1537 = vld [vmem:[%s1430 + $0x78] sm:$0xe]
  %v1538 = vld [vmem:[%s1430 + $0x84] sm:$0xe]
  %v1539 = vld [vmem:[%s1430 + $0x90] sm:$0xe]
  %v1540 = vld [vmem:[%s1430 + $0x9c] sm:$0xe]
  %v1541 = vld [vmem:[%s1430 + $0xa8] sm:$0xe]
  %v1542 = vld [vmem:[%s1430 + $0xb4] sm:$0xe]
  %v1543 = vld [vmem:[%s1430 + $0xd8] sm:$0xe]
  %v1544 = vld [vmem:[%s1430 + $0xe4] sm:$0xe]
  %v1545 = vld [vmem:[%s1430 + $0xf0] sm:$0xe]
  %v1546 = vld [vmem:[%s1430 + $0xfc] sm:$0xe]
  %v1547 = vld [vmem:[%s1430 + $0x108] sm:$0xe]
  %v1548 = vld [vmem:[%s1430 + $0x114] sm:$0xe]
  %v1549 = vld [vmem:[%s1430 + $0x120] sm:$0xe]
  %v1550 = vld [vmem:[%s1430 + $0x12c] sm:$0xe]
  %v1551 = vld [vmem:[%s1430 + $0x138] sm:$0xe]
  %v1552 = vld [vmem:[%s1430 + $0x144] sm:$0xe]
  %v1553 = vld [vmem:[%s1430 + $0x150] sm:$0xe]
  %v1554 = vld [vmem:[%s1430 + $0x15c] sm:$0xe]
  %v1555 = vld [vmem:[%s1430 + $0x168] sm:$0xe]
  %v1556 = vld [vmem:[%s1430 + $0x174] sm:$0xe]
  %v1557 = vld [vmem:[%s1430 + $0x180] sm:$0xe]
  %v1558 = vld [vmem:[%s1430 + $0x18c] sm:$0xe]
  %v1623 = vunpack.c.l.b16 %v1174
  %v1624 = vunpack.c.l.b16 %v1175
  %v1625 = vunpack.c.l.b16 %v1176
  %v1626 = vunpack.c.l.b16 %v1177
  %v1627 = vunpack.c.l.b16 %v1178
  %v1628 = vunpack.c.l.b16 %v1179
  %v1629 = vunpack.c.l.b16 %v1180
  %v1630 = vunpack.c.l.b16 %v1181
  %v1631 = vunpack.c.l.b16 %v1182
  %v1632 = vunpack.c.l.b16 %v1183
  %v1633 = vunpack.c.l.b16 %v1184
  %v1634 = vunpack.c.l.b16 %v1185
  %v1635 = vunpack.c.l.b16 %v1186
  %v1636 = vunpack.c.l.b16 %v1187
  %v1637 = vunpack.c.l.b16 %v1188
  %v1638 = vunpack.c.l.b16 %v1189
  %v1639 = vunpack.c.l.b16 %v1190
  %v1640 = vunpack.c.l.b16 %v1191
  %v1641 = vunpack.c.l.b16 %v1192
  %v1642 = vunpack.c.l.b16 %v1193
  %v1643 = vunpack.c.l.b16 %v1194
  %v1644 = vunpack.c.l.b16 %v1195
  %v1645 = vunpack.c.l.b16 %v1196
  %v1646 = vunpack.c.l.b16 %v1197
  %v1647 = vunpack.c.l.b16 %v1198
  %v1648 = vunpack.c.l.b16 %v1199
  %v1649 = vunpack.c.l.b16 %v1200
  %v1650 = vunpack.c.l.b16 %v1201
  %v1651 = vunpack.c.l.b16 %v1202
  %v1652 = vunpack.c.l.b16 %v1203
  %v1653 = vunpack.c.l.b16 %v1204
  %v1654 = vunpack.c.l.b16 %v1205
  %v1655 = vunpack.c.l.b16 %v1206
  %v1656 = vunpack.c.l.b16 %v1207
  %v1657 = vunpack.c.l.b16 %v1208
  %v1658 = vunpack.c.l.b16 %v1209
  %v1659 = vunpack.c.l.b16 %v1210
  %v1660 = vunpack.c.l.b16 %v1211
  %v1661 = vunpack.c.l.b16 %v1212
  %v1662 = vunpack.c.l.b16 %v1213
  %v1663 = vunpack.c.l.b16 %v1214
  %v1664 = vunpack.c.l.b16 %v1215
  %v1665 = vunpack.c.l.b16 %v1216
  %v1666 = vunpack.c.l.b16 %v1217
  %v1667 = vunpack.c.l.b16 %v1218
  %v1668 = vunpack.c.l.b16 %v1219
  %v1669 = vunpack.c.l.b16 %v1220
  %v1670 = vunpack.c.l.b16 %v1221
  %v1671 = vunpack.c.l.b16 %v1222
  %v1672 = vunpack.c.l.b16 %v1223
  %v1673 = vunpack.c.l.b16 %v1224
  %v1674 = vunpack.c.l.b16 %v1225
  %v1675 = vunpack.c.l.b16 %v1226
  %v1676 = vunpack.c.l.b16 %v1227
  %v1677 = vunpack.c.l.b16 %v1228
  %v1678 = vunpack.c.l.b16 %v1229
  %v1679 = vunpack.c.l.b16 %v1230
  %v1680 = vunpack.c.l.b16 %v1231
  %v1681 = vunpack.c.l.b16 %v1232
  %v1682 = vunpack.c.l.b16 %v1233
  %v1683 = vunpack.c.l.b16 %v1234
  %v1684 = vunpack.c.l.b16 %v1235
  %v1685 = vunpack.c.l.b16 %v1236
  %v1686 = vunpack.c.l.b16 %v1237
  %v1687 = vpack.c.b16 %v1624, %v1623
  %v1688 = vpack.c.b16 %v1626, %v1625
  %v1689 = vpack.c.b16 %v1628, %v1627
  %v1690 = vpack.c.b16 %v1630, %v1629
  %v1691 = vpack.c.b16 %v1632, %v1631
  %v1692 = vpack.c.b16 %v1634, %v1633
  %v1693 = vpack.c.b16 %v1636, %v1635
  %v1694 = vpack.c.b16 %v1638, %v1637
  %v1695 = vpack.c.b16 %v1640, %v1639
  %v1696 = vpack.c.b16 %v1642, %v1641
  %v1697 = vpack.c.b16 %v1644, %v1643
  %v1698 = vpack.c.b16 %v1646, %v1645
  %v1699 = vpack.c.b16 %v1648, %v1647
  %v1700 = vpack.c.b16 %v1650, %v1649
  %v1701 = vpack.c.b16 %v1652, %v1651
  %v1702 = vpack.c.b16 %v1654, %v1653
  %v1703 = vpack.c.b16 %v1656, %v1655
  %v1704 = vpack.c.b16 %v1658, %v1657
  %v1705 = vpack.c.b16 %v1660, %v1659
  %v1706 = vpack.c.b16 %v1662, %v1661
  %v1707 = vpack.c.b16 %v1664, %v1663
  %v1708 = vpack.c.b16 %v1666, %v1665
  %v1709 = vpack.c.b16 %v1668, %v1667
  %v1710 = vpack.c.b16 %v1670, %v1669
  %v1711 = vpack.c.b16 %v1672, %v1671
  %v1712 = vpack.c.b16 %v1674, %v1673
  %v1713 = vpack.c.b16 %v1676, %v1675
  %v1714 = vpack.c.b16 %v1678, %v1677
  %v1715 = vpack.c.b16 %v1680, %v1679
  %v1716 = vpack.c.b16 %v1682, %v1681
  %v1717 = vpack.c.b16 %v1684, %v1683
  %v1718 = vpack.c.b16 %v1686, %v1685
  %v1751 = vunpack.c.l.b16 %v1238
  %v1752 = vunpack.c.l.b16 %v1239
  %v1753 = vunpack.c.l.b16 %v1240
  %v1754 = vunpack.c.l.b16 %v1241
  %v1755 = vunpack.c.l.b16 %v1242
  %v1756 = vunpack.c.l.b16 %v1243
  %v1757 = vunpack.c.l.b16 %v1244
  %v1758 = vunpack.c.l.b16 %v1245
  %v1759 = vunpack.c.l.b16 %v1246
  %v1760 = vunpack.c.l.b16 %v1247
  %v1761 = vunpack.c.l.b16 %v1248
  %v1762 = vunpack.c.l.b16 %v1249
  %v1763 = vunpack.c.l.b16 %v1250
  %v1764 = vunpack.c.l.b16 %v1251
  %v1765 = vunpack.c.l.b16 %v1252
  %v1766 = vunpack.c.l.b16 %v1253
  %v1767 = vunpack.c.l.b16 %v1254
  %v1768 = vunpack.c.l.b16 %v1255
  %v1769 = vunpack.c.l.b16 %v1256
  %v1770 = vunpack.c.l.b16 %v1257
  %v1771 = vunpack.c.l.b16 %v1258
  %v1772 = vunpack.c.l.b16 %v1259
  %v1773 = vunpack.c.l.b16 %v1260
  %v1774 = vunpack.c.l.b16 %v1261
  %v1775 = vunpack.c.l.b16 %v1262
  %v1776 = vunpack.c.l.b16 %v1263
  %v1777 = vunpack.c.l.b16 %v1264
  %v1778 = vunpack.c.l.b16 %v1265
  %v1779 = vunpack.c.l.b16 %v1266
  %v1780 = vunpack.c.l.b16 %v1267
  %v1781 = vunpack.c.l.b16 %v1268
  %v1782 = vunpack.c.l.b16 %v1269
  %v1783 = vpack.c.b16 %v1751, %v1751
  %v1784 = vpack.c.b16 %v1752, %v1752
  %v1785 = vpack.c.b16 %v1753, %v1753
  %v1786 = vpack.c.b16 %v1754, %v1754
  %v1787 = vpack.c.b16 %v1755, %v1755
  %v1788 = vpack.c.b16 %v1756, %v1756
  %v1789 = vpack.c.b16 %v1757, %v1757
  %v1790 = vpack.c.b16 %v1758, %v1758
  %v1791 = vpack.c.b16 %v1759, %v1759
  %v1792 = vpack.c.b16 %v1760, %v1760
  %v1793 = vpack.c.b16 %v1761, %v1761
  %v1794 = vpack.c.b16 %v1762, %v1762
  %v1795 = vpack.c.b16 %v1763, %v1763
  %v1796 = vpack.c.b16 %v1764, %v1764
  %v1797 = vpack.c.b16 %v1765, %v1765
  %v1798 = vpack.c.b16 %v1766, %v1766
  %v1799 = vpack.c.b16 %v1767, %v1767
  %v1800 = vpack.c.b16 %v1768, %v1768
  %v1801 = vpack.c.b16 %v1769, %v1769
  %v1802 = vpack.c.b16 %v1770, %v1770
  %v1803 = vpack.c.b16 %v1771, %v1771
  %v1804 = vpack.c.b16 %v1772, %v1772
  %v1805 = vpack.c.b16 %v1773, %v1773
  %v1806 = vpack.c.b16 %v1774, %v1774
  %v1807 = vpack.c.b16 %v1775, %v1775
  %v1808 = vpack.c.b16 %v1776, %v1776
  %v1809 = vpack.c.b16 %v1777, %v1777
  %v1810 = vpack.c.b16 %v1778, %v1778
  %v1811 = vpack.c.b16 %v1779, %v1779
  %v1812 = vpack.c.b16 %v1780, %v1780
  %v1813 = vpack.c.b16 %v1781, %v1781
  %v1814 = vpack.c.b16 %v1782, %v1782
  %vm1815 = vsmask.f32 7424
  %v1817 = vshrl.u32 %v1687, 16
  %v1819 = vshll.u32 %v1687, 16
  %v1821 = vrot.slane %v1819, 1
  %v1822 = vor.u32 %v1817, %v1821
  %v1824 = vshll.u32 %v1783, 16
  %v1826 = vrot.slane %v1824, 1
  %v1827 = vsel %vm1815, %v1822, %v1826
  %v1829 = vshrl.u32 %v1688, 16
  %v1831 = vshll.u32 %v1688, 16
  %v1833 = vrot.slane %v1831, 1
  %v1834 = vor.u32 %v1829, %v1833
  %v1836 = vshll.u32 %v1784, 16
  %v1838 = vrot.slane %v1836, 1
  %v1839 = vsel %vm1815, %v1834, %v1838
  %v1841 = vshrl.u32 %v1689, 16
  %v1843 = vshll.u32 %v1689, 16
  %v1845 = vrot.slane %v1843, 1
  %v1846 = vor.u32 %v1841, %v1845
  %v1848 = vshll.u32 %v1785, 16
  %v1850 = vrot.slane %v1848, 1
  %v1851 = vsel %vm1815, %v1846, %v1850
  %v1853 = vshrl.u32 %v1690, 16
  %v1855 = vshll.u32 %v1690, 16
  %v1857 = vrot.slane %v1855, 1
  %v1858 = vor.u32 %v1853, %v1857
  %v1860 = vshll.u32 %v1786, 16
  %v1862 = vrot.slane %v1860, 1
  %v1863 = vsel %vm1815, %v1858, %v1862
  %v1865 = vshrl.u32 %v1691, 16
  %v1867 = vshll.u32 %v1691, 16
  %v1869 = vrot.slane %v1867, 1
  %v1870 = vor.u32 %v1865, %v1869
  %v1872 = vshll.u32 %v1787, 16
  %v1874 = vrot.slane %v1872, 1
  %v1875 = vsel %vm1815, %v1870, %v1874
  %v1877 = vshrl.u32 %v1692, 16
  %v1879 = vshll.u32 %v1692, 16
  %v1881 = vrot.slane %v1879, 1
  %v1882 = vor.u32 %v1877, %v1881
  %v1884 = vshll.u32 %v1788, 16
  %v1886 = vrot.slane %v1884, 1
  %v1887 = vsel %vm1815, %v1882, %v1886
  %v1889 = vshrl.u32 %v1693, 16
  %v1891 = vshll.u32 %v1693, 16
  %v1893 = vrot.slane %v1891, 1
  %v1894 = vor.u32 %v1889, %v1893
  %v1896 = vshll.u32 %v1789, 16
  %v1898 = vrot.slane %v1896, 1
  %v1899 = vsel %vm1815, %v1894, %v1898
  %v1901 = vshrl.u32 %v1694, 16
  %v1903 = vshll.u32 %v1694, 16
  %v1905 = vrot.slane %v1903, 1
  %v1906 = vor.u32 %v1901, %v1905
  %v1908 = vshll.u32 %v1790, 16
  %v1910 = vrot.slane %v1908, 1
  %v1911 = vsel %vm1815, %v1906, %v1910
  %v1913 = vshrl.u32 %v1695, 16
  %v1915 = vshll.u32 %v1695, 16
  %v1917 = vrot.slane %v1915, 1
  %v1918 = vor.u32 %v1913, %v1917
  %v1920 = vshll.u32 %v1791, 16
  %v1922 = vrot.slane %v1920, 1
  %v1923 = vsel %vm1815, %v1918, %v1922
  %v1925 = vshrl.u32 %v1696, 16
  %v1927 = vshll.u32 %v1696, 16
  %v1929 = vrot.slane %v1927, 1
  %v1930 = vor.u32 %v1925, %v1929
  %v1932 = vshll.u32 %v1792, 16
  %v1934 = vrot.slane %v1932, 1
  %v1935 = vsel %vm1815, %v1930, %v1934
  %v1937 = vshrl.u32 %v1697, 16
  %v1939 = vshll.u32 %v1697, 16
  %v1941 = vrot.slane %v1939, 1
  %v1942 = vor.u32 %v1937, %v1941
  %v1944 = vshll.u32 %v1793, 16
  %v1946 = vrot.slane %v1944, 1
  %v1947 = vsel %vm1815, %v1942, %v1946
  %v1949 = vshrl.u32 %v1698, 16
  %v1951 = vshll.u32 %v1698, 16
  %v1953 = vrot.slane %v1951, 1
  %v1954 = vor.u32 %v1949, %v1953
  %v1956 = vshll.u32 %v1794, 16
  %v1958 = vrot.slane %v1956, 1
  %v1959 = vsel %vm1815, %v1954, %v1958
  %v1961 = vshrl.u32 %v1699, 16
  %v1963 = vshll.u32 %v1699, 16
  %v1965 = vrot.slane %v1963, 1
  %v1966 = vor.u32 %v1961, %v1965
  %v1968 = vshll.u32 %v1795, 16
  %v1970 = vrot.slane %v1968, 1
  %v1971 = vsel %vm1815, %v1966, %v1970
  %v1973 = vshrl.u32 %v1700, 16
  %v1975 = vshll.u32 %v1700, 16
  %v1977 = vrot.slane %v1975, 1
  %v1978 = vor.u32 %v1973, %v1977
  %v1980 = vshll.u32 %v1796, 16
  %v1982 = vrot.slane %v1980, 1
  %v1983 = vsel %vm1815, %v1978, %v1982
  %v1985 = vshrl.u32 %v1701, 16
  %v1987 = vshll.u32 %v1701, 16
  %v1989 = vrot.slane %v1987, 1
  %v1990 = vor.u32 %v1985, %v1989
  %v1992 = vshll.u32 %v1797, 16
  %v1994 = vrot.slane %v1992, 1
  %v1995 = vsel %vm1815, %v1990, %v1994
  %v1997 = vshrl.u32 %v1702, 16
  %v1999 = vshll.u32 %v1702, 16
  %v2001 = vrot.slane %v1999, 1
  %v2002 = vor.u32 %v1997, %v2001
  %v2004 = vshll.u32 %v1798, 16
  %v2006 = vrot.slane %v2004, 1
  %v2007 = vsel %vm1815, %v2002, %v2006
  %v2009 = vshrl.u32 %v1703, 16
  %v2011 = vshll.u32 %v1703, 16
  %v2013 = vrot.slane %v2011, 1
  %v2014 = vor.u32 %v2009, %v2013
  %v2016 = vshll.u32 %v1799, 16
  %v2018 = vrot.slane %v2016, 1
  %v2019 = vsel %vm1815, %v2014, %v2018
  %v2021 = vshrl.u32 %v1704, 16
  %v2023 = vshll.u32 %v1704, 16
  %v2025 = vrot.slane %v2023, 1
  %v2026 = vor.u32 %v2021, %v2025
  %v2028 = vshll.u32 %v1800, 16
  %v2030 = vrot.slane %v2028, 1
  %v2031 = vsel %vm1815, %v2026, %v2030
  %v2033 = vshrl.u32 %v1705, 16
  %v2035 = vshll.u32 %v1705, 16
  %v2037 = vrot.slane %v2035, 1
  %v2038 = vor.u32 %v2033, %v2037
  %v2040 = vshll.u32 %v1801, 16
  %v2042 = vrot.slane %v2040, 1
  %v2043 = vsel %vm1815, %v2038, %v2042
  %v2045 = vshrl.u32 %v1706, 16
  %v2047 = vshll.u32 %v1706, 16
  %v2049 = vrot.slane %v2047, 1
  %v2050 = vor.u32 %v2045, %v2049
  %v2052 = vshll.u32 %v1802, 16
  %v2054 = vrot.slane %v2052, 1
  %v2055 = vsel %vm1815, %v2050, %v2054
  %v2057 = vshrl.u32 %v1707, 16
  %v2059 = vshll.u32 %v1707, 16
  %v2061 = vrot.slane %v2059, 1
  %v2062 = vor.u32 %v2057, %v2061
  %v2064 = vshll.u32 %v1803, 16
  %v2066 = vrot.slane %v2064, 1
  %v2067 = vsel %vm1815, %v2062, %v2066
  %v2069 = vshrl.u32 %v1708, 16
  %v2071 = vshll.u32 %v1708, 16
  %v2073 = vrot.slane %v2071, 1
  %v2074 = vor.u32 %v2069, %v2073
  %v2076 = vshll.u32 %v1804, 16
  %v2078 = vrot.slane %v2076, 1
  %v2079 = vsel %vm1815, %v2074, %v2078
  %v2081 = vshrl.u32 %v1709, 16
  %v2083 = vshll.u32 %v1709, 16
  %v2085 = vrot.slane %v2083, 1
  %v2086 = vor.u32 %v2081, %v2085
  %v2088 = vshll.u32 %v1805, 16
  %v2090 = vrot.slane %v2088, 1
  %v2091 = vsel %vm1815, %v2086, %v2090
  %v2093 = vshrl.u32 %v1710, 16
  %v2095 = vshll.u32 %v1710, 16
  %v2097 = vrot.slane %v2095, 1
  %v2098 = vor.u32 %v2093, %v2097
  %v2100 = vshll.u32 %v1806, 16
  %v2102 = vrot.slane %v2100, 1
  %v2103 = vsel %vm1815, %v2098, %v2102
  %v2105 = vshrl.u32 %v1711, 16
  %v2107 = vshll.u32 %v1711, 16
  %v2109 = vrot.slane %v2107, 1
  %v2110 = vor.u32 %v2105, %v2109
  %v2112 = vshll.u32 %v1807, 16
  %v2114 = vrot.slane %v2112, 1
  %v2115 = vsel %vm1815, %v2110, %v2114
  %v2117 = vshrl.u32 %v1712, 16
  %v2119 = vshll.u32 %v1712, 16
  %v2121 = vrot.slane %v2119, 1
  %v2122 = vor.u32 %v2117, %v2121
  %v2124 = vshll.u32 %v1808, 16
  %v2126 = vrot.slane %v2124, 1
  %v2127 = vsel %vm1815, %v2122, %v2126
  %v2129 = vshrl.u32 %v1713, 16
  %v2131 = vshll.u32 %v1713, 16
  %v2133 = vrot.slane %v2131, 1
  %v2134 = vor.u32 %v2129, %v2133
  %v2136 = vshll.u32 %v1809, 16
  %v2138 = vrot.slane %v2136, 1
  %v2139 = vsel %vm1815, %v2134, %v2138
  %v2141 = vshrl.u32 %v1714, 16
  %v2143 = vshll.u32 %v1714, 16
  %v2145 = vrot.slane %v2143, 1
  %v2146 = vor.u32 %v2141, %v2145
  %v2148 = vshll.u32 %v1810, 16
  %v2150 = vrot.slane %v2148, 1
  %v2151 = vsel %vm1815, %v2146, %v2150
  %v2153 = vshrl.u32 %v1715, 16
  %v2155 = vshll.u32 %v1715, 16
  %v2157 = vrot.slane %v2155, 1
  %v2158 = vor.u32 %v2153, %v2157
  %v2160 = vshll.u32 %v1811, 16
  %v2162 = vrot.slane %v2160, 1
  %v2163 = vsel %vm1815, %v2158, %v2162
  %v2165 = vshrl.u32 %v1716, 16
  %v2167 = vshll.u32 %v1716, 16
  %v2169 = vrot.slane %v2167, 1
  %v2170 = vor.u32 %v2165, %v2169
  %v2172 = vshll.u32 %v1812, 16
  %v2174 = vrot.slane %v2172, 1
  %v2175 = vsel %vm1815, %v2170, %v2174
  %v2177 = vshrl.u32 %v1717, 16
  %v2179 = vshll.u32 %v1717, 16
  %v2181 = vrot.slane %v2179, 1
  %v2182 = vor.u32 %v2177, %v2181
  %v2184 = vshll.u32 %v1813, 16
  %v2186 = vrot.slane %v2184, 1
  %v2187 = vsel %vm1815, %v2182, %v2186
  %v2189 = vshrl.u32 %v1718, 16
  %v2191 = vshll.u32 %v1718, 16
  %v2193 = vrot.slane %v2191, 1
  %v2194 = vor.u32 %v2189, %v2193
  %v2196 = vshll.u32 %v1814, 16
  %v2198 = vrot.slane %v2196, 1
  %v2199 = vsel %vm1815, %v2194, %v2198
  %2200 = vrot.lane.b32.xlu0 %v1827, 4
  %v2201 = vpop.permute.xlu0 %2200
  %2202 = vrot.lane.b32.xlu0 %v1839, 4
  %v2203 = vpop.permute.xlu0 %2202
  %2204 = vrot.lane.b32.xlu0 %v1851, 4
  %v2205 = vpop.permute.xlu0 %2204
  %2206 = vrot.lane.b32.xlu0 %v1863, 4
  %v2207 = vpop.permute.xlu0 %2206
  %2208 = vrot.lane.b32.xlu0 %v1875, 4
  %v2209 = vpop.permute.xlu0 %2208
  %2210 = vrot.lane.b32.xlu0 %v1887, 4
  %v2211 = vpop.permute.xlu0 %2210
  %2212 = vrot.lane.b32.xlu0 %v1899, 4
  %v2213 = vpop.permute.xlu0 %2212
  %2214 = vrot.lane.b32.xlu0 %v1911, 4
  %v2215 = vpop.permute.xlu0 %2214
  %2216 = vrot.lane.b32.xlu0 %v1923, 4
  %v2217 = vpop.permute.xlu0 %2216
  %2218 = vrot.lane.b32.xlu0 %v1935, 4
  %v2219 = vpop.permute.xlu0 %2218
  %2220 = vrot.lane.b32.xlu0 %v1947, 4
  %v2221 = vpop.permute.xlu0 %2220
  %2222 = vrot.lane.b32.xlu0 %v1959, 4
  %v2223 = vpop.permute.xlu0 %2222
  %2224 = vrot.lane.b32.xlu0 %v1971, 4
  %v2225 = vpop.permute.xlu0 %2224
  %2226 = vrot.lane.b32.xlu0 %v1983, 4
  %v2227 = vpop.permute.xlu0 %2226
  %2228 = vrot.lane.b32.xlu0 %v1995, 4
  %v2229 = vpop.permute.xlu0 %2228
  %2230 = vrot.lane.b32.xlu0 %v2007, 4
  %v2231 = vpop.permute.xlu0 %2230
  %2232 = vrot.lane.b32.xlu0 %v2019, 4
  %v2233 = vpop.permute.xlu0 %2232
  %2234 = vrot.lane.b32.xlu0 %v2031, 4
  %v2235 = vpop.permute.xlu0 %2234
  %2236 = vrot.lane.b32.xlu0 %v2043, 4
  %v2237 = vpop.permute.xlu0 %2236
  %2238 = vrot.lane.b32.xlu0 %v2055, 4
  %v2239 = vpop.permute.xlu0 %2238
  %2240 = vrot.lane.b32.xlu0 %v2067, 4
  %v2241 = vpop.permute.xlu0 %2240
  %2242 = vrot.lane.b32.xlu0 %v2079, 4
  %v2243 = vpop.permute.xlu0 %2242
  %2244 = vrot.lane.b32.xlu0 %v2091, 4
  %v2245 = vpop.permute.xlu0 %2244
  %2246 = vrot.lane.b32.xlu0 %v2103, 4
  %v2247 = vpop.permute.xlu0 %2246
  %2248 = vrot.lane.b32.xlu0 %v2115, 4
  %v2249 = vpop.permute.xlu0 %2248
  %2250 = vrot.lane.b32.xlu0 %v2127, 4
  %v2251 = vpop.permute.xlu0 %2250
  %2252 = vrot.lane.b32.xlu0 %v2139, 4
  %v2253 = vpop.permute.xlu0 %2252
  %2254 = vrot.lane.b32.xlu0 %v2151, 4
  %v2255 = vpop.permute.xlu0 %2254
  %2256 = vrot.lane.b32.xlu0 %v2163, 4
  %v2257 = vpop.permute.xlu0 %2256
  %2258 = vrot.lane.b32.xlu0 %v2175, 4
  %v2259 = vpop.permute.xlu0 %2258
  %2260 = vrot.lane.b32.xlu0 %v2187, 4
  %v2261 = vpop.permute.xlu0 %2260
  %2262 = vrot.lane.b32.xlu0 %v2199, 4
  %v2263 = vpop.permute.xlu0 %2262
  %v2296 = vunpack.c.l.b16 %v1270
  %v2297 = vunpack.c.l.b16 %v1271
  %v2298 = vunpack.c.l.b16 %v1272
  %v2299 = vunpack.c.l.b16 %v1273
  %v2300 = vunpack.c.l.b16 %v1274
  %v2301 = vunpack.c.l.b16 %v1275
  %v2302 = vunpack.c.l.b16 %v1276
  %v2303 = vunpack.c.l.b16 %v1277
  %v2304 = vunpack.c.l.b16 %v1278
  %v2305 = vunpack.c.l.b16 %v1279
  %v2306 = vunpack.c.l.b16 %v1280
  %v2307 = vunpack.c.l.b16 %v1281
  %v2308 = vunpack.c.l.b16 %v1282
  %v2309 = vunpack.c.l.b16 %v1283
  %v2310 = vunpack.c.l.b16 %v1284
  %v2311 = vunpack.c.l.b16 %v1285
  %v2312 = vunpack.c.l.b16 %v1286
  %v2313 = vunpack.c.l.b16 %v1287
  %v2314 = vunpack.c.l.b16 %v1288
  %v2315 = vunpack.c.l.b16 %v1289
  %v2316 = vunpack.c.l.b16 %v1290
  %v2317 = vunpack.c.l.b16 %v1291
  %v2318 = vunpack.c.l.b16 %v1292
  %v2319 = vunpack.c.l.b16 %v1293
  %v2320 = vunpack.c.l.b16 %v1294
  %v2321 = vunpack.c.l.b16 %v1295
  %v2322 = vunpack.c.l.b16 %v1296
  %v2323 = vunpack.c.l.b16 %v1297
  %v2324 = vunpack.c.l.b16 %v1298
  %v2325 = vunpack.c.l.b16 %v1299
  %v2326 = vunpack.c.l.b16 %v1300
  %v2327 = vunpack.c.l.b16 %v1301
  %v2328 = vpack.c.b16 %v1624, %v2296
  %v2329 = vpack.c.b16 %v1626, %v2297
  %v2330 = vpack.c.b16 %v1628, %v2298
  %v2331 = vpack.c.b16 %v1630, %v2299
  %v2332 = vpack.c.b16 %v1632, %v2300
  %v2333 = vpack.c.b16 %v1634, %v2301
  %v2334 = vpack.c.b16 %v1636, %v2302
  %v2335 = vpack.c.b16 %v1638, %v2303
  %v2336 = vpack.c.b16 %v1640, %v2304
  %v2337 = vpack.c.b16 %v1642, %v2305
  %v2338 = vpack.c.b16 %v1644, %v2306
  %v2339 = vpack.c.b16 %v1646, %v2307
  %v2340 = vpack.c.b16 %v1648, %v2308
  %v2341 = vpack.c.b16 %v1650, %v2309
  %v2342 = vpack.c.b16 %v1652, %v2310
  %v2343 = vpack.c.b16 %v1654, %v2311
  %v2344 = vpack.c.b16 %v1656, %v2312
  %v2345 = vpack.c.b16 %v1658, %v2313
  %v2346 = vpack.c.b16 %v1660, %v2314
  %v2347 = vpack.c.b16 %v1662, %v2315
  %v2348 = vpack.c.b16 %v1664, %v2316
  %v2349 = vpack.c.b16 %v1666, %v2317
  %v2350 = vpack.c.b16 %v1668, %v2318
  %v2351 = vpack.c.b16 %v1670, %v2319
  %v2352 = vpack.c.b16 %v1672, %v2320
  %v2353 = vpack.c.b16 %v1674, %v2321
  %v2354 = vpack.c.b16 %v1676, %v2322
  %v2355 = vpack.c.b16 %v1678, %v2323
  %v2356 = vpack.c.b16 %v1680, %v2324
  %v2357 = vpack.c.b16 %v1682, %v2325
  %v2358 = vpack.c.b16 %v1684, %v2326
  %v2359 = vpack.c.b16 %v1686, %v2327
  %vm2360 = vcmask 1046528
  %v2361 = vrot.slane %v2328, 1
  %v2362 = vrot.slane %v1783, 1
  %v2363 = vsel %vm2360, %v2361, %v2362
  %v2364 = vrot.slane %v2329, 1
  %v2365 = vrot.slane %v1784, 1
  %v2366 = vsel %vm2360, %v2364, %v2365
  %v2367 = vrot.slane %v2330, 1
  %v2368 = vrot.slane %v1785, 1
  %v2369 = vsel %vm2360, %v2367, %v2368
  %v2370 = vrot.slane %v2331, 1
  %v2371 = vrot.slane %v1786, 1
  %v2372 = vsel %vm2360, %v2370, %v2371
  %v2373 = vrot.slane %v2332, 1
  %v2374 = vrot.slane %v1787, 1
  %v2375 = vsel %vm2360, %v2373, %v2374
  %v2376 = vrot.slane %v2333, 1
  %v2377 = vrot.slane %v1788, 1
  %v2378 = vsel %vm2360, %v2376, %v2377
  %v2379 = vrot.slane %v2334, 1
  %v2380 = vrot.slane %v1789, 1
  %v2381 = vsel %vm2360, %v2379, %v2380
  %v2382 = vrot.slane %v2335, 1
  %v2383 = vrot.slane %v1790, 1
  %v2384 = vsel %vm2360, %v2382, %v2383
  %v2385 = vrot.slane %v2336, 1
  %v2386 = vrot.slane %v1791, 1
  %v2387 = vsel %vm2360, %v2385, %v2386
  %v2388 = vrot.slane %v2337, 1
  %v2389 = vrot.slane %v1792, 1
  %v2390 = vsel %vm2360, %v2388, %v2389
  %v2391 = vrot.slane %v2338, 1
  %v2392 = vrot.slane %v1793, 1
  %v2393 = vsel %vm2360, %v2391, %v2392
  %v2394 = vrot.slane %v2339, 1
  %v2395 = vrot.slane %v1794, 1
  %v2396 = vsel %vm2360, %v2394, %v2395
  %v2397 = vrot.slane %v2340, 1
  %v2398 = vrot.slane %v1795, 1
  %v2399 = vsel %vm2360, %v2397, %v2398
  %v2400 = vrot.slane %v2341, 1
  %v2401 = vrot.slane %v1796, 1
  %v2402 = vsel %vm2360, %v2400, %v2401
  %v2403 = vrot.slane %v2342, 1
  %v2404 = vrot.slane %v1797, 1
  %v2405 = vsel %vm2360, %v2403, %v2404
  %v2406 = vrot.slane %v2343, 1
  %v2407 = vrot.slane %v1798, 1
  %v2408 = vsel %vm2360, %v2406, %v2407
  %v2409 = vrot.slane %v2344, 1
  %v2410 = vrot.slane %v1799, 1
  %v2411 = vsel %vm2360, %v2409, %v2410
  %v2412 = vrot.slane %v2345, 1
  %v2413 = vrot.slane %v1800, 1
  %v2414 = vsel %vm2360, %v2412, %v2413
  %v2415 = vrot.slane %v2346, 1
  %v2416 = vrot.slane %v1801, 1
  %v2417 = vsel %vm2360, %v2415, %v2416
  %v2418 = vrot.slane %v2347, 1
  %v2419 = vrot.slane %v1802, 1
  %v2420 = vsel %vm2360, %v2418, %v2419
  %v2421 = vrot.slane %v2348, 1
  %v2422 = vrot.slane %v1803, 1
  %v2423 = vsel %vm2360, %v2421, %v2422
  %v2424 = vrot.slane %v2349, 1
  %v2425 = vrot.slane %v1804, 1
  %v2426 = vsel %vm2360, %v2424, %v2425
  %v2427 = vrot.slane %v2350, 1
  %v2428 = vrot.slane %v1805, 1
  %v2429 = vsel %vm2360, %v2427, %v2428
  %v2430 = vrot.slane %v2351, 1
  %v2431 = vrot.slane %v1806, 1
  %v2432 = vsel %vm2360, %v2430, %v2431
  %v2433 = vrot.slane %v2352, 1
  %v2434 = vrot.slane %v1807, 1
  %v2435 = vsel %vm2360, %v2433, %v2434
  %v2436 = vrot.slane %v2353, 1
  %v2437 = vrot.slane %v1808, 1
  %v2438 = vsel %vm2360, %v2436, %v2437
  %v2439 = vrot.slane %v2354, 1
  %v2440 = vrot.slane %v1809, 1
  %v2441 = vsel %vm2360, %v2439, %v2440
  %v2442 = vrot.slane %v2355, 1
  %v2443 = vrot.slane %v1810, 1
  %v2444 = vsel %vm2360, %v2442, %v2443
  %v2445 = vrot.slane %v2356, 1
  %v2446 = vrot.slane %v1811, 1
  %v2447 = vsel %vm2360, %v2445, %v2446
  %v2448 = vrot.slane %v2357, 1
  %v2449 = vrot.slane %v1812, 1
  %v2450 = vsel %vm2360, %v2448, %v2449
  %v2451 = vrot.slane %v2358, 1
  %v2452 = vrot.slane %v1813, 1
  %v2453 = vsel %vm2360, %v2451, %v2452
  %v2454 = vrot.slane %v2359, 1
  %v2455 = vrot.slane %v1814, 1
  %v2456 = vsel %vm2360, %v2454, %v2455
  %2457 = vrot.lane.b32.xlu0 %v2363, 8
  %v2458 = vpop.permute.xlu0 %2457
  %2459 = vrot.lane.b32.xlu0 %v2366, 8
  %v2460 = vpop.permute.xlu0 %2459
  %2461 = vrot.lane.b32.xlu0 %v2369, 8
  %v2462 = vpop.permute.xlu0 %2461
  %2463 = vrot.lane.b32.xlu0 %v2372, 8
  %v2464 = vpop.permute.xlu0 %2463
  %2465 = vrot.lane.b32.xlu0 %v2375, 8
  %v2466 = vpop.permute.xlu0 %2465
  %2467 = vrot.lane.b32.xlu0 %v2378, 8
  %v2468 = vpop.permute.xlu0 %2467
  %2469 = vrot.lane.b32.xlu0 %v2381, 8
  %v2470 = vpop.permute.xlu0 %2469
  %2471 = vrot.lane.b32.xlu0 %v2384, 8
  %v2472 = vpop.permute.xlu0 %2471
  %2473 = vrot.lane.b32.xlu0 %v2387, 8
  %v2474 = vpop.permute.xlu0 %2473
  %2475 = vrot.lane.b32.xlu0 %v2390, 8
  %v2476 = vpop.permute.xlu0 %2475
  %2477 = vrot.lane.b32.xlu0 %v2393, 8
  %v2478 = vpop.permute.xlu0 %2477
  %2479 = vrot.lane.b32.xlu0 %v2396, 8
  %v2480 = vpop.permute.xlu0 %2479
  %2481 = vrot.lane.b32.xlu0 %v2399, 8
  %v2482 = vpop.permute.xlu0 %2481
  %2483 = vrot.lane.b32.xlu0 %v2402, 8
  %v2484 = vpop.permute.xlu0 %2483
  %2485 = vrot.lane.b32.xlu0 %v2405, 8
  %v2486 = vpop.permute.xlu0 %2485
  %2487 = vrot.lane.b32.xlu0 %v2408, 8
  %v2488 = vpop.permute.xlu0 %2487
  %2489 = vrot.lane.b32.xlu0 %v2411, 8
  %v2490 = vpop.permute.xlu0 %2489
  %2491 = vrot.lane.b32.xlu0 %v2414, 8
  %v2492 = vpop.permute.xlu0 %2491
  %2493 = vrot.lane.b32.xlu0 %v2417, 8
  %v2494 = vpop.permute.xlu0 %2493
  %2495 = vrot.lane.b32.xlu0 %v2420, 8
  %v2496 = vpop.permute.xlu0 %2495
  %2497 = vrot.lane.b32.xlu0 %v2423, 8
  %v2498 = vpop.permute.xlu0 %2497
  %2499 = vrot.lane.b32.xlu0 %v2426, 8
  %v2500 = vpop.permute.xlu0 %2499
  %2501 = vrot.lane.b32.xlu0 %v2429, 8
  %v2502 = vpop.permute.xlu0 %2501
  %2503 = vrot.lane.b32.xlu0 %v2432, 8
  %v2504 = vpop.permute.xlu0 %2503
  %2505 = vrot.lane.b32.xlu0 %v2435, 8
  %v2506 = vpop.permute.xlu0 %2505
  %2507 = vrot.lane.b32.xlu0 %v2438, 8
  %v2508 = vpop.permute.xlu0 %2507
  %2509 = vrot.lane.b32.xlu0 %v2441, 8
  %v2510 = vpop.permute.xlu0 %2509
  %2511 = vrot.lane.b32.xlu0 %v2444, 8
  %v2512 = vpop.permute.xlu0 %2511
  %2513 = vrot.lane.b32.xlu0 %v2447, 8
  %v2514 = vpop.permute.xlu0 %2513
  %2515 = vrot.lane.b32.xlu0 %v2450, 8
  %v2516 = vpop.permute.xlu0 %2515
  %2517 = vrot.lane.b32.xlu0 %v2453, 8
  %v2518 = vpop.permute.xlu0 %2517
  %2519 = vrot.lane.b32.xlu0 %v2456, 8
  %v2520 = vpop.permute.xlu0 %2519
  %v2585 = vunpack.c.l.b16 %v1302
  %v2586 = vunpack.c.l.b16 %v1303
  %v2587 = vunpack.c.l.b16 %v1304
  %v2588 = vunpack.c.l.b16 %v1305
  %v2589 = vunpack.c.l.b16 %v1306
  %v2590 = vunpack.c.l.b16 %v1307
  %v2591 = vunpack.c.l.b16 %v1308
  %v2592 = vunpack.c.l.b16 %v1309
  %v2593 = vunpack.c.l.b16 %v1310
  %v2594 = vunpack.c.l.b16 %v1311
  %v2595 = vunpack.c.l.b16 %v1312
  %v2596 = vunpack.c.l.b16 %v1313
  %v2597 = vunpack.c.l.b16 %v1314
  %v2598 = vunpack.c.l.b16 %v1315
  %v2599 = vunpack.c.l.b16 %v1316
  %v2600 = vunpack.c.l.b16 %v1317
  %v2601 = vunpack.c.l.b16 %v1318
  %v2602 = vunpack.c.l.b16 %v1319
  %v2603 = vunpack.c.l.b16 %v1320
  %v2604 = vunpack.c.l.b16 %v1321
  %v2605 = vunpack.c.l.b16 %v1322
  %v2606 = vunpack.c.l.b16 %v1323
  %v2607 = vunpack.c.l.b16 %v1324
  %v2608 = vunpack.c.l.b16 %v1325
  %v2609 = vunpack.c.l.b16 %v1326
  %v2610 = vunpack.c.l.b16 %v1327
  %v2611 = vunpack.c.l.b16 %v1328
  %v2612 = vunpack.c.l.b16 %v1329
  %v2613 = vunpack.c.l.b16 %v1330
  %v2614 = vunpack.c.l.b16 %v1331
  %v2615 = vunpack.c.l.b16 %v1332
  %v2616 = vunpack.c.l.b16 %v1333
  %v2617 = vunpack.c.l.b16 %v1334
  %v2618 = vunpack.c.l.b16 %v1335
  %v2619 = vunpack.c.l.b16 %v1336
  %v2620 = vunpack.c.l.b16 %v1337
  %v2621 = vunpack.c.l.b16 %v1338
  %v2622 = vunpack.c.l.b16 %v1339
  %v2623 = vunpack.c.l.b16 %v1340
  %v2624 = vunpack.c.l.b16 %v1341
  %v2625 = vunpack.c.l.b16 %v1342
  %v2626 = vunpack.c.l.b16 %v1343
  %v2627 = vunpack.c.l.b16 %v1344
  %v2628 = vunpack.c.l.b16 %v1345
  %v2629 = vunpack.c.l.b16 %v1346
  %v2630 = vunpack.c.l.b16 %v1347
  %v2631 = vunpack.c.l.b16 %v1348
  %v2632 = vunpack.c.l.b16 %v1349
  %v2633 = vunpack.c.l.b16 %v1350
  %v2634 = vunpack.c.l.b16 %v1351
  %v2635 = vunpack.c.l.b16 %v1352
  %v2636 = vunpack.c.l.b16 %v1353
  %v2637 = vunpack.c.l.b16 %v1354
  %v2638 = vunpack.c.l.b16 %v1355
  %v2639 = vunpack.c.l.b16 %v1356
  %v2640 = vunpack.c.l.b16 %v1357
  %v2641 = vunpack.c.l.b16 %v1358
  %v2642 = vunpack.c.l.b16 %v1359
  %v2643 = vunpack.c.l.b16 %v1360
  %v2644 = vunpack.c.l.b16 %v1361
  %v2645 = vunpack.c.l.b16 %v1362
  %v2646 = vunpack.c.l.b16 %v1363
  %v2647 = vunpack.c.l.b16 %v1364
  %v2648 = vunpack.c.l.b16 %v1365
  %v2649 = vpack.c.b16 %v2586, %v2585
  %v2650 = vpack.c.b16 %v2588, %v2587
  %v2651 = vpack.c.b16 %v2590, %v2589
  %v2652 = vpack.c.b16 %v2592, %v2591
  %v2653 = vpack.c.b16 %v2594, %v2593
  %v2654 = vpack.c.b16 %v2596, %v2595
  %v2655 = vpack.c.b16 %v2598, %v2597
  %v2656 = vpack.c.b16 %v2600, %v2599
  %v2657 = vpack.c.b16 %v2602, %v2601
  %v2658 = vpack.c.b16 %v2604, %v2603
  %v2659 = vpack.c.b16 %v2606, %v2605
  %v2660 = vpack.c.b16 %v2608, %v2607
  %v2661 = vpack.c.b16 %v2610, %v2609
  %v2662 = vpack.c.b16 %v2612, %v2611
  %v2663 = vpack.c.b16 %v2614, %v2613
  %v2664 = vpack.c.b16 %v2616, %v2615
  %v2665 = vpack.c.b16 %v2618, %v2617
  %v2666 = vpack.c.b16 %v2620, %v2619
  %v2667 = vpack.c.b16 %v2622, %v2621
  %v2668 = vpack.c.b16 %v2624, %v2623
  %v2669 = vpack.c.b16 %v2626, %v2625
  %v2670 = vpack.c.b16 %v2628, %v2627
  %v2671 = vpack.c.b16 %v2630, %v2629
  %v2672 = vpack.c.b16 %v2632, %v2631
  %v2673 = vpack.c.b16 %v2634, %v2633
  %v2674 = vpack.c.b16 %v2636, %v2635
  %v2675 = vpack.c.b16 %v2638, %v2637
  %v2676 = vpack.c.b16 %v2640, %v2639
  %v2677 = vpack.c.b16 %v2642, %v2641
  %v2678 = vpack.c.b16 %v2644, %v2643
  %v2679 = vpack.c.b16 %v2646, %v2645
  %v2680 = vpack.c.b16 %v2648, %v2647
  %2681 = vrot.lane.b32.xlu0 %v2649, 12
  %v2682 = vpop.permute.xlu0 %2681
  %2683 = vrot.lane.b32.xlu0 %v2650, 12
  %v2684 = vpop.permute.xlu0 %2683
  %2685 = vrot.lane.b32.xlu0 %v2651, 12
  %v2686 = vpop.permute.xlu0 %2685
  %2687 = vrot.lane.b32.xlu0 %v2652, 12
  %v2688 = vpop.permute.xlu0 %2687
  %2689 = vrot.lane.b32.xlu0 %v2653, 12
  %v2690 = vpop.permute.xlu0 %2689
  %2691 = vrot.lane.b32.xlu0 %v2654, 12
  %v2692 = vpop.permute.xlu0 %2691
  %2693 = vrot.lane.b32.xlu0 %v2655, 12
  %v2694 = vpop.permute.xlu0 %2693
  %2695 = vrot.lane.b32.xlu0 %v2656, 12
  %v2696 = vpop.permute.xlu0 %2695
  %2697 = vrot.lane.b32.xlu0 %v2657, 12
  %v2698 = vpop.permute.xlu0 %2697
  %2699 = vrot.lane.b32.xlu0 %v2658, 12
  %v2700 = vpop.permute.xlu0 %2699
  %2701 = vrot.lane.b32.xlu0 %v2659, 12
  %v2702 = vpop.permute.xlu0 %2701
  %2703 = vrot.lane.b32.xlu0 %v2660, 12
  %v2704 = vpop.permute.xlu0 %2703
  %2705 = vrot.lane.b32.xlu0 %v2661, 12
  %v2706 = vpop.permute.xlu0 %2705
  %2707 = vrot.lane.b32.xlu0 %v2662, 12
  %v2708 = vpop.permute.xlu0 %2707
  %2709 = vrot.lane.b32.xlu0 %v2663, 12
  %v2710 = vpop.permute.xlu0 %2709
  %2711 = vrot.lane.b32.xlu0 %v2664, 12
  %v2712 = vpop.permute.xlu0 %2711
  %2713 = vrot.lane.b32.xlu0 %v2665, 12
  %v2714 = vpop.permute.xlu0 %2713
  %2715 = vrot.lane.b32.xlu0 %v2666, 12
  %v2716 = vpop.permute.xlu0 %2715
  %2717 = vrot.lane.b32.xlu0 %v2667, 12
  %v2718 = vpop.permute.xlu0 %2717
  %2719 = vrot.lane.b32.xlu0 %v2668, 12
  %v2720 = vpop.permute.xlu0 %2719
  %2721 = vrot.lane.b32.xlu0 %v2669, 12
  %v2722 = vpop.permute.xlu0 %2721
  %2723 = vrot.lane.b32.xlu0 %v2670, 12
  %v2724 = vpop.permute.xlu0 %2723
  %2725 = vrot.lane.b32.xlu0 %v2671, 12
  %v2726 = vpop.permute.xlu0 %2725
  %2727 = vrot.lane.b32.xlu0 %v2672, 12
  %v2728 = vpop.permute.xlu0 %2727
  %2729 = vrot.lane.b32.xlu0 %v2673, 12
  %v2730 = vpop.permute.xlu0 %2729
  %2731 = vrot.lane.b32.xlu0 %v2674, 12
  %v2732 = vpop.permute.xlu0 %2731
  %2733 = vrot.lane.b32.xlu0 %v2675, 12
  %v2734 = vpop.permute.xlu0 %2733
  %2735 = vrot.lane.b32.xlu0 %v2676, 12
  %v2736 = vpop.permute.xlu0 %2735
  %2737 = vrot.lane.b32.xlu0 %v2677, 12
  %v2738 = vpop.permute.xlu0 %2737
  %2739 = vrot.lane.b32.xlu0 %v2678, 12
  %v2740 = vpop.permute.xlu0 %2739
  %2741 = vrot.lane.b32.xlu0 %v2679, 12
  %v2742 = vpop.permute.xlu0 %2741
  %2743 = vrot.lane.b32.xlu0 %v2680, 12
  %v2744 = vpop.permute.xlu0 %2743
  %v2777 = vunpack.c.l.b16 %v1366
  %v2778 = vunpack.c.l.b16 %v1367
  %v2779 = vunpack.c.l.b16 %v1368
  %v2780 = vunpack.c.l.b16 %v1369
  %v2781 = vunpack.c.l.b16 %v1370
  %v2782 = vunpack.c.l.b16 %v1371
  %v2783 = vunpack.c.l.b16 %v1372
  %v2784 = vunpack.c.l.b16 %v1373
  %v2785 = vunpack.c.l.b16 %v1374
  %v2786 = vunpack.c.l.b16 %v1375
  %v2787 = vunpack.c.l.b16 %v1376
  %v2788 = vunpack.c.l.b16 %v1377
  %v2789 = vunpack.c.l.b16 %v1378
  %v2790 = vunpack.c.l.b16 %v1379
  %v2791 = vunpack.c.l.b16 %v1380
  %v2792 = vunpack.c.l.b16 %v1381
  %v2793 = vunpack.c.l.b16 %v1382
  %v2794 = vunpack.c.l.b16 %v1383
  %v2795 = vunpack.c.l.b16 %v1384
  %v2796 = vunpack.c.l.b16 %v1385
  %v2797 = vunpack.c.l.b16 %v1386
  %v2798 = vunpack.c.l.b16 %v1387
  %v2799 = vunpack.c.l.b16 %v1388
  %v2800 = vunpack.c.l.b16 %v1389
  %v2801 = vunpack.c.l.b16 %v1390
  %v2802 = vunpack.c.l.b16 %v1391
  %v2803 = vunpack.c.l.b16 %v1392
  %v2804 = vunpack.c.l.b16 %v1393
  %v2805 = vunpack.c.l.b16 %v1394
  %v2806 = vunpack.c.l.b16 %v1395
  %v2807 = vunpack.c.l.b16 %v1396
  %v2808 = vunpack.c.l.b16 %v1397
  %v2809 = vpack.c.b16 %v2777, %v2777
  %v2810 = vpack.c.b16 %v2778, %v2778
  %v2811 = vpack.c.b16 %v2779, %v2779
  %v2812 = vpack.c.b16 %v2780, %v2780
  %v2813 = vpack.c.b16 %v2781, %v2781
  %v2814 = vpack.c.b16 %v2782, %v2782
  %v2815 = vpack.c.b16 %v2783, %v2783
  %v2816 = vpack.c.b16 %v2784, %v2784
  %v2817 = vpack.c.b16 %v2785, %v2785
  %v2818 = vpack.c.b16 %v2786, %v2786
  %v2819 = vpack.c.b16 %v2787, %v2787
  %v2820 = vpack.c.b16 %v2788, %v2788
  %v2821 = vpack.c.b16 %v2789, %v2789
  %v2822 = vpack.c.b16 %v2790, %v2790
  %v2823 = vpack.c.b16 %v2791, %v2791
  %v2824 = vpack.c.b16 %v2792, %v2792
  %v2825 = vpack.c.b16 %v2793, %v2793
  %v2826 = vpack.c.b16 %v2794, %v2794
  %v2827 = vpack.c.b16 %v2795, %v2795
  %v2828 = vpack.c.b16 %v2796, %v2796
  %v2829 = vpack.c.b16 %v2797, %v2797
  %v2830 = vpack.c.b16 %v2798, %v2798
  %v2831 = vpack.c.b16 %v2799, %v2799
  %v2832 = vpack.c.b16 %v2800, %v2800
  %v2833 = vpack.c.b16 %v2801, %v2801
  %v2834 = vpack.c.b16 %v2802, %v2802
  %v2835 = vpack.c.b16 %v2803, %v2803
  %v2836 = vpack.c.b16 %v2804, %v2804
  %v2837 = vpack.c.b16 %v2805, %v2805
  %v2838 = vpack.c.b16 %v2806, %v2806
  %v2839 = vpack.c.b16 %v2807, %v2807
  %v2840 = vpack.c.b16 %v2808, %v2808
  %v2842 = vshrl.u32 %v2649, 16
  %v2844 = vshll.u32 %v2649, 16
  %v2846 = vrot.slane %v2844, 1
  %v2847 = vor.u32 %v2842, %v2846
  %v2849 = vshll.u32 %v2809, 16
  %v2851 = vrot.slane %v2849, 1
  %v2852 = vsel %vm1815, %v2847, %v2851
  %v2854 = vshrl.u32 %v2650, 16
  %v2856 = vshll.u32 %v2650, 16
  %v2858 = vrot.slane %v2856, 1
  %v2859 = vor.u32 %v2854, %v2858
  %v2861 = vshll.u32 %v2810, 16
  %v2863 = vrot.slane %v2861, 1
  %v2864 = vsel %vm1815, %v2859, %v2863
  %v2866 = vshrl.u32 %v2651, 16
  %v2868 = vshll.u32 %v2651, 16
  %v2870 = vrot.slane %v2868, 1
  %v2871 = vor.u32 %v2866, %v2870
  %v2873 = vshll.u32 %v2811, 16
  %v2875 = vrot.slane %v2873, 1
  %v2876 = vsel %vm1815, %v2871, %v2875
  %v2878 = vshrl.u32 %v2652, 16
  %v2880 = vshll.u32 %v2652, 16
  %v2882 = vrot.slane %v2880, 1
  %v2883 = vor.u32 %v2878, %v2882
  %v2885 = vshll.u32 %v2812, 16
  %v2887 = vrot.slane %v2885, 1
  %v2888 = vsel %vm1815, %v2883, %v2887
  %v2890 = vshrl.u32 %v2653, 16
  %v2892 = vshll.u32 %v2653, 16
  %v2894 = vrot.slane %v2892, 1
  %v2895 = vor.u32 %v2890, %v2894
  %v2897 = vshll.u32 %v2813, 16
  %v2899 = vrot.slane %v2897, 1
  %v2900 = vsel %vm1815, %v2895, %v2899
  %v2902 = vshrl.u32 %v2654, 16
  %v2904 = vshll.u32 %v2654, 16
  %v2906 = vrot.slane %v2904, 1
  %v2907 = vor.u32 %v2902, %v2906
  %v2909 = vshll.u32 %v2814, 16
  %v2911 = vrot.slane %v2909, 1
  %v2912 = vsel %vm1815, %v2907, %v2911
  %v2914 = vshrl.u32 %v2655, 16
  %v2916 = vshll.u32 %v2655, 16
  %v2918 = vrot.slane %v2916, 1
  %v2919 = vor.u32 %v2914, %v2918
  %v2921 = vshll.u32 %v2815, 16
  %v2923 = vrot.slane %v2921, 1
  %v2924 = vsel %vm1815, %v2919, %v2923
  %v2926 = vshrl.u32 %v2656, 16
  %v2928 = vshll.u32 %v2656, 16
  %v2930 = vrot.slane %v2928, 1
  %v2931 = vor.u32 %v2926, %v2930
  %v2933 = vshll.u32 %v2816, 16
  %v2935 = vrot.slane %v2933, 1
  %v2936 = vsel %vm1815, %v2931, %v2935
  %v2938 = vshrl.u32 %v2657, 16
  %v2940 = vshll.u32 %v2657, 16
  %v2942 = vrot.slane %v2940, 1
  %v2943 = vor.u32 %v2938, %v2942
  %v2945 = vshll.u32 %v2817, 16
  %v2947 = vrot.slane %v2945, 1
  %v2948 = vsel %vm1815, %v2943, %v2947
  %v2950 = vshrl.u32 %v2658, 16
  %v2952 = vshll.u32 %v2658, 16
  %v2954 = vrot.slane %v2952, 1
  %v2955 = vor.u32 %v2950, %v2954
  %v2957 = vshll.u32 %v2818, 16
  %v2959 = vrot.slane %v2957, 1
  %v2960 = vsel %vm1815, %v2955, %v2959
  %v2962 = vshrl.u32 %v2659, 16
  %v2964 = vshll.u32 %v2659, 16
  %v2966 = vrot.slane %v2964, 1
  %v2967 = vor.u32 %v2962, %v2966
  %v2969 = vshll.u32 %v2819, 16
  %v2971 = vrot.slane %v2969, 1
  %v2972 = vsel %vm1815, %v2967, %v2971
  %v2974 = vshrl.u32 %v2660, 16
  %v2976 = vshll.u32 %v2660, 16
  %v2978 = vrot.slane %v2976, 1
  %v2979 = vor.u32 %v2974, %v2978
  %v2981 = vshll.u32 %v2820, 16
  %v2983 = vrot.slane %v2981, 1
  %v2984 = vsel %vm1815, %v2979, %v2983
  %v2986 = vshrl.u32 %v2661, 16
  %v2988 = vshll.u32 %v2661, 16
  %v2990 = vrot.slane %v2988, 1
  %v2991 = vor.u32 %v2986, %v2990
  %v2993 = vshll.u32 %v2821, 16
  %v2995 = vrot.slane %v2993, 1
  %v2996 = vsel %vm1815, %v2991, %v2995
  %v2998 = vshrl.u32 %v2662, 16
  %v3000 = vshll.u32 %v2662, 16
  %v3002 = vrot.slane %v3000, 1
  %v3003 = vor.u32 %v2998, %v3002
  %v3005 = vshll.u32 %v2822, 16
  %v3007 = vrot.slane %v3005, 1
  %v3008 = vsel %vm1815, %v3003, %v3007
  %v3010 = vshrl.u32 %v2663, 16
  %v3012 = vshll.u32 %v2663, 16
  %v3014 = vrot.slane %v3012, 1
  %v3015 = vor.u32 %v3010, %v3014
  %v3017 = vshll.u32 %v2823, 16
  %v3019 = vrot.slane %v3017, 1
  %v3020 = vsel %vm1815, %v3015, %v3019
  %v3022 = vshrl.u32 %v2664, 16
  %v3024 = vshll.u32 %v2664, 16
  %v3026 = vrot.slane %v3024, 1
  %v3027 = vor.u32 %v3022, %v3026
  %v3029 = vshll.u32 %v2824, 16
  %v3031 = vrot.slane %v3029, 1
  %v3032 = vsel %vm1815, %v3027, %v3031
  %v3034 = vshrl.u32 %v2665, 16
  %v3036 = vshll.u32 %v2665, 16
  %v3038 = vrot.slane %v3036, 1
  %v3039 = vor.u32 %v3034, %v3038
  %v3041 = vshll.u32 %v2825, 16
  %v3043 = vrot.slane %v3041, 1
  %v3044 = vsel %vm1815, %v3039, %v3043
  %v3046 = vshrl.u32 %v2666, 16
  %v3048 = vshll.u32 %v2666, 16
  %v3050 = vrot.slane %v3048, 1
  %v3051 = vor.u32 %v3046, %v3050
  %v3053 = vshll.u32 %v2826, 16
  %v3055 = vrot.slane %v3053, 1
  %v3056 = vsel %vm1815, %v3051, %v3055
  %v3058 = vshrl.u32 %v2667, 16
  %v3060 = vshll.u32 %v2667, 16
  %v3062 = vrot.slane %v3060, 1
  %v3063 = vor.u32 %v3058, %v3062
  %v3065 = vshll.u32 %v2827, 16
  %v3067 = vrot.slane %v3065, 1
  %v3068 = vsel %vm1815, %v3063, %v3067
  %v3070 = vshrl.u32 %v2668, 16
  %v3072 = vshll.u32 %v2668, 16
  %v3074 = vrot.slane %v3072, 1
  %v3075 = vor.u32 %v3070, %v3074
  %v3077 = vshll.u32 %v2828, 16
  %v3079 = vrot.slane %v3077, 1
  %v3080 = vsel %vm1815, %v3075, %v3079
  %v3082 = vshrl.u32 %v2669, 16
  %v3084 = vshll.u32 %v2669, 16
  %v3086 = vrot.slane %v3084, 1
  %v3087 = vor.u32 %v3082, %v3086
  %v3089 = vshll.u32 %v2829, 16
  %v3091 = vrot.slane %v3089, 1
  %v3092 = vsel %vm1815, %v3087, %v3091
  %v3094 = vshrl.u32 %v2670, 16
  %v3096 = vshll.u32 %v2670, 16
  %v3098 = vrot.slane %v3096, 1
  %v3099 = vor.u32 %v3094, %v3098
  %v3101 = vshll.u32 %v2830, 16
  %v3103 = vrot.slane %v3101, 1
  %v3104 = vsel %vm1815, %v3099, %v3103
  %v3106 = vshrl.u32 %v2671, 16
  %v3108 = vshll.u32 %v2671, 16
  %v3110 = vrot.slane %v3108, 1
  %v3111 = vor.u32 %v3106, %v3110
  %v3113 = vshll.u32 %v2831, 16
  %v3115 = vrot.slane %v3113, 1
  %v3116 = vsel %vm1815, %v3111, %v3115
  %v3118 = vshrl.u32 %v2672, 16
  %v3120 = vshll.u32 %v2672, 16
  %v3122 = vrot.slane %v3120, 1
  %v3123 = vor.u32 %v3118, %v3122
  %v3125 = vshll.u32 %v2832, 16
  %v3127 = vrot.slane %v3125, 1
  %v3128 = vsel %vm1815, %v3123, %v3127
  %v3130 = vshrl.u32 %v2673, 16
  %v3132 = vshll.u32 %v2673, 16
  %v3134 = vrot.slane %v3132, 1
  %v3135 = vor.u32 %v3130, %v3134
  %v3137 = vshll.u32 %v2833, 16
  %v3139 = vrot.slane %v3137, 1
  %v3140 = vsel %vm1815, %v3135, %v3139
  %v3142 = vshrl.u32 %v2674, 16
  %v3144 = vshll.u32 %v2674, 16
  %v3146 = vrot.slane %v3144, 1
  %v3147 = vor.u32 %v3142, %v3146
  %v3149 = vshll.u32 %v2834, 16
  %v3151 = vrot.slane %v3149, 1
  %v3152 = vsel %vm1815, %v3147, %v3151
  %v3154 = vshrl.u32 %v2675, 16
  %v3156 = vshll.u32 %v2675, 16
  %v3158 = vrot.slane %v3156, 1
  %v3159 = vor.u32 %v3154, %v3158
  %v3161 = vshll.u32 %v2835, 16
  %v3163 = vrot.slane %v3161, 1
  %v3164 = vsel %vm1815, %v3159, %v3163
  %v3166 = vshrl.u32 %v2676, 16
  %v3168 = vshll.u32 %v2676, 16
  %v3170 = vrot.slane %v3168, 1
  %v3171 = vor.u32 %v3166, %v3170
  %v3173 = vshll.u32 %v2836, 16
  %v3175 = vrot.slane %v3173, 1
  %v3176 = vsel %vm1815, %v3171, %v3175
  %v3178 = vshrl.u32 %v2677, 16
  %v3180 = vshll.u32 %v2677, 16
  %v3182 = vrot.slane %v3180, 1
  %v3183 = vor.u32 %v3178, %v3182
  %v3185 = vshll.u32 %v2837, 16
  %v3187 = vrot.slane %v3185, 1
  %v3188 = vsel %vm1815, %v3183, %v3187
  %v3190 = vshrl.u32 %v2678, 16
  %v3192 = vshll.u32 %v2678, 16
  %v3194 = vrot.slane %v3192, 1
  %v3195 = vor.u32 %v3190, %v3194
  %v3197 = vshll.u32 %v2838, 16
  %v3199 = vrot.slane %v3197, 1
  %v3200 = vsel %vm1815, %v3195, %v3199
  %v3202 = vshrl.u32 %v2679, 16
  %v3204 = vshll.u32 %v2679, 16
  %v3206 = vrot.slane %v3204, 1
  %v3207 = vor.u32 %v3202, %v3206
  %v3209 = vshll.u32 %v2839, 16
  %v3211 = vrot.slane %v3209, 1
  %v3212 = vsel %vm1815, %v3207, %v3211
  %v3214 = vshrl.u32 %v2680, 16
  %v3216 = vshll.u32 %v2680, 16
  %v3218 = vrot.slane %v3216, 1
  %v3219 = vor.u32 %v3214, %v3218
  %v3221 = vshll.u32 %v2840, 16
  %v3223 = vrot.slane %v3221, 1
  %v3224 = vsel %vm1815, %v3219, %v3223
  %3225 = vrot.lane.b32.xlu0 %v2852, 16
  %v3226 = vpop.permute.xlu0 %3225
  %3227 = vrot.lane.b32.xlu0 %v2864, 16
  %v3228 = vpop.permute.xlu0 %3227
  %3229 = vrot.lane.b32.xlu0 %v2876, 16
  %v3230 = vpop.permute.xlu0 %3229
  %3231 = vrot.lane.b32.xlu0 %v2888, 16
  %v3232 = vpop.permute.xlu0 %3231
  %3233 = vrot.lane.b32.xlu0 %v2900, 16
  %v3234 = vpop.permute.xlu0 %3233
  %3235 = vrot.lane.b32.xlu0 %v2912, 16
  %v3236 = vpop.permute.xlu0 %3235
  %3237 = vrot.lane.b32.xlu0 %v2924, 16
  %v3238 = vpop.permute.xlu0 %3237
  %3239 = vrot.lane.b32.xlu0 %v2936, 16
  %v3240 = vpop.permute.xlu0 %3239
  %3241 = vrot.lane.b32.xlu0 %v2948, 16
  %v3242 = vpop.permute.xlu0 %3241
  %3243 = vrot.lane.b32.xlu0 %v2960, 16
  %v3244 = vpop.permute.xlu0 %3243
  %3245 = vrot.lane.b32.xlu0 %v2972, 16
  %v3246 = vpop.permute.xlu0 %3245
  %3247 = vrot.lane.b32.xlu0 %v2984, 16
  %v3248 = vpop.permute.xlu0 %3247
  %3249 = vrot.lane.b32.xlu0 %v2996, 16
  %v3250 = vpop.permute.xlu0 %3249
  %3251 = vrot.lane.b32.xlu0 %v3008, 16
  %v3252 = vpop.permute.xlu0 %3251
  %3253 = vrot.lane.b32.xlu0 %v3020, 16
  %v3254 = vpop.permute.xlu0 %3253
  %3255 = vrot.lane.b32.xlu0 %v3032, 16
  %v3256 = vpop.permute.xlu0 %3255
  %3257 = vrot.lane.b32.xlu0 %v3044, 16
  %v3258 = vpop.permute.xlu0 %3257
  %3259 = vrot.lane.b32.xlu0 %v3056, 16
  %v3260 = vpop.permute.xlu0 %3259
  %3261 = vrot.lane.b32.xlu0 %v3068, 16
  %v3262 = vpop.permute.xlu0 %3261
  %3263 = vrot.lane.b32.xlu0 %v3080, 16
  %v3264 = vpop.permute.xlu0 %3263
  %3265 = vrot.lane.b32.xlu0 %v3092, 16
  %v3266 = vpop.permute.xlu0 %3265
  %3267 = vrot.lane.b32.xlu0 %v3104, 16
  %v3268 = vpop.permute.xlu0 %3267
  %3269 = vrot.lane.b32.xlu0 %v3116, 16
  %v3270 = vpop.permute.xlu0 %3269
  %3271 = vrot.lane.b32.xlu0 %v3128, 16
  %v3272 = vpop.permute.xlu0 %3271
  %3273 = vrot.lane.b32.xlu0 %v3140, 16
  %v3274 = vpop.permute.xlu0 %3273
  %3275 = vrot.lane.b32.xlu0 %v3152, 16
  %v3276 = vpop.permute.xlu0 %3275
  %3277 = vrot.lane.b32.xlu0 %v3164, 16
  %v3278 = vpop.permute.xlu0 %3277
  %3279 = vrot.lane.b32.xlu0 %v3176, 16
  %v3280 = vpop.permute.xlu0 %3279
  %3281 = vrot.lane.b32.xlu0 %v3188, 16
  %v3282 = vpop.permute.xlu0 %3281
  %3283 = vrot.lane.b32.xlu0 %v3200, 16
  %v3284 = vpop.permute.xlu0 %3283
  %3285 = vrot.lane.b32.xlu0 %v3212, 16
  %v3286 = vpop.permute.xlu0 %3285
  %3287 = vrot.lane.b32.xlu0 %v3224, 16
  %v3288 = vpop.permute.xlu0 %3287
  %v3321 = vunpack.c.l.b16 %v1398
  %v3322 = vunpack.c.l.b16 %v1399
  %v3323 = vunpack.c.l.b16 %v1400
  %v3324 = vunpack.c.l.b16 %v1401
  %v3325 = vunpack.c.l.b16 %v1402
  %v3326 = vunpack.c.l.b16 %v1403
  %v3327 = vunpack.c.l.b16 %v1404
  %v3328 = vunpack.c.l.b16 %v1405
  %v3329 = vunpack.c.l.b16 %v1406
  %v3330 = vunpack.c.l.b16 %v1407
  %v3331 = vunpack.c.l.b16 %v1408
  %v3332 = vunpack.c.l.b16 %v1409
  %v3333 = vunpack.c.l.b16 %v1410
  %v3334 = vunpack.c.l.b16 %v1411
  %v3335 = vunpack.c.l.b16 %v1412
  %v3336 = vunpack.c.l.b16 %v1413
  %v3337 = vunpack.c.l.b16 %v1414
  %v3338 = vunpack.c.l.b16 %v1415
  %v3339 = vunpack.c.l.b16 %v1416
  %v3340 = vunpack.c.l.b16 %v1417
  %v3341 = vunpack.c.l.b16 %v1418
  %v3342 = vunpack.c.l.b16 %v1419
  %v3343 = vunpack.c.l.b16 %v1420
  %v3344 = vunpack.c.l.b16 %v1421
  %v3345 = vunpack.c.l.b16 %v1422
  %v3346 = vunpack.c.l.b16 %v1423
  %v3347 = vunpack.c.l.b16 %v1424
  %v3348 = vunpack.c.l.b16 %v1425
  %v3349 = vunpack.c.l.b16 %v1426
  %v3350 = vunpack.c.l.b16 %v1427
  %v3351 = vunpack.c.l.b16 %v1428
  %v3352 = vunpack.c.l.b16 %v1429
  %v3353 = vpack.c.b16 %v2586, %v3321
  %v3354 = vpack.c.b16 %v2588, %v3322
  %v3355 = vpack.c.b16 %v2590, %v3323
  %v3356 = vpack.c.b16 %v2592, %v3324
  %v3357 = vpack.c.b16 %v2594, %v3325
  %v3358 = vpack.c.b16 %v2596, %v3326
  %v3359 = vpack.c.b16 %v2598, %v3327
  %v3360 = vpack.c.b16 %v2600, %v3328
  %v3361 = vpack.c.b16 %v2602, %v3329
  %v3362 = vpack.c.b16 %v2604, %v3330
  %v3363 = vpack.c.b16 %v2606, %v3331
  %v3364 = vpack.c.b16 %v2608, %v3332
  %v3365 = vpack.c.b16 %v2610, %v3333
  %v3366 = vpack.c.b16 %v2612, %v3334
  %v3367 = vpack.c.b16 %v2614, %v3335
  %v3368 = vpack.c.b16 %v2616, %v3336
  %v3369 = vpack.c.b16 %v2618, %v3337
  %v3370 = vpack.c.b16 %v2620, %v3338
  %v3371 = vpack.c.b16 %v2622, %v3339
  %v3372 = vpack.c.b16 %v2624, %v3340
  %v3373 = vpack.c.b16 %v2626, %v3341
  %v3374 = vpack.c.b16 %v2628, %v3342
  %v3375 = vpack.c.b16 %v2630, %v3343
  %v3376 = vpack.c.b16 %v2632, %v3344
  %v3377 = vpack.c.b16 %v2634, %v3345
  %v3378 = vpack.c.b16 %v2636, %v3346
  %v3379 = vpack.c.b16 %v2638, %v3347
  %v3380 = vpack.c.b16 %v2640, %v3348
  %v3381 = vpack.c.b16 %v2642, %v3349
  %v3382 = vpack.c.b16 %v2644, %v3350
  %v3383 = vpack.c.b16 %v2646, %v3351
  %v3384 = vpack.c.b16 %v2648, %v3352
  %v3385 = vrot.slane %v3353, 1
  %v3386 = vrot.slane %v2809, 1
  %v3387 = vsel %vm2360, %v3385, %v3386
  %v3388 = vrot.slane %v3354, 1
  %v3389 = vrot.slane %v2810, 1
  %v3390 = vsel %vm2360, %v3388, %v3389
  %v3391 = vrot.slane %v3355, 1
  %v3392 = vrot.slane %v2811, 1
  %v3393 = vsel %vm2360, %v3391, %v3392
  %v3394 = vrot.slane %v3356, 1
  %v3395 = vrot.slane %v2812, 1
  %v3396 = vsel %vm2360, %v3394, %v3395
  %v3397 = vrot.slane %v3357, 1
  %v3398 = vrot.slane %v2813, 1
  %v3399 = vsel %vm2360, %v3397, %v3398
  %v3400 = vrot.slane %v3358, 1
  %v3401 = vrot.slane %v2814, 1
  %v3402 = vsel %vm2360, %v3400, %v3401
  %v3403 = vrot.slane %v3359, 1
  %v3404 = vrot.slane %v2815, 1
  %v3405 = vsel %vm2360, %v3403, %v3404
  %v3406 = vrot.slane %v3360, 1
  %v3407 = vrot.slane %v2816, 1
  %v3408 = vsel %vm2360, %v3406, %v3407
  %v3409 = vrot.slane %v3361, 1
  %v3410 = vrot.slane %v2817, 1
  %v3411 = vsel %vm2360, %v3409, %v3410
  %v3412 = vrot.slane %v3362, 1
  %v3413 = vrot.slane %v2818, 1
  %v3414 = vsel %vm2360, %v3412, %v3413
  %v3415 = vrot.slane %v3363, 1
  %v3416 = vrot.slane %v2819, 1
  %v3417 = vsel %vm2360, %v3415, %v3416
  %v3418 = vrot.slane %v3364, 1
  %v3419 = vrot.slane %v2820, 1
  %v3420 = vsel %vm2360, %v3418, %v3419
  %v3421 = vrot.slane %v3365, 1
  %v3422 = vrot.slane %v2821, 1
  %v3423 = vsel %vm2360, %v3421, %v3422
  %v3424 = vrot.slane %v3366, 1
  %v3425 = vrot.slane %v2822, 1
  %v3426 = vsel %vm2360, %v3424, %v3425
  %v3427 = vrot.slane %v3367, 1
  %v3428 = vrot.slane %v2823, 1
  %v3429 = vsel %vm2360, %v3427, %v3428
  %v3430 = vrot.slane %v3368, 1
  %v3431 = vrot.slane %v2824, 1
  %v3432 = vsel %vm2360, %v3430, %v3431
  %v3433 = vrot.slane %v3369, 1
  %v3434 = vrot.slane %v2825, 1
  %v3435 = vsel %vm2360, %v3433, %v3434
  %v3436 = vrot.slane %v3370, 1
  %v3437 = vrot.slane %v2826, 1
  %v3438 = vsel %vm2360, %v3436, %v3437
  %v3439 = vrot.slane %v3371, 1
  %v3440 = vrot.slane %v2827, 1
  %v3441 = vsel %vm2360, %v3439, %v3440
  %v3442 = vrot.slane %v3372, 1
  %v3443 = vrot.slane %v2828, 1
  %v3444 = vsel %vm2360, %v3442, %v3443
  %v3445 = vrot.slane %v3373, 1
  %v3446 = vrot.slane %v2829, 1
  %v3447 = vsel %vm2360, %v3445, %v3446
  %v3448 = vrot.slane %v3374, 1
  %v3449 = vrot.slane %v2830, 1
  %v3450 = vsel %vm2360, %v3448, %v3449
  %v3451 = vrot.slane %v3375, 1
  %v3452 = vrot.slane %v2831, 1
  %v3453 = vsel %vm2360, %v3451, %v3452
  %v3454 = vrot.slane %v3376, 1
  %v3455 = vrot.slane %v2832, 1
  %v3456 = vsel %vm2360, %v3454, %v3455
  %v3457 = vrot.slane %v3377, 1
  %v3458 = vrot.slane %v2833, 1
  %v3459 = vsel %vm2360, %v3457, %v3458
  %v3460 = vrot.slane %v3378, 1
  %v3461 = vrot.slane %v2834, 1
  %v3462 = vsel %vm2360, %v3460, %v3461
  %v3463 = vrot.slane %v3379, 1
  %v3464 = vrot.slane %v2835, 1
  %v3465 = vsel %vm2360, %v3463, %v3464
  %v3466 = vrot.slane %v3380, 1
  %v3467 = vrot.slane %v2836, 1
  %v3468 = vsel %vm2360, %v3466, %v3467
  %v3469 = vrot.slane %v3381, 1
  %v3470 = vrot.slane %v2837, 1
  %v3471 = vsel %vm2360, %v3469, %v3470
  %v3472 = vrot.slane %v3382, 1
  %v3473 = vrot.slane %v2838, 1
  %v3474 = vsel %vm2360, %v3472, %v3473
  %v3475 = vrot.slane %v3383, 1
  %v3476 = vrot.slane %v2839, 1
  %v3477 = vsel %vm2360, %v3475, %v3476
  %v3478 = vrot.slane %v3384, 1
  %v3479 = vrot.slane %v2840, 1
  %v3480 = vsel %vm2360, %v3478, %v3479
  %3481 = vrot.lane.b32.xlu0 %v3387, 20
  %v3482 = vpop.permute.xlu0 %3481
  %3483 = vrot.lane.b32.xlu0 %v3390, 20
  %v3484 = vpop.permute.xlu0 %3483
  %3485 = vrot.lane.b32.xlu0 %v3393, 20
  %v3486 = vpop.permute.xlu0 %3485
  %3487 = vrot.lane.b32.xlu0 %v3396, 20
  %v3488 = vpop.permute.xlu0 %3487
  %3489 = vrot.lane.b32.xlu0 %v3399, 20
  %v3490 = vpop.permute.xlu0 %3489
  %3491 = vrot.lane.b32.xlu0 %v3402, 20
  %v3492 = vpop.permute.xlu0 %3491
  %3493 = vrot.lane.b32.xlu0 %v3405, 20
  %v3494 = vpop.permute.xlu0 %3493
  %3495 = vrot.lane.b32.xlu0 %v3408, 20
  %v3496 = vpop.permute.xlu0 %3495
  %3497 = vrot.lane.b32.xlu0 %v3411, 20
  %v3498 = vpop.permute.xlu0 %3497
  %3499 = vrot.lane.b32.xlu0 %v3414, 20
  %v3500 = vpop.permute.xlu0 %3499
  %3501 = vrot.lane.b32.xlu0 %v3417, 20
  %v3502 = vpop.permute.xlu0 %3501
  %3503 = vrot.lane.b32.xlu0 %v3420, 20
  %v3504 = vpop.permute.xlu0 %3503
  %3505 = vrot.lane.b32.xlu0 %v3423, 20
  %v3506 = vpop.permute.xlu0 %3505
  %3507 = vrot.lane.b32.xlu0 %v3426, 20
  %v3508 = vpop.permute.xlu0 %3507
  %3509 = vrot.lane.b32.xlu0 %v3429, 20
  %v3510 = vpop.permute.xlu0 %3509
  %3511 = vrot.lane.b32.xlu0 %v3432, 20
  %v3512 = vpop.permute.xlu0 %3511
  %3513 = vrot.lane.b32.xlu0 %v3435, 20
  %v3514 = vpop.permute.xlu0 %3513
  %3515 = vrot.lane.b32.xlu0 %v3438, 20
  %v3516 = vpop.permute.xlu0 %3515
  %3517 = vrot.lane.b32.xlu0 %v3441, 20
  %v3518 = vpop.permute.xlu0 %3517
  %3519 = vrot.lane.b32.xlu0 %v3444, 20
  %v3520 = vpop.permute.xlu0 %3519
  %3521 = vrot.lane.b32.xlu0 %v3447, 20
  %v3522 = vpop.permute.xlu0 %3521
  %3523 = vrot.lane.b32.xlu0 %v3450, 20
  %v3524 = vpop.permute.xlu0 %3523
  %3525 = vrot.lane.b32.xlu0 %v3453, 20
  %v3526 = vpop.permute.xlu0 %3525
  %3527 = vrot.lane.b32.xlu0 %v3456, 20
  %v3528 = vpop.permute.xlu0 %3527
  %3529 = vrot.lane.b32.xlu0 %v3459, 20
  %v3530 = vpop.permute.xlu0 %3529
  %3531 = vrot.lane.b32.xlu0 %v3462, 20
  %v3532 = vpop.permute.xlu0 %3531
  %3533 = vrot.lane.b32.xlu0 %v3465, 20
  %v3534 = vpop.permute.xlu0 %3533
  %3535 = vrot.lane.b32.xlu0 %v3468, 20
  %v3536 = vpop.permute.xlu0 %3535
  %3537 = vrot.lane.b32.xlu0 %v3471, 20
  %v3538 = vpop.permute.xlu0 %3537
  %3539 = vrot.lane.b32.xlu0 %v3474, 20
  %v3540 = vpop.permute.xlu0 %3539
  %3541 = vrot.lane.b32.xlu0 %v3477, 20
  %v3542 = vpop.permute.xlu0 %3541
  %3543 = vrot.lane.b32.xlu0 %v3480, 20
  %v3544 = vpop.permute.xlu0 %3543
  %v3609 = vunpack.c.l.b16 %v1431
  %v3610 = vunpack.c.l.b16 %v1432
  %v3611 = vunpack.c.l.b16 %v1433
  %v3612 = vunpack.c.l.b16 %v1434
  %v3613 = vunpack.c.l.b16 %v1435
  %v3614 = vunpack.c.l.b16 %v1436
  %v3615 = vunpack.c.l.b16 %v1437
  %v3616 = vunpack.c.l.b16 %v1438
  %v3617 = vunpack.c.l.b16 %v1439
  %v3618 = vunpack.c.l.b16 %v1440
  %v3619 = vunpack.c.l.b16 %v1441
  %v3620 = vunpack.c.l.b16 %v1442
  %v3621 = vunpack.c.l.b16 %v1443
  %v3622 = vunpack.c.l.b16 %v1444
  %v3623 = vunpack.c.l.b16 %v1445
  %v3624 = vunpack.c.l.b16 %v1446
  %v3625 = vunpack.c.l.b16 %v1447
  %v3626 = vunpack.c.l.b16 %v1448
  %v3627 = vunpack.c.l.b16 %v1449
  %v3628 = vunpack.c.l.b16 %v1450
  %v3629 = vunpack.c.l.b16 %v1451
  %v3630 = vunpack.c.l.b16 %v1452
  %v3631 = vunpack.c.l.b16 %v1453
  %v3632 = vunpack.c.l.b16 %v1454
  %v3633 = vunpack.c.l.b16 %v1455
  %v3634 = vunpack.c.l.b16 %v1456
  %v3635 = vunpack.c.l.b16 %v1457
  %v3636 = vunpack.c.l.b16 %v1458
  %v3637 = vunpack.c.l.b16 %v1459
  %v3638 = vunpack.c.l.b16 %v1460
  %v3639 = vunpack.c.l.b16 %v1461
  %v3640 = vunpack.c.l.b16 %v1462
  %v3641 = vunpack.c.l.b16 %v1463
  %v3642 = vunpack.c.l.b16 %v1464
  %v3643 = vunpack.c.l.b16 %v1465
  %v3644 = vunpack.c.l.b16 %v1466
  %v3645 = vunpack.c.l.b16 %v1467
  %v3646 = vunpack.c.l.b16 %v1468
  %v3647 = vunpack.c.l.b16 %v1469
  %v3648 = vunpack.c.l.b16 %v1470
  %v3649 = vunpack.c.l.b16 %v1471
  %v3650 = vunpack.c.l.b16 %v1472
  %v3651 = vunpack.c.l.b16 %v1473
  %v3652 = vunpack.c.l.b16 %v1474
  %v3653 = vunpack.c.l.b16 %v1475
  %v3654 = vunpack.c.l.b16 %v1476
  %v3655 = vunpack.c.l.b16 %v1477
  %v3656 = vunpack.c.l.b16 %v1478
  %v3657 = vunpack.c.l.b16 %v1479
  %v3658 = vunpack.c.l.b16 %v1480
  %v3659 = vunpack.c.l.b16 %v1481
  %v3660 = vunpack.c.l.b16 %v1482
  %v3661 = vunpack.c.l.b16 %v1483
  %v3662 = vunpack.c.l.b16 %v1484
  %v3663 = vunpack.c.l.b16 %v1485
  %v3664 = vunpack.c.l.b16 %v1486
  %v3665 = vunpack.c.l.b16 %v1487
  %v3666 = vunpack.c.l.b16 %v1488
  %v3667 = vunpack.c.l.b16 %v1489
  %v3668 = vunpack.c.l.b16 %v1490
  %v3669 = vunpack.c.l.b16 %v1491
  %v3670 = vunpack.c.l.b16 %v1492
  %v3671 = vunpack.c.l.b16 %v1493
  %v3672 = vunpack.c.l.b16 %v1494
  %v3673 = vpack.c.b16 %v3610, %v3609
  %v3674 = vpack.c.b16 %v3612, %v3611
  %v3675 = vpack.c.b16 %v3614, %v3613
  %v3676 = vpack.c.b16 %v3616, %v3615
  %v3677 = vpack.c.b16 %v3618, %v3617
  %v3678 = vpack.c.b16 %v3620, %v3619
  %v3679 = vpack.c.b16 %v3622, %v3621
  %v3680 = vpack.c.b16 %v3624, %v3623
  %v3681 = vpack.c.b16 %v3626, %v3625
  %v3682 = vpack.c.b16 %v3628, %v3627
  %v3683 = vpack.c.b16 %v3630, %v3629
  %v3684 = vpack.c.b16 %v3632, %v3631
  %v3685 = vpack.c.b16 %v3634, %v3633
  %v3686 = vpack.c.b16 %v3636, %v3635
  %v3687 = vpack.c.b16 %v3638, %v3637
  %v3688 = vpack.c.b16 %v3640, %v3639
  %v3689 = vpack.c.b16 %v3642, %v3641
  %v3690 = vpack.c.b16 %v3644, %v3643
  %v3691 = vpack.c.b16 %v3646, %v3645
  %v3692 = vpack.c.b16 %v3648, %v3647
  %v3693 = vpack.c.b16 %v3650, %v3649
  %v3694 = vpack.c.b16 %v3652, %v3651
  %v3695 = vpack.c.b16 %v3654, %v3653
  %v3696 = vpack.c.b16 %v3656, %v3655
  %v3697 = vpack.c.b16 %v3658, %v3657
  %v3698 = vpack.c.b16 %v3660, %v3659
  %v3699 = vpack.c.b16 %v3662, %v3661
  %v3700 = vpack.c.b16 %v3664, %v3663
  %v3701 = vpack.c.b16 %v3666, %v3665
  %v3702 = vpack.c.b16 %v3668, %v3667
  %v3703 = vpack.c.b16 %v3670, %v3669
  %v3704 = vpack.c.b16 %v3672, %v3671
  %3705 = vrot.lane.b32.xlu0 %v3673, 24
  %v3706 = vpop.permute.xlu0 %3705
  %3707 = vrot.lane.b32.xlu0 %v3674, 24
  %v3708 = vpop.permute.xlu0 %3707
  %3709 = vrot.lane.b32.xlu0 %v3675, 24
  %v3710 = vpop.permute.xlu0 %3709
  %3711 = vrot.lane.b32.xlu0 %v3676, 24
  %v3712 = vpop.permute.xlu0 %3711
  %3713 = vrot.lane.b32.xlu0 %v3677, 24
  %v3714 = vpop.permute.xlu0 %3713
  %3715 = vrot.lane.b32.xlu0 %v3678, 24
  %v3716 = vpop.permute.xlu0 %3715
  %3717 = vrot.lane.b32.xlu0 %v3679, 24
  %v3718 = vpop.permute.xlu0 %3717
  %3719 = vrot.lane.b32.xlu0 %v3680, 24
  %v3720 = vpop.permute.xlu0 %3719
  %3721 = vrot.lane.b32.xlu0 %v3681, 24
  %v3722 = vpop.permute.xlu0 %3721
  %3723 = vrot.lane.b32.xlu0 %v3682, 24
  %v3724 = vpop.permute.xlu0 %3723
  %3725 = vrot.lane.b32.xlu0 %v3683, 24
  %v3726 = vpop.permute.xlu0 %3725
  %3727 = vrot.lane.b32.xlu0 %v3684, 24
  %v3728 = vpop.permute.xlu0 %3727
  %3729 = vrot.lane.b32.xlu0 %v3685, 24
  %v3730 = vpop.permute.xlu0 %3729
  %3731 = vrot.lane.b32.xlu0 %v3686, 24
  %v3732 = vpop.permute.xlu0 %3731
  %3733 = vrot.lane.b32.xlu0 %v3687, 24
  %v3734 = vpop.permute.xlu0 %3733
  %3735 = vrot.lane.b32.xlu0 %v3688, 24
  %v3736 = vpop.permute.xlu0 %3735
  %3737 = vrot.lane.b32.xlu0 %v3689, 24
  %v3738 = vpop.permute.xlu0 %3737
  %3739 = vrot.lane.b32.xlu0 %v3690, 24
  %v3740 = vpop.permute.xlu0 %3739
  %3741 = vrot.lane.b32.xlu0 %v3691, 24
  %v3742 = vpop.permute.xlu0 %3741
  %3743 = vrot.lane.b32.xlu0 %v3692, 24
  %v3744 = vpop.permute.xlu0 %3743
  %3745 = vrot.lane.b32.xlu0 %v3693, 24
  %v3746 = vpop.permute.xlu0 %3745
  %3747 = vrot.lane.b32.xlu0 %v3694, 24
  %v3748 = vpop.permute.xlu0 %3747
  %3749 = vrot.lane.b32.xlu0 %v3695, 24
  %v3750 = vpop.permute.xlu0 %3749
  %3751 = vrot.lane.b32.xlu0 %v3696, 24
  %v3752 = vpop.permute.xlu0 %3751
  %3753 = vrot.lane.b32.xlu0 %v3697, 24
  %v3754 = vpop.permute.xlu0 %3753
  %3755 = vrot.lane.b32.xlu0 %v3698, 24
  %v3756 = vpop.permute.xlu0 %3755
  %3757 = vrot.lane.b32.xlu0 %v3699, 24
  %v3758 = vpop.permute.xlu0 %3757
  %3759 = vrot.lane.b32.xlu0 %v3700, 24
  %v3760 = vpop.permute.xlu0 %3759
  %3761 = vrot.lane.b32.xlu0 %v3701, 24
  %v3762 = vpop.permute.xlu0 %3761
  %3763 = vrot.lane.b32.xlu0 %v3702, 24
  %v3764 = vpop.permute.xlu0 %3763
  %3765 = vrot.lane.b32.xlu0 %v3703, 24
  %v3766 = vpop.permute.xlu0 %3765
  %3767 = vrot.lane.b32.xlu0 %v3704, 24
  %v3768 = vpop.permute.xlu0 %3767
  %v3801 = vunpack.c.l.b16 %v1495
  %v3802 = vunpack.c.l.b16 %v1496
  %v3803 = vunpack.c.l.b16 %v1497
  %v3804 = vunpack.c.l.b16 %v1498
  %v3805 = vunpack.c.l.b16 %v1499
  %v3806 = vunpack.c.l.b16 %v1500
  %v3807 = vunpack.c.l.b16 %v1501
  %v3808 = vunpack.c.l.b16 %v1502
  %v3809 = vunpack.c.l.b16 %v1503
  %v3810 = vunpack.c.l.b16 %v1504
  %v3811 = vunpack.c.l.b16 %v1505
  %v3812 = vunpack.c.l.b16 %v1506
  %v3813 = vunpack.c.l.b16 %v1507
  %v3814 = vunpack.c.l.b16 %v1508
  %v3815 = vunpack.c.l.b16 %v1509
  %v3816 = vunpack.c.l.b16 %v1510
  %v3817 = vunpack.c.l.b16 %v1511
  %v3818 = vunpack.c.l.b16 %v1512
  %v3819 = vunpack.c.l.b16 %v1513
  %v3820 = vunpack.c.l.b16 %v1514
  %v3821 = vunpack.c.l.b16 %v1515
  %v3822 = vunpack.c.l.b16 %v1516
  %v3823 = vunpack.c.l.b16 %v1517
  %v3824 = vunpack.c.l.b16 %v1518
  %v3825 = vunpack.c.l.b16 %v1519
  %v3826 = vunpack.c.l.b16 %v1520
  %v3827 = vunpack.c.l.b16 %v1521
  %v3828 = vunpack.c.l.b16 %v1522
  %v3829 = vunpack.c.l.b16 %v1523
  %v3830 = vunpack.c.l.b16 %v1524
  %v3831 = vunpack.c.l.b16 %v1525
  %v3832 = vunpack.c.l.b16 %v1526
  %v3833 = vpack.c.b16 %v3801, %v3801
  %v3834 = vpack.c.b16 %v3802, %v3802
  %v3835 = vpack.c.b16 %v3803, %v3803
  %v3836 = vpack.c.b16 %v3804, %v3804
  %v3837 = vpack.c.b16 %v3805, %v3805
  %v3838 = vpack.c.b16 %v3806, %v3806
  %v3839 = vpack.c.b16 %v3807, %v3807
  %v3840 = vpack.c.b16 %v3808, %v3808
  %v3841 = vpack.c.b16 %v3809, %v3809
  %v3842 = vpack.c.b16 %v3810, %v3810
  %v3843 = vpack.c.b16 %v3811, %v3811
  %v3844 = vpack.c.b16 %v3812, %v3812
  %v3845 = vpack.c.b16 %v3813, %v3813
  %v3846 = vpack.c.b16 %v3814, %v3814
  %v3847 = vpack.c.b16 %v3815, %v3815
  %v3848 = vpack.c.b16 %v3816, %v3816
  %v3849 = vpack.c.b16 %v3817, %v3817
  %v3850 = vpack.c.b16 %v3818, %v3818
  %v3851 = vpack.c.b16 %v3819, %v3819
  %v3852 = vpack.c.b16 %v3820, %v3820
  %v3853 = vpack.c.b16 %v3821, %v3821
  %v3854 = vpack.c.b16 %v3822, %v3822
  %v3855 = vpack.c.b16 %v3823, %v3823
  %v3856 = vpack.c.b16 %v3824, %v3824
  %v3857 = vpack.c.b16 %v3825, %v3825
  %v3858 = vpack.c.b16 %v3826, %v3826
  %v3859 = vpack.c.b16 %v3827, %v3827
  %v3860 = vpack.c.b16 %v3828, %v3828
  %v3861 = vpack.c.b16 %v3829, %v3829
  %v3862 = vpack.c.b16 %v3830, %v3830
  %v3863 = vpack.c.b16 %v3831, %v3831
  %v3864 = vpack.c.b16 %v3832, %v3832
  %v3866 = vshrl.u32 %v3673, 16
  %v3868 = vshll.u32 %v3673, 16
  %v3870 = vrot.slane %v3868, 1
  %v3871 = vor.u32 %v3866, %v3870
  %v3873 = vshll.u32 %v3833, 16
  %v3875 = vrot.slane %v3873, 1
  %v3876 = vsel %vm1815, %v3871, %v3875
  %v3878 = vshrl.u32 %v3674, 16
  %v3880 = vshll.u32 %v3674, 16
  %v3882 = vrot.slane %v3880, 1
  %v3883 = vor.u32 %v3878, %v3882
  %v3885 = vshll.u32 %v3834, 16
  %v3887 = vrot.slane %v3885, 1
  %v3888 = vsel %vm1815, %v3883, %v3887
  %v3890 = vshrl.u32 %v3675, 16
  %v3892 = vshll.u32 %v3675, 16
  %v3894 = vrot.slane %v3892, 1
  %v3895 = vor.u32 %v3890, %v3894
  %v3897 = vshll.u32 %v3835, 16
  %v3899 = vrot.slane %v3897, 1
  %v3900 = vsel %vm1815, %v3895, %v3899
  %v3902 = vshrl.u32 %v3676, 16
  %v3904 = vshll.u32 %v3676, 16
  %v3906 = vrot.slane %v3904, 1
  %v3907 = vor.u32 %v3902, %v3906
  %v3909 = vshll.u32 %v3836, 16
  %v3911 = vrot.slane %v3909, 1
  %v3912 = vsel %vm1815, %v3907, %v3911
  %v3914 = vshrl.u32 %v3677, 16
  %v3916 = vshll.u32 %v3677, 16
  %v3918 = vrot.slane %v3916, 1
  %v3919 = vor.u32 %v3914, %v3918
  %v3921 = vshll.u32 %v3837, 16
  %v3923 = vrot.slane %v3921, 1
  %v3924 = vsel %vm1815, %v3919, %v3923
  %v3926 = vshrl.u32 %v3678, 16
  %v3928 = vshll.u32 %v3678, 16
  %v3930 = vrot.slane %v3928, 1
  %v3931 = vor.u32 %v3926, %v3930
  %v3933 = vshll.u32 %v3838, 16
  %v3935 = vrot.slane %v3933, 1
  %v3936 = vsel %vm1815, %v3931, %v3935
  %v3938 = vshrl.u32 %v3679, 16
  %v3940 = vshll.u32 %v3679, 16
  %v3942 = vrot.slane %v3940, 1
  %v3943 = vor.u32 %v3938, %v3942
  %v3945 = vshll.u32 %v3839, 16
  %v3947 = vrot.slane %v3945, 1
  %v3948 = vsel %vm1815, %v3943, %v3947
  %v3950 = vshrl.u32 %v3680, 16
  %v3952 = vshll.u32 %v3680, 16
  %v3954 = vrot.slane %v3952, 1
  %v3955 = vor.u32 %v3950, %v3954
  %v3957 = vshll.u32 %v3840, 16
  %v3959 = vrot.slane %v3957, 1
  %v3960 = vsel %vm1815, %v3955, %v3959
  %v3962 = vshrl.u32 %v3681, 16
  %v3964 = vshll.u32 %v3681, 16
  %v3966 = vrot.slane %v3964, 1
  %v3967 = vor.u32 %v3962, %v3966
  %v3969 = vshll.u32 %v3841, 16
  %v3971 = vrot.slane %v3969, 1
  %v3972 = vsel %vm1815, %v3967, %v3971
  %v3974 = vshrl.u32 %v3682, 16
  %v3976 = vshll.u32 %v3682, 16
  %v3978 = vrot.slane %v3976, 1
  %v3979 = vor.u32 %v3974, %v3978
  %v3981 = vshll.u32 %v3842, 16
  %v3983 = vrot.slane %v3981, 1
  %v3984 = vsel %vm1815, %v3979, %v3983
  %v3986 = vshrl.u32 %v3683, 16
  %v3988 = vshll.u32 %v3683, 16
  %v3990 = vrot.slane %v3988, 1
  %v3991 = vor.u32 %v3986, %v3990
  %v3993 = vshll.u32 %v3843, 16
  %v3995 = vrot.slane %v3993, 1
  %v3996 = vsel %vm1815, %v3991, %v3995
  %v3998 = vshrl.u32 %v3684, 16
  %v4000 = vshll.u32 %v3684, 16
  %v4002 = vrot.slane %v4000, 1
  %v4003 = vor.u32 %v3998, %v4002
  %v4005 = vshll.u32 %v3844, 16
  %v4007 = vrot.slane %v4005, 1
  %v4008 = vsel %vm1815, %v4003, %v4007
  %v4010 = vshrl.u32 %v3685, 16
  %v4012 = vshll.u32 %v3685, 16
  %v4014 = vrot.slane %v4012, 1
  %v4015 = vor.u32 %v4010, %v4014
  %v4017 = vshll.u32 %v3845, 16
  %v4019 = vrot.slane %v4017, 1
  %v4020 = vsel %vm1815, %v4015, %v4019
  %v4022 = vshrl.u32 %v3686, 16
  %v4024 = vshll.u32 %v3686, 16
  %v4026 = vrot.slane %v4024, 1
  %v4027 = vor.u32 %v4022, %v4026
  %v4029 = vshll.u32 %v3846, 16
  %v4031 = vrot.slane %v4029, 1
  %v4032 = vsel %vm1815, %v4027, %v4031
  %v4034 = vshrl.u32 %v3687, 16
  %v4036 = vshll.u32 %v3687, 16
  %v4038 = vrot.slane %v4036, 1
  %v4039 = vor.u32 %v4034, %v4038
  %v4041 = vshll.u32 %v3847, 16
  %v4043 = vrot.slane %v4041, 1
  %v4044 = vsel %vm1815, %v4039, %v4043
  %v4046 = vshrl.u32 %v3688, 16
  %v4048 = vshll.u32 %v3688, 16
  %v4050 = vrot.slane %v4048, 1
  %v4051 = vor.u32 %v4046, %v4050
  %v4053 = vshll.u32 %v3848, 16
  %v4055 = vrot.slane %v4053, 1
  %v4056 = vsel %vm1815, %v4051, %v4055
  %v4058 = vshrl.u32 %v3689, 16
  %v4060 = vshll.u32 %v3689, 16
  %v4062 = vrot.slane %v4060, 1
  %v4063 = vor.u32 %v4058, %v4062
  %v4065 = vshll.u32 %v3849, 16
  %v4067 = vrot.slane %v4065, 1
  %v4068 = vsel %vm1815, %v4063, %v4067
  %v4070 = vshrl.u32 %v3690, 16
  %v4072 = vshll.u32 %v3690, 16
  %v4074 = vrot.slane %v4072, 1
  %v4075 = vor.u32 %v4070, %v4074
  %v4077 = vshll.u32 %v3850, 16
  %v4079 = vrot.slane %v4077, 1
  %v4080 = vsel %vm1815, %v4075, %v4079
  %v4082 = vshrl.u32 %v3691, 16
  %v4084 = vshll.u32 %v3691, 16
  %v4086 = vrot.slane %v4084, 1
  %v4087 = vor.u32 %v4082, %v4086
  %v4089 = vshll.u32 %v3851, 16
  %v4091 = vrot.slane %v4089, 1
  %v4092 = vsel %vm1815, %v4087, %v4091
  %v4094 = vshrl.u32 %v3692, 16
  %v4096 = vshll.u32 %v3692, 16
  %v4098 = vrot.slane %v4096, 1
  %v4099 = vor.u32 %v4094, %v4098
  %v4101 = vshll.u32 %v3852, 16
  %v4103 = vrot.slane %v4101, 1
  %v4104 = vsel %vm1815, %v4099, %v4103
  %v4106 = vshrl.u32 %v3693, 16
  %v4108 = vshll.u32 %v3693, 16
  %v4110 = vrot.slane %v4108, 1
  %v4111 = vor.u32 %v4106, %v4110
  %v4113 = vshll.u32 %v3853, 16
  %v4115 = vrot.slane %v4113, 1
  %v4116 = vsel %vm1815, %v4111, %v4115
  %v4118 = vshrl.u32 %v3694, 16
  %v4120 = vshll.u32 %v3694, 16
  %v4122 = vrot.slane %v4120, 1
  %v4123 = vor.u32 %v4118, %v4122
  %v4125 = vshll.u32 %v3854, 16
  %v4127 = vrot.slane %v4125, 1
  %v4128 = vsel %vm1815, %v4123, %v4127
  %v4130 = vshrl.u32 %v3695, 16
  %v4132 = vshll.u32 %v3695, 16
  %v4134 = vrot.slane %v4132, 1
  %v4135 = vor.u32 %v4130, %v4134
  %v4137 = vshll.u32 %v3855, 16
  %v4139 = vrot.slane %v4137, 1
  %v4140 = vsel %vm1815, %v4135, %v4139
  %v4142 = vshrl.u32 %v3696, 16
  %v4144 = vshll.u32 %v3696, 16
  %v4146 = vrot.slane %v4144, 1
  %v4147 = vor.u32 %v4142, %v4146
  %v4149 = vshll.u32 %v3856, 16
  %v4151 = vrot.slane %v4149, 1
  %v4152 = vsel %vm1815, %v4147, %v4151
  %v4154 = vshrl.u32 %v3697, 16
  %v4156 = vshll.u32 %v3697, 16
  %v4158 = vrot.slane %v4156, 1
  %v4159 = vor.u32 %v4154, %v4158
  %v4161 = vshll.u32 %v3857, 16
  %v4163 = vrot.slane %v4161, 1
  %v4164 = vsel %vm1815, %v4159, %v4163
  %v4166 = vshrl.u32 %v3698, 16
  %v4168 = vshll.u32 %v3698, 16
  %v4170 = vrot.slane %v4168, 1
  %v4171 = vor.u32 %v4166, %v4170
  %v4173 = vshll.u32 %v3858, 16
  %v4175 = vrot.slane %v4173, 1
  %v4176 = vsel %vm1815, %v4171, %v4175
  %v4178 = vshrl.u32 %v3699, 16
  %v4180 = vshll.u32 %v3699, 16
  %v4182 = vrot.slane %v4180, 1
  %v4183 = vor.u32 %v4178, %v4182
  %v4185 = vshll.u32 %v3859, 16
  %v4187 = vrot.slane %v4185, 1
  %v4188 = vsel %vm1815, %v4183, %v4187
  %v4190 = vshrl.u32 %v3700, 16
  %v4192 = vshll.u32 %v3700, 16
  %v4194 = vrot.slane %v4192, 1
  %v4195 = vor.u32 %v4190, %v4194
  %v4197 = vshll.u32 %v3860, 16
  %v4199 = vrot.slane %v4197, 1
  %v4200 = vsel %vm1815, %v4195, %v4199
  %v4202 = vshrl.u32 %v3701, 16
  %v4204 = vshll.u32 %v3701, 16
  %v4206 = vrot.slane %v4204, 1
  %v4207 = vor.u32 %v4202, %v4206
  %v4209 = vshll.u32 %v3861, 16
  %v4211 = vrot.slane %v4209, 1
  %v4212 = vsel %vm1815, %v4207, %v4211
  %v4214 = vshrl.u32 %v3702, 16
  %v4216 = vshll.u32 %v3702, 16
  %v4218 = vrot.slane %v4216, 1
  %v4219 = vor.u32 %v4214, %v4218
  %v4221 = vshll.u32 %v3862, 16
  %v4223 = vrot.slane %v4221, 1
  %v4224 = vsel %vm1815, %v4219, %v4223
  %v4226 = vshrl.u32 %v3703, 16
  %v4228 = vshll.u32 %v3703, 16
  %v4230 = vrot.slane %v4228, 1
  %v4231 = vor.u32 %v4226, %v4230
  %v4233 = vshll.u32 %v3863, 16
  %v4235 = vrot.slane %v4233, 1
  %v4236 = vsel %vm1815, %v4231, %v4235
  %v4238 = vshrl.u32 %v3704, 16
  %v4240 = vshll.u32 %v3704, 16
  %v4242 = vrot.slane %v4240, 1
  %v4243 = vor.u32 %v4238, %v4242
  %v4245 = vshll.u32 %v3864, 16
  %v4247 = vrot.slane %v4245, 1
  %v4248 = vsel %vm1815, %v4243, %v4247
  %4249 = vrot.lane.b32.xlu0 %v3876, 28
  %v4250 = vpop.permute.xlu0 %4249
  %4251 = vrot.lane.b32.xlu0 %v3888, 28
  %v4252 = vpop.permute.xlu0 %4251
  %4253 = vrot.lane.b32.xlu0 %v3900, 28
  %v4254 = vpop.permute.xlu0 %4253
  %4255 = vrot.lane.b32.xlu0 %v3912, 28
  %v4256 = vpop.permute.xlu0 %4255
  %4257 = vrot.lane.b32.xlu0 %v3924, 28
  %v4258 = vpop.permute.xlu0 %4257
  %4259 = vrot.lane.b32.xlu0 %v3936, 28
  %v4260 = vpop.permute.xlu0 %4259
  %4261 = vrot.lane.b32.xlu0 %v3948, 28
  %v4262 = vpop.permute.xlu0 %4261
  %4263 = vrot.lane.b32.xlu0 %v3960, 28
  %v4264 = vpop.permute.xlu0 %4263
  %4265 = vrot.lane.b32.xlu0 %v3972, 28
  %v4266 = vpop.permute.xlu0 %4265
  %4267 = vrot.lane.b32.xlu0 %v3984, 28
  %v4268 = vpop.permute.xlu0 %4267
  %4269 = vrot.lane.b32.xlu0 %v3996, 28
  %v4270 = vpop.permute.xlu0 %4269
  %4271 = vrot.lane.b32.xlu0 %v4008, 28
  %v4272 = vpop.permute.xlu0 %4271
  %4273 = vrot.lane.b32.xlu0 %v4020, 28
  %v4274 = vpop.permute.xlu0 %4273
  %4275 = vrot.lane.b32.xlu0 %v4032, 28
  %v4276 = vpop.permute.xlu0 %4275
  %4277 = vrot.lane.b32.xlu0 %v4044, 28
  %v4278 = vpop.permute.xlu0 %4277
  %4279 = vrot.lane.b32.xlu0 %v4056, 28
  %v4280 = vpop.permute.xlu0 %4279
  %4281 = vrot.lane.b32.xlu0 %v4068, 28
  %v4282 = vpop.permute.xlu0 %4281
  %4283 = vrot.lane.b32.xlu0 %v4080, 28
  %v4284 = vpop.permute.xlu0 %4283
  %4285 = vrot.lane.b32.xlu0 %v4092, 28
  %v4286 = vpop.permute.xlu0 %4285
  %4287 = vrot.lane.b32.xlu0 %v4104, 28
  %v4288 = vpop.permute.xlu0 %4287
  %4289 = vrot.lane.b32.xlu0 %v4116, 28
  %v4290 = vpop.permute.xlu0 %4289
  %4291 = vrot.lane.b32.xlu0 %v4128, 28
  %v4292 = vpop.permute.xlu0 %4291
  %4293 = vrot.lane.b32.xlu0 %v4140, 28
  %v4294 = vpop.permute.xlu0 %4293
  %4295 = vrot.lane.b32.xlu0 %v4152, 28
  %v4296 = vpop.permute.xlu0 %4295
  %4297 = vrot.lane.b32.xlu0 %v4164, 28
  %v4298 = vpop.permute.xlu0 %4297
  %4299 = vrot.lane.b32.xlu0 %v4176, 28
  %v4300 = vpop.permute.xlu0 %4299
  %4301 = vrot.lane.b32.xlu0 %v4188, 28
  %v4302 = vpop.permute.xlu0 %4301
  %4303 = vrot.lane.b32.xlu0 %v4200, 28
  %v4304 = vpop.permute.xlu0 %4303
  %4305 = vrot.lane.b32.xlu0 %v4212, 28
  %v4306 = vpop.permute.xlu0 %4305
  %4307 = vrot.lane.b32.xlu0 %v4224, 28
  %v4308 = vpop.permute.xlu0 %4307
  %4309 = vrot.lane.b32.xlu0 %v4236, 28
  %v4310 = vpop.permute.xlu0 %4309
  %4311 = vrot.lane.b32.xlu0 %v4248, 28
  %v4312 = vpop.permute.xlu0 %4311
  %v4345 = vunpack.c.l.b16 %v1527
  %v4346 = vunpack.c.l.b16 %v1528
  %v4347 = vunpack.c.l.b16 %v1529
  %v4348 = vunpack.c.l.b16 %v1530
  %v4349 = vunpack.c.l.b16 %v1531
  %v4350 = vunpack.c.l.b16 %v1532
  %v4351 = vunpack.c.l.b16 %v1533
  %v4352 = vunpack.c.l.b16 %v1534
  %v4353 = vunpack.c.l.b16 %v1535
  %v4354 = vunpack.c.l.b16 %v1536
  %v4355 = vunpack.c.l.b16 %v1537
  %v4356 = vunpack.c.l.b16 %v1538
  %v4357 = vunpack.c.l.b16 %v1539
  %v4358 = vunpack.c.l.b16 %v1540
  %v4359 = vunpack.c.l.b16 %v1541
  %v4360 = vunpack.c.l.b16 %v1542
  %v4361 = vunpack.c.l.b16 %v1543
  %v4362 = vunpack.c.l.b16 %v1544
  %v4363 = vunpack.c.l.b16 %v1545
  %v4364 = vunpack.c.l.b16 %v1546
  %v4365 = vunpack.c.l.b16 %v1547
  %v4366 = vunpack.c.l.b16 %v1548
  %v4367 = vunpack.c.l.b16 %v1549
  %v4368 = vunpack.c.l.b16 %v1550
  %v4369 = vunpack.c.l.b16 %v1551
  %v4370 = vunpack.c.l.b16 %v1552
  %v4371 = vunpack.c.l.b16 %v1553
  %v4372 = vunpack.c.l.b16 %v1554
  %v4373 = vunpack.c.l.b16 %v1555
  %v4374 = vunpack.c.l.b16 %v1556
  %v4375 = vunpack.c.l.b16 %v1557
  %v4376 = vunpack.c.l.b16 %v1558
  %v4377 = vpack.c.b16 %v3610, %v4345
  %v4378 = vpack.c.b16 %v3612, %v4346
  %v4379 = vpack.c.b16 %v3614, %v4347
  %v4380 = vpack.c.b16 %v3616, %v4348
  %v4381 = vpack.c.b16 %v3618, %v4349
  %v4382 = vpack.c.b16 %v3620, %v4350
  %v4383 = vpack.c.b16 %v3622, %v4351
  %v4384 = vpack.c.b16 %v3624, %v4352
  %v4385 = vpack.c.b16 %v3626, %v4353
  %v4386 = vpack.c.b16 %v3628, %v4354
  %v4387 = vpack.c.b16 %v3630, %v4355
  %v4388 = vpack.c.b16 %v3632, %v4356
  %v4389 = vpack.c.b16 %v3634, %v4357
  %v4390 = vpack.c.b16 %v3636, %v4358
  %v4391 = vpack.c.b16 %v3638, %v4359
  %v4392 = vpack.c.b16 %v3640, %v4360
  %v4393 = vpack.c.b16 %v3642, %v4361
  %v4394 = vpack.c.b16 %v3644, %v4362
  %v4395 = vpack.c.b16 %v3646, %v4363
  %v4396 = vpack.c.b16 %v3648, %v4364
  %v4397 = vpack.c.b16 %v3650, %v4365
  %v4398 = vpack.c.b16 %v3652, %v4366
  %v4399 = vpack.c.b16 %v3654, %v4367
  %v4400 = vpack.c.b16 %v3656, %v4368
  %v4401 = vpack.c.b16 %v3658, %v4369
  %v4402 = vpack.c.b16 %v3660, %v4370
  %v4403 = vpack.c.b16 %v3662, %v4371
  %v4404 = vpack.c.b16 %v3664, %v4372
  %v4405 = vpack.c.b16 %v3666, %v4373
  %v4406 = vpack.c.b16 %v3668, %v4374
  %v4407 = vpack.c.b16 %v3670, %v4375
  %v4408 = vpack.c.b16 %v3672, %v4376
  %v4409 = vrot.slane %v4377, 1
  %v4410 = vrot.slane %v3833, 1
  %v4411 = vsel %vm2360, %v4409, %v4410
  %v4412 = vrot.slane %v4378, 1
  %v4413 = vrot.slane %v3834, 1
  %v4414 = vsel %vm2360, %v4412, %v4413
  %v4415 = vrot.slane %v4379, 1
  %v4416 = vrot.slane %v3835, 1
  %v4417 = vsel %vm2360, %v4415, %v4416
  %v4418 = vrot.slane %v4380, 1
  %v4419 = vrot.slane %v3836, 1
  %v4420 = vsel %vm2360, %v4418, %v4419
  %v4421 = vrot.slane %v4381, 1
  %v4422 = vrot.slane %v3837, 1
  %v4423 = vsel %vm2360, %v4421, %v4422
  %v4424 = vrot.slane %v4382, 1
  %v4425 = vrot.slane %v3838, 1
  %v4426 = vsel %vm2360, %v4424, %v4425
  %v4427 = vrot.slane %v4383, 1
  %v4428 = vrot.slane %v3839, 1
  %v4429 = vsel %vm2360, %v4427, %v4428
  %v4430 = vrot.slane %v4384, 1
  %v4431 = vrot.slane %v3840, 1
  %v4432 = vsel %vm2360, %v4430, %v4431
  %v4433 = vrot.slane %v4385, 1
  %v4434 = vrot.slane %v3841, 1
  %v4435 = vsel %vm2360, %v4433, %v4434
  %v4436 = vrot.slane %v4386, 1
  %v4437 = vrot.slane %v3842, 1
  %v4438 = vsel %vm2360, %v4436, %v4437
  %v4439 = vrot.slane %v4387, 1
  %v4440 = vrot.slane %v3843, 1
  %v4441 = vsel %vm2360, %v4439, %v4440
  %v4442 = vrot.slane %v4388, 1
  %v4443 = vrot.slane %v3844, 1
  %v4444 = vsel %vm2360, %v4442, %v4443
  %v4445 = vrot.slane %v4389, 1
  %v4446 = vrot.slane %v3845, 1
  %v4447 = vsel %vm2360, %v4445, %v4446
  %v4448 = vrot.slane %v4390, 1
  %v4449 = vrot.slane %v3846, 1
  %v4450 = vsel %vm2360, %v4448, %v4449
  %v4451 = vrot.slane %v4391, 1
  %v4452 = vrot.slane %v3847, 1
  %v4453 = vsel %vm2360, %v4451, %v4452
  %v4454 = vrot.slane %v4392, 1
  %v4455 = vrot.slane %v3848, 1
  %v4456 = vsel %vm2360, %v4454, %v4455
  %v4457 = vrot.slane %v4393, 1
  %v4458 = vrot.slane %v3849, 1
  %v4459 = vsel %vm2360, %v4457, %v4458
  %v4460 = vrot.slane %v4394, 1
  %v4461 = vrot.slane %v3850, 1
  %v4462 = vsel %vm2360, %v4460, %v4461
  %v4463 = vrot.slane %v4395, 1
  %v4464 = vrot.slane %v3851, 1
  %v4465 = vsel %vm2360, %v4463, %v4464
  %v4466 = vrot.slane %v4396, 1
  %v4467 = vrot.slane %v3852, 1
  %v4468 = vsel %vm2360, %v4466, %v4467
  %v4469 = vrot.slane %v4397, 1
  %v4470 = vrot.slane %v3853, 1
  %v4471 = vsel %vm2360, %v4469, %v4470
  %v4472 = vrot.slane %v4398, 1
  %v4473 = vrot.slane %v3854, 1
  %v4474 = vsel %vm2360, %v4472, %v4473
  %v4475 = vrot.slane %v4399, 1
  %v4476 = vrot.slane %v3855, 1
  %v4477 = vsel %vm2360, %v4475, %v4476
  %v4478 = vrot.slane %v4400, 1
  %v4479 = vrot.slane %v3856, 1
  %v4480 = vsel %vm2360, %v4478, %v4479
  %v4481 = vrot.slane %v4401, 1
  %v4482 = vrot.slane %v3857, 1
  %v4483 = vsel %vm2360, %v4481, %v4482
  %v4484 = vrot.slane %v4402, 1
  %v4485 = vrot.slane %v3858, 1
  %v4486 = vsel %vm2360, %v4484, %v4485
  %v4487 = vrot.slane %v4403, 1
  %v4488 = vrot.slane %v3859, 1
  %v4489 = vsel %vm2360, %v4487, %v4488
  %v4490 = vrot.slane %v4404, 1
  %v4491 = vrot.slane %v3860, 1
  %v4492 = vsel %vm2360, %v4490, %v4491
  %v4493 = vrot.slane %v4405, 1
  %v4494 = vrot.slane %v3861, 1
  %v4495 = vsel %vm2360, %v4493, %v4494
  %v4496 = vrot.slane %v4406, 1
  %v4497 = vrot.slane %v3862, 1
  %v4498 = vsel %vm2360, %v4496, %v4497
  %v4499 = vrot.slane %v4407, 1
  %v4500 = vrot.slane %v3863, 1
  %v4501 = vsel %vm2360, %v4499, %v4500
  %v4502 = vrot.slane %v4408, 1
  %v4503 = vrot.slane %v3864, 1
  %v4504 = vsel %vm2360, %v4502, %v4503
  %4505 = vrot.lane.b32.xlu0 %v4411, 32
  %v4506 = vpop.permute.xlu0 %4505
  %4507 = vrot.lane.b32.xlu0 %v4414, 32
  %v4508 = vpop.permute.xlu0 %4507
  %4509 = vrot.lane.b32.xlu0 %v4417, 32
  %v4510 = vpop.permute.xlu0 %4509
  %4511 = vrot.lane.b32.xlu0 %v4420, 32
  %v4512 = vpop.permute.xlu0 %4511
  %4513 = vrot.lane.b32.xlu0 %v4423, 32
  %v4514 = vpop.permute.xlu0 %4513
  %4515 = vrot.lane.b32.xlu0 %v4426, 32
  %v4516 = vpop.permute.xlu0 %4515
  %4517 = vrot.lane.b32.xlu0 %v4429, 32
  %v4518 = vpop.permute.xlu0 %4517
  %4519 = vrot.lane.b32.xlu0 %v4432, 32
  %v4520 = vpop.permute.xlu0 %4519
  %4521 = vrot.lane.b32.xlu0 %v4435, 32
  %v4522 = vpop.permute.xlu0 %4521
  %4523 = vrot.lane.b32.xlu0 %v4438, 32
  %v4524 = vpop.permute.xlu0 %4523
  %4525 = vrot.lane.b32.xlu0 %v4441, 32
  %v4526 = vpop.permute.xlu0 %4525
  %4527 = vrot.lane.b32.xlu0 %v4444, 32
  %v4528 = vpop.permute.xlu0 %4527
  %4529 = vrot.lane.b32.xlu0 %v4447, 32
  %v4530 = vpop.permute.xlu0 %4529
  %4531 = vrot.lane.b32.xlu0 %v4450, 32
  %v4532 = vpop.permute.xlu0 %4531
  %4533 = vrot.lane.b32.xlu0 %v4453, 32
  %v4534 = vpop.permute.xlu0 %4533
  %4535 = vrot.lane.b32.xlu0 %v4456, 32
  %v4536 = vpop.permute.xlu0 %4535
  %4537 = vrot.lane.b32.xlu0 %v4459, 32
  %v4538 = vpop.permute.xlu0 %4537
  %4539 = vrot.lane.b32.xlu0 %v4462, 32
  %v4540 = vpop.permute.xlu0 %4539
  %4541 = vrot.lane.b32.xlu0 %v4465, 32
  %v4542 = vpop.permute.xlu0 %4541
  %4543 = vrot.lane.b32.xlu0 %v4468, 32
  %v4544 = vpop.permute.xlu0 %4543
  %4545 = vrot.lane.b32.xlu0 %v4471, 32
  %v4546 = vpop.permute.xlu0 %4545
  %4547 = vrot.lane.b32.xlu0 %v4474, 32
  %v4548 = vpop.permute.xlu0 %4547
  %4549 = vrot.lane.b32.xlu0 %v4477, 32
  %v4550 = vpop.permute.xlu0 %4549
  %4551 = vrot.lane.b32.xlu0 %v4480, 32
  %v4552 = vpop.permute.xlu0 %4551
  %4553 = vrot.lane.b32.xlu0 %v4483, 32
  %v4554 = vpop.permute.xlu0 %4553
  %4555 = vrot.lane.b32.xlu0 %v4486, 32
  %v4556 = vpop.permute.xlu0 %4555
  %4557 = vrot.lane.b32.xlu0 %v4489, 32
  %v4558 = vpop.permute.xlu0 %4557
  %4559 = vrot.lane.b32.xlu0 %v4492, 32
  %v4560 = vpop.permute.xlu0 %4559
  %4561 = vrot.lane.b32.xlu0 %v4495, 32
  %v4562 = vpop.permute.xlu0 %4561
  %4563 = vrot.lane.b32.xlu0 %v4498, 32
  %v4564 = vpop.permute.xlu0 %4563
  %4565 = vrot.lane.b32.xlu0 %v4501, 32
  %v4566 = vpop.permute.xlu0 %4565
  %4567 = vrot.lane.b32.xlu0 %v4504, 32
  %v4568 = vpop.permute.xlu0 %4567
  %vm4569 = vcmask 31744
  %v4571 = vsel %vm4569, %v1687, %v2201
  %v4573 = vsel %vm4569, %v1688, %v2203
  %v4575 = vsel %vm4569, %v1689, %v2205
  %v4577 = vsel %vm4569, %v1690, %v2207
  %v4579 = vsel %vm4569, %v1691, %v2209
  %v4581 = vsel %vm4569, %v1692, %v2211
  %v4583 = vsel %vm4569, %v1693, %v2213
  %v4585 = vsel %vm4569, %v1694, %v2215
  %v4587 = vsel %vm4569, %v1695, %v2217
  %v4589 = vsel %vm4569, %v1696, %v2219
  %v4591 = vsel %vm4569, %v1697, %v2221
  %v4593 = vsel %vm4569, %v1698, %v2223
  %v4595 = vsel %vm4569, %v1699, %v2225
  %v4597 = vsel %vm4569, %v1700, %v2227
  %v4599 = vsel %vm4569, %v1701, %v2229
  %v4601 = vsel %vm4569, %v1702, %v2231
  %v4603 = vsel %vm4569, %v1703, %v2233
  %v4605 = vsel %vm4569, %v1704, %v2235
  %v4607 = vsel %vm4569, %v1705, %v2237
  %v4609 = vsel %vm4569, %v1706, %v2239
  %v4611 = vsel %vm4569, %v1707, %v2241
  %v4613 = vsel %vm4569, %v1708, %v2243
  %v4615 = vsel %vm4569, %v1709, %v2245
  %v4617 = vsel %vm4569, %v1710, %v2247
  %v4619 = vsel %vm4569, %v1711, %v2249
  %v4621 = vsel %vm4569, %v1712, %v2251
  %v4623 = vsel %vm4569, %v1713, %v2253
  %v4625 = vsel %vm4569, %v1714, %v2255
  %v4627 = vsel %vm4569, %v1715, %v2257
  %v4629 = vsel %vm4569, %v1716, %v2259
  %v4631 = vsel %vm4569, %v1717, %v2261
  %v4633 = vsel %vm4569, %v1718, %v2263
  %vm4634 = vcmask 64512
  %v4636 = vsel %vm4634, %v4571, %v2458
  %v4638 = vsel %vm4634, %v4573, %v2460
  %v4640 = vsel %vm4634, %v4575, %v2462
  %v4642 = vsel %vm4634, %v4577, %v2464
  %v4644 = vsel %vm4634, %v4579, %v2466
  %v4646 = vsel %vm4634, %v4581, %v2468
  %v4648 = vsel %vm4634, %v4583, %v2470
  %v4650 = vsel %vm4634, %v4585, %v2472
  %v4652 = vsel %vm4634, %v4587, %v2474
  %v4654 = vsel %vm4634, %v4589, %v2476
  %v4656 = vsel %vm4634, %v4591, %v2478
  %v4658 = vsel %vm4634, %v4593, %v2480
  %v4660 = vsel %vm4634, %v4595, %v2482
  %v4662 = vsel %vm4634, %v4597, %v2484
  %v4664 = vsel %vm4634, %v4599, %v2486
  %v4666 = vsel %vm4634, %v4601, %v2488
  %v4668 = vsel %vm4634, %v4603, %v2490
  %v4670 = vsel %vm4634, %v4605, %v2492
  %v4672 = vsel %vm4634, %v4607, %v2494
  %v4674 = vsel %vm4634, %v4609, %v2496
  %v4676 = vsel %vm4634, %v4611, %v2498
  %v4678 = vsel %vm4634, %v4613, %v2500
  %v4680 = vsel %vm4634, %v4615, %v2502
  %v4682 = vsel %vm4634, %v4617, %v2504
  %v4684 = vsel %vm4634, %v4619, %v2506
  %v4686 = vsel %vm4634, %v4621, %v2508
  %v4688 = vsel %vm4634, %v4623, %v2510
  %v4690 = vsel %vm4634, %v4625, %v2512
  %v4692 = vsel %vm4634, %v4627, %v2514
  %v4694 = vsel %vm4634, %v4629, %v2516
  %v4696 = vsel %vm4634, %v4631, %v2518
  %v4698 = vsel %vm4634, %v4633, %v2520
  %vm4699 = vcmask 97280
  %v4701 = vsel %vm4699, %v4636, %v2682
  %v4703 = vsel %vm4699, %v4638, %v2684
  %v4705 = vsel %vm4699, %v4640, %v2686
  %v4707 = vsel %vm4699, %v4642, %v2688
  %v4709 = vsel %vm4699, %v4644, %v2690
  %v4711 = vsel %vm4699, %v4646, %v2692
  %v4713 = vsel %vm4699, %v4648, %v2694
  %v4715 = vsel %vm4699, %v4650, %v2696
  %v4717 = vsel %vm4699, %v4652, %v2698
  %v4719 = vsel %vm4699, %v4654, %v2700
  %v4721 = vsel %vm4699, %v4656, %v2702
  %v4723 = vsel %vm4699, %v4658, %v2704
  %v4725 = vsel %vm4699, %v4660, %v2706
  %v4727 = vsel %vm4699, %v4662, %v2708
  %v4729 = vsel %vm4699, %v4664, %v2710
  %v4731 = vsel %vm4699, %v4666, %v2712
  %v4733 = vsel %vm4699, %v4668, %v2714
  %v4735 = vsel %vm4699, %v4670, %v2716
  %v4737 = vsel %vm4699, %v4672, %v2718
  %v4739 = vsel %vm4699, %v4674, %v2720
  %v4741 = vsel %vm4699, %v4676, %v2722
  %v4743 = vsel %vm4699, %v4678, %v2724
  %v4745 = vsel %vm4699, %v4680, %v2726
  %v4747 = vsel %vm4699, %v4682, %v2728
  %v4749 = vsel %vm4699, %v4684, %v2730
  %v4751 = vsel %vm4699, %v4686, %v2732
  %v4753 = vsel %vm4699, %v4688, %v2734
  %v4755 = vsel %vm4699, %v4690, %v2736
  %v4757 = vsel %vm4699, %v4692, %v2738
  %v4759 = vsel %vm4699, %v4694, %v2740
  %v4761 = vsel %vm4699, %v4696, %v2742
  %v4763 = vsel %vm4699, %v4698, %v2744
  %vm4764 = vcmask 130048
  %v4766 = vsel %vm4764, %v4701, %v3226
  %v4768 = vsel %vm4764, %v4703, %v3228
  %v4770 = vsel %vm4764, %v4705, %v3230
  %v4772 = vsel %vm4764, %v4707, %v3232
  %v4774 = vsel %vm4764, %v4709, %v3234
  %v4776 = vsel %vm4764, %v4711, %v3236
  %v4778 = vsel %vm4764, %v4713, %v3238
  %v4780 = vsel %vm4764, %v4715, %v3240
  %v4782 = vsel %vm4764, %v4717, %v3242
  %v4784 = vsel %vm4764, %v4719, %v3244
  %v4786 = vsel %vm4764, %v4721, %v3246
  %v4788 = vsel %vm4764, %v4723, %v3248
  %v4790 = vsel %vm4764, %v4725, %v3250
  %v4792 = vsel %vm4764, %v4727, %v3252
  %v4794 = vsel %vm4764, %v4729, %v3254
  %v4796 = vsel %vm4764, %v4731, %v3256
  %v4798 = vsel %vm4764, %v4733, %v3258
  %v4800 = vsel %vm4764, %v4735, %v3260
  %v4802 = vsel %vm4764, %v4737, %v3262
  %v4804 = vsel %vm4764, %v4739, %v3264
  %v4806 = vsel %vm4764, %v4741, %v3266
  %v4808 = vsel %vm4764, %v4743, %v3268
  %v4810 = vsel %vm4764, %v4745, %v3270
  %v4812 = vsel %vm4764, %v4747, %v3272
  %v4814 = vsel %vm4764, %v4749, %v3274
  %v4816 = vsel %vm4764, %v4751, %v3276
  %v4818 = vsel %vm4764, %v4753, %v3278
  %v4820 = vsel %vm4764, %v4755, %v3280
  %v4822 = vsel %vm4764, %v4757, %v3282
  %v4824 = vsel %vm4764, %v4759, %v3284
  %v4826 = vsel %vm4764, %v4761, %v3286
  %v4828 = vsel %vm4764, %v4763, %v3288
  %vm4829 = vcmask 162816
  %v4831 = vsel %vm4829, %v4766, %v3482
  %v4833 = vsel %vm4829, %v4768, %v3484
  %v4835 = vsel %vm4829, %v4770, %v3486
  %v4837 = vsel %vm4829, %v4772, %v3488
  %v4839 = vsel %vm4829, %v4774, %v3490
  %v4841 = vsel %vm4829, %v4776, %v3492
  %v4843 = vsel %vm4829, %v4778, %v3494
  %v4845 = vsel %vm4829, %v4780, %v3496
  %v4847 = vsel %vm4829, %v4782, %v3498
  %v4849 = vsel %vm4829, %v4784, %v3500
  %v4851 = vsel %vm4829, %v4786, %v3502
  %v4853 = vsel %vm4829, %v4788, %v3504
  %v4855 = vsel %vm4829, %v4790, %v3506
  %v4857 = vsel %vm4829, %v4792, %v3508
  %v4859 = vsel %vm4829, %v4794, %v3510
  %v4861 = vsel %vm4829, %v4796, %v3512
  %v4863 = vsel %vm4829, %v4798, %v3514
  %v4865 = vsel %vm4829, %v4800, %v3516
  %v4867 = vsel %vm4829, %v4802, %v3518
  %v4869 = vsel %vm4829, %v4804, %v3520
  %v4871 = vsel %vm4829, %v4806, %v3522
  %v4873 = vsel %vm4829, %v4808, %v3524
  %v4875 = vsel %vm4829, %v4810, %v3526
  %v4877 = vsel %vm4829, %v4812, %v3528
  %v4879 = vsel %vm4829, %v4814, %v3530
  %v4881 = vsel %vm4829, %v4816, %v3532
  %v4883 = vsel %vm4829, %v4818, %v3534
  %v4885 = vsel %vm4829, %v4820, %v3536
  %v4887 = vsel %vm4829, %v4822, %v3538
  %v4889 = vsel %vm4829, %v4824, %v3540
  %v4891 = vsel %vm4829, %v4826, %v3542
  %v4893 = vsel %vm4829, %v4828, %v3544
  %vm4894 = vcmask 195584
  %v4896 = vsel %vm4894, %v4831, %v3706
  %v4898 = vsel %vm4894, %v4833, %v3708
  %v4900 = vsel %vm4894, %v4835, %v3710
  %v4902 = vsel %vm4894, %v4837, %v3712
  %v4904 = vsel %vm4894, %v4839, %v3714
  %v4906 = vsel %vm4894, %v4841, %v3716
  %v4908 = vsel %vm4894, %v4843, %v3718
  %v4910 = vsel %vm4894, %v4845, %v3720
  %v4912 = vsel %vm4894, %v4847, %v3722
  %v4914 = vsel %vm4894, %v4849, %v3724
  %v4916 = vsel %vm4894, %v4851, %v3726
  %v4918 = vsel %vm4894, %v4853, %v3728
  %v4920 = vsel %vm4894, %v4855, %v3730
  %v4922 = vsel %vm4894, %v4857, %v3732
  %v4924 = vsel %vm4894, %v4859, %v3734
  %v4926 = vsel %vm4894, %v4861, %v3736
  %v4928 = vsel %vm4894, %v4863, %v3738
  %v4930 = vsel %vm4894, %v4865, %v3740
  %v4932 = vsel %vm4894, %v4867, %v3742
  %v4934 = vsel %vm4894, %v4869, %v3744
  %v4936 = vsel %vm4894, %v4871, %v3746
  %v4938 = vsel %vm4894, %v4873, %v3748
  %v4940 = vsel %vm4894, %v4875, %v3750
  %v4942 = vsel %vm4894, %v4877, %v3752
  %v4944 = vsel %vm4894, %v4879, %v3754
  %v4946 = vsel %vm4894, %v4881, %v3756
  %v4948 = vsel %vm4894, %v4883, %v3758
  %v4950 = vsel %vm4894, %v4885, %v3760
  %v4952 = vsel %vm4894, %v4887, %v3762
  %v4954 = vsel %vm4894, %v4889, %v3764
  %v4956 = vsel %vm4894, %v4891, %v3766
  %v4958 = vsel %vm4894, %v4893, %v3768
  %vm4959 = vcmask 228352
  %v4961 = vsel %vm4959, %v4896, %v4250
  %v4963 = vsel %vm4959, %v4898, %v4252
  %v4965 = vsel %vm4959, %v4900, %v4254
  %v4967 = vsel %vm4959, %v4902, %v4256
  %v4969 = vsel %vm4959, %v4904, %v4258
  %v4971 = vsel %vm4959, %v4906, %v4260
  %v4973 = vsel %vm4959, %v4908, %v4262
  %v4975 = vsel %vm4959, %v4910, %v4264
  %v4977 = vsel %vm4959, %v4912, %v4266
  %v4979 = vsel %vm4959, %v4914, %v4268
  %v4981 = vsel %vm4959, %v4916, %v4270
  %v4983 = vsel %vm4959, %v4918, %v4272
  %v4985 = vsel %vm4959, %v4920, %v4274
  %v4987 = vsel %vm4959, %v4922, %v4276
  %v4989 = vsel %vm4959, %v4924, %v4278
  %v4991 = vsel %vm4959, %v4926, %v4280
  %v4993 = vsel %vm4959, %v4928, %v4282
  %v4995 = vsel %vm4959, %v4930, %v4284
  %v4997 = vsel %vm4959, %v4932, %v4286
  %v4999 = vsel %vm4959, %v4934, %v4288
  %v5001 = vsel %vm4959, %v4936, %v4290
  %v5003 = vsel %vm4959, %v4938, %v4292
  %v5005 = vsel %vm4959, %v4940, %v4294
  %v5007 = vsel %vm4959, %v4942, %v4296
  %v5009 = vsel %vm4959, %v4944, %v4298
  %v5011 = vsel %vm4959, %v4946, %v4300
  %v5013 = vsel %vm4959, %v4948, %v4302
  %v5015 = vsel %vm4959, %v4950, %v4304
  %v5017 = vsel %vm4959, %v4952, %v4306
  %v5019 = vsel %vm4959, %v4954, %v4308
  %v5021 = vsel %vm4959, %v4956, %v4310
  %v5023 = vsel %vm4959, %v4958, %v4312
  %vm5024 = vcmask 261120
  %v5026 = vsel %vm5024, %v4961, %v4506
  %v5028 = vsel %vm5024, %v4963, %v4508
  %v5030 = vsel %vm5024, %v4965, %v4510
  %v5032 = vsel %vm5024, %v4967, %v4512
  %v5034 = vsel %vm5024, %v4969, %v4514
  %v5036 = vsel %vm5024, %v4971, %v4516
  %v5038 = vsel %vm5024, %v4973, %v4518
  %v5040 = vsel %vm5024, %v4975, %v4520
  %v5042 = vsel %vm5024, %v4977, %v4522
  %v5044 = vsel %vm5024, %v4979, %v4524
  %v5046 = vsel %vm5024, %v4981, %v4526
  %v5048 = vsel %vm5024, %v4983, %v4528
  %v5050 = vsel %vm5024, %v4985, %v4530
  %v5052 = vsel %vm5024, %v4987, %v4532
  %v5054 = vsel %vm5024, %v4989, %v4534
  %v5056 = vsel %vm5024, %v4991, %v4536
  %v5058 = vsel %vm5024, %v4993, %v4538
  %v5060 = vsel %vm5024, %v4995, %v4540
  %v5062 = vsel %vm5024, %v4997, %v4542
  %v5064 = vsel %vm5024, %v4999, %v4544
  %v5066 = vsel %vm5024, %v5001, %v4546
  %v5068 = vsel %vm5024, %v5003, %v4548
  %v5070 = vsel %vm5024, %v5005, %v4550
  %v5072 = vsel %vm5024, %v5007, %v4552
  %v5074 = vsel %vm5024, %v5009, %v4554
  %v5076 = vsel %vm5024, %v5011, %v4556
  %v5078 = vsel %vm5024, %v5013, %v4558
  %v5080 = vsel %vm5024, %v5015, %v4560
  %v5082 = vsel %vm5024, %v5017, %v4562
  %v5084 = vsel %vm5024, %v5019, %v4564
  %v5086 = vsel %vm5024, %v5021, %v4566
  %v5088 = vsel %vm5024, %v5023, %v4568
  %v5089 = vld [vmem:[%s1] sm:$0xf]
  %v5090 = vld [vmem:[%s1 + $0x4] sm:$0xf]
  %v5091 = vld [vmem:[%s1 + $0x8] sm:$0xf]
  %v5092 = vld [vmem:[%s1 + $0xc] sm:$0xf]
  %v5093 = vld [vmem:[%s1 + $0x10] sm:$0x3]
  %v5094 = vld [vmem:[%s4] sm:$0x1]
  %v5096 = vlaneseq
  %v5097 = vshrl.u32 %v5096, 7
  %v5098 = vsub.s32 0, %v5097
  %v5099 = vrot.slane %v5094, %v5098
  %v5106 = vunpack.c.l.b16 %v5089
  %v5107 = vunpack.c.l.b16 %v5090
  %v5108 = vunpack.c.l.b16 %v5091
  %v5109 = vunpack.c.l.b16 %v5092
  %v5110 = vunpack.c.l.b16 %v5093
  %v5111 = vpack.c.b16 %v5107, %v5106
  %v5112 = vpack.c.b16 %v5109, %v5108
  %v5113 = vpack.c.b16 %v5110, %v5110
  %vm5116 = vcmask 293888
  %v5117 = vsel %vm5116, %v5026, 0
  %v5119 = vsel %vm5116, %v5028, 0
  %v5121 = vsel %vm5116, %v5030, 0
  %v5123 = vsel %vm5116, %v5032, 0
  %v5125 = vsel %vm5116, %v5034, 0
  %v5127 = vsel %vm5116, %v5036, 0
  %v5129 = vsel %vm5116, %v5038, 0
  %v5131 = vsel %vm5116, %v5040, 0
  %v5133 = vsel %vm5116, %v5042, 0
  %v5135 = vsel %vm5116, %v5044, 0
  %v5137 = vsel %vm5116, %v5046, 0
  %v5139 = vsel %vm5116, %v5048, 0
  %v5141 = vsel %vm5116, %v5050, 0
  %v5143 = vsel %vm5116, %v5052, 0
  %v5145 = vsel %vm5116, %v5054, 0
  %v5147 = vsel %vm5116, %v5056, 0
  %v5149 = vsel %vm5116, %v5058, 0
  %v5151 = vsel %vm5116, %v5060, 0
  %v5153 = vsel %vm5116, %v5062, 0
  %v5155 = vsel %vm5116, %v5064, 0
  %v5157 = vsel %vm5116, %v5066, 0
  %v5159 = vsel %vm5116, %v5068, 0
  %v5161 = vsel %vm5116, %v5070, 0
  %v5163 = vsel %vm5116, %v5072, 0
  %v5165 = vsel %vm5116, %v5074, 0
  %v5167 = vsel %vm5116, %v5076, 0
  %v5169 = vsel %vm5116, %v5078, 0
  %v5171 = vsel %vm5116, %v5080, 0
  %v5173 = vsel %vm5116, %v5082, 0
  %v5175 = vsel %vm5116, %v5084, 0
  %v5177 = vsel %vm5116, %v5086, 0
  %v5179 = vsel %vm5116, %v5088, 0
  %vm5181 = vcmask 1041408
  %v5183 = vsel %vm5181, %v5113, 0
  %5185 = vmatprep.subr.bf16.mxu0 0
  %5186 = vmatpush1.bf16.msra.mxu0 0
  %5187 = vmatprep.subr.bf16.mxu0 0
  %5188 = vmatpush1.bf16.msra.mxu0 0
  %5189 = vmatprep.subr.bf16.mxu0 0
  %5190 = vmatpush1.bf16.msra.mxu0 0
  %5191 = vmatprep.subr.bf16.mxu0 0
  %5192 = vmatpush1.bf16.msra.mxu0 0
  %5193 = vmatprep.subr.bf16.mxu0 0
  %5194 = vmatpush1.bf16.msra.mxu0 0
  %5195 = vmatprep.subr.bf16.mxu0 0
  %5196 = vmatpush1.bf16.msra.mxu0 %v5183
  %5197 = vmatprep.subr.bf16.mxu0 0
  %5198 = vmatpush1.bf16.msra.mxu0 %v5112
  %5199 = vmatprep.subr.bf16.mxu0 0
  %5200 = vmatpush1.bf16.msra.mxu0 %v5111
  %5201 = vmatprep.subr.bf16.mxu0 0
  %5202 = vmatpush2.bf16.msra.mxu0 0
  %5203 = vmatprep.subr.bf16.mxu0 0
  %5204 = vmatpush2.bf16.msra.mxu0 0
  %5205 = vmatprep.subr.bf16.mxu0 0
  %5206 = vmatpush2.bf16.msra.mxu0 0
  %5207 = vmatprep.subr.bf16.mxu0 0
  %5208 = vmatpush2.bf16.msra.mxu0 0
  %5209 = vmatprep.subr.bf16.mxu0 0
  %5210 = vmatpush2.bf16.msra.mxu0 0
  %5211 = vmatprep.subr.bf16.mxu0 0
  %5212 = vmatpush2.bf16.msra.mxu0 0
  %5213 = vmatprep.subr.bf16.mxu0 0
  %5214 = vmatpush2.bf16.msra.mxu0 0
  %5215 = vmatprep.subr.bf16.mxu0 0
  %5216 = vmatpush2.bf16.msra.mxu0 0
  %5217 = vmatprep.mubr.bf16.mxu0 0
  %5218 = vmatmul.mubr.bf16.gmra.mxu0 %v5117
  %v5219 = vpop.f32.mrf.mxu0
  %v5220 = vadd.f32 %v5099, %v5219
  %v5221 = vpop.f32.mrf.mxu0
  %v5222 = vpop.f32.mrf.mxu0
  %v5223 = vadd.f32 %v5099, %v5222
  %v5224 = vpop.f32.mrf.mxu0
  %5225 = vmatprep.mubr.bf16.mxu0 0
  %5226 = vmatmul.mubr.bf16.gmra.mxu0 %v5119
  %v5227 = vpop.f32.mrf.mxu0
  %v5228 = vadd.f32 %v5099, %v5227
  %v5229 = vpop.f32.mrf.mxu0
  %v5230 = vpop.f32.mrf.mxu0
  %v5231 = vadd.f32 %v5099, %v5230
  %v5232 = vpop.f32.mrf.mxu0
  %5233 = vmatprep.mubr.bf16.mxu0 0
  %5234 = vmatmul.mubr.bf16.gmra.mxu0 %v5121
  %v5235 = vpop.f32.mrf.mxu0
  %v5236 = vadd.f32 %v5099, %v5235
  %v5237 = vpop.f32.mrf.mxu0
  %v5238 = vpop.f32.mrf.mxu0
  %v5239 = vadd.f32 %v5099, %v5238
  %v5240 = vpop.f32.mrf.mxu0
  %5241 = vmatprep.mubr.bf16.mxu0 0
  %5242 = vmatmul.mubr.bf16.gmra.mxu0 %v5123
  %v5243 = vpop.f32.mrf.mxu0
  %v5244 = vadd.f32 %v5099, %v5243
  %v5245 = vpop.f32.mrf.mxu0
  %v5246 = vpop.f32.mrf.mxu0
  %v5247 = vadd.f32 %v5099, %v5246
  %v5248 = vpop.f32.mrf.mxu0
  %5249 = vmatprep.mubr.bf16.mxu0 0
  %5250 = vmatmul.mubr.bf16.gmra.mxu0 %v5125
  %v5251 = vpop.f32.mrf.mxu0
  %v5252 = vadd.f32 %v5099, %v5251
  %v5253 = vpop.f32.mrf.mxu0
  %v5254 = vpop.f32.mrf.mxu0
  %v5255 = vadd.f32 %v5099, %v5254
  %v5256 = vpop.f32.mrf.mxu0
  %5257 = vmatprep.mubr.bf16.mxu0 0
  %5258 = vmatmul.mubr.bf16.gmra.mxu0 %v5127
  %v5259 = vpop.f32.mrf.mxu0
  %v5260 = vadd.f32 %v5099, %v5259
  %v5261 = vpop.f32.mrf.mxu0
  %v5262 = vpop.f32.mrf.mxu0
  %v5263 = vadd.f32 %v5099, %v5262
  %v5264 = vpop.f32.mrf.mxu0
  %5265 = vmatprep.mubr.bf16.mxu0 0
  %5266 = vmatmul.mubr.bf16.gmra.mxu0 %v5129
  %v5267 = vpop.f32.mrf.mxu0
  %v5268 = vadd.f32 %v5099, %v5267
  %v5269 = vpop.f32.mrf.mxu0
  %v5270 = vpop.f32.mrf.mxu0
  %v5271 = vadd.f32 %v5099, %v5270
  %v5272 = vpop.f32.mrf.mxu0
  %5273 = vmatprep.mubr.bf16.mxu0 0
  %5274 = vmatmul.mubr.bf16.gmra.mxu0 %v5131
  %v5275 = vpop.f32.mrf.mxu0
  %v5276 = vadd.f32 %v5099, %v5275
  %v5277 = vpop.f32.mrf.mxu0
  %v5278 = vpop.f32.mrf.mxu0
  %v5279 = vadd.f32 %v5099, %v5278
  %v5280 = vpop.f32.mrf.mxu0
  %5281 = vmatprep.mubr.bf16.mxu0 0
  %5282 = vmatmul.mubr.bf16.gmra.mxu0 %v5133
  %v5283 = vpop.f32.mrf.mxu0
  %v5284 = vadd.f32 %v5099, %v5283
  %v5285 = vpop.f32.mrf.mxu0
  %v5286 = vpop.f32.mrf.mxu0
  %v5287 = vadd.f32 %v5099, %v5286
  %v5288 = vpop.f32.mrf.mxu0
  %5289 = vmatprep.mubr.bf16.mxu0 0
  %5290 = vmatmul.mubr.bf16.gmra.mxu0 %v5135
  %v5291 = vpop.f32.mrf.mxu0
  %v5292 = vadd.f32 %v5099, %v5291
  %v5293 = vpop.f32.mrf.mxu0
  %v5294 = vpop.f32.mrf.mxu0
  %v5295 = vadd.f32 %v5099, %v5294
  %v5296 = vpop.f32.mrf.mxu0
  %5297 = vmatprep.mubr.bf16.mxu0 0
  %5298 = vmatmul.mubr.bf16.gmra.mxu0 %v5137
  %v5299 = vpop.f32.mrf.mxu0
  %v5300 = vadd.f32 %v5099, %v5299
  %v5301 = vpop.f32.mrf.mxu0
  %v5302 = vpop.f32.mrf.mxu0
  %v5303 = vadd.f32 %v5099, %v5302
  %v5304 = vpop.f32.mrf.mxu0
  %5305 = vmatprep.mubr.bf16.mxu0 0
  %5306 = vmatmul.mubr.bf16.gmra.mxu0 %v5139
  %v5307 = vpop.f32.mrf.mxu0
  %v5308 = vadd.f32 %v5099, %v5307
  %v5309 = vpop.f32.mrf.mxu0
  %v5310 = vpop.f32.mrf.mxu0
  %v5311 = vadd.f32 %v5099, %v5310
  %v5312 = vpop.f32.mrf.mxu0
  %5313 = vmatprep.mubr.bf16.mxu0 0
  %5314 = vmatmul.mubr.bf16.gmra.mxu0 %v5141
  %v5315 = vpop.f32.mrf.mxu0
  %v5316 = vadd.f32 %v5099, %v5315
  %v5317 = vpop.f32.mrf.mxu0
  %v5318 = vpop.f32.mrf.mxu0
  %v5319 = vadd.f32 %v5099, %v5318
  %v5320 = vpop.f32.mrf.mxu0
  %5321 = vmatprep.mubr.bf16.mxu0 0
  %5322 = vmatmul.mubr.bf16.gmra.mxu0 %v5143
  %v5323 = vpop.f32.mrf.mxu0
  %v5324 = vadd.f32 %v5099, %v5323
  %v5325 = vpop.f32.mrf.mxu0
  %v5326 = vpop.f32.mrf.mxu0
  %v5327 = vadd.f32 %v5099, %v5326
  %v5328 = vpop.f32.mrf.mxu0
  %5329 = vmatprep.mubr.bf16.mxu0 0
  %5330 = vmatmul.mubr.bf16.gmra.mxu0 %v5145
  %v5331 = vpop.f32.mrf.mxu0
  %v5332 = vadd.f32 %v5099, %v5331
  %v5333 = vpop.f32.mrf.mxu0
  %v5334 = vpop.f32.mrf.mxu0
  %v5335 = vadd.f32 %v5099, %v5334
  %v5336 = vpop.f32.mrf.mxu0
  %5337 = vmatprep.mubr.bf16.mxu0 0
  %5338 = vmatmul.mubr.bf16.gmra.mxu0 %v5147
  %v5339 = vpop.f32.mrf.mxu0
  %v5340 = vadd.f32 %v5099, %v5339
  %v5341 = vpop.f32.mrf.mxu0
  %v5342 = vpop.f32.mrf.mxu0
  %v5343 = vadd.f32 %v5099, %v5342
  %v5344 = vpop.f32.mrf.mxu0
  %5345 = vmatprep.mubr.bf16.mxu0 0
  %5346 = vmatmul.mubr.bf16.gmra.mxu0 %v5149
  %v5347 = vpop.f32.mrf.mxu0
  %v5348 = vadd.f32 %v5099, %v5347
  %v5349 = vpop.f32.mrf.mxu0
  %v5350 = vpop.f32.mrf.mxu0
  %v5351 = vadd.f32 %v5099, %v5350
  %v5352 = vpop.f32.mrf.mxu0
  %5353 = vmatprep.mubr.bf16.mxu0 0
  %5354 = vmatmul.mubr.bf16.gmra.mxu0 %v5151
  %v5355 = vpop.f32.mrf.mxu0
  %v5356 = vadd.f32 %v5099, %v5355
  %v5357 = vpop.f32.mrf.mxu0
  %v5358 = vpop.f32.mrf.mxu0
  %v5359 = vadd.f32 %v5099, %v5358
  %v5360 = vpop.f32.mrf.mxu0
  %5361 = vmatprep.mubr.bf16.mxu0 0
  %5362 = vmatmul.mubr.bf16.gmra.mxu0 %v5153
  %v5363 = vpop.f32.mrf.mxu0
  %v5364 = vadd.f32 %v5099, %v5363
  %v5365 = vpop.f32.mrf.mxu0
  %v5366 = vpop.f32.mrf.mxu0
  %v5367 = vadd.f32 %v5099, %v5366
  %v5368 = vpop.f32.mrf.mxu0
  %5369 = vmatprep.mubr.bf16.mxu0 0
  %5370 = vmatmul.mubr.bf16.gmra.mxu0 %v5155
  %v5371 = vpop.f32.mrf.mxu0
  %v5372 = vadd.f32 %v5099, %v5371
  %v5373 = vpop.f32.mrf.mxu0
  %v5374 = vpop.f32.mrf.mxu0
  %v5375 = vadd.f32 %v5099, %v5374
  %v5376 = vpop.f32.mrf.mxu0
  %5377 = vmatprep.mubr.bf16.mxu0 0
  %5378 = vmatmul.mubr.bf16.gmra.mxu0 %v5157
  %v5379 = vpop.f32.mrf.mxu0
  %v5380 = vadd.f32 %v5099, %v5379
  %v5381 = vpop.f32.mrf.mxu0
  %v5382 = vpop.f32.mrf.mxu0
  %v5383 = vadd.f32 %v5099, %v5382
  %v5384 = vpop.f32.mrf.mxu0
  %5385 = vmatprep.mubr.bf16.mxu0 0
  %5386 = vmatmul.mubr.bf16.gmra.mxu0 %v5159
  %v5387 = vpop.f32.mrf.mxu0
  %v5388 = vadd.f32 %v5099, %v5387
  %v5389 = vpop.f32.mrf.mxu0
  %v5390 = vpop.f32.mrf.mxu0
  %v5391 = vadd.f32 %v5099, %v5390
  %v5392 = vpop.f32.mrf.mxu0
  %5393 = vmatprep.mubr.bf16.mxu0 0
  %5394 = vmatmul.mubr.bf16.gmra.mxu0 %v5161
  %v5395 = vpop.f32.mrf.mxu0
  %v5396 = vadd.f32 %v5099, %v5395
  %v5397 = vpop.f32.mrf.mxu0
  %v5398 = vpop.f32.mrf.mxu0
  %v5399 = vadd.f32 %v5099, %v5398
  %v5400 = vpop.f32.mrf.mxu0
  %5401 = vmatprep.mubr.bf16.mxu0 0
  %5402 = vmatmul.mubr.bf16.gmra.mxu0 %v5163
  %v5403 = vpop.f32.mrf.mxu0
  %v5404 = vadd.f32 %v5099, %v5403
  %v5405 = vpop.f32.mrf.mxu0
  %v5406 = vpop.f32.mrf.mxu0
  %v5407 = vadd.f32 %v5099, %v5406
  %v5408 = vpop.f32.mrf.mxu0
  %5409 = vmatprep.mubr.bf16.mxu0 0
  %5410 = vmatmul.mubr.bf16.gmra.mxu0 %v5165
  %v5411 = vpop.f32.mrf.mxu0
  %v5412 = vadd.f32 %v5099, %v5411
  %v5413 = vpop.f32.mrf.mxu0
  %v5414 = vpop.f32.mrf.mxu0
  %v5415 = vadd.f32 %v5099, %v5414
  %v5416 = vpop.f32.mrf.mxu0
  %5417 = vmatprep.mubr.bf16.mxu0 0
  %5418 = vmatmul.mubr.bf16.gmra.mxu0 %v5167
  %v5419 = vpop.f32.mrf.mxu0
  %v5420 = vadd.f32 %v5099, %v5419
  %v5421 = vpop.f32.mrf.mxu0
  %v5422 = vpop.f32.mrf.mxu0
  %v5423 = vadd.f32 %v5099, %v5422
  %v5424 = vpop.f32.mrf.mxu0
  %5425 = vmatprep.mubr.bf16.mxu0 0
  %5426 = vmatmul.mubr.bf16.gmra.mxu0 %v5169
  %v5427 = vpop.f32.mrf.mxu0
  %v5428 = vadd.f32 %v5099, %v5427
  %v5429 = vpop.f32.mrf.mxu0
  %v5430 = vpop.f32.mrf.mxu0
  %v5431 = vadd.f32 %v5099, %v5430
  %v5432 = vpop.f32.mrf.mxu0
  %5433 = vmatprep.mubr.bf16.mxu0 0
  %5434 = vmatmul.mubr.bf16.gmra.mxu0 %v5171
  %v5435 = vpop.f32.mrf.mxu0
  %v5436 = vadd.f32 %v5099, %v5435
  %v5437 = vpop.f32.mrf.mxu0
  %v5438 = vpop.f32.mrf.mxu0
  %v5439 = vadd.f32 %v5099, %v5438
  %v5440 = vpop.f32.mrf.mxu0
  %5441 = vmatprep.mubr.bf16.mxu0 0
  %5442 = vmatmul.mubr.bf16.gmra.mxu0 %v5173
  %v5443 = vpop.f32.mrf.mxu0
  %v5444 = vadd.f32 %v5099, %v5443
  %v5445 = vpop.f32.mrf.mxu0
  %v5446 = vpop.f32.mrf.mxu0
  %v5447 = vadd.f32 %v5099, %v5446
  %v5448 = vpop.f32.mrf.mxu0
  %5449 = vmatprep.mubr.bf16.mxu0 0
  %5450 = vmatmul.mubr.bf16.gmra.mxu0 %v5175
  %v5451 = vpop.f32.mrf.mxu0
  %v5452 = vadd.f32 %v5099, %v5451
  %v5453 = vpop.f32.mrf.mxu0
  %v5454 = vpop.f32.mrf.mxu0
  %v5455 = vadd.f32 %v5099, %v5454
  %v5456 = vpop.f32.mrf.mxu0
  %5457 = vmatprep.mubr.bf16.mxu0 0
  %5458 = vmatmul.mubr.bf16.gmra.mxu0 %v5177
  %v5459 = vpop.f32.mrf.mxu0
  %v5460 = vadd.f32 %v5099, %v5459
  %v5461 = vpop.f32.mrf.mxu0
  %v5462 = vpop.f32.mrf.mxu0
  %v5463 = vadd.f32 %v5099, %v5462
  %v5464 = vpop.f32.mrf.mxu0
  %5465 = vmatprep.mubr.bf16.mxu0 0
  %5466 = vmatmul.mubr.bf16.gmra.mxu0 %v5179
  %v5467 = vpop.f32.mrf.mxu0
  %v5468 = vadd.f32 %v5099, %v5467
  %v5469 = vpop.f32.mrf.mxu0
  %v5470 = vpop.f32.mrf.mxu0
  %v5471 = vadd.f32 %v5099, %v5470
  %v5472 = vpop.f32.mrf.mxu0
  %5473 = vdwg.mxu0
  %v5474 = vmax.f32 %v5220, 0.0
  %v5475 = vmax.f32 %v5223, 0.0
  %v5476 = vmax.f32 %v5228, 0.0
  %v5477 = vmax.f32 %v5231, 0.0
  %v5478 = vmax.f32 %v5236, 0.0
  %v5479 = vmax.f32 %v5239, 0.0
  %v5480 = vmax.f32 %v5244, 0.0
  %v5481 = vmax.f32 %v5247, 0.0
  %v5482 = vmax.f32 %v5252, 0.0
  %v5483 = vmax.f32 %v5255, 0.0
  %v5484 = vmax.f32 %v5260, 0.0
  %v5485 = vmax.f32 %v5263, 0.0
  %v5486 = vmax.f32 %v5268, 0.0
  %v5487 = vmax.f32 %v5271, 0.0
  %v5488 = vmax.f32 %v5276, 0.0
  %v5489 = vmax.f32 %v5279, 0.0
  %v5490 = vmax.f32 %v5284, 0.0
  %v5491 = vmax.f32 %v5287, 0.0
  %v5492 = vmax.f32 %v5292, 0.0
  %v5493 = vmax.f32 %v5295, 0.0
  %v5494 = vmax.f32 %v5300, 0.0
  %v5495 = vmax.f32 %v5303, 0.0
  %v5496 = vmax.f32 %v5308, 0.0
  %v5497 = vmax.f32 %v5311, 0.0
  %v5498 = vmax.f32 %v5316, 0.0
  %v5499 = vmax.f32 %v5319, 0.0
  %v5500 = vmax.f32 %v5324, 0.0
  %v5501 = vmax.f32 %v5327, 0.0
  %v5502 = vmax.f32 %v5332, 0.0
  %v5503 = vmax.f32 %v5335, 0.0
  %v5504 = vmax.f32 %v5340, 0.0
  %v5505 = vmax.f32 %v5343, 0.0
  %v5506 = vmax.f32 %v5348, 0.0
  %v5507 = vmax.f32 %v5351, 0.0
  %v5508 = vmax.f32 %v5356, 0.0
  %v5509 = vmax.f32 %v5359, 0.0
  %v5510 = vmax.f32 %v5364, 0.0
  %v5511 = vmax.f32 %v5367, 0.0
  %v5512 = vmax.f32 %v5372, 0.0
  %v5513 = vmax.f32 %v5375, 0.0
  %v5514 = vmax.f32 %v5380, 0.0
  %v5515 = vmax.f32 %v5383, 0.0
  %v5516 = vmax.f32 %v5388, 0.0
  %v5517 = vmax.f32 %v5391, 0.0
  %v5518 = vmax.f32 %v5396, 0.0
  %v5519 = vmax.f32 %v5399, 0.0
  %v5520 = vmax.f32 %v5404, 0.0
  %v5521 = vmax.f32 %v5407, 0.0
  %v5522 = vmax.f32 %v5412, 0.0
  %v5523 = vmax.f32 %v5415, 0.0
  %v5524 = vmax.f32 %v5420, 0.0
  %v5525 = vmax.f32 %v5423, 0.0
  %v5526 = vmax.f32 %v5428, 0.0
  %v5527 = vmax.f32 %v5431, 0.0
  %v5528 = vmax.f32 %v5436, 0.0
  %v5529 = vmax.f32 %v5439, 0.0
  %v5530 = vmax.f32 %v5444, 0.0
  %v5531 = vmax.f32 %v5447, 0.0
  %v5532 = vmax.f32 %v5452, 0.0
  %v5533 = vmax.f32 %v5455, 0.0
  %v5534 = vmax.f32 %v5460, 0.0
  %v5535 = vmax.f32 %v5463, 0.0
  %v5536 = vmax.f32 %v5468, 0.0
  %v5537 = vmax.f32 %v5471, 0.0
  %5538 = vst.msk [vmem:[#allocation3] sm:$0xff] %vm4634, 0.0
  %5539 = vst.msk [vmem:[#allocation3 + $0x8] sm:$0xff] %vm4634, 0.0
  %vm5540 = vcmask 58368
  %5541 = vst.msk [vmem:[#allocation3 + $0x10] sm:$0x3] %vm5540, 0.0
  %5542 = vst.msk [vmem:[#allocation3 + $0x1b0] sm:$0xff] %vm4634, 0.0
  %5543 = vst.msk [vmem:[#allocation3 + $0x1b8] sm:$0xff] %vm4634, 0.0
  %5544 = vst.msk [vmem:[#allocation3 + $0x1c0] sm:$0x3] %vm5540, 0.0
  %s5545 = scalar_lea.vmem [#allocation3], 408
  %5546 = vst.msk [vmem:[%s5545] sm:$0xff] %vm4634, 0.0
  %5547 = vst.msk [vmem:[%s5545 + $0x8] sm:$0xff] %vm4634, 0.0
  %5548 = vst.msk [vmem:[%s5545 + $0x10] sm:$0x3] %vm5540, 0.0
  %5549 = vst.msk [vmem:[%s5545 + $0x1b0] sm:$0xff] %vm4634, 0.0
  %5550 = vst.msk [vmem:[%s5545 + $0x1b8] sm:$0xff] %vm4634, 0.0
  %5551 = vst.msk [vmem:[%s5545 + $0x1c0] sm:$0x3] %vm5540, 0.0
  %s5552 = scalar_lea.vmem [#allocation3], 24
  %vm5553 = vcmask 57344
  %5554 = vst.msk [vmem:[%s5552] sm:$0x1] %vm5553, 0.0
  %5555 = vst.msk [vmem:[%s5552 + $0x18] sm:$0x1] %vm5553, 0.0
  %5556 = vst.msk [vmem:[%s5552 + $0x30] sm:$0x1] %vm5553, 0.0
  %5557 = vst.msk [vmem:[%s5552 + $0x48] sm:$0x1] %vm5553, 0.0
  %5558 = vst.msk [vmem:[%s5552 + $0x60] sm:$0x1] %vm5553, 0.0
  %5559 = vst.msk [vmem:[%s5552 + $0x78] sm:$0x1] %vm5553, 0.0
  %5560 = vst.msk [vmem:[%s5552 + $0x90] sm:$0x1] %vm5553, 0.0
  %5561 = vst.msk [vmem:[%s5552 + $0xa8] sm:$0x1] %vm5553, 0.0
  %5562 = vst.msk [vmem:[%s5552 + $0xc0] sm:$0x1] %vm5553, 0.0
  %5563 = vst.msk [vmem:[%s5552 + $0xd8] sm:$0x1] %vm5553, 0.0
  %5564 = vst.msk [vmem:[%s5552 + $0xf0] sm:$0x1] %vm5553, 0.0
  %5565 = vst.msk [vmem:[%s5552 + $0x108] sm:$0x1] %vm5553, 0.0
  %5566 = vst.msk [vmem:[%s5552 + $0x120] sm:$0x1] %vm5553, 0.0
  %5567 = vst.msk [vmem:[%s5552 + $0x138] sm:$0x1] %vm5553, 0.0
  %5568 = vst.msk [vmem:[%s5552 + $0x150] sm:$0x1] %vm5553, 0.0
  %5569 = vst.msk [vmem:[%s5552 + $0x168] sm:$0x1] %vm5553, 0.0
  %5570 = vst.msk [vmem:[%s5552 + $0x1b0] sm:$0x1] %vm5553, 0.0
  %5571 = vst.msk [vmem:[%s5552 + $0x1c8] sm:$0x1] %vm5553, 0.0
  %5572 = vst.msk [vmem:[%s5552 + $0x1e0] sm:$0x1] %vm5553, 0.0
  %5573 = vst.msk [vmem:[%s5552 + $0x1f8] sm:$0x1] %vm5553, 0.0
  %5574 = vst.msk [vmem:[%s5552 + $0x210] sm:$0x1] %vm5553, 0.0
  %5575 = vst.msk [vmem:[%s5552 + $0x228] sm:$0x1] %vm5553, 0.0
  %5576 = vst.msk [vmem:[%s5552 + $0x240] sm:$0x1] %vm5553, 0.0
  %5577 = vst.msk [vmem:[%s5552 + $0x258] sm:$0x1] %vm5553, 0.0
  %5578 = vst.msk [vmem:[%s5552 + $0x270] sm:$0x1] %vm5553, 0.0
  %5579 = vst.msk [vmem:[%s5552 + $0x288] sm:$0x1] %vm5553, 0.0
  %5580 = vst.msk [vmem:[%s5552 + $0x2a0] sm:$0x1] %vm5553, 0.0
  %5581 = vst.msk [vmem:[%s5552 + $0x2b8] sm:$0x1] %vm5553, 0.0
  %5582 = vst.msk [vmem:[%s5552 + $0x2d0] sm:$0x1] %vm5553, 0.0
  %5583 = vst.msk [vmem:[%s5552 + $0x2e8] sm:$0x1] %vm5553, 0.0
  %5584 = vst.msk [vmem:[%s5552 + $0x300] sm:$0x1] %vm5553, 0.0
  %5585 = vst.msk [vmem:[%s5552 + $0x318] sm:$0x1] %vm5553, 0.0
  %5586 = vst.msk [vmem:[%s5552 + $0x11] sm:$0x1] %vm5553, 0.0
  %5587 = vst.msk [vmem:[%s5552 + $0x29] sm:$0x1] %vm5553, 0.0
  %5588 = vst.msk [vmem:[%s5552 + $0x41] sm:$0x1] %vm5553, 0.0
  %5589 = vst.msk [vmem:[%s5552 + $0x59] sm:$0x1] %vm5553, 0.0
  %5590 = vst.msk [vmem:[%s5552 + $0x71] sm:$0x1] %vm5553, 0.0
  %5591 = vst.msk [vmem:[%s5552 + $0x89] sm:$0x1] %vm5553, 0.0
  %5592 = vst.msk [vmem:[%s5552 + $0xa1] sm:$0x1] %vm5553, 0.0
  %5593 = vst.msk [vmem:[%s5552 + $0xb9] sm:$0x1] %vm5553, 0.0
  %5594 = vst.msk [vmem:[%s5552 + $0xd1] sm:$0x1] %vm5553, 0.0
  %5595 = vst.msk [vmem:[%s5552 + $0xe9] sm:$0x1] %vm5553, 0.0
  %5596 = vst.msk [vmem:[%s5552 + $0x101] sm:$0x1] %vm5553, 0.0
  %5597 = vst.msk [vmem:[%s5552 + $0x119] sm:$0x1] %vm5553, 0.0
  %5598 = vst.msk [vmem:[%s5552 + $0x131] sm:$0x1] %vm5553, 0.0
  %5599 = vst.msk [vmem:[%s5552 + $0x149] sm:$0x1] %vm5553, 0.0
  %5600 = vst.msk [vmem:[%s5552 + $0x161] sm:$0x1] %vm5553, 0.0
  %5601 = vst.msk [vmem:[%s5552 + $0x179] sm:$0x1] %vm5553, 0.0
  %5602 = vst.msk [vmem:[%s5552 + $0x1c1] sm:$0x1] %vm5553, 0.0
  %5603 = vst.msk [vmem:[%s5552 + $0x1d9] sm:$0x1] %vm5553, 0.0
  %5604 = vst.msk [vmem:[%s5552 + $0x1f1] sm:$0x1] %vm5553, 0.0
  %5605 = vst.msk [vmem:[%s5552 + $0x209] sm:$0x1] %vm5553, 0.0
  %5606 = vst.msk [vmem:[%s5552 + $0x221] sm:$0x1] %vm5553, 0.0
  %5607 = vst.msk [vmem:[%s5552 + $0x239] sm:$0x1] %vm5553, 0.0
  %5608 = vst.msk [vmem:[%s5552 + $0x251] sm:$0x1] %vm5553, 0.0
  %5609 = vst.msk [vmem:[%s5552 + $0x269] sm:$0x1] %vm5553, 0.0
  %5610 = vst.msk [vmem:[%s5552 + $0x281] sm:$0x1] %vm5553, 0.0
  %5611 = vst.msk [vmem:[%s5552 + $0x299] sm:$0x1] %vm5553, 0.0
  %5612 = vst.msk [vmem:[%s5552 + $0x2b1] sm:$0x1] %vm5553, 0.0
  %5613 = vst.msk [vmem:[%s5552 + $0x2c9] sm:$0x1] %vm5553, 0.0
  %5614 = vst.msk [vmem:[%s5552 + $0x2e1] sm:$0x1] %vm5553, 0.0
  %5615 = vst.msk [vmem:[%s5552 + $0x2f9] sm:$0x1] %vm5553, 0.0
  %5616 = vst.msk [vmem:[%s5552 + $0x311] sm:$0x1] %vm5553, 0.0
  %5617 = vst.msk [vmem:[%s5552 + $0x329] sm:$0x1] %vm5553, 0.0
  %5618 = vst.msk [vmem:[%s5552 + $0x1] sm:$0xff] %vm4634, %v5474
  %5619 = vst.msk [vmem:[%s5552 + $0x9] sm:$0xff] %vm4634, %v5475
  %5620 = vst.msk [vmem:[%s5552 + $0x19] sm:$0xff] %vm4634, %v5476
  %5621 = vst.msk [vmem:[%s5552 + $0x21] sm:$0xff] %vm4634, %v5477
  %5622 = vst.msk [vmem:[%s5552 + $0x31] sm:$0xff] %vm4634, %v5478
  %5623 = vst.msk [vmem:[%s5552 + $0x39] sm:$0xff] %vm4634, %v5479
  %5624 = vst.msk [vmem:[%s5552 + $0x49] sm:$0xff] %vm4634, %v5480
  %5625 = vst.msk [vmem:[%s5552 + $0x51] sm:$0xff] %vm4634, %v5481
  %5626 = vst.msk [vmem:[%s5552 + $0x61] sm:$0xff] %vm4634, %v5482
  %5627 = vst.msk [vmem:[%s5552 + $0x69] sm:$0xff] %vm4634, %v5483
  %5628 = vst.msk [vmem:[%s5552 + $0x79] sm:$0xff] %vm4634, %v5484
  %5629 = vst.msk [vmem:[%s5552 + $0x81] sm:$0xff] %vm4634, %v5485
  %5630 = vst.msk [vmem:[%s5552 + $0x91] sm:$0xff] %vm4634, %v5486
  %5631 = vst.msk [vmem:[%s5552 + $0x99] sm:$0xff] %vm4634, %v5487
  %5632 = vst.msk [vmem:[%s5552 + $0xa9] sm:$0xff] %vm4634, %v5488
  %5633 = vst.msk [vmem:[%s5552 + $0xb1] sm:$0xff] %vm4634, %v5489
  %5634 = vst.msk [vmem:[%s5552 + $0xc1] sm:$0xff] %vm4634, %v5490
  %5635 = vst.msk [vmem:[%s5552 + $0xc9] sm:$0xff] %vm4634, %v5491
  %5636 = vst.msk [vmem:[%s5552 + $0xd9] sm:$0xff] %vm4634, %v5492
  %5637 = vst.msk [vmem:[%s5552 + $0xe1] sm:$0xff] %vm4634, %v5493
  %5638 = vst.msk [vmem:[%s5552 + $0xf1] sm:$0xff] %vm4634, %v5494
  %5639 = vst.msk [vmem:[%s5552 + $0xf9] sm:$0xff] %vm4634, %v5495
  %5640 = vst.msk [vmem:[%s5552 + $0x109] sm:$0xff] %vm4634, %v5496
  %5641 = vst.msk [vmem:[%s5552 + $0x111] sm:$0xff] %vm4634, %v5497
  %5642 = vst.msk [vmem:[%s5552 + $0x121] sm:$0xff] %vm4634, %v5498
  %5643 = vst.msk [vmem:[%s5552 + $0x129] sm:$0xff] %vm4634, %v5499
  %5644 = vst.msk [vmem:[%s5552 + $0x139] sm:$0xff] %vm4634, %v5500
  %5645 = vst.msk [vmem:[%s5552 + $0x141] sm:$0xff] %vm4634, %v5501
  %5646 = vst.msk [vmem:[%s5552 + $0x151] sm:$0xff] %vm4634, %v5502
  %5647 = vst.msk [vmem:[%s5552 + $0x159] sm:$0xff] %vm4634, %v5503
  %5648 = vst.msk [vmem:[%s5552 + $0x169] sm:$0xff] %vm4634, %v5504
  %5649 = vst.msk [vmem:[%s5552 + $0x171] sm:$0xff] %vm4634, %v5505
  %5650 = vst.msk [vmem:[%s5552 + $0x1b1] sm:$0xff] %vm4634, %v5506
  %5651 = vst.msk [vmem:[%s5552 + $0x1b9] sm:$0xff] %vm4634, %v5507
  %5652 = vst.msk [vmem:[%s5552 + $0x1c9] sm:$0xff] %vm4634, %v5508
  %5653 = vst.msk [vmem:[%s5552 + $0x1d1] sm:$0xff] %vm4634, %v5509
  %5654 = vst.msk [vmem:[%s5552 + $0x1e1] sm:$0xff] %vm4634, %v5510
  %5655 = vst.msk [vmem:[%s5552 + $0x1e9] sm:$0xff] %vm4634, %v5511
  %5656 = vst.msk [vmem:[%s5552 + $0x1f9] sm:$0xff] %vm4634, %v5512
  %5657 = vst.msk [vmem:[%s5552 + $0x201] sm:$0xff] %vm4634, %v5513
  %5658 = vst.msk [vmem:[%s5552 + $0x211] sm:$0xff] %vm4634, %v5514
  %5659 = vst.msk [vmem:[%s5552 + $0x219] sm:$0xff] %vm4634, %v5515
  %5660 = vst.msk [vmem:[%s5552 + $0x229] sm:$0xff] %vm4634, %v5516
  %5661 = vst.msk [vmem:[%s5552 + $0x231] sm:$0xff] %vm4634, %v5517
  %5662 = vst.msk [vmem:[%s5552 + $0x241] sm:$0xff] %vm4634, %v5518
  %5663 = vst.msk [vmem:[%s5552 + $0x249] sm:$0xff] %vm4634, %v5519
  %5664 = vst.msk [vmem:[%s5552 + $0x259] sm:$0xff] %vm4634, %v5520
  %5665 = vst.msk [vmem:[%s5552 + $0x261] sm:$0xff] %vm4634, %v5521
  %5666 = vst.msk [vmem:[%s5552 + $0x271] sm:$0xff] %vm4634, %v5522
  %5667 = vst.msk [vmem:[%s5552 + $0x279] sm:$0xff] %vm4634, %v5523
  %5668 = vst.msk [vmem:[%s5552 + $0x289] sm:$0xff] %vm4634, %v5524
  %5669 = vst.msk [vmem:[%s5552 + $0x291] sm:$0xff] %vm4634, %v5525
  %5670 = vst.msk [vmem:[%s5552 + $0x2a1] sm:$0xff] %vm4634, %v5526
  %5671 = vst.msk [vmem:[%s5552 + $0x2a9] sm:$0xff] %vm4634, %v5527
  %5672 = vst.msk [vmem:[%s5552 + $0x2b9] sm:$0xff] %vm4634, %v5528
  %5673 = vst.msk [vmem:[%s5552 + $0x2c1] sm:$0xff] %vm4634, %v5529
  %5674 = vst.msk [vmem:[%s5552 + $0x2d1] sm:$0xff] %vm4634, %v5530
  %5675 = vst.msk [vmem:[%s5552 + $0x2d9] sm:$0xff] %vm4634, %v5531
  %5676 = vst.msk [vmem:[%s5552 + $0x2e9] sm:$0xff] %vm4634, %v5532
  %5677 = vst.msk [vmem:[%s5552 + $0x2f1] sm:$0xff] %vm4634, %v5533
  %5678 = vst.msk [vmem:[%s5552 + $0x301] sm:$0xff] %vm4634, %v5534
  %5679 = vst.msk [vmem:[%s5552 + $0x309] sm:$0xff] %vm4634, %v5535
  %5680 = vst.msk [vmem:[%s5552 + $0x319] sm:$0xff] %vm4634, %v5536
  %5681 = vst.msk [vmem:[%s5552 + $0x321] sm:$0xff] %vm4634, %v5537
  %v5682 = vld [vmem:[#allocation3] ss:$2 sm:$0xff]
  %s5683 = scalar_lea.vmem [#allocation3], 48
  %v5684 = vld [vmem:[%s5683] ss:$2 sm:$0xff]
  %s5685 = scalar_lea.vmem [#allocation3], 96
  %v5686 = vld [vmem:[%s5685] ss:$2 sm:$0xff]
  %s5687 = scalar_lea.vmem [#allocation3], 144
  %v5688 = vld [vmem:[%s5687] ss:$2 sm:$0xff]
  %s5689 = scalar_lea.vmem [#allocation3], 192
  %v5690 = vld [vmem:[%s5689] ss:$2 sm:$0xff]
  %s5691 = scalar_lea.vmem [#allocation3], 240
  %v5692 = vld [vmem:[%s5691] ss:$2 sm:$0xff]
  %s5693 = scalar_lea.vmem [#allocation3], 288
  %v5694 = vld [vmem:[%s5693] ss:$2 sm:$0xff]
  %s5695 = scalar_lea.vmem [#allocation3], 336
  %v5696 = vld [vmem:[%s5695] ss:$2 sm:$0xff]
  %s5697 = scalar_lea.vmem [#allocation3], 432
  %v5698 = vld [vmem:[%s5697] ss:$2 sm:$0xff]
  %s5699 = scalar_lea.vmem [#allocation3], 480
  %v5700 = vld [vmem:[%s5699] ss:$2 sm:$0xff]
  %s5701 = scalar_lea.vmem [#allocation3], 528
  %v5702 = vld [vmem:[%s5701] ss:$2 sm:$0xff]
  %s5703 = scalar_lea.vmem [#allocation3], 576
  %v5704 = vld [vmem:[%s5703] ss:$2 sm:$0xff]
  %s5705 = scalar_lea.vmem [#allocation3], 624
  %v5706 = vld [vmem:[%s5705] ss:$2 sm:$0xff]
  %s5707 = scalar_lea.vmem [#allocation3], 672
  %v5708 = vld [vmem:[%s5707] ss:$2 sm:$0xff]
  %s5709 = scalar_lea.vmem [#allocation3], 720
  %v5710 = vld [vmem:[%s5709] ss:$2 sm:$0xff]
  %s5711 = scalar_lea.vmem [#allocation3], 768
  %v5712 = vld [vmem:[%s5711] ss:$2 sm:$0xff]
  %v5713 = vpack.c.bf16 %v5682, %v5682
  %v5714 = vpack.c.bf16 %v5684, %v5684
  %v5715 = vpack.c.bf16 %v5686, %v5686
  %v5716 = vpack.c.bf16 %v5688, %v5688
  %v5717 = vpack.c.bf16 %v5690, %v5690
  %v5718 = vpack.c.bf16 %v5692, %v5692
  %v5719 = vpack.c.bf16 %v5694, %v5694
  %v5720 = vpack.c.bf16 %v5696, %v5696
  %v5721 = vpack.c.bf16 %v5698, %v5698
  %v5722 = vpack.c.bf16 %v5700, %v5700
  %v5723 = vpack.c.bf16 %v5702, %v5702
  %v5724 = vpack.c.bf16 %v5704, %v5704
  %v5725 = vpack.c.bf16 %v5706, %v5706
  %v5726 = vpack.c.bf16 %v5708, %v5708
  %v5727 = vpack.c.bf16 %v5710, %v5710
  %v5728 = vpack.c.bf16 %v5712, %v5712
  %s5729 = scalar_lea.vmem [#allocation3], 1
  %v5730 = vld [vmem:[%s5729] ss:$2 sm:$0xff]
  %s5731 = scalar_lea.vmem [#allocation3], 49
  %v5732 = vld [vmem:[%s5731] ss:$2 sm:$0xff]
  %s5733 = scalar_lea.vmem [#allocation3], 97
  %v5734 = vld [vmem:[%s5733] ss:$2 sm:$0xff]
  %s5735 = scalar_lea.vmem [#allocation3], 145
  %v5736 = vld [vmem:[%s5735] ss:$2 sm:$0xff]
  %s5737 = scalar_lea.vmem [#allocation3], 193
  %v5738 = vld [vmem:[%s5737] ss:$2 sm:$0xff]
  %s5739 = scalar_lea.vmem [#allocation3], 241
  %v5740 = vld [vmem:[%s5739] ss:$2 sm:$0xff]
  %s5741 = scalar_lea.vmem [#allocation3], 289
  %v5742 = vld [vmem:[%s5741] ss:$2 sm:$0xff]
  %s5743 = scalar_lea.vmem [#allocation3], 337
  %v5744 = vld [vmem:[%s5743] ss:$2 sm:$0xff]
  %s5745 = scalar_lea.vmem [#allocation3], 433
  %v5746 = vld [vmem:[%s5745] ss:$2 sm:$0xff]
  %s5747 = scalar_lea.vmem [#allocation3], 481
  %v5748 = vld [vmem:[%s5747] ss:$2 sm:$0xff]
  %s5749 = scalar_lea.vmem [#allocation3], 529
  %v5750 = vld [vmem:[%s5749] ss:$2 sm:$0xff]
  %s5751 = scalar_lea.vmem [#allocation3], 577
  %v5752 = vld [vmem:[%s5751] ss:$2 sm:$0xff]
  %s5753 = scalar_lea.vmem [#allocation3], 625
  %v5754 = vld [vmem:[%s5753] ss:$2 sm:$0xff]
  %s5755 = scalar_lea.vmem [#allocation3], 673
  %v5756 = vld [vmem:[%s5755] ss:$2 sm:$0xff]
  %s5757 = scalar_lea.vmem [#allocation3], 721
  %v5758 = vld [vmem:[%s5757] ss:$2 sm:$0xff]
  %s5759 = scalar_lea.vmem [#allocation3], 769
  %v5760 = vld [vmem:[%s5759] ss:$2 sm:$0xff]
  %v5761 = vpack.c.bf16 %v5730, %v5730
  %v5762 = vpack.c.bf16 %v5732, %v5732
  %v5763 = vpack.c.bf16 %v5734, %v5734
  %v5764 = vpack.c.bf16 %v5736, %v5736
  %v5765 = vpack.c.bf16 %v5738, %v5738
  %v5766 = vpack.c.bf16 %v5740, %v5740
  %v5767 = vpack.c.bf16 %v5742, %v5742
  %v5768 = vpack.c.bf16 %v5744, %v5744
  %v5769 = vpack.c.bf16 %v5746, %v5746
  %v5770 = vpack.c.bf16 %v5748, %v5748
  %v5771 = vpack.c.bf16 %v5750, %v5750
  %v5772 = vpack.c.bf16 %v5752, %v5752
  %v5773 = vpack.c.bf16 %v5754, %v5754
  %v5774 = vpack.c.bf16 %v5756, %v5756
  %v5775 = vpack.c.bf16 %v5758, %v5758
  %v5776 = vpack.c.bf16 %v5760, %v5760
  %s5777 = scalar_lea.vmem [#allocation3], 2
  %v5778 = vld [vmem:[%s5777] ss:$2 sm:$0xff]
  %s5779 = scalar_lea.vmem [#allocation3], 50
  %v5780 = vld [vmem:[%s5779] ss:$2 sm:$0xff]
  %s5781 = scalar_lea.vmem [#allocation3], 98
  %v5782 = vld [vmem:[%s5781] ss:$2 sm:$0xff]
  %s5783 = scalar_lea.vmem [#allocation3], 146
  %v5784 = vld [vmem:[%s5783] ss:$2 sm:$0xff]
  %s5785 = scalar_lea.vmem [#allocation3], 194
  %v5786 = vld [vmem:[%s5785] ss:$2 sm:$0xff]
  %s5787 = scalar_lea.vmem [#allocation3], 242
  %v5788 = vld [vmem:[%s5787] ss:$2 sm:$0xff]
  %s5789 = scalar_lea.vmem [#allocation3], 290
  %v5790 = vld [vmem:[%s5789] ss:$2 sm:$0xff]
  %s5791 = scalar_lea.vmem [#allocation3], 338
  %v5792 = vld [vmem:[%s5791] ss:$2 sm:$0xff]
  %s5793 = scalar_lea.vmem [#allocation3], 434
  %v5794 = vld [vmem:[%s5793] ss:$2 sm:$0xff]
  %s5795 = scalar_lea.vmem [#allocation3], 482
  %v5796 = vld [vmem:[%s5795] ss:$2 sm:$0xff]
  %s5797 = scalar_lea.vmem [#allocation3], 530
  %v5798 = vld [vmem:[%s5797] ss:$2 sm:$0xff]
  %s5799 = scalar_lea.vmem [#allocation3], 578
  %v5800 = vld [vmem:[%s5799] ss:$2 sm:$0xff]
  %s5801 = scalar_lea.vmem [#allocation3], 626
  %v5802 = vld [vmem:[%s5801] ss:$2 sm:$0xff]
  %s5803 = scalar_lea.vmem [#allocation3], 674
  %v5804 = vld [vmem:[%s5803] ss:$2 sm:$0xff]
  %s5805 = scalar_lea.vmem [#allocation3], 722
  %v5806 = vld [vmem:[%s5805] ss:$2 sm:$0xff]
  %s5807 = scalar_lea.vmem [#allocation3], 770
  %v5808 = vld [vmem:[%s5807] ss:$2 sm:$0xff]
  %v5809 = vpack.c.bf16 %v5778, %v5778
  %v5810 = vpack.c.bf16 %v5780, %v5780
  %v5811 = vpack.c.bf16 %v5782, %v5782
  %v5812 = vpack.c.bf16 %v5784, %v5784
  %v5813 = vpack.c.bf16 %v5786, %v5786
  %v5814 = vpack.c.bf16 %v5788, %v5788
  %v5815 = vpack.c.bf16 %v5790, %v5790
  %v5816 = vpack.c.bf16 %v5792, %v5792
  %v5817 = vpack.c.bf16 %v5794, %v5794
  %v5818 = vpack.c.bf16 %v5796, %v5796
  %v5819 = vpack.c.bf16 %v5798, %v5798
  %v5820 = vpack.c.bf16 %v5800, %v5800
  %v5821 = vpack.c.bf16 %v5802, %v5802
  %v5822 = vpack.c.bf16 %v5804, %v5804
  %v5823 = vpack.c.bf16 %v5806, %v5806
  %v5824 = vpack.c.bf16 %v5808, %v5808
  %v5825 = vld [vmem:[%s5552] ss:$2 sm:$0xff]
  %s5826 = scalar_lea.vmem %s5552, 48 [#allocation3]
  %v5827 = vld [vmem:[%s5826] ss:$2 sm:$0xff]
  %s5828 = scalar_lea.vmem %s5552, 96 [#allocation3]
  %v5829 = vld [vmem:[%s5828] ss:$2 sm:$0xff]
  %s5830 = scalar_lea.vmem %s5552, 144 [#allocation3]
  %v5831 = vld [vmem:[%s5830] ss:$2 sm:$0xff]
  %s5832 = scalar_lea.vmem %s5552, 192 [#allocation3]
  %v5833 = vld [vmem:[%s5832] ss:$2 sm:$0xff]
  %s5834 = scalar_lea.vmem %s5552, 240 [#allocation3]
  %v5835 = vld [vmem:[%s5834] ss:$2 sm:$0xff]
  %s5836 = scalar_lea.vmem %s5552, 288 [#allocation3]
  %v5837 = vld [vmem:[%s5836] ss:$2 sm:$0xff]
  %s5838 = scalar_lea.vmem %s5552, 336 [#allocation3]
  %v5839 = vld [vmem:[%s5838] ss:$2 sm:$0xff]
  %s5840 = scalar_lea.vmem %s5552, 432 [#allocation3]
  %v5841 = vld [vmem:[%s5840] ss:$2 sm:$0xff]
  %s5842 = scalar_lea.vmem %s5552, 480 [#allocation3]
  %v5843 = vld [vmem:[%s5842] ss:$2 sm:$0xff]
  %s5844 = scalar_lea.vmem %s5552, 528 [#allocation3]
  %v5845 = vld [vmem:[%s5844] ss:$2 sm:$0xff]
  %s5846 = scalar_lea.vmem %s5552, 576 [#allocation3]
  %v5847 = vld [vmem:[%s5846] ss:$2 sm:$0xff]
  %s5848 = scalar_lea.vmem %s5552, 624 [#allocation3]
  %v5849 = vld [vmem:[%s5848] ss:$2 sm:$0xff]
  %s5850 = scalar_lea.vmem %s5552, 672 [#allocation3]
  %v5851 = vld [vmem:[%s5850] ss:$2 sm:$0xff]
  %s5852 = scalar_lea.vmem %s5552, 720 [#allocation3]
  %v5853 = vld [vmem:[%s5852] ss:$2 sm:$0xff]
  %s5854 = scalar_lea.vmem %s5552, 768 [#allocation3]
  %v5855 = vld [vmem:[%s5854] ss:$2 sm:$0xff]
  %v5856 = vpack.c.bf16 %v5825, %v5825
  %v5857 = vpack.c.bf16 %v5827, %v5827
  %v5858 = vpack.c.bf16 %v5829, %v5829
  %v5859 = vpack.c.bf16 %v5831, %v5831
  %v5860 = vpack.c.bf16 %v5833, %v5833
  %v5861 = vpack.c.bf16 %v5835, %v5835
  %v5862 = vpack.c.bf16 %v5837, %v5837
  %v5863 = vpack.c.bf16 %v5839, %v5839
  %v5864 = vpack.c.bf16 %v5841, %v5841
  %v5865 = vpack.c.bf16 %v5843, %v5843
  %v5866 = vpack.c.bf16 %v5845, %v5845
  %v5867 = vpack.c.bf16 %v5847, %v5847
  %v5868 = vpack.c.bf16 %v5849, %v5849
  %v5869 = vpack.c.bf16 %v5851, %v5851
  %v5870 = vpack.c.bf16 %v5853, %v5853
  %v5871 = vpack.c.bf16 %v5855, %v5855
  %s5872 = scalar_lea.vmem %s5552, 1 [#allocation3]
  %v5873 = vld [vmem:[%s5872] ss:$2 sm:$0xff]
  %s5874 = scalar_lea.vmem %s5552, 49 [#allocation3]
  %v5875 = vld [vmem:[%s5874] ss:$2 sm:$0xff]
  %s5876 = scalar_lea.vmem %s5552, 97 [#allocation3]
  %v5877 = vld [vmem:[%s5876] ss:$2 sm:$0xff]
  %s5878 = scalar_lea.vmem %s5552, 145 [#allocation3]
  %v5879 = vld [vmem:[%s5878] ss:$2 sm:$0xff]
  %s5880 = scalar_lea.vmem %s5552, 193 [#allocation3]
  %v5881 = vld [vmem:[%s5880] ss:$2 sm:$0xff]
  %s5882 = scalar_lea.vmem %s5552, 241 [#allocation3]
  %v5883 = vld [vmem:[%s5882] ss:$2 sm:$0xff]
  %s5884 = scalar_lea.vmem %s5552, 289 [#allocation3]
  %v5885 = vld [vmem:[%s5884] ss:$2 sm:$0xff]
  %s5886 = scalar_lea.vmem %s5552, 337 [#allocation3]
  %v5887 = vld [vmem:[%s5886] ss:$2 sm:$0xff]
  %s5888 = scalar_lea.vmem %s5552, 433 [#allocation3]
  %v5889 = vld [vmem:[%s5888] ss:$2 sm:$0xff]
  %s5890 = scalar_lea.vmem %s5552, 481 [#allocation3]
  %v5891 = vld [vmem:[%s5890] ss:$2 sm:$0xff]
  %s5892 = scalar_lea.vmem %s5552, 529 [#allocation3]
  %v5893 = vld [vmem:[%s5892] ss:$2 sm:$0xff]
  %s5894 = scalar_lea.vmem %s5552, 577 [#allocation3]
  %v5895 = vld [vmem:[%s5894] ss:$2 sm:$0xff]
  %s5896 = scalar_lea.vmem %s5552, 625 [#allocation3]
  %v5897 = vld [vmem:[%s5896] ss:$2 sm:$0xff]
  %s5898 = scalar_lea.vmem %s5552, 673 [#allocation3]
  %v5899 = vld [vmem:[%s5898] ss:$2 sm:$0xff]
  %s5900 = scalar_lea.vmem %s5552, 721 [#allocation3]
  %v5901 = vld [vmem:[%s5900] ss:$2 sm:$0xff]
  %s5902 = scalar_lea.vmem %s5552, 769 [#allocation3]
  %v5903 = vld [vmem:[%s5902] ss:$2 sm:$0xff]
  %v5904 = vpack.c.bf16 %v5873, %v5873
  %v5905 = vpack.c.bf16 %v5875, %v5875
  %v5906 = vpack.c.bf16 %v5877, %v5877
  %v5907 = vpack.c.bf16 %v5879, %v5879
  %v5908 = vpack.c.bf16 %v5881, %v5881
  %v5909 = vpack.c.bf16 %v5883, %v5883
  %v5910 = vpack.c.bf16 %v5885, %v5885
  %v5911 = vpack.c.bf16 %v5887, %v5887
  %v5912 = vpack.c.bf16 %v5889, %v5889
  %v5913 = vpack.c.bf16 %v5891, %v5891
  %v5914 = vpack.c.bf16 %v5893, %v5893
  %v5915 = vpack.c.bf16 %v5895, %v5895
  %v5916 = vpack.c.bf16 %v5897, %v5897
  %v5917 = vpack.c.bf16 %v5899, %v5899
  %v5918 = vpack.c.bf16 %v5901, %v5901
  %v5919 = vpack.c.bf16 %v5903, %v5903
  %s5920 = scalar_lea.vmem %s5552, 2 [#allocation3]
  %v5921 = vld [vmem:[%s5920] ss:$2 sm:$0xff]
  %s5922 = scalar_lea.vmem %s5552, 50 [#allocation3]
  %v5923 = vld [vmem:[%s5922] ss:$2 sm:$0xff]
  %s5924 = scalar_lea.vmem %s5552, 98 [#allocation3]
  %v5925 = vld [vmem:[%s5924] ss:$2 sm:$0xff]
  %s5926 = scalar_lea.vmem %s5552, 146 [#allocation3]
  %v5927 = vld [vmem:[%s5926] ss:$2 sm:$0xff]
  %s5928 = scalar_lea.vmem %s5552, 194 [#allocation3]
  %v5929 = vld [vmem:[%s5928] ss:$2 sm:$0xff]
  %s5930 = scalar_lea.vmem %s5552, 242 [#allocation3]
  %v5931 = vld [vmem:[%s5930] ss:$2 sm:$0xff]
  %s5932 = scalar_lea.vmem %s5552, 290 [#allocation3]
  %v5933 = vld [vmem:[%s5932] ss:$2 sm:$0xff]
  %s5934 = scalar_lea.vmem %s5552, 338 [#allocation3]
  %v5935 = vld [vmem:[%s5934] ss:$2 sm:$0xff]
  %s5936 = scalar_lea.vmem %s5552, 434 [#allocation3]
  %v5937 = vld [vmem:[%s5936] ss:$2 sm:$0xff]
  %s5938 = scalar_lea.vmem %s5552, 482 [#allocation3]
  %v5939 = vld [vmem:[%s5938] ss:$2 sm:$0xff]
  %s5940 = scalar_lea.vmem %s5552, 530 [#allocation3]
  %v5941 = vld [vmem:[%s5940] ss:$2 sm:$0xff]
  %s5942 = scalar_lea.vmem %s5552, 578 [#allocation3]
  %v5943 = vld [vmem:[%s5942] ss:$2 sm:$0xff]
  %s5944 = scalar_lea.vmem %s5552, 626 [#allocation3]
  %v5945 = vld [vmem:[%s5944] ss:$2 sm:$0xff]
  %s5946 = scalar_lea.vmem %s5552, 674 [#allocation3]
  %v5947 = vld [vmem:[%s5946] ss:$2 sm:$0xff]
  %s5948 = scalar_lea.vmem %s5552, 722 [#allocation3]
  %v5949 = vld [vmem:[%s5948] ss:$2 sm:$0xff]
  %s5950 = scalar_lea.vmem %s5552, 770 [#allocation3]
  %v5951 = vld [vmem:[%s5950] ss:$2 sm:$0xff]
  %v5952 = vpack.c.bf16 %v5921, %v5921
  %v5953 = vpack.c.bf16 %v5923, %v5923
  %v5954 = vpack.c.bf16 %v5925, %v5925
  %v5955 = vpack.c.bf16 %v5927, %v5927
  %v5956 = vpack.c.bf16 %v5929, %v5929
  %v5957 = vpack.c.bf16 %v5931, %v5931
  %v5958 = vpack.c.bf16 %v5933, %v5933
  %v5959 = vpack.c.bf16 %v5935, %v5935
  %v5960 = vpack.c.bf16 %v5937, %v5937
  %v5961 = vpack.c.bf16 %v5939, %v5939
  %v5962 = vpack.c.bf16 %v5941, %v5941
  %v5963 = vpack.c.bf16 %v5943, %v5943
  %v5964 = vpack.c.bf16 %v5945, %v5945
  %v5965 = vpack.c.bf16 %v5947, %v5947
  %v5966 = vpack.c.bf16 %v5949, %v5949
  %v5967 = vpack.c.bf16 %v5951, %v5951
  %s5968 = scalar_lea.vmem [#allocation3], 48
  %v5969 = vld [vmem:[%s5968] ss:$2 sm:$0xff]
  %s5970 = scalar_lea.vmem %s5968, 48 [#allocation3]
  %v5971 = vld [vmem:[%s5970] ss:$2 sm:$0xff]
  %s5972 = scalar_lea.vmem %s5968, 96 [#allocation3]
  %v5973 = vld [vmem:[%s5972] ss:$2 sm:$0xff]
  %s5974 = scalar_lea.vmem %s5968, 144 [#allocation3]
  %v5975 = vld [vmem:[%s5974] ss:$2 sm:$0xff]
  %s5976 = scalar_lea.vmem %s5968, 192 [#allocation3]
  %v5977 = vld [vmem:[%s5976] ss:$2 sm:$0xff]
  %s5978 = scalar_lea.vmem %s5968, 240 [#allocation3]
  %v5979 = vld [vmem:[%s5978] ss:$2 sm:$0xff]
  %s5980 = scalar_lea.vmem %s5968, 288 [#allocation3]
  %v5981 = vld [vmem:[%s5980] ss:$2 sm:$0xff]
  %s5982 = scalar_lea.vmem %s5968, 336 [#allocation3]
  %v5983 = vld [vmem:[%s5982] ss:$2 sm:$0xff]
  %s5984 = scalar_lea.vmem %s5968, 432 [#allocation3]
  %v5985 = vld [vmem:[%s5984] ss:$2 sm:$0xff]
  %s5986 = scalar_lea.vmem %s5968, 480 [#allocation3]
  %v5987 = vld [vmem:[%s5986] ss:$2 sm:$0xff]
  %s5988 = scalar_lea.vmem %s5968, 528 [#allocation3]
  %v5989 = vld [vmem:[%s5988] ss:$2 sm:$0xff]
  %s5990 = scalar_lea.vmem %s5968, 576 [#allocation3]
  %v5991 = vld [vmem:[%s5990] ss:$2 sm:$0xff]
  %s5992 = scalar_lea.vmem %s5968, 624 [#allocation3]
  %v5993 = vld [vmem:[%s5992] ss:$2 sm:$0xff]
  %s5994 = scalar_lea.vmem %s5968, 672 [#allocation3]
  %v5995 = vld [vmem:[%s5994] ss:$2 sm:$0xff]
  %s5996 = scalar_lea.vmem %s5968, 720 [#allocation3]
  %v5997 = vld [vmem:[%s5996] ss:$2 sm:$0xff]
  %s5998 = scalar_lea.vmem %s5968, 768 [#allocation3]
  %v5999 = vld [vmem:[%s5998] ss:$2 sm:$0xff]
  %v6000 = vpack.c.bf16 %v5969, %v5969
  %v6001 = vpack.c.bf16 %v5971, %v5971
  %v6002 = vpack.c.bf16 %v5973, %v5973
  %v6003 = vpack.c.bf16 %v5975, %v5975
  %v6004 = vpack.c.bf16 %v5977, %v5977
  %v6005 = vpack.c.bf16 %v5979, %v5979
  %v6006 = vpack.c.bf16 %v5981, %v5981
  %v6007 = vpack.c.bf16 %v5983, %v5983
  %v6008 = vpack.c.bf16 %v5985, %v5985
  %v6009 = vpack.c.bf16 %v5987, %v5987
  %v6010 = vpack.c.bf16 %v5989, %v5989
  %v6011 = vpack.c.bf16 %v5991, %v5991
  %v6012 = vpack.c.bf16 %v5993, %v5993
  %v6013 = vpack.c.bf16 %v5995, %v5995
  %v6014 = vpack.c.bf16 %v5997, %v5997
  %v6015 = vpack.c.bf16 %v5999, %v5999
  %s6016 = scalar_lea.vmem %s5968, 1 [#allocation3]
  %v6017 = vld [vmem:[%s6016] ss:$2 sm:$0xff]
  %s6018 = scalar_lea.vmem %s5968, 49 [#allocation3]
  %v6019 = vld [vmem:[%s6018] ss:$2 sm:$0xff]
  %s6020 = scalar_lea.vmem %s5968, 97 [#allocation3]
  %v6021 = vld [vmem:[%s6020] ss:$2 sm:$0xff]
  %s6022 = scalar_lea.vmem %s5968, 145 [#allocation3]
  %v6023 = vld [vmem:[%s6022] ss:$2 sm:$0xff]
  %s6024 = scalar_lea.vmem %s5968, 193 [#allocation3]
  %v6025 = vld [vmem:[%s6024] ss:$2 sm:$0xff]
  %s6026 = scalar_lea.vmem %s5968, 241 [#allocation3]
  %v6027 = vld [vmem:[%s6026] ss:$2 sm:$0xff]
  %s6028 = scalar_lea.vmem %s5968, 289 [#allocation3]
  %v6029 = vld [vmem:[%s6028] ss:$2 sm:$0xff]
  %s6030 = scalar_lea.vmem %s5968, 337 [#allocation3]
  %v6031 = vld [vmem:[%s6030] ss:$2 sm:$0xff]
  %s6032 = scalar_lea.vmem %s5968, 433 [#allocation3]
  %v6033 = vld [vmem:[%s6032] ss:$2 sm:$0xff]
  %s6034 = scalar_lea.vmem %s5968, 481 [#allocation3]
  %v6035 = vld [vmem:[%s6034] ss:$2 sm:$0xff]
  %s6036 = scalar_lea.vmem %s5968, 529 [#allocation3]
  %v6037 = vld [vmem:[%s6036] ss:$2 sm:$0xff]
  %s6038 = scalar_lea.vmem %s5968, 577 [#allocation3]
  %v6039 = vld [vmem:[%s6038] ss:$2 sm:$0xff]
  %s6040 = scalar_lea.vmem %s5968, 625 [#allocation3]
  %v6041 = vld [vmem:[%s6040] ss:$2 sm:$0xff]
  %s6042 = scalar_lea.vmem %s5968, 673 [#allocation3]
  %v6043 = vld [vmem:[%s6042] ss:$2 sm:$0xff]
  %s6044 = scalar_lea.vmem %s5968, 721 [#allocation3]
  %v6045 = vld [vmem:[%s6044] ss:$2 sm:$0xff]
  %s6046 = scalar_lea.vmem %s5968, 769 [#allocation3]
  %v6047 = vld [vmem:[%s6046] ss:$2 sm:$0xff]
  %v6048 = vpack.c.bf16 %v6017, %v6017
  %v6049 = vpack.c.bf16 %v6019, %v6019
  %v6050 = vpack.c.bf16 %v6021, %v6021
  %v6051 = vpack.c.bf16 %v6023, %v6023
  %v6052 = vpack.c.bf16 %v6025, %v6025
  %v6053 = vpack.c.bf16 %v6027, %v6027
  %v6054 = vpack.c.bf16 %v6029, %v6029
  %v6055 = vpack.c.bf16 %v6031, %v6031
  %v6056 = vpack.c.bf16 %v6033, %v6033
  %v6057 = vpack.c.bf16 %v6035, %v6035
  %v6058 = vpack.c.bf16 %v6037, %v6037
  %v6059 = vpack.c.bf16 %v6039, %v6039
  %v6060 = vpack.c.bf16 %v6041, %v6041
  %v6061 = vpack.c.bf16 %v6043, %v6043
  %v6062 = vpack.c.bf16 %v6045, %v6045
  %v6063 = vpack.c.bf16 %v6047, %v6047
  %s6064 = scalar_lea.vmem %s5968, 2 [#allocation3]
  %v6065 = vld [vmem:[%s6064] ss:$2 sm:$0xff]
  %s6066 = scalar_lea.vmem %s5968, 50 [#allocation3]
  %v6067 = vld [vmem:[%s6066] ss:$2 sm:$0xff]
  %s6068 = scalar_lea.vmem %s5968, 98 [#allocation3]
  %v6069 = vld [vmem:[%s6068] ss:$2 sm:$0xff]
  %s6070 = scalar_lea.vmem %s5968, 146 [#allocation3]
  %v6071 = vld [vmem:[%s6070] ss:$2 sm:$0xff]
  %s6072 = scalar_lea.vmem %s5968, 194 [#allocation3]
  %v6073 = vld [vmem:[%s6072] ss:$2 sm:$0xff]
  %s6074 = scalar_lea.vmem %s5968, 242 [#allocation3]
  %v6075 = vld [vmem:[%s6074] ss:$2 sm:$0xff]
  %s6076 = scalar_lea.vmem %s5968, 290 [#allocation3]
  %v6077 = vld [vmem:[%s6076] ss:$2 sm:$0xff]
  %s6078 = scalar_lea.vmem %s5968, 338 [#allocation3]
  %v6079 = vld [vmem:[%s6078] ss:$2 sm:$0xff]
  %s6080 = scalar_lea.vmem %s5968, 434 [#allocation3]
  %v6081 = vld [vmem:[%s6080] ss:$2 sm:$0xff]
  %s6082 = scalar_lea.vmem %s5968, 482 [#allocation3]
  %v6083 = vld [vmem:[%s6082] ss:$2 sm:$0xff]
  %s6084 = scalar_lea.vmem %s5968, 530 [#allocation3]
  %v6085 = vld [vmem:[%s6084] ss:$2 sm:$0xff]
  %s6086 = scalar_lea.vmem %s5968, 578 [#allocation3]
  %v6087 = vld [vmem:[%s6086] ss:$2 sm:$0xff]
  %s6088 = scalar_lea.vmem %s5968, 626 [#allocation3]
  %v6089 = vld [vmem:[%s6088] ss:$2 sm:$0xff]
  %s6090 = scalar_lea.vmem %s5968, 674 [#allocation3]
  %v6091 = vld [vmem:[%s6090] ss:$2 sm:$0xff]
  %s6092 = scalar_lea.vmem %s5968, 722 [#allocation3]
  %v6093 = vld [vmem:[%s6092] ss:$2 sm:$0xff]
  %s6094 = scalar_lea.vmem %s5968, 770 [#allocation3]
  %v6095 = vld [vmem:[%s6094] ss:$2 sm:$0xff]
  %v6096 = vpack.c.bf16 %v6065, %v6065
  %v6097 = vpack.c.bf16 %v6067, %v6067
  %v6098 = vpack.c.bf16 %v6069, %v6069
  %v6099 = vpack.c.bf16 %v6071, %v6071
  %v6100 = vpack.c.bf16 %v6073, %v6073
  %v6101 = vpack.c.bf16 %v6075, %v6075
  %v6102 = vpack.c.bf16 %v6077, %v6077
  %v6103 = vpack.c.bf16 %v6079, %v6079
  %v6104 = vpack.c.bf16 %v6081, %v6081
  %v6105 = vpack.c.bf16 %v6083, %v6083
  %v6106 = vpack.c.bf16 %v6085, %v6085
  %v6107 = vpack.c.bf16 %v6087, %v6087
  %v6108 = vpack.c.bf16 %v6089, %v6089
  %v6109 = vpack.c.bf16 %v6091, %v6091
  %v6110 = vpack.c.bf16 %v6093, %v6093
  %v6111 = vpack.c.bf16 %v6095, %v6095
  %6128 = vrot.lane.b32.xlu0 %v5761, 8
  %v6129 = vpop.permute.xlu0 %6128
  %6130 = vrot.lane.b32.xlu0 %v5762, 8
  %v6131 = vpop.permute.xlu0 %6130
  %6132 = vrot.lane.b32.xlu0 %v5763, 8
  %v6133 = vpop.permute.xlu0 %6132
  %6134 = vrot.lane.b32.xlu0 %v5764, 8
  %v6135 = vpop.permute.xlu0 %6134
  %6136 = vrot.lane.b32.xlu0 %v5765, 8
  %v6137 = vpop.permute.xlu0 %6136
  %6138 = vrot.lane.b32.xlu0 %v5766, 8
  %v6139 = vpop.permute.xlu0 %6138
  %6140 = vrot.lane.b32.xlu0 %v5767, 8
  %v6141 = vpop.permute.xlu0 %6140
  %6142 = vrot.lane.b32.xlu0 %v5768, 8
  %v6143 = vpop.permute.xlu0 %6142
  %6144 = vrot.lane.b32.xlu0 %v5769, 8
  %v6145 = vpop.permute.xlu0 %6144
  %6146 = vrot.lane.b32.xlu0 %v5770, 8
  %v6147 = vpop.permute.xlu0 %6146
  %6148 = vrot.lane.b32.xlu0 %v5771, 8
  %v6149 = vpop.permute.xlu0 %6148
  %6150 = vrot.lane.b32.xlu0 %v5772, 8
  %v6151 = vpop.permute.xlu0 %6150
  %6152 = vrot.lane.b32.xlu0 %v5773, 8
  %v6153 = vpop.permute.xlu0 %6152
  %6154 = vrot.lane.b32.xlu0 %v5774, 8
  %v6155 = vpop.permute.xlu0 %6154
  %6156 = vrot.lane.b32.xlu0 %v5775, 8
  %v6157 = vpop.permute.xlu0 %6156
  %6158 = vrot.lane.b32.xlu0 %v5776, 8
  %v6159 = vpop.permute.xlu0 %6158
  %6176 = vrot.lane.b32.xlu0 %v5809, 16
  %v6177 = vpop.permute.xlu0 %6176
  %6178 = vrot.lane.b32.xlu0 %v5810, 16
  %v6179 = vpop.permute.xlu0 %6178
  %6180 = vrot.lane.b32.xlu0 %v5811, 16
  %v6181 = vpop.permute.xlu0 %6180
  %6182 = vrot.lane.b32.xlu0 %v5812, 16
  %v6183 = vpop.permute.xlu0 %6182
  %6184 = vrot.lane.b32.xlu0 %v5813, 16
  %v6185 = vpop.permute.xlu0 %6184
  %6186 = vrot.lane.b32.xlu0 %v5814, 16
  %v6187 = vpop.permute.xlu0 %6186
  %6188 = vrot.lane.b32.xlu0 %v5815, 16
  %v6189 = vpop.permute.xlu0 %6188
  %6190 = vrot.lane.b32.xlu0 %v5816, 16
  %v6191 = vpop.permute.xlu0 %6190
  %6192 = vrot.lane.b32.xlu0 %v5817, 16
  %v6193 = vpop.permute.xlu0 %6192
  %6194 = vrot.lane.b32.xlu0 %v5818, 16
  %v6195 = vpop.permute.xlu0 %6194
  %6196 = vrot.lane.b32.xlu0 %v5819, 16
  %v6197 = vpop.permute.xlu0 %6196
  %6198 = vrot.lane.b32.xlu0 %v5820, 16
  %v6199 = vpop.permute.xlu0 %6198
  %6200 = vrot.lane.b32.xlu0 %v5821, 16
  %v6201 = vpop.permute.xlu0 %6200
  %6202 = vrot.lane.b32.xlu0 %v5822, 16
  %v6203 = vpop.permute.xlu0 %6202
  %6204 = vrot.lane.b32.xlu0 %v5823, 16
  %v6205 = vpop.permute.xlu0 %6204
  %6206 = vrot.lane.b32.xlu0 %v5824, 16
  %v6207 = vpop.permute.xlu0 %6206
  %6224 = vrot.lane.b32.xlu0 %v5856, 24
  %v6225 = vpop.permute.xlu0 %6224
  %6226 = vrot.lane.b32.xlu0 %v5857, 24
  %v6227 = vpop.permute.xlu0 %6226
  %6228 = vrot.lane.b32.xlu0 %v5858, 24
  %v6229 = vpop.permute.xlu0 %6228
  %6230 = vrot.lane.b32.xlu0 %v5859, 24
  %v6231 = vpop.permute.xlu0 %6230
  %6232 = vrot.lane.b32.xlu0 %v5860, 24
  %v6233 = vpop.permute.xlu0 %6232
  %6234 = vrot.lane.b32.xlu0 %v5861, 24
  %v6235 = vpop.permute.xlu0 %6234
  %6236 = vrot.lane.b32.xlu0 %v5862, 24
  %v6237 = vpop.permute.xlu0 %6236
  %6238 = vrot.lane.b32.xlu0 %v5863, 24
  %v6239 = vpop.permute.xlu0 %6238
  %6240 = vrot.lane.b32.xlu0 %v5864, 24
  %v6241 = vpop.permute.xlu0 %6240
  %6242 = vrot.lane.b32.xlu0 %v5865, 24
  %v6243 = vpop.permute.xlu0 %6242
  %6244 = vrot.lane.b32.xlu0 %v5866, 24
  %v6245 = vpop.permute.xlu0 %6244
  %6246 = vrot.lane.b32.xlu0 %v5867, 24
  %v6247 = vpop.permute.xlu0 %6246
  %6248 = vrot.lane.b32.xlu0 %v5868, 24
  %v6249 = vpop.permute.xlu0 %6248
  %6250 = vrot.lane.b32.xlu0 %v5869, 24
  %v6251 = vpop.permute.xlu0 %6250
  %6252 = vrot.lane.b32.xlu0 %v5870, 24
  %v6253 = vpop.permute.xlu0 %6252
  %6254 = vrot.lane.b32.xlu0 %v5871, 24
  %v6255 = vpop.permute.xlu0 %6254
  %6272 = vrot.lane.b32.xlu0 %v5904, 32
  %v6273 = vpop.permute.xlu0 %6272
  %6274 = vrot.lane.b32.xlu0 %v5905, 32
  %v6275 = vpop.permute.xlu0 %6274
  %6276 = vrot.lane.b32.xlu0 %v5906, 32
  %v6277 = vpop.permute.xlu0 %6276
  %6278 = vrot.lane.b32.xlu0 %v5907, 32
  %v6279 = vpop.permute.xlu0 %6278
  %6280 = vrot.lane.b32.xlu0 %v5908, 32
  %v6281 = vpop.permute.xlu0 %6280
  %6282 = vrot.lane.b32.xlu0 %v5909, 32
  %v6283 = vpop.permute.xlu0 %6282
  %6284 = vrot.lane.b32.xlu0 %v5910, 32
  %v6285 = vpop.permute.xlu0 %6284
  %6286 = vrot.lane.b32.xlu0 %v5911, 32
  %v6287 = vpop.permute.xlu0 %6286
  %6288 = vrot.lane.b32.xlu0 %v5912, 32
  %v6289 = vpop.permute.xlu0 %6288
  %6290 = vrot.lane.b32.xlu0 %v5913, 32
  %v6291 = vpop.permute.xlu0 %6290
  %6292 = vrot.lane.b32.xlu0 %v5914, 32
  %v6293 = vpop.permute.xlu0 %6292
  %6294 = vrot.lane.b32.xlu0 %v5915, 32
  %v6295 = vpop.permute.xlu0 %6294
  %6296 = vrot.lane.b32.xlu0 %v5916, 32
  %v6297 = vpop.permute.xlu0 %6296
  %6298 = vrot.lane.b32.xlu0 %v5917, 32
  %v6299 = vpop.permute.xlu0 %6298
  %6300 = vrot.lane.b32.xlu0 %v5918, 32
  %v6301 = vpop.permute.xlu0 %6300
  %6302 = vrot.lane.b32.xlu0 %v5919, 32
  %v6303 = vpop.permute.xlu0 %6302
  %6320 = vrot.lane.b32.xlu0 %v5952, 40
  %v6321 = vpop.permute.xlu0 %6320
  %6322 = vrot.lane.b32.xlu0 %v5953, 40
  %v6323 = vpop.permute.xlu0 %6322
  %6324 = vrot.lane.b32.xlu0 %v5954, 40
  %v6325 = vpop.permute.xlu0 %6324
  %6326 = vrot.lane.b32.xlu0 %v5955, 40
  %v6327 = vpop.permute.xlu0 %6326
  %6328 = vrot.lane.b32.xlu0 %v5956, 40
  %v6329 = vpop.permute.xlu0 %6328
  %6330 = vrot.lane.b32.xlu0 %v5957, 40
  %v6331 = vpop.permute.xlu0 %6330
  %6332 = vrot.lane.b32.xlu0 %v5958, 40
  %v6333 = vpop.permute.xlu0 %6332
  %6334 = vrot.lane.b32.xlu0 %v5959, 40
  %v6335 = vpop.permute.xlu0 %6334
  %6336 = vrot.lane.b32.xlu0 %v5960, 40
  %v6337 = vpop.permute.xlu0 %6336
  %6338 = vrot.lane.b32.xlu0 %v5961, 40
  %v6339 = vpop.permute.xlu0 %6338
  %6340 = vrot.lane.b32.xlu0 %v5962, 40
  %v6341 = vpop.permute.xlu0 %6340
  %6342 = vrot.lane.b32.xlu0 %v5963, 40
  %v6343 = vpop.permute.xlu0 %6342
  %6344 = vrot.lane.b32.xlu0 %v5964, 40
  %v6345 = vpop.permute.xlu0 %6344
  %6346 = vrot.lane.b32.xlu0 %v5965, 40
  %v6347 = vpop.permute.xlu0 %6346
  %6348 = vrot.lane.b32.xlu0 %v5966, 40
  %v6349 = vpop.permute.xlu0 %6348
  %6350 = vrot.lane.b32.xlu0 %v5967, 40
  %v6351 = vpop.permute.xlu0 %6350
  %6368 = vrot.lane.b32.xlu0 %v6000, 48
  %v6369 = vpop.permute.xlu0 %6368
  %6370 = vrot.lane.b32.xlu0 %v6001, 48
  %v6371 = vpop.permute.xlu0 %6370
  %6372 = vrot.lane.b32.xlu0 %v6002, 48
  %v6373 = vpop.permute.xlu0 %6372
  %6374 = vrot.lane.b32.xlu0 %v6003, 48
  %v6375 = vpop.permute.xlu0 %6374
  %6376 = vrot.lane.b32.xlu0 %v6004, 48
  %v6377 = vpop.permute.xlu0 %6376
  %6378 = vrot.lane.b32.xlu0 %v6005, 48
  %v6379 = vpop.permute.xlu0 %6378
  %6380 = vrot.lane.b32.xlu0 %v6006, 48
  %v6381 = vpop.permute.xlu0 %6380
  %6382 = vrot.lane.b32.xlu0 %v6007, 48
  %v6383 = vpop.permute.xlu0 %6382
  %6384 = vrot.lane.b32.xlu0 %v6008, 48
  %v6385 = vpop.permute.xlu0 %6384
  %6386 = vrot.lane.b32.xlu0 %v6009, 48
  %v6387 = vpop.permute.xlu0 %6386
  %6388 = vrot.lane.b32.xlu0 %v6010, 48
  %v6389 = vpop.permute.xlu0 %6388
  %6390 = vrot.lane.b32.xlu0 %v6011, 48
  %v6391 = vpop.permute.xlu0 %6390
  %6392 = vrot.lane.b32.xlu0 %v6012, 48
  %v6393 = vpop.permute.xlu0 %6392
  %6394 = vrot.lane.b32.xlu0 %v6013, 48
  %v6395 = vpop.permute.xlu0 %6394
  %6396 = vrot.lane.b32.xlu0 %v6014, 48
  %v6397 = vpop.permute.xlu0 %6396
  %6398 = vrot.lane.b32.xlu0 %v6015, 48
  %v6399 = vpop.permute.xlu0 %6398
  %6416 = vrot.lane.b32.xlu0 %v6048, 56
  %v6417 = vpop.permute.xlu0 %6416
  %6418 = vrot.lane.b32.xlu0 %v6049, 56
  %v6419 = vpop.permute.xlu0 %6418
  %6420 = vrot.lane.b32.xlu0 %v6050, 56
  %v6421 = vpop.permute.xlu0 %6420
  %6422 = vrot.lane.b32.xlu0 %v6051, 56
  %v6423 = vpop.permute.xlu0 %6422
  %6424 = vrot.lane.b32.xlu0 %v6052, 56
  %v6425 = vpop.permute.xlu0 %6424
  %6426 = vrot.lane.b32.xlu0 %v6053, 56
  %v6427 = vpop.permute.xlu0 %6426
  %6428 = vrot.lane.b32.xlu0 %v6054, 56
  %v6429 = vpop.permute.xlu0 %6428
  %6430 = vrot.lane.b32.xlu0 %v6055, 56
  %v6431 = vpop.permute.xlu0 %6430
  %6432 = vrot.lane.b32.xlu0 %v6056, 56
  %v6433 = vpop.permute.xlu0 %6432
  %6434 = vrot.lane.b32.xlu0 %v6057, 56
  %v6435 = vpop.permute.xlu0 %6434
  %6436 = vrot.lane.b32.xlu0 %v6058, 56
  %v6437 = vpop.permute.xlu0 %6436
  %6438 = vrot.lane.b32.xlu0 %v6059, 56
  %v6439 = vpop.permute.xlu0 %6438
  %6440 = vrot.lane.b32.xlu0 %v6060, 56
  %v6441 = vpop.permute.xlu0 %6440
  %6442 = vrot.lane.b32.xlu0 %v6061, 56
  %v6443 = vpop.permute.xlu0 %6442
  %6444 = vrot.lane.b32.xlu0 %v6062, 56
  %v6445 = vpop.permute.xlu0 %6444
  %6446 = vrot.lane.b32.xlu0 %v6063, 56
  %v6447 = vpop.permute.xlu0 %6446
  %6464 = vrot.lane.b32.xlu0 %v6096, 64
  %v6465 = vpop.permute.xlu0 %6464
  %6466 = vrot.lane.b32.xlu0 %v6097, 64
  %v6467 = vpop.permute.xlu0 %6466
  %6468 = vrot.lane.b32.xlu0 %v6098, 64
  %v6469 = vpop.permute.xlu0 %6468
  %6470 = vrot.lane.b32.xlu0 %v6099, 64
  %v6471 = vpop.permute.xlu0 %6470
  %6472 = vrot.lane.b32.xlu0 %v6100, 64
  %v6473 = vpop.permute.xlu0 %6472
  %6474 = vrot.lane.b32.xlu0 %v6101, 64
  %v6475 = vpop.permute.xlu0 %6474
  %6476 = vrot.lane.b32.xlu0 %v6102, 64
  %v6477 = vpop.permute.xlu0 %6476
  %6478 = vrot.lane.b32.xlu0 %v6103, 64
  %v6479 = vpop.permute.xlu0 %6478
  %6480 = vrot.lane.b32.xlu0 %v6104, 64
  %v6481 = vpop.permute.xlu0 %6480
  %6482 = vrot.lane.b32.xlu0 %v6105, 64
  %v6483 = vpop.permute.xlu0 %6482
  %6484 = vrot.lane.b32.xlu0 %v6106, 64
  %v6485 = vpop.permute.xlu0 %6484
  %6486 = vrot.lane.b32.xlu0 %v6107, 64
  %v6487 = vpop.permute.xlu0 %6486
  %6488 = vrot.lane.b32.xlu0 %v6108, 64
  %v6489 = vpop.permute.xlu0 %6488
  %6490 = vrot.lane.b32.xlu0 %v6109, 64
  %v6491 = vpop.permute.xlu0 %6490
  %6492 = vrot.lane.b32.xlu0 %v6110, 64
  %v6493 = vpop.permute.xlu0 %6492
  %6494 = vrot.lane.b32.xlu0 %v6111, 64
  %v6495 = vpop.permute.xlu0 %6494
  %v6498 = vsel %vm4634, %v5713, %v6129
  %v6501 = vsel %vm4634, %v5714, %v6131
  %v6504 = vsel %vm4634, %v5715, %v6133
  %v6507 = vsel %vm4634, %v5716, %v6135
  %v6510 = vsel %vm4634, %v5717, %v6137
  %v6513 = vsel %vm4634, %v5718, %v6139
  %v6516 = vsel %vm4634, %v5719, %v6141
  %v6519 = vsel %vm4634, %v5720, %v6143
  %v6522 = vsel %vm4634, %v5721, %v6145
  %v6525 = vsel %vm4634, %v5722, %v6147
  %v6528 = vsel %vm4634, %v5723, %v6149
  %v6531 = vsel %vm4634, %v5724, %v6151
  %v6534 = vsel %vm4634, %v5725, %v6153
  %v6537 = vsel %vm4634, %v5726, %v6155
  %v6540 = vsel %vm4634, %v5727, %v6157
  %v6543 = vsel %vm4634, %v5728, %v6159
  %v6545 = vsel %vm4764, %v6498, %v6177
  %v6547 = vsel %vm4764, %v6501, %v6179
  %v6549 = vsel %vm4764, %v6504, %v6181
  %v6551 = vsel %vm4764, %v6507, %v6183
  %v6553 = vsel %vm4764, %v6510, %v6185
  %v6555 = vsel %vm4764, %v6513, %v6187
  %v6557 = vsel %vm4764, %v6516, %v6189
  %v6559 = vsel %vm4764, %v6519, %v6191
  %v6561 = vsel %vm4764, %v6522, %v6193
  %v6563 = vsel %vm4764, %v6525, %v6195
  %v6565 = vsel %vm4764, %v6528, %v6197
  %v6567 = vsel %vm4764, %v6531, %v6199
  %v6569 = vsel %vm4764, %v6534, %v6201
  %v6571 = vsel %vm4764, %v6537, %v6203
  %v6573 = vsel %vm4764, %v6540, %v6205
  %v6575 = vsel %vm4764, %v6543, %v6207
  %v6577 = vsel %vm4894, %v6545, %v6225
  %v6579 = vsel %vm4894, %v6547, %v6227
  %v6581 = vsel %vm4894, %v6549, %v6229
  %v6583 = vsel %vm4894, %v6551, %v6231
  %v6585 = vsel %vm4894, %v6553, %v6233
  %v6587 = vsel %vm4894, %v6555, %v6235
  %v6589 = vsel %vm4894, %v6557, %v6237
  %v6591 = vsel %vm4894, %v6559, %v6239
  %v6593 = vsel %vm4894, %v6561, %v6241
  %v6595 = vsel %vm4894, %v6563, %v6243
  %v6597 = vsel %vm4894, %v6565, %v6245
  %v6599 = vsel %vm4894, %v6567, %v6247
  %v6601 = vsel %vm4894, %v6569, %v6249
  %v6603 = vsel %vm4894, %v6571, %v6251
  %v6605 = vsel %vm4894, %v6573, %v6253
  %v6607 = vsel %vm4894, %v6575, %v6255
  %v6609 = vsel %vm5024, %v6577, %v6273
  %v6611 = vsel %vm5024, %v6579, %v6275
  %v6613 = vsel %vm5024, %v6581, %v6277
  %v6615 = vsel %vm5024, %v6583, %v6279
  %v6617 = vsel %vm5024, %v6585, %v6281
  %v6619 = vsel %vm5024, %v6587, %v6283
  %v6621 = vsel %vm5024, %v6589, %v6285
  %v6623 = vsel %vm5024, %v6591, %v6287
  %v6625 = vsel %vm5024, %v6593, %v6289
  %v6627 = vsel %vm5024, %v6595, %v6291
  %v6629 = vsel %vm5024, %v6597, %v6293
  %v6631 = vsel %vm5024, %v6599, %v6295
  %v6633 = vsel %vm5024, %v6601, %v6297
  %v6635 = vsel %vm5024, %v6603, %v6299
  %v6637 = vsel %vm5024, %v6605, %v6301
  %v6639 = vsel %vm5024, %v6607, %v6303
  %vm6640 = vcmask 326656
  %v6642 = vsel %vm6640, %v6609, %v6321
  %v6644 = vsel %vm6640, %v6611, %v6323
  %v6646 = vsel %vm6640, %v6613, %v6325
  %v6648 = vsel %vm6640, %v6615, %v6327
  %v6650 = vsel %vm6640, %v6617, %v6329
  %v6652 = vsel %vm6640, %v6619, %v6331
  %v6654 = vsel %vm6640, %v6621, %v6333
  %v6656 = vsel %vm6640, %v6623, %v6335
  %v6658 = vsel %vm6640, %v6625, %v6337
  %v6660 = vsel %vm6640, %v6627, %v6339
  %v6662 = vsel %vm6640, %v6629, %v6341
  %v6664 = vsel %vm6640, %v6631, %v6343
  %v6666 = vsel %vm6640, %v6633, %v6345
  %v6668 = vsel %vm6640, %v6635, %v6347
  %v6670 = vsel %vm6640, %v6637, %v6349
  %v6672 = vsel %vm6640, %v6639, %v6351
  %vm6673 = vcmask 392192
  %v6675 = vsel %vm6673, %v6642, %v6369
  %v6677 = vsel %vm6673, %v6644, %v6371
  %v6679 = vsel %vm6673, %v6646, %v6373
  %v6681 = vsel %vm6673, %v6648, %v6375
  %v6683 = vsel %vm6673, %v6650, %v6377
  %v6685 = vsel %vm6673, %v6652, %v6379
  %v6687 = vsel %vm6673, %v6654, %v6381
  %v6689 = vsel %vm6673, %v6656, %v6383
  %v6691 = vsel %vm6673, %v6658, %v6385
  %v6693 = vsel %vm6673, %v6660, %v6387
  %v6695 = vsel %vm6673, %v6662, %v6389
  %v6697 = vsel %vm6673, %v6664, %v6391
  %v6699 = vsel %vm6673, %v6666, %v6393
  %v6701 = vsel %vm6673, %v6668, %v6395
  %v6703 = vsel %vm6673, %v6670, %v6397
  %v6705 = vsel %vm6673, %v6672, %v6399
  %vm6706 = vcmask 457728
  %v6708 = vsel %vm6706, %v6675, %v6417
  %v6710 = vsel %vm6706, %v6677, %v6419
  %v6712 = vsel %vm6706, %v6679, %v6421
  %v6714 = vsel %vm6706, %v6681, %v6423
  %v6716 = vsel %vm6706, %v6683, %v6425
  %v6718 = vsel %vm6706, %v6685, %v6427
  %v6720 = vsel %vm6706, %v6687, %v6429
  %v6722 = vsel %vm6706, %v6689, %v6431
  %v6724 = vsel %vm6706, %v6691, %v6433
  %v6726 = vsel %vm6706, %v6693, %v6435
  %v6728 = vsel %vm6706, %v6695, %v6437
  %v6730 = vsel %vm6706, %v6697, %v6439
  %v6732 = vsel %vm6706, %v6699, %v6441
  %v6734 = vsel %vm6706, %v6701, %v6443
  %v6736 = vsel %vm6706, %v6703, %v6445
  %v6738 = vsel %vm6706, %v6705, %v6447
  %vm6739 = vcmask 523264
  %v6741 = vsel %vm6739, %v6708, %v6465
  %v6743 = vsel %vm6739, %v6710, %v6467
  %v6745 = vsel %vm6739, %v6712, %v6469
  %v6747 = vsel %vm6739, %v6714, %v6471
  %v6749 = vsel %vm6739, %v6716, %v6473
  %v6751 = vsel %vm6739, %v6718, %v6475
  %v6753 = vsel %vm6739, %v6720, %v6477
  %v6755 = vsel %vm6739, %v6722, %v6479
  %v6757 = vsel %vm6739, %v6724, %v6481
  %v6759 = vsel %vm6739, %v6726, %v6483
  %v6761 = vsel %vm6739, %v6728, %v6485
  %v6763 = vsel %vm6739, %v6730, %v6487
  %v6765 = vsel %vm6739, %v6732, %v6489
  %v6767 = vsel %vm6739, %v6734, %v6491
  %v6769 = vsel %vm6739, %v6736, %v6493
  %v6771 = vsel %vm6739, %v6738, %v6495
  %v6772 = vld [vmem:[%s2] sm:$0xf]
  %v6773 = vld [vmem:[%s2 + $0x4] sm:$0xf]
  %v6774 = vld [vmem:[%s2 + $0x8] sm:$0xf]
  %v6775 = vld [vmem:[%s2 + $0xc] sm:$0xf]
  %v6776 = vld [vmem:[%s2 + $0x10] sm:$0xf]
  %v6777 = vld [vmem:[%s2 + $0x14] sm:$0xf]
  %v6778 = vld [vmem:[%s2 + $0x18] sm:$0xf]
  %v6779 = vld [vmem:[%s2 + $0x1c] sm:$0xf]
  %v6780 = vld [vmem:[%s2 + $0x20] sm:$0xf]
  %v6781 = vld [vmem:[%s5] sm:$0x1]
  %v6783 = vlaneseq
  %v6784 = vshrl.u32 %v6783, 7
  %v6785 = vsub.s32 0, %v6784
  %v6786 = vrot.slane %v6781, %v6785
  %v6804 = vunpack.c.l.b16 %v6741
  %v6805 = vunpack.c.l.b16 %v6743
  %v6806 = vunpack.c.l.b16 %v6745
  %v6807 = vunpack.c.l.b16 %v6747
  %v6808 = vunpack.c.l.b16 %v6749
  %v6809 = vunpack.c.l.b16 %v6751
  %v6810 = vunpack.c.l.b16 %v6753
  %v6811 = vunpack.c.l.b16 %v6755
  %v6812 = vunpack.c.l.b16 %v6757
  %v6813 = vunpack.c.l.b16 %v6759
  %v6814 = vunpack.c.l.b16 %v6761
  %v6815 = vunpack.c.l.b16 %v6763
  %v6816 = vunpack.c.l.b16 %v6765
  %v6817 = vunpack.c.l.b16 %v6767
  %v6818 = vunpack.c.l.b16 %v6769
  %v6819 = vunpack.c.l.b16 %v6771
  %v6820 = vpack.c.b16 %v6805, %v6804
  %v6821 = vpack.c.b16 %v6807, %v6806
  %v6822 = vpack.c.b16 %v6809, %v6808
  %v6823 = vpack.c.b16 %v6811, %v6810
  %v6824 = vpack.c.b16 %v6813, %v6812
  %v6825 = vpack.c.b16 %v6815, %v6814
  %v6826 = vpack.c.b16 %v6817, %v6816
  %v6827 = vpack.c.b16 %v6819, %v6818
  %v6837 = vunpack.c.l.b16 %v6772
  %v6838 = vunpack.c.l.b16 %v6773
  %v6839 = vunpack.c.l.b16 %v6774
  %v6840 = vunpack.c.l.b16 %v6775
  %v6841 = vunpack.c.l.b16 %v6776
  %v6842 = vunpack.c.l.b16 %v6777
  %v6843 = vunpack.c.l.b16 %v6778
  %v6844 = vunpack.c.l.b16 %v6779
  %v6845 = vunpack.c.l.b16 %v6780
  %v6846 = vpack.c.b16 %v6838, %v6837
  %v6847 = vpack.c.b16 %v6840, %v6839
  %v6848 = vpack.c.b16 %v6842, %v6841
  %v6849 = vpack.c.b16 %v6844, %v6843
  %v6850 = vpack.c.b16 %v6845, %v6845
  %vm6855 = vcmask 588800
  %v6857 = vsel %vm6855, %v6820, 0
  %v6860 = vsel %vm6855, %v6821, 0
  %v6863 = vsel %vm6855, %v6822, 0
  %v6866 = vsel %vm6855, %v6823, 0
  %v6869 = vsel %vm6855, %v6824, 0
  %v6872 = vsel %vm6855, %v6825, 0
  %v6875 = vsel %vm6855, %v6826, 0
  %v6878 = vsel %vm6855, %v6827, 0
  %vm6880 = vcmask 1043456
  %v6882 = vsel %vm6880, %v6850, 0
  %6884 = vmatprep.subr.bf16.mxu0 0
  %6885 = vmatpush1.bf16.msra.mxu0 0
  %6886 = vmatprep.subr.bf16.mxu0 0
  %6887 = vmatpush1.bf16.msra.mxu0 0
  %6888 = vmatprep.subr.bf16.mxu0 0
  %6889 = vmatpush1.bf16.msra.mxu0 0
  %6890 = vmatprep.subr.bf16.mxu0 0
  %6891 = vmatpush1.bf16.msra.mxu0 %v6882
  %6892 = vmatprep.subr.bf16.mxu0 0
  %6893 = vmatpush1.bf16.msra.mxu0 %v6849
  %6894 = vmatprep.subr.bf16.mxu0 0
  %6895 = vmatpush1.bf16.msra.mxu0 %v6848
  %6896 = vmatprep.subr.bf16.mxu0 0
  %6897 = vmatpush1.bf16.msra.mxu0 %v6847
  %6898 = vmatprep.subr.bf16.mxu0 0
  %6899 = vmatpush1.bf16.msra.mxu0 %v6846
  %6900 = vmatprep.subr.bf16.mxu0 0
  %6901 = vmatpush2.bf16.msra.mxu0 0
  %6902 = vmatprep.subr.bf16.mxu0 0
  %6903 = vmatpush2.bf16.msra.mxu0 0
  %6904 = vmatprep.subr.bf16.mxu0 0
  %6905 = vmatpush2.bf16.msra.mxu0 0
  %6906 = vmatprep.subr.bf16.mxu0 0
  %6907 = vmatpush2.bf16.msra.mxu0 0
  %6908 = vmatprep.subr.bf16.mxu0 0
  %6909 = vmatpush2.bf16.msra.mxu0 0
  %6910 = vmatprep.subr.bf16.mxu0 0
  %6911 = vmatpush2.bf16.msra.mxu0 0
  %6912 = vmatprep.subr.bf16.mxu0 0
  %6913 = vmatpush2.bf16.msra.mxu0 0
  %6914 = vmatprep.subr.bf16.mxu0 0
  %6915 = vmatpush2.bf16.msra.mxu0 0
  %6916 = vmatprep.mubr.bf16.mxu0 0
  %6917 = vmatmul.mubr.bf16.gmra.mxu0 %v6857
  %v6918 = vpop.f32.mrf.mxu0
  %v6919 = vadd.f32 %v6786, %v6918
  %v6920 = vpop.f32.mrf.mxu0
  %v6921 = vpop.f32.mrf.mxu0
  %v6922 = vadd.f32 %v6786, %v6921
  %v6923 = vpop.f32.mrf.mxu0
  %6924 = vmatprep.mubr.bf16.mxu0 0
  %6925 = vmatmul.mubr.bf16.gmra.mxu0 %v6860
  %v6926 = vpop.f32.mrf.mxu0
  %v6927 = vadd.f32 %v6786, %v6926
  %v6928 = vpop.f32.mrf.mxu0
  %v6929 = vpop.f32.mrf.mxu0
  %v6930 = vadd.f32 %v6786, %v6929
  %v6931 = vpop.f32.mrf.mxu0
  %6932 = vmatprep.mubr.bf16.mxu0 0
  %6933 = vmatmul.mubr.bf16.gmra.mxu0 %v6863
  %v6934 = vpop.f32.mrf.mxu0
  %v6935 = vadd.f32 %v6786, %v6934
  %v6936 = vpop.f32.mrf.mxu0
  %v6937 = vpop.f32.mrf.mxu0
  %v6938 = vadd.f32 %v6786, %v6937
  %v6939 = vpop.f32.mrf.mxu0
  %6940 = vmatprep.mubr.bf16.mxu0 0
  %6941 = vmatmul.mubr.bf16.gmra.mxu0 %v6866
  %v6942 = vpop.f32.mrf.mxu0
  %v6943 = vadd.f32 %v6786, %v6942
  %v6944 = vpop.f32.mrf.mxu0
  %v6945 = vpop.f32.mrf.mxu0
  %v6946 = vadd.f32 %v6786, %v6945
  %v6947 = vpop.f32.mrf.mxu0
  %6948 = vmatprep.mubr.bf16.mxu0 0
  %6949 = vmatmul.mubr.bf16.gmra.mxu0 %v6869
  %v6950 = vpop.f32.mrf.mxu0
  %v6951 = vadd.f32 %v6786, %v6950
  %v6952 = vpop.f32.mrf.mxu0
  %v6953 = vpop.f32.mrf.mxu0
  %v6954 = vadd.f32 %v6786, %v6953
  %v6955 = vpop.f32.mrf.mxu0
  %6956 = vmatprep.mubr.bf16.mxu0 0
  %6957 = vmatmul.mubr.bf16.gmra.mxu0 %v6872
  %v6958 = vpop.f32.mrf.mxu0
  %v6959 = vadd.f32 %v6786, %v6958
  %v6960 = vpop.f32.mrf.mxu0
  %v6961 = vpop.f32.mrf.mxu0
  %v6962 = vadd.f32 %v6786, %v6961
  %v6963 = vpop.f32.mrf.mxu0
  %6964 = vmatprep.mubr.bf16.mxu0 0
  %6965 = vmatmul.mubr.bf16.gmra.mxu0 %v6875
  %v6966 = vpop.f32.mrf.mxu0
  %v6967 = vadd.f32 %v6786, %v6966
  %v6968 = vpop.f32.mrf.mxu0
  %v6969 = vpop.f32.mrf.mxu0
  %v6970 = vadd.f32 %v6786, %v6969
  %v6971 = vpop.f32.mrf.mxu0
  %6972 = vmatprep.mubr.bf16.mxu0 0
  %6973 = vmatmul.mubr.bf16.gmra.mxu0 %v6878
  %v6974 = vpop.f32.mrf.mxu0
  %v6975 = vadd.f32 %v6786, %v6974
  %v6976 = vpop.f32.mrf.mxu0
  %v6977 = vpop.f32.mrf.mxu0
  %v6978 = vadd.f32 %v6786, %v6977
  %v6979 = vpop.f32.mrf.mxu0
  %6980 = vdwg.mxu0
  %v6981 = vmax.f32 %v6919, 0.0
  %v6982 = vmax.f32 %v6922, 0.0
  %v6983 = vmax.f32 %v6927, 0.0
  %v6984 = vmax.f32 %v6930, 0.0
  %v6985 = vmax.f32 %v6935, 0.0
  %v6986 = vmax.f32 %v6938, 0.0
  %v6987 = vmax.f32 %v6943, 0.0
  %v6988 = vmax.f32 %v6946, 0.0
  %v6989 = vmax.f32 %v6951, 0.0
  %v6990 = vmax.f32 %v6954, 0.0
  %v6991 = vmax.f32 %v6959, 0.0
  %v6992 = vmax.f32 %v6962, 0.0
  %v6993 = vmax.f32 %v6967, 0.0
  %v6994 = vmax.f32 %v6970, 0.0
  %v6995 = vmax.f32 %v6975, 0.0
  %v6996 = vmax.f32 %v6978, 0.0
  %v7013 = vrot.slane %v6982, 7
  %vm7014 = vcmask 1041409
  %v7015 = vsel %vm7014, %v7013, %v6981
  %v7016 = vrot.slane %v6983, 6
  %vm7017 = vcmask 1042434
  %v7018 = vsel %vm7017, %v7016, %v7015
  %v7019 = vrot.slane %v6984, 5
  %vm7020 = vcmask 1043459
  %v7021 = vsel %vm7020, %v7019, %v7018
  %v7022 = vrot.slane %v6985, 4
  %vm7023 = vcmask 1044484
  %v7024 = vsel %vm7023, %v7022, %v7021
  %v7025 = vrot.slane %v6986, 3
  %vm7026 = vcmask 1045509
  %v7027 = vsel %vm7026, %v7025, %v7024
  %v7028 = vrot.slane %v6987, 2
  %vm7029 = vcmask 1046534
  %v7030 = vsel %vm7029, %v7028, %v7027
  %v7031 = vrot.slane %v6988, 1
  %vm7032 = vcmask 1047559
  %v7033 = vsel %vm7032, %v7031, %v7030
  %v7034 = vrot.slane %v6990, 7
  %v7035 = vsel %vm7014, %v7034, %v6989
  %v7036 = vrot.slane %v6991, 6
  %v7037 = vsel %vm7017, %v7036, %v7035
  %v7038 = vrot.slane %v6992, 5
  %v7039 = vsel %vm7020, %v7038, %v7037
  %v7040 = vrot.slane %v6993, 4
  %v7041 = vsel %vm7023, %v7040, %v7039
  %v7042 = vrot.slane %v6994, 3
  %v7043 = vsel %vm7026, %v7042, %v7041
  %v7044 = vrot.slane %v6995, 2
  %v7045 = vsel %vm7029, %v7044, %v7043
  %v7046 = vrot.slane %v6996, 1
  %v7047 = vsel %vm7032, %v7046, %v7045
  %v7050 = vrot.slane %v6981, 1
  %v7051 = vsel %vm7014, %v6982, %v7050
  %v7052 = vrot.slane %v6983, 7
  %v7053 = vsel %vm7017, %v7052, %v7051
  %v7054 = vrot.slane %v6984, 6
  %v7055 = vsel %vm7020, %v7054, %v7053
  %v7056 = vrot.slane %v6985, 5
  %v7057 = vsel %vm7023, %v7056, %v7055
  %v7058 = vrot.slane %v6986, 4
  %v7059 = vsel %vm7026, %v7058, %v7057
  %v7060 = vrot.slane %v6987, 3
  %v7061 = vsel %vm7029, %v7060, %v7059
  %v7062 = vrot.slane %v6988, 2
  %v7063 = vsel %vm7032, %v7062, %v7061
  %v7064 = vrot.slane %v6989, 1
  %v7065 = vsel %vm7014, %v6990, %v7064
  %v7066 = vrot.slane %v6991, 7
  %v7067 = vsel %vm7017, %v7066, %v7065
  %v7068 = vrot.slane %v6992, 6
  %v7069 = vsel %vm7020, %v7068, %v7067
  %v7070 = vrot.slane %v6993, 5
  %v7071 = vsel %vm7023, %v7070, %v7069
  %v7072 = vrot.slane %v6994, 4
  %v7073 = vsel %vm7026, %v7072, %v7071
  %v7074 = vrot.slane %v6995, 3
  %v7075 = vsel %vm7029, %v7074, %v7073
  %v7076 = vrot.slane %v6996, 2
  %v7077 = vsel %vm7032, %v7076, %v7075
  %7078 = vrot.lane.b32.xlu0 %v7063, 16
  %v7079 = vpop.permute.xlu0 %7078
  %7080 = vrot.lane.b32.xlu0 %v7077, 16
  %v7081 = vpop.permute.xlu0 %7080
  %v7084 = vrot.slane %v6981, 2
  %v7085 = vrot.slane %v6982, 1
  %v7086 = vsel %vm7014, %v7085, %v7084
  %v7087 = vsel %vm7017, %v6983, %v7086
  %v7088 = vrot.slane %v6984, 7
  %v7089 = vsel %vm7020, %v7088, %v7087
  %v7090 = vrot.slane %v6985, 6
  %v7091 = vsel %vm7023, %v7090, %v7089
  %v7092 = vrot.slane %v6986, 5
  %v7093 = vsel %vm7026, %v7092, %v7091
  %v7094 = vrot.slane %v6987, 4
  %v7095 = vsel %vm7029, %v7094, %v7093
  %v7096 = vrot.slane %v6988, 3
  %v7097 = vsel %vm7032, %v7096, %v7095
  %v7098 = vrot.slane %v6989, 2
  %v7099 = vrot.slane %v6990, 1
  %v7100 = vsel %vm7014, %v7099, %v7098
  %v7101 = vsel %vm7017, %v6991, %v7100
  %v7102 = vrot.slane %v6992, 7
  %v7103 = vsel %vm7020, %v7102, %v7101
  %v7104 = vrot.slane %v6993, 6
  %v7105 = vsel %vm7023, %v7104, %v7103
  %v7106 = vrot.slane %v6994, 5
  %v7107 = vsel %vm7026, %v7106, %v7105
  %v7108 = vrot.slane %v6995, 4
  %v7109 = vsel %vm7029, %v7108, %v7107
  %v7110 = vrot.slane %v6996, 3
  %v7111 = vsel %vm7032, %v7110, %v7109
  %7112 = vrot.lane.b32.xlu0 %v7097, 32
  %v7113 = vpop.permute.xlu0 %7112
  %7114 = vrot.lane.b32.xlu0 %v7111, 32
  %v7115 = vpop.permute.xlu0 %7114
  %v7118 = vrot.slane %v6981, 3
  %v7119 = vrot.slane %v6982, 2
  %v7120 = vsel %vm7014, %v7119, %v7118
  %v7121 = vrot.slane %v6983, 1
  %v7122 = vsel %vm7017, %v7121, %v7120
  %v7123 = vsel %vm7020, %v6984, %v7122
  %v7124 = vrot.slane %v6985, 7
  %v7125 = vsel %vm7023, %v7124, %v7123
  %v7126 = vrot.slane %v6986, 6
  %v7127 = vsel %vm7026, %v7126, %v7125
  %v7128 = vrot.slane %v6987, 5
  %v7129 = vsel %vm7029, %v7128, %v7127
  %v7130 = vrot.slane %v6988, 4
  %v7131 = vsel %vm7032, %v7130, %v7129
  %v7132 = vrot.slane %v6989, 3
  %v7133 = vrot.slane %v6990, 2
  %v7134 = vsel %vm7014, %v7133, %v7132
  %v7135 = vrot.slane %v6991, 1
  %v7136 = vsel %vm7017, %v7135, %v7134
  %v7137 = vsel %vm7020, %v6992, %v7136
  %v7138 = vrot.slane %v6993, 7
  %v7139 = vsel %vm7023, %v7138, %v7137
  %v7140 = vrot.slane %v6994, 6
  %v7141 = vsel %vm7026, %v7140, %v7139
  %v7142 = vrot.slane %v6995, 5
  %v7143 = vsel %vm7029, %v7142, %v7141
  %v7144 = vrot.slane %v6996, 4
  %v7145 = vsel %vm7032, %v7144, %v7143
  %7146 = vrot.lane.b32.xlu0 %v7131, 48
  %v7147 = vpop.permute.xlu0 %7146
  %7148 = vrot.lane.b32.xlu0 %v7145, 48
  %v7149 = vpop.permute.xlu0 %7148
  %v7152 = vrot.slane %v6981, 4
  %v7153 = vrot.slane %v6982, 3
  %v7154 = vsel %vm7014, %v7153, %v7152
  %v7155 = vrot.slane %v6983, 2
  %v7156 = vsel %vm7017, %v7155, %v7154
  %v7157 = vrot.slane %v6984, 1
  %v7158 = vsel %vm7020, %v7157, %v7156
  %v7159 = vsel %vm7023, %v6985, %v7158
  %v7160 = vrot.slane %v6986, 7
  %v7161 = vsel %vm7026, %v7160, %v7159
  %v7162 = vrot.slane %v6987, 6
  %v7163 = vsel %vm7029, %v7162, %v7161
  %v7164 = vrot.slane %v6988, 5
  %v7165 = vsel %vm7032, %v7164, %v7163
  %v7166 = vrot.slane %v6989, 4
  %v7167 = vrot.slane %v6990, 3
  %v7168 = vsel %vm7014, %v7167, %v7166
  %v7169 = vrot.slane %v6991, 2
  %v7170 = vsel %vm7017, %v7169, %v7168
  %v7171 = vrot.slane %v6992, 1
  %v7172 = vsel %vm7020, %v7171, %v7170
  %v7173 = vsel %vm7023, %v6993, %v7172
  %v7174 = vrot.slane %v6994, 7
  %v7175 = vsel %vm7026, %v7174, %v7173
  %v7176 = vrot.slane %v6995, 6
  %v7177 = vsel %vm7029, %v7176, %v7175
  %v7178 = vrot.slane %v6996, 5
  %v7179 = vsel %vm7032, %v7178, %v7177
  %7180 = vrot.lane.b32.xlu0 %v7165, 64
  %v7181 = vpop.permute.xlu0 %7180
  %7182 = vrot.lane.b32.xlu0 %v7179, 64
  %v7183 = vpop.permute.xlu0 %7182
  %v7186 = vrot.slane %v6981, 5
  %v7187 = vrot.slane %v6982, 4
  %v7188 = vsel %vm7014, %v7187, %v7186
  %v7189 = vrot.slane %v6983, 3
  %v7190 = vsel %vm7017, %v7189, %v7188
  %v7191 = vrot.slane %v6984, 2
  %v7192 = vsel %vm7020, %v7191, %v7190
  %v7193 = vrot.slane %v6985, 1
  %v7194 = vsel %vm7023, %v7193, %v7192
  %v7195 = vsel %vm7026, %v6986, %v7194
  %v7196 = vrot.slane %v6987, 7
  %v7197 = vsel %vm7029, %v7196, %v7195
  %v7198 = vrot.slane %v6988, 6
  %v7199 = vsel %vm7032, %v7198, %v7197
  %v7200 = vrot.slane %v6989, 5
  %v7201 = vrot.slane %v6990, 4
  %v7202 = vsel %vm7014, %v7201, %v7200
  %v7203 = vrot.slane %v6991, 3
  %v7204 = vsel %vm7017, %v7203, %v7202
  %v7205 = vrot.slane %v6992, 2
  %v7206 = vsel %vm7020, %v7205, %v7204
  %v7207 = vrot.slane %v6993, 1
  %v7208 = vsel %vm7023, %v7207, %v7206
  %v7209 = vsel %vm7026, %v6994, %v7208
  %v7210 = vrot.slane %v6995, 7
  %v7211 = vsel %vm7029, %v7210, %v7209
  %v7212 = vrot.slane %v6996, 6
  %v7213 = vsel %vm7032, %v7212, %v7211
  %7214 = vrot.lane.b32.xlu0 %v7199, 80
  %v7215 = vpop.permute.xlu0 %7214
  %7216 = vrot.lane.b32.xlu0 %v7213, 80
  %v7217 = vpop.permute.xlu0 %7216
  %v7220 = vrot.slane %v6981, 6
  %v7221 = vrot.slane %v6982, 5
  %v7222 = vsel %vm7014, %v7221, %v7220
  %v7223 = vrot.slane %v6983, 4
  %v7224 = vsel %vm7017, %v7223, %v7222
  %v7225 = vrot.slane %v6984, 3
  %v7226 = vsel %vm7020, %v7225, %v7224
  %v7227 = vrot.slane %v6985, 2
  %v7228 = vsel %vm7023, %v7227, %v7226
  %v7229 = vrot.slane %v6986, 1
  %v7230 = vsel %vm7026, %v7229, %v7228
  %v7231 = vsel %vm7029, %v6987, %v7230
  %v7232 = vrot.slane %v6988, 7
  %v7233 = vsel %vm7032, %v7232, %v7231
  %v7234 = vrot.slane %v6989, 6
  %v7235 = vrot.slane %v6990, 5
  %v7236 = vsel %vm7014, %v7235, %v7234
  %v7237 = vrot.slane %v6991, 4
  %v7238 = vsel %vm7017, %v7237, %v7236
  %v7239 = vrot.slane %v6992, 3
  %v7240 = vsel %vm7020, %v7239, %v7238
  %v7241 = vrot.slane %v6993, 2
  %v7242 = vsel %vm7023, %v7241, %v7240
  %v7243 = vrot.slane %v6994, 1
  %v7244 = vsel %vm7026, %v7243, %v7242
  %v7245 = vsel %vm7029, %v6995, %v7244
  %v7246 = vrot.slane %v6996, 7
  %v7247 = vsel %vm7032, %v7246, %v7245
  %7248 = vrot.lane.b32.xlu0 %v7233, 96
  %v7249 = vpop.permute.xlu0 %7248
  %7250 = vrot.lane.b32.xlu0 %v7247, 96
  %v7251 = vpop.permute.xlu0 %7250
  %v7254 = vrot.slane %v6981, 7
  %v7255 = vrot.slane %v6982, 6
  %v7256 = vsel %vm7014, %v7255, %v7254
  %v7257 = vrot.slane %v6983, 5
  %v7258 = vsel %vm7017, %v7257, %v7256
  %v7259 = vrot.slane %v6984, 4
  %v7260 = vsel %vm7020, %v7259, %v7258
  %v7261 = vrot.slane %v6985, 3
  %v7262 = vsel %vm7023, %v7261, %v7260
  %v7263 = vrot.slane %v6986, 2
  %v7264 = vsel %vm7026, %v7263, %v7262
  %v7265 = vrot.slane %v6987, 1
  %v7266 = vsel %vm7029, %v7265, %v7264
  %v7267 = vsel %vm7032, %v6988, %v7266
  %v7268 = vrot.slane %v6989, 7
  %v7269 = vrot.slane %v6990, 6
  %v7270 = vsel %vm7014, %v7269, %v7268
  %v7271 = vrot.slane %v6991, 5
  %v7272 = vsel %vm7017, %v7271, %v7270
  %v7273 = vrot.slane %v6992, 4
  %v7274 = vsel %vm7020, %v7273, %v7272
  %v7275 = vrot.slane %v6993, 3
  %v7276 = vsel %vm7023, %v7275, %v7274
  %v7277 = vrot.slane %v6994, 2
  %v7278 = vsel %vm7026, %v7277, %v7276
  %v7279 = vrot.slane %v6995, 1
  %v7280 = vsel %vm7029, %v7279, %v7278
  %v7281 = vsel %vm7032, %v6996, %v7280
  %7282 = vrot.lane.b32.xlu0 %v7267, 112
  %v7283 = vpop.permute.xlu0 %7282
  %7284 = vrot.lane.b32.xlu0 %v7281, 112
  %v7285 = vpop.permute.xlu0 %7284
  %v7288 = vsel %vm4764, %v7033, %v7079
  %v7289 = vsel %vm4764, %v7047, %v7081
  %v7290 = vsel %vm5024, %v7288, %v7113
  %v7291 = vsel %vm5024, %v7289, %v7115
  %v7292 = vsel %vm6673, %v7290, %v7147
  %v7293 = vsel %vm6673, %v7291, %v7149
  %v7294 = vsel %vm6739, %v7292, %v7181
  %v7295 = vsel %vm6739, %v7293, %v7183
  %vm7296 = vcmask 654336
  %v7297 = vsel %vm7296, %v7294, %v7215
  %v7298 = vsel %vm7296, %v7295, %v7217
  %vm7299 = vcmask 785408
  %v7300 = vsel %vm7299, %v7297, %v7249
  %v7301 = vsel %vm7299, %v7298, %v7251
  %vm7302 = vcmask 916480
  %v7303 = vsel %vm7302, %v7300, %v7283
  %v7304 = vsel %vm7302, %v7301, %v7285
  %7305 = vst [vmem:[%s7] sm:$0xff] %v7303
  %7306 = vst [vmem:[%s7 + $0x8] sm:$0xff] %v7304
  %7307 = vst.msk [vmem:[#allocation4] sm:$0xff] %vm4764, 0.0
  %vm7308 = vcmask 123904
  %7309 = vst.msk [vmem:[#allocation4 + $0x8] sm:$0x3] %vm7308, 0.0
  %7310 = vst.msk [vmem:[#allocation4 + $0xa0] sm:$0xff] %vm4764, 0.0
  %7311 = vst.msk [vmem:[#allocation4 + $0xa8] sm:$0x3] %vm7308, 0.0
  %s7312 = scalar_lea.vmem [#allocation4], 144
  %7313 = vst.msk [vmem:[%s7312] sm:$0xff] %vm4764, 0.0
  %7314 = vst.msk [vmem:[%s7312 + $0x8] sm:$0x3] %vm7308, 0.0
  %7315 = vst.msk [vmem:[%s7312 + $0xa0] sm:$0xff] %vm4764, 0.0
  %7316 = vst.msk [vmem:[%s7312 + $0xa8] sm:$0x3] %vm7308, 0.0
  %s7317 = scalar_lea.vmem [#allocation4], 16
  %vm7318 = vcmask 122880
  %7319 = vst.msk [vmem:[%s7317] sm:$0x1] %vm7318, 0.0
  %7320 = vst.msk [vmem:[%s7317 + $0x10] sm:$0x1] %vm7318, 0.0
  %7321 = vst.msk [vmem:[%s7317 + $0x20] sm:$0x1] %vm7318, 0.0
  %7322 = vst.msk [vmem:[%s7317 + $0x30] sm:$0x1] %vm7318, 0.0
  %7323 = vst.msk [vmem:[%s7317 + $0x40] sm:$0x1] %vm7318, 0.0
  %7324 = vst.msk [vmem:[%s7317 + $0x50] sm:$0x1] %vm7318, 0.0
  %7325 = vst.msk [vmem:[%s7317 + $0x60] sm:$0x1] %vm7318, 0.0
  %7326 = vst.msk [vmem:[%s7317 + $0x70] sm:$0x1] %vm7318, 0.0
  %7327 = vst.msk [vmem:[%s7317 + $0xa0] sm:$0x1] %vm7318, 0.0
  %7328 = vst.msk [vmem:[%s7317 + $0xb0] sm:$0x1] %vm7318, 0.0
  %7329 = vst.msk [vmem:[%s7317 + $0xc0] sm:$0x1] %vm7318, 0.0
  %7330 = vst.msk [vmem:[%s7317 + $0xd0] sm:$0x1] %vm7318, 0.0
  %7331 = vst.msk [vmem:[%s7317 + $0xe0] sm:$0x1] %vm7318, 0.0
  %7332 = vst.msk [vmem:[%s7317 + $0xf0] sm:$0x1] %vm7318, 0.0
  %7333 = vst.msk [vmem:[%s7317 + $0x100] sm:$0x1] %vm7318, 0.0
  %7334 = vst.msk [vmem:[%s7317 + $0x110] sm:$0x1] %vm7318, 0.0
  %7335 = vst.msk [vmem:[%s7317 + $0x9] sm:$0x1] %vm7318, 0.0
  %7336 = vst.msk [vmem:[%s7317 + $0x19] sm:$0x1] %vm7318, 0.0
  %7337 = vst.msk [vmem:[%s7317 + $0x29] sm:$0x1] %vm7318, 0.0
  %7338 = vst.msk [vmem:[%s7317 + $0x39] sm:$0x1] %vm7318, 0.0
  %7339 = vst.msk [vmem:[%s7317 + $0x49] sm:$0x1] %vm7318, 0.0
  %7340 = vst.msk [vmem:[%s7317 + $0x59] sm:$0x1] %vm7318, 0.0
  %7341 = vst.msk [vmem:[%s7317 + $0x69] sm:$0x1] %vm7318, 0.0
  %7342 = vst.msk [vmem:[%s7317 + $0x79] sm:$0x1] %vm7318, 0.0
  %7343 = vst.msk [vmem:[%s7317 + $0xa9] sm:$0x1] %vm7318, 0.0
  %7344 = vst.msk [vmem:[%s7317 + $0xb9] sm:$0x1] %vm7318, 0.0
  %7345 = vst.msk [vmem:[%s7317 + $0xc9] sm:$0x1] %vm7318, 0.0
  %7346 = vst.msk [vmem:[%s7317 + $0xd9] sm:$0x1] %vm7318, 0.0
  %7347 = vst.msk [vmem:[%s7317 + $0xe9] sm:$0x1] %vm7318, 0.0
  %7348 = vst.msk [vmem:[%s7317 + $0xf9] sm:$0x1] %vm7318, 0.0
  %7349 = vst.msk [vmem:[%s7317 + $0x109] sm:$0x1] %vm7318, 0.0
  %7350 = vst.msk [vmem:[%s7317 + $0x119] sm:$0x1] %vm7318, 0.0
  %7351 = vst.msk [vmem:[%s7317 + $0x1] sm:$0xff] %vm4764, %v6981
  %7352 = vst.msk [vmem:[%s7317 + $0x11] sm:$0xff] %vm4764, %v6982
  %7353 = vst.msk [vmem:[%s7317 + $0x21] sm:$0xff] %vm4764, %v6983
  %7354 = vst.msk [vmem:[%s7317 + $0x31] sm:$0xff] %vm4764, %v6984
  %7355 = vst.msk [vmem:[%s7317 + $0x41] sm:$0xff] %vm4764, %v6985
  %7356 = vst.msk [vmem:[%s7317 + $0x51] sm:$0xff] %vm4764, %v6986
  %7357 = vst.msk [vmem:[%s7317 + $0x61] sm:$0xff] %vm4764, %v6987
  %7358 = vst.msk [vmem:[%s7317 + $0x71] sm:$0xff] %vm4764, %v6988
  %7359 = vst.msk [vmem:[%s7317 + $0xa1] sm:$0xff] %vm4764, %v6989
  %7360 = vst.msk [vmem:[%s7317 + $0xb1] sm:$0xff] %vm4764, %v6990
  %7361 = vst.msk [vmem:[%s7317 + $0xc1] sm:$0xff] %vm4764, %v6991
  %7362 = vst.msk [vmem:[%s7317 + $0xd1] sm:$0xff] %vm4764, %v6992
  %7363 = vst.msk [vmem:[%s7317 + $0xe1] sm:$0xff] %vm4764, %v6993
  %7364 = vst.msk [vmem:[%s7317 + $0xf1] sm:$0xff] %vm4764, %v6994
  %7365 = vst.msk [vmem:[%s7317 + $0x101] sm:$0xff] %vm4764, %v6995
  %7366 = vst.msk [vmem:[%s7317 + $0x111] sm:$0xff] %vm4764, %v6996
  %v7367 = vld [vmem:[#allocation4] ss:$2 sm:$0xf]
  %s7368 = scalar_lea.vmem [#allocation4], 32
  %v7369 = vld [vmem:[%s7368] ss:$2 sm:$0xf]
  %s7370 = scalar_lea.vmem [#allocation4], 64
  %v7371 = vld [vmem:[%s7370] ss:$2 sm:$0xf]
  %s7372 = scalar_lea.vmem [#allocation4], 96
  %v7373 = vld [vmem:[%s7372] ss:$2 sm:$0xf]
  %s7374 = scalar_lea.vmem [#allocation4], 160
  %v7375 = vld [vmem:[%s7374] ss:$2 sm:$0xf]
  %s7376 = scalar_lea.vmem [#allocation4], 192
  %v7377 = vld [vmem:[%s7376] ss:$2 sm:$0xf]
  %s7378 = scalar_lea.vmem [#allocation4], 224
  %v7379 = vld [vmem:[%s7378] ss:$2 sm:$0xf]
  %s7380 = scalar_lea.vmem [#allocation4], 256
  %v7381 = vld [vmem:[%s7380] ss:$2 sm:$0xf]
  %v7382 = vpack.c.bf16 %v7367, %v7367
  %v7383 = vpack.c.bf16 %v7369, %v7369
  %v7384 = vpack.c.bf16 %v7371, %v7371
  %v7385 = vpack.c.bf16 %v7373, %v7373
  %v7386 = vpack.c.bf16 %v7375, %v7375
  %v7387 = vpack.c.bf16 %v7377, %v7377
  %v7388 = vpack.c.bf16 %v7379, %v7379
  %v7389 = vpack.c.bf16 %v7381, %v7381
  %s7390 = scalar_lea.vmem [#allocation4], 1
  %v7391 = vld [vmem:[%s7390] ss:$2 sm:$0xf]
  %s7392 = scalar_lea.vmem [#allocation4], 33
  %v7393 = vld [vmem:[%s7392] ss:$2 sm:$0xf]
  %s7394 = scalar_lea.vmem [#allocation4], 65
  %v7395 = vld [vmem:[%s7394] ss:$2 sm:$0xf]
  %s7396 = scalar_lea.vmem [#allocation4], 97
  %v7397 = vld [vmem:[%s7396] ss:$2 sm:$0xf]
  %s7398 = scalar_lea.vmem [#allocation4], 161
  %v7399 = vld [vmem:[%s7398] ss:$2 sm:$0xf]
  %s7400 = scalar_lea.vmem [#allocation4], 193
  %v7401 = vld [vmem:[%s7400] ss:$2 sm:$0xf]
  %s7402 = scalar_lea.vmem [#allocation4], 225
  %v7403 = vld [vmem:[%s7402] ss:$2 sm:$0xf]
  %s7404 = scalar_lea.vmem [#allocation4], 257
  %v7405 = vld [vmem:[%s7404] ss:$2 sm:$0xf]
  %v7406 = vpack.c.bf16 %v7391, %v7391
  %v7407 = vpack.c.bf16 %v7393, %v7393
  %v7408 = vpack.c.bf16 %v7395, %v7395
  %v7409 = vpack.c.bf16 %v7397, %v7397
  %v7410 = vpack.c.bf16 %v7399, %v7399
  %v7411 = vpack.c.bf16 %v7401, %v7401
  %v7412 = vpack.c.bf16 %v7403, %v7403
  %v7413 = vpack.c.bf16 %v7405, %v7405
  %s7414 = scalar_lea.vmem [#allocation4], 2
  %v7415 = vld [vmem:[%s7414] ss:$2 sm:$0xf]
  %s7416 = scalar_lea.vmem [#allocation4], 34
  %v7417 = vld [vmem:[%s7416] ss:$2 sm:$0xf]
  %s7418 = scalar_lea.vmem [#allocation4], 66
  %v7419 = vld [vmem:[%s7418] ss:$2 sm:$0xf]
  %s7420 = scalar_lea.vmem [#allocation4], 98
  %v7421 = vld [vmem:[%s7420] ss:$2 sm:$0xf]
  %s7422 = scalar_lea.vmem [#allocation4], 162
  %v7423 = vld [vmem:[%s7422] ss:$2 sm:$0xf]
  %s7424 = scalar_lea.vmem [#allocation4], 194
  %v7425 = vld [vmem:[%s7424] ss:$2 sm:$0xf]
  %s7426 = scalar_lea.vmem [#allocation4], 226
  %v7427 = vld [vmem:[%s7426] ss:$2 sm:$0xf]
  %s7428 = scalar_lea.vmem [#allocation4], 258
  %v7429 = vld [vmem:[%s7428] ss:$2 sm:$0xf]
  %v7430 = vpack.c.bf16 %v7415, %v7415
  %v7431 = vpack.c.bf16 %v7417, %v7417
  %v7432 = vpack.c.bf16 %v7419, %v7419
  %v7433 = vpack.c.bf16 %v7421, %v7421
  %v7434 = vpack.c.bf16 %v7423, %v7423
  %v7435 = vpack.c.bf16 %v7425, %v7425
  %v7436 = vpack.c.bf16 %v7427, %v7427
  %v7437 = vpack.c.bf16 %v7429, %v7429
  %v7438 = vld [vmem:[%s7317] ss:$2 sm:$0xf]
  %s7439 = scalar_lea.vmem %s7317, 32 [#allocation4]
  %v7440 = vld [vmem:[%s7439] ss:$2 sm:$0xf]
  %s7441 = scalar_lea.vmem %s7317, 64 [#allocation4]
  %v7442 = vld [vmem:[%s7441] ss:$2 sm:$0xf]
  %s7443 = scalar_lea.vmem %s7317, 96 [#allocation4]
  %v7444 = vld [vmem:[%s7443] ss:$2 sm:$0xf]
  %s7445 = scalar_lea.vmem %s7317, 160 [#allocation4]
  %v7446 = vld [vmem:[%s7445] ss:$2 sm:$0xf]
  %s7447 = scalar_lea.vmem %s7317, 192 [#allocation4]
  %v7448 = vld [vmem:[%s7447] ss:$2 sm:$0xf]
  %s7449 = scalar_lea.vmem %s7317, 224 [#allocation4]
  %v7450 = vld [vmem:[%s7449] ss:$2 sm:$0xf]
  %s7451 = scalar_lea.vmem %s7317, 256 [#allocation4]
  %v7452 = vld [vmem:[%s7451] ss:$2 sm:$0xf]
  %v7453 = vpack.c.bf16 %v7438, %v7438
  %v7454 = vpack.c.bf16 %v7440, %v7440
  %v7455 = vpack.c.bf16 %v7442, %v7442
  %v7456 = vpack.c.bf16 %v7444, %v7444
  %v7457 = vpack.c.bf16 %v7446, %v7446
  %v7458 = vpack.c.bf16 %v7448, %v7448
  %v7459 = vpack.c.bf16 %v7450, %v7450
  %v7460 = vpack.c.bf16 %v7452, %v7452
  %s7461 = scalar_lea.vmem %s7317, 1 [#allocation4]
  %v7462 = vld [vmem:[%s7461] ss:$2 sm:$0xf]
  %s7463 = scalar_lea.vmem %s7317, 33 [#allocation4]
  %v7464 = vld [vmem:[%s7463] ss:$2 sm:$0xf]
  %s7465 = scalar_lea.vmem %s7317, 65 [#allocation4]
  %v7466 = vld [vmem:[%s7465] ss:$2 sm:$0xf]
  %s7467 = scalar_lea.vmem %s7317, 97 [#allocation4]
  %v7468 = vld [vmem:[%s7467] ss:$2 sm:$0xf]
  %s7469 = scalar_lea.vmem %s7317, 161 [#allocation4]
  %v7470 = vld [vmem:[%s7469] ss:$2 sm:$0xf]
  %s7471 = scalar_lea.vmem %s7317, 193 [#allocation4]
  %v7472 = vld [vmem:[%s7471] ss:$2 sm:$0xf]
  %s7473 = scalar_lea.vmem %s7317, 225 [#allocation4]
  %v7474 = vld [vmem:[%s7473] ss:$2 sm:$0xf]
  %s7475 = scalar_lea.vmem %s7317, 257 [#allocation4]
  %v7476 = vld [vmem:[%s7475] ss:$2 sm:$0xf]
  %v7477 = vpack.c.bf16 %v7462, %v7462
  %v7478 = vpack.c.bf16 %v7464, %v7464
  %v7479 = vpack.c.bf16 %v7466, %v7466
  %v7480 = vpack.c.bf16 %v7468, %v7468
  %v7481 = vpack.c.bf16 %v7470, %v7470
  %v7482 = vpack.c.bf16 %v7472, %v7472
  %v7483 = vpack.c.bf16 %v7474, %v7474
  %v7484 = vpack.c.bf16 %v7476, %v7476
  %s7485 = scalar_lea.vmem %s7317, 2 [#allocation4]
  %v7486 = vld [vmem:[%s7485] ss:$2 sm:$0xf]
  %s7487 = scalar_lea.vmem %s7317, 34 [#allocation4]
  %v7488 = vld [vmem:[%s7487] ss:$2 sm:$0xf]
  %s7489 = scalar_lea.vmem %s7317, 66 [#allocation4]
  %v7490 = vld [vmem:[%s7489] ss:$2 sm:$0xf]
  %s7491 = scalar_lea.vmem %s7317, 98 [#allocation4]
  %v7492 = vld [vmem:[%s7491] ss:$2 sm:$0xf]
  %s7493 = scalar_lea.vmem %s7317, 162 [#allocation4]
  %v7494 = vld [vmem:[%s7493] ss:$2 sm:$0xf]
  %s7495 = scalar_lea.vmem %s7317, 194 [#allocation4]
  %v7496 = vld [vmem:[%s7495] ss:$2 sm:$0xf]
  %s7497 = scalar_lea.vmem %s7317, 226 [#allocation4]
  %v7498 = vld [vmem:[%s7497] ss:$2 sm:$0xf]
  %s7499 = scalar_lea.vmem %s7317, 258 [#allocation4]
  %v7500 = vld [vmem:[%s7499] ss:$2 sm:$0xf]
  %v7501 = vpack.c.bf16 %v7486, %v7486
  %v7502 = vpack.c.bf16 %v7488, %v7488
  %v7503 = vpack.c.bf16 %v7490, %v7490
  %v7504 = vpack.c.bf16 %v7492, %v7492
  %v7505 = vpack.c.bf16 %v7494, %v7494
  %v7506 = vpack.c.bf16 %v7496, %v7496
  %v7507 = vpack.c.bf16 %v7498, %v7498
  %v7508 = vpack.c.bf16 %v7500, %v7500
  %s7509 = scalar_lea.vmem [#allocation4], 32
  %v7510 = vld [vmem:[%s7509] ss:$2 sm:$0xf]
  %s7511 = scalar_lea.vmem %s7509, 32 [#allocation4]
  %v7512 = vld [vmem:[%s7511] ss:$2 sm:$0xf]
  %s7513 = scalar_lea.vmem %s7509, 64 [#allocation4]
  %v7514 = vld [vmem:[%s7513] ss:$2 sm:$0xf]
  %s7515 = scalar_lea.vmem %s7509, 96 [#allocation4]
  %v7516 = vld [vmem:[%s7515] ss:$2 sm:$0xf]
  %s7517 = scalar_lea.vmem %s7509, 160 [#allocation4]
  %v7518 = vld [vmem:[%s7517] ss:$2 sm:$0xf]
  %s7519 = scalar_lea.vmem %s7509, 192 [#allocation4]
  %v7520 = vld [vmem:[%s7519] ss:$2 sm:$0xf]
  %s7521 = scalar_lea.vmem %s7509, 224 [#allocation4]
  %v7522 = vld [vmem:[%s7521] ss:$2 sm:$0xf]
  %s7523 = scalar_lea.vmem %s7509, 256 [#allocation4]
  %v7524 = vld [vmem:[%s7523] ss:$2 sm:$0xf]
  %v7525 = vpack.c.bf16 %v7510, %v7510
  %v7526 = vpack.c.bf16 %v7512, %v7512
  %v7527 = vpack.c.bf16 %v7514, %v7514
  %v7528 = vpack.c.bf16 %v7516, %v7516
  %v7529 = vpack.c.bf16 %v7518, %v7518
  %v7530 = vpack.c.bf16 %v7520, %v7520
  %v7531 = vpack.c.bf16 %v7522, %v7522
  %v7532 = vpack.c.bf16 %v7524, %v7524
  %s7533 = scalar_lea.vmem %s7509, 1 [#allocation4]
  %v7534 = vld [vmem:[%s7533] ss:$2 sm:$0xf]
  %s7535 = scalar_lea.vmem %s7509, 33 [#allocation4]
  %v7536 = vld [vmem:[%s7535] ss:$2 sm:$0xf]
  %s7537 = scalar_lea.vmem %s7509, 65 [#allocation4]
  %v7538 = vld [vmem:[%s7537] ss:$2 sm:$0xf]
  %s7539 = scalar_lea.vmem %s7509, 97 [#allocation4]
  %v7540 = vld [vmem:[%s7539] ss:$2 sm:$0xf]
  %s7541 = scalar_lea.vmem %s7509, 161 [#allocation4]
  %v7542 = vld [vmem:[%s7541] ss:$2 sm:$0xf]
  %s7543 = scalar_lea.vmem %s7509, 193 [#allocation4]
  %v7544 = vld [vmem:[%s7543] ss:$2 sm:$0xf]
  %s7545 = scalar_lea.vmem %s7509, 225 [#allocation4]
  %v7546 = vld [vmem:[%s7545] ss:$2 sm:$0xf]
  %s7547 = scalar_lea.vmem %s7509, 257 [#allocation4]
  %v7548 = vld [vmem:[%s7547] ss:$2 sm:$0xf]
  %v7549 = vpack.c.bf16 %v7534, %v7534
  %v7550 = vpack.c.bf16 %v7536, %v7536
  %v7551 = vpack.c.bf16 %v7538, %v7538
  %v7552 = vpack.c.bf16 %v7540, %v7540
  %v7553 = vpack.c.bf16 %v7542, %v7542
  %v7554 = vpack.c.bf16 %v7544, %v7544
  %v7555 = vpack.c.bf16 %v7546, %v7546
  %v7556 = vpack.c.bf16 %v7548, %v7548
  %s7557 = scalar_lea.vmem %s7509, 2 [#allocation4]
  %v7558 = vld [vmem:[%s7557] ss:$2 sm:$0xf]
  %s7559 = scalar_lea.vmem %s7509, 34 [#allocation4]
  %v7560 = vld [vmem:[%s7559] ss:$2 sm:$0xf]
  %s7561 = scalar_lea.vmem %s7509, 66 [#allocation4]
  %v7562 = vld [vmem:[%s7561] ss:$2 sm:$0xf]
  %s7563 = scalar_lea.vmem %s7509, 98 [#allocation4]
  %v7564 = vld [vmem:[%s7563] ss:$2 sm:$0xf]
  %s7565 = scalar_lea.vmem %s7509, 162 [#allocation4]
  %v7566 = vld [vmem:[%s7565] ss:$2 sm:$0xf]
  %s7567 = scalar_lea.vmem %s7509, 194 [#allocation4]
  %v7568 = vld [vmem:[%s7567] ss:$2 sm:$0xf]
  %s7569 = scalar_lea.vmem %s7509, 226 [#allocation4]
  %v7570 = vld [vmem:[%s7569] ss:$2 sm:$0xf]
  %s7571 = scalar_lea.vmem %s7509, 258 [#allocation4]
  %v7572 = vld [vmem:[%s7571] ss:$2 sm:$0xf]
  %v7573 = vpack.c.bf16 %v7558, %v7558
  %v7574 = vpack.c.bf16 %v7560, %v7560
  %v7575 = vpack.c.bf16 %v7562, %v7562
  %v7576 = vpack.c.bf16 %v7564, %v7564
  %v7577 = vpack.c.bf16 %v7566, %v7566
  %v7578 = vpack.c.bf16 %v7568, %v7568
  %v7579 = vpack.c.bf16 %v7570, %v7570
  %v7580 = vpack.c.bf16 %v7572, %v7572
  %7589 = vrot.lane.b32.xlu0 %v7406, 16
  %v7590 = vpop.permute.xlu0 %7589
  %7591 = vrot.lane.b32.xlu0 %v7407, 16
  %v7592 = vpop.permute.xlu0 %7591
  %7593 = vrot.lane.b32.xlu0 %v7408, 16
  %v7594 = vpop.permute.xlu0 %7593
  %7595 = vrot.lane.b32.xlu0 %v7409, 16
  %v7596 = vpop.permute.xlu0 %7595
  %7597 = vrot.lane.b32.xlu0 %v7410, 16
  %v7598 = vpop.permute.xlu0 %7597
  %7599 = vrot.lane.b32.xlu0 %v7411, 16
  %v7600 = vpop.permute.xlu0 %7599
  %7601 = vrot.lane.b32.xlu0 %v7412, 16
  %v7602 = vpop.permute.xlu0 %7601
  %7603 = vrot.lane.b32.xlu0 %v7413, 16
  %v7604 = vpop.permute.xlu0 %7603
  %7613 = vrot.lane.b32.xlu0 %v7430, 32
  %v7614 = vpop.permute.xlu0 %7613
  %7615 = vrot.lane.b32.xlu0 %v7431, 32
  %v7616 = vpop.permute.xlu0 %7615
  %7617 = vrot.lane.b32.xlu0 %v7432, 32
  %v7618 = vpop.permute.xlu0 %7617
  %7619 = vrot.lane.b32.xlu0 %v7433, 32
  %v7620 = vpop.permute.xlu0 %7619
  %7621 = vrot.lane.b32.xlu0 %v7434, 32
  %v7622 = vpop.permute.xlu0 %7621
  %7623 = vrot.lane.b32.xlu0 %v7435, 32
  %v7624 = vpop.permute.xlu0 %7623
  %7625 = vrot.lane.b32.xlu0 %v7436, 32
  %v7626 = vpop.permute.xlu0 %7625
  %7627 = vrot.lane.b32.xlu0 %v7437, 32
  %v7628 = vpop.permute.xlu0 %7627
  %7637 = vrot.lane.b32.xlu0 %v7453, 48
  %v7638 = vpop.permute.xlu0 %7637
  %7639 = vrot.lane.b32.xlu0 %v7454, 48
  %v7640 = vpop.permute.xlu0 %7639
  %7641 = vrot.lane.b32.xlu0 %v7455, 48
  %v7642 = vpop.permute.xlu0 %7641
  %7643 = vrot.lane.b32.xlu0 %v7456, 48
  %v7644 = vpop.permute.xlu0 %7643
  %7645 = vrot.lane.b32.xlu0 %v7457, 48
  %v7646 = vpop.permute.xlu0 %7645
  %7647 = vrot.lane.b32.xlu0 %v7458, 48
  %v7648 = vpop.permute.xlu0 %7647
  %7649 = vrot.lane.b32.xlu0 %v7459, 48
  %v7650 = vpop.permute.xlu0 %7649
  %7651 = vrot.lane.b32.xlu0 %v7460, 48
  %v7652 = vpop.permute.xlu0 %7651
  %7661 = vrot.lane.b32.xlu0 %v7477, 64
  %v7662 = vpop.permute.xlu0 %7661
  %7663 = vrot.lane.b32.xlu0 %v7478, 64
  %v7664 = vpop.permute.xlu0 %7663
  %7665 = vrot.lane.b32.xlu0 %v7479, 64
  %v7666 = vpop.permute.xlu0 %7665
  %7667 = vrot.lane.b32.xlu0 %v7480, 64
  %v7668 = vpop.permute.xlu0 %7667
  %7669 = vrot.lane.b32.xlu0 %v7481, 64
  %v7670 = vpop.permute.xlu0 %7669
  %7671 = vrot.lane.b32.xlu0 %v7482, 64
  %v7672 = vpop.permute.xlu0 %7671
  %7673 = vrot.lane.b32.xlu0 %v7483, 64
  %v7674 = vpop.permute.xlu0 %7673
  %7675 = vrot.lane.b32.xlu0 %v7484, 64
  %v7676 = vpop.permute.xlu0 %7675
  %7685 = vrot.lane.b32.xlu0 %v7501, 80
  %v7686 = vpop.permute.xlu0 %7685
  %7687 = vrot.lane.b32.xlu0 %v7502, 80
  %v7688 = vpop.permute.xlu0 %7687
  %7689 = vrot.lane.b32.xlu0 %v7503, 80
  %v7690 = vpop.permute.xlu0 %7689
  %7691 = vrot.lane.b32.xlu0 %v7504, 80
  %v7692 = vpop.permute.xlu0 %7691
  %7693 = vrot.lane.b32.xlu0 %v7505, 80
  %v7694 = vpop.permute.xlu0 %7693
  %7695 = vrot.lane.b32.xlu0 %v7506, 80
  %v7696 = vpop.permute.xlu0 %7695
  %7697 = vrot.lane.b32.xlu0 %v7507, 80
  %v7698 = vpop.permute.xlu0 %7697
  %7699 = vrot.lane.b32.xlu0 %v7508, 80
  %v7700 = vpop.permute.xlu0 %7699
  %7709 = vrot.lane.b32.xlu0 %v7525, 96
  %v7710 = vpop.permute.xlu0 %7709
  %7711 = vrot.lane.b32.xlu0 %v7526, 96
  %v7712 = vpop.permute.xlu0 %7711
  %7713 = vrot.lane.b32.xlu0 %v7527, 96
  %v7714 = vpop.permute.xlu0 %7713
  %7715 = vrot.lane.b32.xlu0 %v7528, 96
  %v7716 = vpop.permute.xlu0 %7715
  %7717 = vrot.lane.b32.xlu0 %v7529, 96
  %v7718 = vpop.permute.xlu0 %7717
  %7719 = vrot.lane.b32.xlu0 %v7530, 96
  %v7720 = vpop.permute.xlu0 %7719
  %7721 = vrot.lane.b32.xlu0 %v7531, 96
  %v7722 = vpop.permute.xlu0 %7721
  %7723 = vrot.lane.b32.xlu0 %v7532, 96
  %v7724 = vpop.permute.xlu0 %7723
  %7733 = vrot.lane.b32.xlu0 %v7549, 112
  %v7734 = vpop.permute.xlu0 %7733
  %7735 = vrot.lane.b32.xlu0 %v7550, 112
  %v7736 = vpop.permute.xlu0 %7735
  %7737 = vrot.lane.b32.xlu0 %v7551, 112
  %v7738 = vpop.permute.xlu0 %7737
  %7739 = vrot.lane.b32.xlu0 %v7552, 112
  %v7740 = vpop.permute.xlu0 %7739
  %7741 = vrot.lane.b32.xlu0 %v7553, 112
  %v7742 = vpop.permute.xlu0 %7741
  %7743 = vrot.lane.b32.xlu0 %v7554, 112
  %v7744 = vpop.permute.xlu0 %7743
  %7745 = vrot.lane.b32.xlu0 %v7555, 112
  %v7746 = vpop.permute.xlu0 %7745
  %7747 = vrot.lane.b32.xlu0 %v7556, 112
  %v7748 = vpop.permute.xlu0 %7747
  %v7751 = vsel %vm4764, %v7382, %v7590
  %v7754 = vsel %vm4764, %v7383, %v7592
  %v7757 = vsel %vm4764, %v7384, %v7594
  %v7760 = vsel %vm4764, %v7385, %v7596
  %v7763 = vsel %vm4764, %v7386, %v7598
  %v7766 = vsel %vm4764, %v7387, %v7600
  %v7769 = vsel %vm4764, %v7388, %v7602
  %v7772 = vsel %vm4764, %v7389, %v7604
  %v7774 = vsel %vm5024, %v7751, %v7614
  %v7776 = vsel %vm5024, %v7754, %v7616
  %v7778 = vsel %vm5024, %v7757, %v7618
  %v7780 = vsel %vm5024, %v7760, %v7620
  %v7782 = vsel %vm5024, %v7763, %v7622
  %v7784 = vsel %vm5024, %v7766, %v7624
  %v7786 = vsel %vm5024, %v7769, %v7626
  %v7788 = vsel %vm5024, %v7772, %v7628
  %v7790 = vsel %vm6673, %v7774, %v7638
  %v7792 = vsel %vm6673, %v7776, %v7640
  %v7794 = vsel %vm6673, %v7778, %v7642
  %v7796 = vsel %vm6673, %v7780, %v7644
  %v7798 = vsel %vm6673, %v7782, %v7646
  %v7800 = vsel %vm6673, %v7784, %v7648
  %v7802 = vsel %vm6673, %v7786, %v7650
  %v7804 = vsel %vm6673, %v7788, %v7652
  %v7806 = vsel %vm6739, %v7790, %v7662
  %v7808 = vsel %vm6739, %v7792, %v7664
  %v7810 = vsel %vm6739, %v7794, %v7666
  %v7812 = vsel %vm6739, %v7796, %v7668
  %v7814 = vsel %vm6739, %v7798, %v7670
  %v7816 = vsel %vm6739, %v7800, %v7672
  %v7818 = vsel %vm6739, %v7802, %v7674
  %v7820 = vsel %vm6739, %v7804, %v7676
  %v7822 = vsel %vm7296, %v7806, %v7686
  %v7824 = vsel %vm7296, %v7808, %v7688
  %v7826 = vsel %vm7296, %v7810, %v7690
  %v7828 = vsel %vm7296, %v7812, %v7692
  %v7830 = vsel %vm7296, %v7814, %v7694
  %v7832 = vsel %vm7296, %v7816, %v7696
  %v7834 = vsel %vm7296, %v7818, %v7698
  %v7836 = vsel %vm7296, %v7820, %v7700
  %v7838 = vsel %vm7299, %v7822, %v7710
  %v7840 = vsel %vm7299, %v7824, %v7712
  %v7842 = vsel %vm7299, %v7826, %v7714
  %v7844 = vsel %vm7299, %v7828, %v7716
  %v7846 = vsel %vm7299, %v7830, %v7718
  %v7848 = vsel %vm7299, %v7832, %v7720
  %v7850 = vsel %vm7299, %v7834, %v7722
  %v7852 = vsel %vm7299, %v7836, %v7724
  %v7854 = vsel %vm7302, %v7838, %v7734
  %v7856 = vsel %vm7302, %v7840, %v7736
  %v7858 = vsel %vm7302, %v7842, %v7738
  %v7860 = vsel %vm7302, %v7844, %v7740
  %v7862 = vsel %vm7302, %v7846, %v7742
  %v7864 = vsel %vm7302, %v7848, %v7744
  %v7866 = vsel %vm7302, %v7850, %v7746
  %v7868 = vsel %vm7302, %v7852, %v7748
  %v7885 = vcombine.low %v7854, %v7573
  %v7887 = vunpack.c.l.s4 1983009808
  %v7888 = vunpack.c.0.s8 %v7887
  %v7889 = vlaneseq
  %v7890 = vshrl.u32 %v7889, 7
  %v7891 = vsub.s32 %v7888, %v7890
  %v7892 = vrot.slane %v7885, %v7891
  %v7893 = vcombine.low %v7856, %v7574
  %v7895 = vunpack.c.l.s4 1983009808
  %v7896 = vunpack.c.0.s8 %v7895
  %v7897 = vlaneseq
  %v7898 = vshrl.u32 %v7897, 7
  %v7899 = vsub.s32 %v7896, %v7898
  %v7900 = vrot.slane %v7893, %v7899
  %v7901 = vcombine.low %v7858, %v7575
  %v7903 = vunpack.c.l.s4 1983009808
  %v7904 = vunpack.c.0.s8 %v7903
  %v7905 = vlaneseq
  %v7906 = vshrl.u32 %v7905, 7
  %v7907 = vsub.s32 %v7904, %v7906
  %v7908 = vrot.slane %v7901, %v7907
  %v7909 = vcombine.low %v7860, %v7576
  %v7911 = vunpack.c.l.s4 1983009808
  %v7912 = vunpack.c.0.s8 %v7911
  %v7913 = vlaneseq
  %v7914 = vshrl.u32 %v7913, 7
  %v7915 = vsub.s32 %v7912, %v7914
  %v7916 = vrot.slane %v7909, %v7915
  %v7917 = vcombine.low %v7862, %v7577
  %v7919 = vunpack.c.l.s4 1983009808
  %v7920 = vunpack.c.0.s8 %v7919
  %v7921 = vlaneseq
  %v7922 = vshrl.u32 %v7921, 7
  %v7923 = vsub.s32 %v7920, %v7922
  %v7924 = vrot.slane %v7917, %v7923
  %v7925 = vcombine.low %v7864, %v7578
  %v7927 = vunpack.c.l.s4 1983009808
  %v7928 = vunpack.c.0.s8 %v7927
  %v7929 = vlaneseq
  %v7930 = vshrl.u32 %v7929, 7
  %v7931 = vsub.s32 %v7928, %v7930
  %v7932 = vrot.slane %v7925, %v7931
  %v7933 = vcombine.low %v7866, %v7579
  %v7935 = vunpack.c.l.s4 1983009808
  %v7936 = vunpack.c.0.s8 %v7935
  %v7937 = vlaneseq
  %v7938 = vshrl.u32 %v7937, 7
  %v7939 = vsub.s32 %v7936, %v7938
  %v7940 = vrot.slane %v7933, %v7939
  %v7941 = vcombine.low %v7868, %v7580
  %v7943 = vunpack.c.l.s4 1983009808
  %v7944 = vunpack.c.0.s8 %v7943
  %v7945 = vlaneseq
  %v7946 = vshrl.u32 %v7945, 7
  %v7947 = vsub.s32 %v7944, %v7946
  %v7948 = vrot.slane %v7941, %v7947
  %v7949 = vld [vmem:[%s3] sm:$0xf]
  %v7950 = vld [vmem:[%s3 + $0x4] sm:$0xf]
  %v7951 = vld [vmem:[%s3 + $0x8] sm:$0xf]
  %v7952 = vld [vmem:[%s3 + $0xc] sm:$0xf]
  %v7953 = vld [vmem:[%s3 + $0x10] sm:$0xf]
  %v7954 = vld [vmem:[%s3 + $0x14] sm:$0xf]
  %v7955 = vld [vmem:[%s3 + $0x18] sm:$0xf]
  %v7956 = vld [vmem:[%s3 + $0x1c] sm:$0xf]
  %v7957 = vld [vmem:[%s3 + $0x20] sm:$0xf]
  %v7958 = vld [vmem:[%s3 + $0x24] sm:$0xf]
  %v7959 = vld [vmem:[%s3 + $0x28] sm:$0xf]
  %v7960 = vld [vmem:[%s3 + $0x2c] sm:$0xf]
  %v7961 = vld [vmem:[%s3 + $0x30] sm:$0xf]
  %v7962 = vld [vmem:[%s3 + $0x34] sm:$0xf]
  %v7963 = vld [vmem:[%s3 + $0x38] sm:$0xf]
  %v7964 = vld [vmem:[%s3 + $0x3c] sm:$0xf]
  %v7965 = vld [vmem:[%s3 + $0x40] sm:$0xf]
  %v7966 = vld [vmem:[%s3 + $0x44] sm:$0xf]
  %v7967 = vld [vmem:[%s6] sm:$0x1]
  %v7969 = vlaneseq
  %v7970 = vshrl.u32 %v7969, 7
  %v7971 = vsub.s32 0, %v7970
  %v7972 = vrot.slane %v7967, %v7971
  %v7974 = vcombine.low %v7892, %v7900
  %v7975 = vcombine.low %v7908, %v7916
  %v7977 = vunpack.c.l.s4 1983009808
  %v7978 = vunpack.c.0.s8 %v7977
  %v7979 = vlaneseq
  %v7980 = vshrl.u32 %v7979, 7
  %v7981 = vsub.s32 %v7978, %v7980
  %v7982 = vrot.slane %v7974, %v7981
  %v7984 = vunpack.c.l.s4 1983009808
  %v7985 = vunpack.c.0.s8 %v7984
  %v7986 = vlaneseq
  %v7987 = vshrl.u32 %v7986, 7
  %v7988 = vsub.s32 %v7985, %v7987
  %v7989 = vrot.slane %v7975, %v7988
  %v7990 = vcombine.low %v7982, %v7989
  %v7991 = vcombine.high %v7982, %v7989
  %v7992 = vcombine.low %v7924, %v7932
  %v7993 = vcombine.low %v7940, %v7948
  %v7995 = vunpack.c.l.s4 1983009808
  %v7996 = vunpack.c.0.s8 %v7995
  %v7997 = vlaneseq
  %v7998 = vshrl.u32 %v7997, 7
  %v7999 = vsub.s32 %v7996, %v7998
  %v8000 = vrot.slane %v7992, %v7999
  %v8002 = vunpack.c.l.s4 1983009808
  %v8003 = vunpack.c.0.s8 %v8002
  %v8004 = vlaneseq
  %v8005 = vshrl.u32 %v8004, 7
  %v8006 = vsub.s32 %v8003, %v8005
  %v8007 = vrot.slane %v7993, %v8006
  %v8008 = vcombine.low %v8000, %v8007
  %v8009 = vcombine.high %v8000, %v8007
  %v8030 = vunpack.c.l.b16 %v7949
  %v8031 = vunpack.c.l.b16 %v7950
  %v8032 = vunpack.c.l.b16 %v7951
  %v8033 = vunpack.c.l.b16 %v7952
  %v8034 = vunpack.c.l.b16 %v7953
  %v8035 = vunpack.c.l.b16 %v7954
  %v8036 = vunpack.c.l.b16 %v7955
  %v8037 = vunpack.c.l.b16 %v7956
  %v8038 = vunpack.c.l.b16 %v7957
  %v8039 = vunpack.c.l.b16 %v7958
  %v8040 = vunpack.c.l.b16 %v7959
  %v8041 = vunpack.c.l.b16 %v7960
  %v8042 = vunpack.c.l.b16 %v7961
  %v8043 = vunpack.c.l.b16 %v7962
  %v8044 = vunpack.c.l.b16 %v7963
  %v8045 = vunpack.c.l.b16 %v7964
  %v8046 = vunpack.c.l.b16 %v7965
  %v8047 = vunpack.c.l.b16 %v7966
  %v8048 = vpack.c.b16 %v8031, %v8030
  %v8049 = vpack.c.b16 %v8033, %v8032
  %v8050 = vpack.c.b16 %v8035, %v8034
  %v8051 = vpack.c.b16 %v8037, %v8036
  %v8052 = vpack.c.b16 %v8039, %v8038
  %v8053 = vpack.c.b16 %v8041, %v8040
  %v8054 = vpack.c.b16 %v8043, %v8042
  %v8055 = vpack.c.b16 %v8045, %v8044
  %v8056 = vpack.c.b16 %v8047, %v8046
  %v8067 = vsel %vm4764, %v7991, 0
  %v8070 = vsel %vm4764, %v8009, 0
  %8072 = vmatprep.subr.bf16.mxu0 0
  %8073 = vmatpush1.bf16.msra.mxu0 %v8055
  %8074 = vmatprep.subr.bf16.mxu0 0
  %8075 = vmatpush1.bf16.msra.mxu0 %v8054
  %8076 = vmatprep.subr.bf16.mxu0 0
  %8077 = vmatpush1.bf16.msra.mxu0 %v8053
  %8078 = vmatprep.subr.bf16.mxu0 0
  %8079 = vmatpush1.bf16.msra.mxu0 %v8052
  %8080 = vmatprep.subr.bf16.mxu0 0
  %8081 = vmatpush1.bf16.msra.mxu0 %v8051
  %8082 = vmatprep.subr.bf16.mxu0 0
  %8083 = vmatpush1.bf16.msra.mxu0 %v8050
  %8084 = vmatprep.subr.bf16.mxu0 0
  %8085 = vmatpush1.bf16.msra.mxu0 %v8049
  %8086 = vmatprep.subr.bf16.mxu0 0
  %8087 = vmatpush1.bf16.msra.mxu0 %v8048
  %8088 = vmatprep.subr.bf16.mxu0 0
  %8089 = vmatpush2.bf16.msra.mxu0 0
  %8090 = vmatprep.subr.bf16.mxu0 0
  %8091 = vmatpush2.bf16.msra.mxu0 0
  %8092 = vmatprep.subr.bf16.mxu0 0
  %8093 = vmatpush2.bf16.msra.mxu0 0
  %8094 = vmatprep.subr.bf16.mxu0 0
  %8095 = vmatpush2.bf16.msra.mxu0 0
  %8096 = vmatprep.subr.bf16.mxu0 0
  %8097 = vmatpush2.bf16.msra.mxu0 0
  %8098 = vmatprep.subr.bf16.mxu0 0
  %8099 = vmatpush2.bf16.msra.mxu0 0
  %8100 = vmatprep.subr.bf16.mxu0 0
  %8101 = vmatpush2.bf16.msra.mxu0 0
  %8102 = vmatprep.subr.bf16.mxu0 0
  %8103 = vmatpush2.bf16.msra.mxu0 %v8056
  %8104 = vmatprep.mubr.bf16.mxu0 %v8067
  %8105 = vmatmul.mubr.bf16.gmra.mxu0 %v7990
  %v8106 = vpop.f32.mrf.mxu0
  %v8107 = vadd.f32 %v7972, %v8106
  %v8108 = vpop.f32.mrf.mxu0
  %v8109 = vpop.f32.mrf.mxu0
  %v8110 = vadd.f32 %v7972, %v8109
  %v8111 = vpop.f32.mrf.mxu0
  %8112 = vmatprep.mubr.bf16.mxu0 %v8070
  %8113 = vmatmul.mubr.bf16.gmra.mxu0 %v8008
  %v8114 = vpop.f32.mrf.mxu0
  %v8115 = vadd.f32 %v7972, %v8114
  %v8116 = vpop.f32.mrf.mxu0
  %v8117 = vpop.f32.mrf.mxu0
  %v8118 = vadd.f32 %v7972, %v8117
  %v8119 = vpop.f32.mrf.mxu0
  %8120 = vdwg.mxu0
  %v8121 = vmax.f32 %v8107, 0.0
  %v8122 = vmax.f32 %v8110, 0.0
  %v8123 = vmax.f32 %v8115, 0.0
  %v8124 = vmax.f32 %v8118, 0.0
  %v8129 = vcombine.high %v8121, %v8121
  %v8130 = vcombine.high %v8122, %v8122
  %v8131 = vcombine.high %v8123, %v8123
  %v8132 = vcombine.high %v8124, %v8124
  %v8133 = vlaneseq
  %v8134 = vshrl.u32 %v8133, 7
  %v8135 = vsub.s32 0, %v8134
  %v8136 = vrot.slane %v8121, %v8135
  %v8137 = vlaneseq
  %v8138 = vshrl.u32 %v8137, 7
  %v8139 = vsub.s32 0, %v8138
  %v8140 = vrot.slane %v8129, %v8139
  %v8141 = vlaneseq
  %v8142 = vshrl.u32 %v8141, 7
  %v8143 = vsub.s32 0, %v8142
  %v8144 = vrot.slane %v8122, %v8143
  %v8145 = vlaneseq
  %v8146 = vshrl.u32 %v8145, 7
  %v8147 = vsub.s32 0, %v8146
  %v8148 = vrot.slane %v8130, %v8147
  %v8149 = vlaneseq
  %v8150 = vshrl.u32 %v8149, 7
  %v8151 = vsub.s32 0, %v8150
  %v8152 = vrot.slane %v8123, %v8151
  %v8153 = vlaneseq
  %v8154 = vshrl.u32 %v8153, 7
  %v8155 = vsub.s32 0, %v8154
  %v8156 = vrot.slane %v8131, %v8155
  %v8157 = vlaneseq
  %v8158 = vshrl.u32 %v8157, 7
  %v8159 = vsub.s32 0, %v8158
  %v8160 = vrot.slane %v8124, %v8159
  %v8161 = vlaneseq
  %v8162 = vshrl.u32 %v8161, 7
  %v8163 = vsub.s32 0, %v8162
  %v8164 = vrot.slane %v8132, %v8163
  %v8165 = vsel %vm7014, %v8140, %v8136
  %v8166 = vsel %vm7017, %v8144, %v8165
  %v8167 = vsel %vm7020, %v8148, %v8166
  %v8168 = vsel %vm7014, %v8156, %v8152
  %v8169 = vsel %vm7017, %v8160, %v8168
  %v8170 = vsel %vm7020, %v8164, %v8169
  %v8173 = vlaneseq
  %v8174 = vshrl.u32 %v8173, 7
  %v8175 = vsub.s32 1, %v8174
  %v8176 = vrot.slane %v8121, %v8175
  %v8177 = vlaneseq
  %v8178 = vshrl.u32 %v8177, 7
  %v8179 = vsub.s32 1, %v8178
  %v8180 = vrot.slane %v8129, %v8179
  %v8181 = vlaneseq
  %v8182 = vshrl.u32 %v8181, 7
  %v8183 = vsub.s32 1, %v8182
  %v8184 = vrot.slane %v8122, %v8183
  %v8185 = vlaneseq
  %v8186 = vshrl.u32 %v8185, 7
  %v8187 = vsub.s32 1, %v8186
  %v8188 = vrot.slane %v8130, %v8187
  %v8189 = vlaneseq
  %v8190 = vshrl.u32 %v8189, 7
  %v8191 = vsub.s32 1, %v8190
  %v8192 = vrot.slane %v8123, %v8191
  %v8193 = vlaneseq
  %v8194 = vshrl.u32 %v8193, 7
  %v8195 = vsub.s32 1, %v8194
  %v8196 = vrot.slane %v8131, %v8195
  %v8197 = vlaneseq
  %v8198 = vshrl.u32 %v8197, 7
  %v8199 = vsub.s32 1, %v8198
  %v8200 = vrot.slane %v8124, %v8199
  %v8201 = vlaneseq
  %v8202 = vshrl.u32 %v8201, 7
  %v8203 = vsub.s32 1, %v8202
  %v8204 = vrot.slane %v8132, %v8203
  %v8205 = vsel %vm7014, %v8180, %v8176
  %v8206 = vsel %vm7017, %v8184, %v8205
  %v8207 = vsel %vm7020, %v8188, %v8206
  %v8208 = vsel %vm7014, %v8196, %v8192
  %v8209 = vsel %vm7017, %v8200, %v8208
  %v8210 = vsel %vm7020, %v8204, %v8209
  %8211 = vrot.lane.b32.xlu0 %v8207, 32
  %v8212 = vpop.permute.xlu0 %8211
  %8213 = vrot.lane.b32.xlu0 %v8210, 32
  %v8214 = vpop.permute.xlu0 %8213
  %v8217 = vlaneseq
  %v8218 = vshrl.u32 %v8217, 7
  %v8219 = vsub.s32 2, %v8218
  %v8220 = vrot.slane %v8121, %v8219
  %v8221 = vlaneseq
  %v8222 = vshrl.u32 %v8221, 7
  %v8223 = vsub.s32 2, %v8222
  %v8224 = vrot.slane %v8129, %v8223
  %v8225 = vlaneseq
  %v8226 = vshrl.u32 %v8225, 7
  %v8227 = vsub.s32 2, %v8226
  %v8228 = vrot.slane %v8122, %v8227
  %v8229 = vlaneseq
  %v8230 = vshrl.u32 %v8229, 7
  %v8231 = vsub.s32 2, %v8230
  %v8232 = vrot.slane %v8130, %v8231
  %v8233 = vlaneseq
  %v8234 = vshrl.u32 %v8233, 7
  %v8235 = vsub.s32 2, %v8234
  %v8236 = vrot.slane %v8123, %v8235
  %v8237 = vlaneseq
  %v8238 = vshrl.u32 %v8237, 7
  %v8239 = vsub.s32 2, %v8238
  %v8240 = vrot.slane %v8131, %v8239
  %v8241 = vlaneseq
  %v8242 = vshrl.u32 %v8241, 7
  %v8243 = vsub.s32 2, %v8242
  %v8244 = vrot.slane %v8124, %v8243
  %v8245 = vlaneseq
  %v8246 = vshrl.u32 %v8245, 7
  %v8247 = vsub.s32 2, %v8246
  %v8248 = vrot.slane %v8132, %v8247
  %v8249 = vsel %vm7014, %v8224, %v8220
  %v8250 = vsel %vm7017, %v8228, %v8249
  %v8251 = vsel %vm7020, %v8232, %v8250
  %v8252 = vsel %vm7014, %v8240, %v8236
  %v8253 = vsel %vm7017, %v8244, %v8252
  %v8254 = vsel %vm7020, %v8248, %v8253
  %8255 = vrot.lane.b32.xlu0 %v8251, 64
  %v8256 = vpop.permute.xlu0 %8255
  %8257 = vrot.lane.b32.xlu0 %v8254, 64
  %v8258 = vpop.permute.xlu0 %8257
  %v8261 = vlaneseq
  %v8262 = vshrl.u32 %v8261, 7
  %v8263 = vsub.s32 3, %v8262
  %v8264 = vrot.slane %v8121, %v8263
  %v8265 = vlaneseq
  %v8266 = vshrl.u32 %v8265, 7
  %v8267 = vsub.s32 3, %v8266
  %v8268 = vrot.slane %v8129, %v8267
  %v8269 = vlaneseq
  %v8270 = vshrl.u32 %v8269, 7
  %v8271 = vsub.s32 3, %v8270
  %v8272 = vrot.slane %v8122, %v8271
  %v8273 = vlaneseq
  %v8274 = vshrl.u32 %v8273, 7
  %v8275 = vsub.s32 3, %v8274
  %v8276 = vrot.slane %v8130, %v8275
  %v8277 = vlaneseq
  %v8278 = vshrl.u32 %v8277, 7
  %v8279 = vsub.s32 3, %v8278
  %v8280 = vrot.slane %v8123, %v8279
  %v8281 = vlaneseq
  %v8282 = vshrl.u32 %v8281, 7
  %v8283 = vsub.s32 3, %v8282
  %v8284 = vrot.slane %v8131, %v8283
  %v8285 = vlaneseq
  %v8286 = vshrl.u32 %v8285, 7
  %v8287 = vsub.s32 3, %v8286
  %v8288 = vrot.slane %v8124, %v8287
  %v8289 = vlaneseq
  %v8290 = vshrl.u32 %v8289, 7
  %v8291 = vsub.s32 3, %v8290
  %v8292 = vrot.slane %v8132, %v8291
  %v8293 = vsel %vm7014, %v8268, %v8264
  %v8294 = vsel %vm7017, %v8272, %v8293
  %v8295 = vsel %vm7020, %v8276, %v8294
  %v8296 = vsel %vm7014, %v8284, %v8280
  %v8297 = vsel %vm7017, %v8288, %v8296
  %v8298 = vsel %vm7020, %v8292, %v8297
  %8299 = vrot.lane.b32.xlu0 %v8295, 96
  %v8300 = vpop.permute.xlu0 %8299
  %8301 = vrot.lane.b32.xlu0 %v8298, 96
  %v8302 = vpop.permute.xlu0 %8301
  %v8305 = vsel %vm5024, %v8167, %v8212
  %v8306 = vsel %vm5024, %v8170, %v8214
  %v8307 = vsel %vm6739, %v8305, %v8256
  %v8308 = vsel %vm6739, %v8306, %v8258
  %v8309 = vsel %vm7299, %v8307, %v8300
  %v8310 = vsel %vm7299, %v8308, %v8302
  %8311 = vst [vmem:[%s8] sm:$0xf] %v8309
  %8312 = vst [vmem:[%s8 + $0x4] sm:$0xf] %v8310
  // Predicated region
  $region30: #{run.1} parent=0 // pred_check
    _
  $region31: #{run.1} parent=0 // pred_check_branch
    %8314 = sbr.rel (0) target = $region33
  $region32: #{run.1} parent=0 // pred_region
    _
  $region33: #{run.1} parent=0 // pred_fallthru
    _
  // Predicated region
  $region34: #{run.1} parent=0 // pred_check
    _
  $region35: #{run.1} parent=0 // pred_check_branch
    %8316 = sbr.rel (0) target = $region37
  $region36: #{run.1} parent=0 // pred_region
    _
  $region37: #{run.1} parent=0 // pred_fallthru
    _
  // Predicated region
  $region38: #{run.1} parent=0 // pred_check
    _
  $region39: #{run.1} parent=0 // pred_check_branch
    %8318 = sbr.rel (0) target = $region41
  $region40: #{run.1} parent=0 // pred_region
    _
  $region41: #{run.1} parent=0 // pred_fallthru
    _
  // Predicated region
  $region42: #{run.1} parent=0 // pred_check
    _
  $region43: #{run.1} parent=0 // pred_check_branch
    %8320 = sbr.rel (0) target = $region45
  $region44: #{run.1} parent=0 // pred_region
    _
  $region45: #{run.1} parent=0 // pred_fallthru
    _

</llo_original>
